<compile_context>
chip_gen: v7x
topology: tpu7x:2x2x1
jax: 0.10.0
libtpu: 0.0.40
codegen_flags: <defaults>
</compile_context>

<pallas_src>
import functools
import math

import jax
import jax.numpy as jnp
import numpy as np
from jax.experimental import pallas as pl
from jax.experimental.pallas import tpu as pltpu


# ----------------------------- Pallas kernels ------------------------------

def _head_kernel(x_ref,
                 s11_ref, t11_ref, w1_ref, b1_ref, s12_ref, t12_ref,
                 s21_ref, t21_ref, w2_ref, b2_ref, s22_ref, t22_ref,
                 o1_ref, o2_ref):
    """Fused: both branches' BN+ReLU+1x1conv and the following BN+ReLU.

    o1 = relu(bn_b1_2(relu(bn_b1_1(x)) @ W1 + b1))   (branch1, pre-3x3)
    o2 = relu(bn_pyra(relu(bn_b2_1(x)) @ W2 + b2))   (branch2, pyramid input)
    Outputs stored in bf16 (they are only ever matmul operands downstream).
    """
    x = x_ref[...]
    a1 = jnp.maximum(x * s11_ref[...] + t11_ref[...], 0.0)
    t1 = (jnp.dot(a1.astype(jnp.bfloat16), w1_ref[...],
                  preferred_element_type=jnp.float32) + b1_ref[...])
    o1_ref[...] = jnp.maximum(t1 * s12_ref[...] + t12_ref[...],
                              0.0).astype(o1_ref.dtype)

    a2 = jnp.maximum(x * s21_ref[...] + t21_ref[...], 0.0)
    t2 = (jnp.dot(a2.astype(jnp.bfloat16), w2_ref[...],
                  preferred_element_type=jnp.float32) + b2_ref[...])
    o2_ref[...] = jnp.maximum(t2 * s22_ref[...] + t22_ref[...],
                              0.0).astype(o2_ref.dtype)


def _conv3x3_flat_kernel(xf_ref, w_ref, b_ref, o_ref, *, wp):
    """3x3 conv (stride 1, zero pad 1) on a pre-activated input.

    xf_ref: (1, P + 2*(wp+1), C) bf16 — spatially flattened, zero-padded
            (spatial pad + flat halo) activation.
    w_ref : (9, C, Cout) bf16 taps; b_ref: (1, Cout) f32.
    o_ref : (1, P, Cout) f32 — conv over the whole padded grid; the wrapper
            slices out the H x W interior (small ring of wasted rows instead
            of a 9x im2col blowup or risky in-kernel reshapes).
    """
    p_out = o_ref.shape[1]
    cout = o_ref.shape[-1]
    acc = jnp.zeros((p_out, cout), jnp.float32)
    for dy in range(3):
        for dx in range(3):
            start = dy * wp + dx                      # static offset
            src = xf_ref[0, start:start + p_out, :]   # (P, C) bf16
            acc = acc + jnp.dot(src, w_ref[dy * 3 + dx],
                                preferred_element_type=jnp.float32)
    o_ref[0] = acc + b_ref[...]


def _tail_kernel(p_ref, b1_ref,
                 s3_ref, t3_ref, w3_ref, bias3_ref,
                 saa_ref, taa_ref, waa_ref, biasaa_ref, o_ref):
    """Fused: branch2's last BnReluConv(1x1) + add + afteradd BnReluConv(1x1).

    y = relu(bn_aa(relu(bn3(pyra_out)) @ W3 + b3  +  b1)) @ Waa + baa
    """
    a = jnp.maximum(p_ref[...] * s3_ref[...] + t3_ref[...], 0.0)
    b2o = (jnp.dot(a.astype(jnp.bfloat16), w3_ref[...],
                   preferred_element_type=jnp.float32) + bias3_ref[...])
    s = b2o + b1_ref[...]
    a2 = jnp.maximum(s * saa_ref[...] + taa_ref[...], 0.0)
    o_ref[...] = (jnp.dot(a2.astype(jnp.bfloat16), waa_ref[...],
                          preferred_element_type=jnp.float32) + biasaa_ref[...])


# ----------------------------- kernel wrappers ------------------------------

def _row_blocks(m, num_blocks=2):
    """Pad the flattened row count so it splits into `num_blocks` equal,
    sublane-aligned tiles (>=2 parallel blocks keeps both v7x TCs busy;
    harmless on single-TC v5e/v6e since the whole problem fits VMEM)."""
    mult = 8 * num_blocks
    mp = ((m + mult - 1) // mult) * mult
    return mp, mp // num_blocks


def head_fused(x2d, params):
    m, cin = x2d.shape
    mp, tm = _row_blocks(m)
    xpad = jnp.pad(x2d, ((0, mp - m), (0, 0))) if mp != m else x2d
    c1 = params["b1_w1"].shape[1]
    c2 = params["b2_w1"].shape[1]
    row = lambda i: (i, 0)
    fix = lambda i: (0, 0)
    o1, o2 = pl.pallas_call(
        _head_kernel,
        out_shape=(jax.ShapeDtypeStruct((mp, c1), jnp.bfloat16),
                   jax.ShapeDtypeStruct((mp, c2), jnp.bfloat16)),
        grid=(mp // tm,),
        in_specs=[
            pl.BlockSpec((tm, cin), row),
            pl.BlockSpec((1, cin), fix), pl.BlockSpec((1, cin), fix),
            pl.BlockSpec((cin, c1), fix), pl.BlockSpec((1, c1), fix),
            pl.BlockSpec((1, c1), fix), pl.BlockSpec((1, c1), fix),
            pl.BlockSpec((1, cin), fix), pl.BlockSpec((1, cin), fix),
            pl.BlockSpec((cin, c2), fix), pl.BlockSpec((1, c2), fix),
            pl.BlockSpec((1, c2), fix), pl.BlockSpec((1, c2), fix),
        ],
        out_specs=(pl.BlockSpec((tm, c1), row), pl.BlockSpec((tm, c2), row)),
        compiler_params=pltpu.CompilerParams(dimension_semantics=("parallel",)),
    )(xpad,
      params["b1_bn1"][0].reshape(1, -1), params["b1_bn1"][1].reshape(1, -1),
      params["b1_w1"], params["b1_b1"].reshape(1, -1),
      params["b1_bn2"][0].reshape(1, -1), params["b1_bn2"][1].reshape(1, -1),
      params["b2_bn1"][0].reshape(1, -1), params["b2_bn1"][1].reshape(1, -1),
      params["b2_w1"], params["b2_b1"].reshape(1, -1),
      params["pyra_bn"][0].reshape(1, -1), params["pyra_bn"][1].reshape(1, -1))
    return o1[:m], o2[:m]


def conv3x3(a_nhwc, w9, b):
    """3x3 conv (stride 1, zero pad 1) on an already-activated NHWC tensor.

    Zero padding is applied AFTER BN+ReLU (done upstream), matching PyTorch's
    Conv2d padding of relu(bn(x)).  The padded grid is flattened plus a
    zero halo so the nine taps are static row shifts inside the kernel.
    """
    n, h, w, c = a_nhwc.shape
    cout = w9.shape[-1]
    hp, wp = h + 2, w + 2
    p = hp * wp
    halo = wp + 1
    xp = jnp.pad(a_nhwc, ((0, 0), (1, 1), (1, 1), (0, 0)))
    xf = jnp.pad(xp.reshape(n, p, c), ((0, 0), (halo, halo), (0, 0)))
    out = pl.pallas_call(
        functools.partial(_conv3x3_flat_kernel, wp=wp),
        out_shape=jax.ShapeDtypeStruct((n, p, cout), jnp.float32),
        grid=(n,),
        in_specs=[
            pl.BlockSpec((1, p + 2 * halo, c), lambda i: (i, 0, 0)),
            pl.BlockSpec((9, c, cout), lambda i: (0, 0, 0)),
            pl.BlockSpec((1, cout), lambda i: (0, 0)),
        ],
        out_specs=pl.BlockSpec((1, p, cout), lambda i: (i, 0, 0)),
        compiler_params=pltpu.CompilerParams(dimension_semantics=("parallel",)),
    )(xf, w9, b.reshape(1, -1))
    return out.reshape(n, hp, wp, cout)[:, 1:-1, 1:-1, :]


def tail_fused(p2d, b1o2d, params):
    m, d = p2d.shape
    c2 = b1o2d.shape[1]
    cout = params["aa_w"].shape[1]
    mp, tm = _row_blocks(m)
    if mp != m:
        p2d = jnp.pad(p2d, ((0, mp - m), (0, 0)))
        b1o2d = jnp.pad(b1o2d, ((0, mp - m), (0, 0)))
    row = lambda i: (i, 0)
    fix = lambda i: (0, 0)
    out = pl.pallas_call(
        _tail_kernel,
        out_shape=jax.ShapeDtypeStruct((mp, cout), jnp.float32),
        grid=(mp // tm,),
        in_specs=[
            pl.BlockSpec((tm, d), row),
            pl.BlockSpec((tm, c2), row),
            pl.BlockSpec((1, d), fix), pl.BlockSpec((1, d), fix),
            pl.BlockSpec((d, c2), fix), pl.BlockSpec((1, c2), fix),
            pl.BlockSpec((1, c2), fix), pl.BlockSpec((1, c2), fix),
            pl.BlockSpec((c2, cout), fix), pl.BlockSpec((1, cout), fix),
        ],
        out_specs=pl.BlockSpec((tm, cout), row),
        compiler_params=pltpu.CompilerParams(dimension_semantics=("parallel",)),
    )(p2d, b1o2d,
      params["b2_bn3"][0].reshape(1, -1), params["b2_bn3"][1].reshape(1, -1),
      params["b2_w3"], params["b2_b3"].reshape(1, -1),
      params["aa_bn"][0].reshape(1, -1), params["aa_bn"][1].reshape(1, -1),
      params["aa_w"], params["aa_b"].reshape(1, -1))
    return out[:m]


# ----------------------------- JAX glue (tiny gathers) -----------------------

def fractional_max_pool2(x, out_size):
    """2x2 fractional max pool to (out_size, out_size).

    # TODO(synk): PyTorch FractionalMaxPool2d samples pooling-region offsets
    # pseudo-randomly per forward; we use the deterministic evenly-spaced
    # variant (offset u = 0), which matches output shape and kernel size.
    """
    n, h, w, c = x.shape
    sr = np.minimum(np.floor((h / out_size) * np.arange(out_size)).astype(np.int32), h - 2)
    sc = np.minimum(np.floor((w / out_size) * np.arange(out_size)).astype(np.int32), w - 2)
    rmax = jnp.maximum(x[:, sr, :, :], x[:, sr + 1, :, :])
    return jnp.maximum(rmax[:, :, sc, :], rmax[:, :, sc + 1, :])


def upsample_nearest(x, out_size):
    n, h, w, c = x.shape
    ri = np.floor(np.arange(out_size) * (h / out_size)).astype(np.int32)
    ci = np.floor(np.arange(out_size) * (w / out_size)).astype(np.int32)
    return x[:, ri][:, :, ci]
# TODO(synk): the pool/upsample index gathers could be folded into the conv
# pallas_call via PrefetchScalarGridSpec index tables; kept in XLA here.


# ----------------------------- parameter init -------------------------------

def init_params(key, in_c, out_c, base_width, cardinality):
    d = out_c // base_width
    out_c2 = out_c // 2
    keys = iter(jax.random.split(key, 64))

    def bn_params(c):
        # BatchNorm2d eval mode folded into per-channel (scale, shift), f32.
        gamma = 1.0 + 0.1 * jax.random.normal(next(keys), (c,), jnp.float32)
        beta = 0.1 * jax.random.normal(next(keys), (c,), jnp.float32)
        mean = 0.1 * jax.random.normal(next(keys), (c,), jnp.float32)
        var = jnp.abs(1.0 + 0.1 * jax.random.normal(next(keys), (c,), jnp.float32))
        scale = gamma / jnp.sqrt(var + 1e-5)
        shift = beta - mean * scale
        return scale, shift

    def conv1x1(cin, cout):
        w = (jax.random.normal(next(keys), (cin, cout), jnp.float32)
             / math.sqrt(cin)).astype(jnp.bfloat16)          # matmul operand -> bf16
        b = 0.01 * jax.random.normal(next(keys), (cout,), jnp.float32)
        return w, b

    def conv3x3_p(cin, cout):
        w = (jax.random.normal(next(keys), (3, 3, cin, cout), jnp.float32)
             / math.sqrt(9 * cin)).reshape(9, cin, cout).astype(jnp.bfloat16)
        b = 0.01 * jax.random.normal(next(keys), (cout,), jnp.float32)
        return w, b

    b1_w1, b1_b1 = conv1x1(in_c, out_c2)
    b1_w2, b1_b2 = conv3x3_p(out_c2, out_c2)
    b2_w1, b2_b1 = conv1x1(in_c, d)
    b2_w3, b2_b3 = conv1x1(d, out_c2)
    aa_w, aa_b = conv1x1(out_c2, out_c)

    return {
        "b1_bn1": bn_params(in_c), "b1_w1": b1_w1, "b1_b1": b1_b1,
        "b1_bn2": bn_params(out_c2), "b1_w2_9": b1_w2, "b1_b2": b1_b2,
        "b2_bn1": bn_params(in_c), "b2_w1": b2_w1, "b2_b1": b2_b1,
        "pyra_bn": bn_params(d),
        "pyra_convs": [conv3x3_p(d, d) for _ in range(cardinality)],
        "b2_bn3": bn_params(d), "b2_w3": b2_w3, "b2_b3": b2_b3,
        "aa_bn": bn_params(out_c2), "aa_w": aa_w, "aa_b": aa_b,
    }


# ------------------------------- forward ------------------------------------

@functools.partial(jax.jit, static_argnums=(2, 3))
def pyra_conv_block(x_nchw, params, input_res, cardinality):
    """Forward pass of PyraConvBlock.  Input/output NCHW (PyTorch convention)."""
    x = jnp.transpose(x_nchw, (0, 2, 3, 1)).astype(jnp.float32)  # -> NHWC
    n, h, w, cin = x.shape
    m = n * h * w

    # Fused head: both branches' BN+ReLU+1x1 conv + follow-up BN+ReLU.
    o1, o2 = head_fused(x.reshape(m, cin), params)
    b1_act = o1.reshape(n, h, w, -1)   # branch1 post-bn2/relu, ready for 3x3
    p = o2.reshape(n, h, w, -1)        # branch2 post-pyra-bn/relu

    # Branch1 tail: plain 3x3 conv (zero pad of post-ReLU activation == PyTorch).
    b1 = conv3x3(b1_act, params["b1_w2_9"], params["b1_b2"])

    # Branch2 pyramid: pool -> 3x3 conv -> upsample -> accumulate.
    scale = 2.0 ** (-1.0 / cardinality)
    pyra_out = jnp.zeros((n, h, w, p.shape[-1]), jnp.float32)
    for card in range(cardinality):
        o = int(math.floor(input_res * (scale ** (card + 1))))
        pooled = fractional_max_pool2(p, o)
        w9, bias = params["pyra_convs"][card]
        conv = conv3x3(pooled, w9, bias)
        pyra_out = pyra_out + upsample_nearest(conv, input_res)

    # Fused tail: branch2 last 1x1 BnReluConv + add + afteradd BnReluConv.
    y2d = tail_fused(pyra_out.reshape(m, -1), b1.reshape(m, -1), params)
    y = y2d.reshape(n, h, w, -1)
    return jnp.transpose(y, (0, 3, 1, 2))  # -> NCHW


# --------------------------------- main --------------------------------------

if __name__ == "__main__":
    N, in_c, res = 2, 16, 16
    out_c, base_width, cardinality = 32, 4, 2   # -> D = 8, outChannels//2 = 16

    key = jax.random.PRNGKey(0)
    kx, kp = jax.random.split(key)
    x = jax.random.normal(kx, (N, in_c, res, res), jnp.float32)  # NCHW input
    params = init_params(kp, in_c, out_c, base_width, cardinality)

    y = pyra_conv_block(x, params, res, cardinality)
    jax.block_until_ready(y)
    assert y.shape == (N, out_c, res, res), y.shape
    assert bool(jnp.all(jnp.isfinite(y)))
    print("KERNEL_OK")
</pallas_src>

<mosaic_0001>
module attributes {stable_mosaic.version = 11 : i64} {
  func.func @_head_kernel(%arg0: i32, %arg1: memref<256x16xf32, #tpu.memory_space<vmem>>, %arg2: memref<1x16xf32, #tpu.memory_space<vmem>>, %arg3: memref<1x16xf32, #tpu.memory_space<vmem>>, %arg4: memref<16x16xbf16, #tpu.memory_space<vmem>>, %arg5: memref<1x16xf32, #tpu.memory_space<vmem>>, %arg6: memref<1x16xf32, #tpu.memory_space<vmem>>, %arg7: memref<1x16xf32, #tpu.memory_space<vmem>>, %arg8: memref<1x16xf32, #tpu.memory_space<vmem>>, %arg9: memref<1x16xf32, #tpu.memory_space<vmem>>, %arg10: memref<16x8xbf16, #tpu.memory_space<vmem>>, %arg11: memref<1x8xf32, #tpu.memory_space<vmem>>, %arg12: memref<1x8xf32, #tpu.memory_space<vmem>>, %arg13: memref<1x8xf32, #tpu.memory_space<vmem>>, %arg14: memref<256x16xbf16, #tpu.memory_space<vmem>>, %arg15: memref<256x8xbf16, #tpu.memory_space<vmem>>) attributes {dimension_semantics = [#tpu.dimension_semantics<parallel>], iteration_bounds = array<i64: 2>, scalar_prefetch = 0 : i64, scratch_operands = 0 : i64, tpu.core_type = #tpu.core_type<tc>, window_params = [{transform_indices = @transform_0, window_bounds = array<i64: 256, 16>}, {pipeline_mode = #tpu.pipeline_mode<synchronous>, transform_indices = @transform_1, window_bounds = array<i64: 1, 16>}, {pipeline_mode = #tpu.pipeline_mode<synchronous>, transform_indices = @transform_2, window_bounds = array<i64: 1, 16>}, {pipeline_mode = #tpu.pipeline_mode<synchronous>, transform_indices = @transform_3, window_bounds = array<i64: 16, 16>}, {pipeline_mode = #tpu.pipeline_mode<synchronous>, transform_indices = @transform_4, window_bounds = array<i64: 1, 16>}, {pipeline_mode = #tpu.pipeline_mode<synchronous>, transform_indices = @transform_5, window_bounds = array<i64: 1, 16>}, {pipeline_mode = #tpu.pipeline_mode<synchronous>, transform_indices = @transform_6, window_bounds = array<i64: 1, 16>}, {pipeline_mode = #tpu.pipeline_mode<synchronous>, transform_indices = @transform_7, window_bounds = array<i64: 1, 16>}, {pipeline_mode = #tpu.pipeline_mode<synchronous>, transform_indices = @transform_8, window_bounds = array<i64: 1, 16>}, {pipeline_mode = #tpu.pipeline_mode<synchronous>, transform_indices = @transform_9, window_bounds = array<i64: 16, 8>}, {pipeline_mode = #tpu.pipeline_mode<synchronous>, transform_indices = @transform_10, window_bounds = array<i64: 1, 8>}, {pipeline_mode = #tpu.pipeline_mode<synchronous>, transform_indices = @transform_11, window_bounds = array<i64: 1, 8>}, {pipeline_mode = #tpu.pipeline_mode<synchronous>, transform_indices = @transform_12, window_bounds = array<i64: 1, 8>}, {transform_indices = @transform_13, window_bounds = array<i64: 256, 16>}, {transform_indices = @transform_14, window_bounds = array<i64: 256, 8>}]} {
    %c0 = arith.constant 0 : index
    %c0_0 = arith.constant 0 : index
    %0 = vector.load %arg1[%c0, %c0_0] : memref<256x16xf32, #tpu.memory_space<vmem>>, vector<256x16xf32>
    %c0_1 = arith.constant 0 : index
    %c0_2 = arith.constant 0 : index
    %1 = vector.load %arg2[%c0_1, %c0_2] : memref<1x16xf32, #tpu.memory_space<vmem>>, vector<1x16xf32>
    %2 = vector.broadcast %1 : vector<1x16xf32> to vector<256x16xf32>
    %3 = arith.mulf %0, %2 : vector<256x16xf32>
    %c0_3 = arith.constant 0 : index
    %c0_4 = arith.constant 0 : index
    %4 = vector.load %arg3[%c0_3, %c0_4] : memref<1x16xf32, #tpu.memory_space<vmem>>, vector<1x16xf32>
    %5 = vector.broadcast %4 : vector<1x16xf32> to vector<256x16xf32>
    %6 = arith.addf %3, %5 : vector<256x16xf32>
    %cst = arith.constant 0.000000e+00 : f32
    %7 = vector.broadcast %cst : f32 to vector<256x16xf32>
    %8 = arith.maximumf %6, %7 : vector<256x16xf32>
    %9 = arith.truncf %8 : vector<256x16xf32> to vector<256x16xbf16>
    %c0_5 = arith.constant 0 : index
    %c0_6 = arith.constant 0 : index
    %10 = vector.load %arg4[%c0_5, %c0_6] : memref<16x16xbf16, #tpu.memory_space<vmem>>, vector<16x16xbf16>
    %cst_7 = arith.constant dense<0.000000e+00> : vector<256x16xf32>
    %11 = tpu.matmul %9, %10, %cst_7 {dimension_numbers = #tpu.dot_dimension_numbers<[1], [0], [0], [1], [0, 0, 1, 1], [], []>} : vector<256x16xbf16>, vector<16x16xbf16>, vector<256x16xf32> -> vector<256x16xf32>
    %c0_8 = arith.constant 0 : index
    %c0_9 = arith.constant 0 : index
    %12 = vector.load %arg5[%c0_8, %c0_9] : memref<1x16xf32, #tpu.memory_space<vmem>>, vector<1x16xf32>
    %13 = vector.broadcast %12 : vector<1x16xf32> to vector<256x16xf32>
    %14 = arith.addf %11, %13 : vector<256x16xf32>
    %c0_10 = arith.constant 0 : index
    %c0_11 = arith.constant 0 : index
    %15 = vector.load %arg6[%c0_10, %c0_11] : memref<1x16xf32, #tpu.memory_space<vmem>>, vector<1x16xf32>
    %16 = vector.broadcast %15 : vector<1x16xf32> to vector<256x16xf32>
    %17 = arith.mulf %14, %16 : vector<256x16xf32>
    %c0_12 = arith.constant 0 : index
    %c0_13 = arith.constant 0 : index
    %18 = vector.load %arg7[%c0_12, %c0_13] : memref<1x16xf32, #tpu.memory_space<vmem>>, vector<1x16xf32>
    %19 = vector.broadcast %18 : vector<1x16xf32> to vector<256x16xf32>
    %20 = arith.addf %17, %19 : vector<256x16xf32>
    %cst_14 = arith.constant 0.000000e+00 : f32
    %21 = vector.broadcast %cst_14 : f32 to vector<256x16xf32>
    %22 = arith.maximumf %20, %21 : vector<256x16xf32>
    %23 = arith.truncf %22 : vector<256x16xf32> to vector<256x16xbf16>
    %c0_15 = arith.constant 0 : index
    %c0_16 = arith.constant 0 : index
    %24 = vector.load %arg14[%c0_15, %c0_16] : memref<256x16xbf16, #tpu.memory_space<vmem>>, vector<256x16xbf16>
    tpu.vector_store %arg14[%c0_15, %c0_16], %23 {strides = array<i32>} : memref<256x16xbf16, #tpu.memory_space<vmem>>, vector<256x16xbf16>,
    %c0_17 = arith.constant 0 : index
    %c0_18 = arith.constant 0 : index
    %25 = vector.load %arg8[%c0_17, %c0_18] : memref<1x16xf32, #tpu.memory_space<vmem>>, vector<1x16xf32>
    %26 = vector.broadcast %25 : vector<1x16xf32> to vector<256x16xf32>
    %27 = arith.mulf %0, %26 : vector<256x16xf32>
    %c0_19 = arith.constant 0 : index
    %c0_20 = arith.constant 0 : index
    %28 = vector.load %arg9[%c0_19, %c0_20] : memref<1x16xf32, #tpu.memory_space<vmem>>, vector<1x16xf32>
    %29 = vector.broadcast %28 : vector<1x16xf32> to vector<256x16xf32>
    %30 = arith.addf %27, %29 : vector<256x16xf32>
    %cst_21 = arith.constant 0.000000e+00 : f32
    %31 = vector.broadcast %cst_21 : f32 to vector<256x16xf32>
    %32 = arith.maximumf %30, %31 : vector<256x16xf32>
    %33 = arith.truncf %32 : vector<256x16xf32> to vector<256x16xbf16>
    %c0_22 = arith.constant 0 : index
    %c0_23 = arith.constant 0 : index
    %34 = vector.load %arg10[%c0_22, %c0_23] : memref<16x8xbf16, #tpu.memory_space<vmem>>, vector<16x8xbf16>
    %cst_24 = arith.constant dense<0.000000e+00> : vector<256x8xf32>
    %35 = tpu.matmul %33, %34, %cst_24 {dimension_numbers = #tpu.dot_dimension_numbers<[1], [0], [0], [1], [0, 0, 1, 1], [], []>} : vector<256x16xbf16>, vector<16x8xbf16>, vector<256x8xf32> -> vector<256x8xf32>
    %c0_25 = arith.constant 0 : index
    %c0_26 = arith.constant 0 : index
    %36 = vector.load %arg11[%c0_25, %c0_26] : memref<1x8xf32, #tpu.memory_space<vmem>>, vector<1x8xf32>
    %37 = vector.broadcast %36 : vector<1x8xf32> to vector<256x8xf32>
    %38 = arith.addf %35, %37 : vector<256x8xf32>
    %c0_27 = arith.constant 0 : index
    %c0_28 = arith.constant 0 : index
    %39 = vector.load %arg12[%c0_27, %c0_28] : memref<1x8xf32, #tpu.memory_space<vmem>>, vector<1x8xf32>
    %40 = vector.broadcast %39 : vector<1x8xf32> to vector<256x8xf32>
    %41 = arith.mulf %38, %40 : vector<256x8xf32>
    %c0_29 = arith.constant 0 : index
    %c0_30 = arith.constant 0 : index
    %42 = vector.load %arg13[%c0_29, %c0_30] : memref<1x8xf32, #tpu.memory_space<vmem>>, vector<1x8xf32>
    %43 = vector.broadcast %42 : vector<1x8xf32> to vector<256x8xf32>
    %44 = arith.addf %41, %43 : vector<256x8xf32>
    %cst_31 = arith.constant 0.000000e+00 : f32
    %45 = vector.broadcast %cst_31 : f32 to vector<256x8xf32>
    %46 = arith.maximumf %44, %45 : vector<256x8xf32>
    %47 = arith.truncf %46 : vector<256x8xf32> to vector<256x8xbf16>
    %c0_32 = arith.constant 0 : index
    %c0_33 = arith.constant 0 : index
    %48 = vector.load %arg15[%c0_32, %c0_33] : memref<256x8xbf16, #tpu.memory_space<vmem>>, vector<256x8xbf16>
    tpu.vector_store %arg15[%c0_32, %c0_33], %47 {strides = array<i32>} : memref<256x8xbf16, #tpu.memory_space<vmem>>, vector<256x8xbf16>,
    return
  }
  func.func @transform_0(%arg0: i32) -> (i32, i32) {
    %c0_i32 = arith.constant 0 : i32
    %c0_i32_0 = arith.constant 0 : i32
    return %arg0, %c0_i32 : i32, i32
  }
  func.func @transform_1(%arg0: i32) -> (i32, i32) {
    %c0_i32 = arith.constant 0 : i32
    %c0_i32_0 = arith.constant 0 : i32
    %c0_i32_1 = arith.constant 0 : i32
    return %c0_i32, %c0_i32_0 : i32, i32
  }
  func.func @transform_2(%arg0: i32) -> (i32, i32) {
    %c0_i32 = arith.constant 0 : i32
    %c0_i32_0 = arith.constant 0 : i32
    %c0_i32_1 = arith.constant 0 : i32
    return %c0_i32, %c0_i32_0 : i32, i32
  }
  func.func @transform_3(%arg0: i32) -> (i32, i32) {
    %c0_i32 = arith.constant 0 : i32
    %c0_i32_0 = arith.constant 0 : i32
    %c0_i32_1 = arith.constant 0 : i32
    return %c0_i32, %c0_i32_0 : i32, i32
  }
  func.func @transform_4(%arg0: i32) -> (i32, i32) {
    %c0_i32 = arith.constant 0 : i32
    %c0_i32_0 = arith.constant 0 : i32
    %c0_i32_1 = arith.constant 0 : i32
    return %c0_i32, %c0_i32_0 : i32, i32
  }
  func.func @transform_5(%arg0: i32) -> (i32, i32) {
    %c0_i32 = arith.constant 0 : i32
    %c0_i32_0 = arith.constant 0 : i32
    %c0_i32_1 = arith.constant 0 : i32
    return %c0_i32, %c0_i32_0 : i32, i32
  }
  func.func @transform_6(%arg0: i32) -> (i32, i32) {
    %c0_i32 = arith.constant 0 : i32
    %c0_i32_0 = arith.constant 0 : i32
    %c0_i32_1 = arith.constant 0 : i32
    return %c0_i32, %c0_i32_0 : i32, i32
  }
  func.func @transform_7(%arg0: i32) -> (i32, i32) {
    %c0_i32 = arith.constant 0 : i32
    %c0_i32_0 = arith.constant 0 : i32
    %c0_i32_1 = arith.constant 0 : i32
    return %c0_i32, %c0_i32_0 : i32, i32
  }
  func.func @transform_8(%arg0: i32) -> (i32, i32) {
    %c0_i32 = arith.constant 0 : i32
    %c0_i32_0 = arith.constant 0 : i32
    %c0_i32_1 = arith.constant 0 : i32
    return %c0_i32, %c0_i32_0 : i32, i32
  }
  func.func @transform_9(%arg0: i32) -> (i32, i32) {
    %c0_i32 = arith.constant 0 : i32
    %c0_i32_0 = arith.constant 0 : i32
    %c0_i32_1 = arith.constant 0 : i32
    return %c0_i32, %c0_i32_0 : i32, i32
  }
  func.func @transform_10(%arg0: i32) -> (i32, i32) {
    %c0_i32 = arith.constant 0 : i32
    %c0_i32_0 = arith.constant 0 : i32
    %c0_i32_1 = arith.constant 0 : i32
    return %c0_i32, %c0_i32_0 : i32, i32
  }
  func.func @transform_11(%arg0: i32) -> (i32, i32) {
    %c0_i32 = arith.constant 0 : i32
    %c0_i32_0 = arith.constant 0 : i32
    %c0_i32_1 = arith.constant 0 : i32
    return %c0_i32, %c0_i32_0 : i32, i32
  }
  func.func @transform_12(%arg0: i32) -> (i32, i32) {
    %c0_i32 = arith.constant 0 : i32
    %c0_i32_0 = arith.constant 0 : i32
    %c0_i32_1 = arith.constant 0 : i32
    return %c0_i32, %c0_i32_0 : i32, i32
  }
  func.func @transform_13(%arg0: i32) -> (i32, i32) {
    %c0_i32 = arith.constant 0 : i32
    %c0_i32_0 = arith.constant 0 : i32
    return %arg0, %c0_i32 : i32, i32
  }
  func.func @transform_14(%arg0: i32) -> (i32, i32) {
    %c0_i32 = arith.constant 0 : i32
    %c0_i32_0 = arith.constant 0 : i32
    return %arg0, %c0_i32 : i32, i32
  }
}

module attributes {stable_mosaic.version = 11 : i64} {
  func.func @_conv3x3_flat_kernel(%arg0: i32, %arg1: memref<1x122x8xbf16, #tpu.memory_space<vmem>>, %arg2: memref<9x8x8xbf16, #tpu.memory_space<vmem>>, %arg3: memref<1x8xf32, #tpu.memory_space<vmem>>, %arg4: memref<1x100x8xf32, #tpu.memory_space<vmem>>) attributes {dimension_semantics = [#tpu.dimension_semantics<parallel>], iteration_bounds = array<i64: 2>, scalar_prefetch = 0 : i64, scratch_operands = 0 : i64, tpu.core_type = #tpu.core_type<tc>, window_params = [{transform_indices = @transform_0, window_bounds = array<i64: 1, 122, 8>}, {pipeline_mode = #tpu.pipeline_mode<synchronous>, transform_indices = @transform_1, window_bounds = array<i64: 9, 8, 8>}, {pipeline_mode = #tpu.pipeline_mode<synchronous>, transform_indices = @transform_2, window_bounds = array<i64: 1, 8>}, {transform_indices = @transform_3, window_bounds = array<i64: 1, 100, 8>}]} {
    %cst = arith.constant 0.000000e+00 : f32
    %0 = vector.broadcast %cst : f32 to vector<100x8xf32>
    %c0 = arith.constant 0 : index
    %c0_0 = arith.constant 0 : index
    %c0_1 = arith.constant 0 : index
    %1 = vector.load %arg1[%c0, %c0_0, %c0_1] : memref<1x122x8xbf16, #tpu.memory_space<vmem>>, vector<1x100x8xbf16>
    %2 = vector.shape_cast %1 : vector<1x100x8xbf16> to vector<100x8xbf16>
    %c0_2 = arith.constant 0 : index
    %c0_3 = arith.constant 0 : index
    %c0_4 = arith.constant 0 : index
    %3 = vector.load %arg2[%c0_2, %c0_3, %c0_4] : memref<9x8x8xbf16, #tpu.memory_space<vmem>>, vector<1x8x8xbf16>
    %4 = vector.shape_cast %3 : vector<1x8x8xbf16> to vector<8x8xbf16>
    %cst_5 = arith.constant dense<0.000000e+00> : vector<100x8xf32>
    %5 = tpu.matmul %2, %4, %cst_5 {dimension_numbers = #tpu.dot_dimension_numbers<[1], [0], [0], [1], [0, 0, 1, 1], [], []>} : vector<100x8xbf16>, vector<8x8xbf16>, vector<100x8xf32> -> vector<100x8xf32>
    %6 = arith.addf %0, %5 : vector<100x8xf32>
    %c0_6 = arith.constant 0 : index
    %c1 = arith.constant 1 : index
    %c0_7 = arith.constant 0 : index
    %7 = vector.load %arg1[%c0_6, %c1, %c0_7] : memref<1x122x8xbf16, #tpu.memory_space<vmem>>, vector<1x100x8xbf16>
    %8 = vector.shape_cast %7 : vector<1x100x8xbf16> to vector<100x8xbf16>
    %c1_8 = arith.constant 1 : index
    %c0_9 = arith.constant 0 : index
    %c0_10 = arith.constant 0 : index
    %9 = vector.load %arg2[%c1_8, %c0_9, %c0_10] : memref<9x8x8xbf16, #tpu.memory_space<vmem>>, vector<1x8x8xbf16>
    %10 = vector.shape_cast %9 : vector<1x8x8xbf16> to vector<8x8xbf16>
    %cst_11 = arith.constant dense<0.000000e+00> : vector<100x8xf32>
    %11 = tpu.matmul %8, %10, %cst_11 {dimension_numbers = #tpu.dot_dimension_numbers<[1], [0], [0], [1], [0, 0, 1, 1], [], []>} : vector<100x8xbf16>, vector<8x8xbf16>, vector<100x8xf32> -> vector<100x8xf32>
    %12 = arith.addf %6, %11 : vector<100x8xf32>
    %c0_12 = arith.constant 0 : index
    %c2 = arith.constant 2 : index
    %c0_13 = arith.constant 0 : index
    %13 = vector.load %arg1[%c0_12, %c2, %c0_13] : memref<1x122x8xbf16, #tpu.memory_space<vmem>>, vector<1x100x8xbf16>
    %14 = vector.shape_cast %13 : vector<1x100x8xbf16> to vector<100x8xbf16>
    %c2_14 = arith.constant 2 : index
    %c0_15 = arith.constant 0 : index
    %c0_16 = arith.constant 0 : index
    %15 = vector.load %arg2[%c2_14, %c0_15, %c0_16] : memref<9x8x8xbf16, #tpu.memory_space<vmem>>, vector<1x8x8xbf16>
    %16 = vector.shape_cast %15 : vector<1x8x8xbf16> to vector<8x8xbf16>
    %cst_17 = arith.constant dense<0.000000e+00> : vector<100x8xf32>
    %17 = tpu.matmul %14, %16, %cst_17 {dimension_numbers = #tpu.dot_dimension_numbers<[1], [0], [0], [1], [0, 0, 1, 1], [], []>} : vector<100x8xbf16>, vector<8x8xbf16>, vector<100x8xf32> -> vector<100x8xf32>
    %18 = arith.addf %12, %17 : vector<100x8xf32>
    %c0_18 = arith.constant 0 : index
    %c10 = arith.constant 10 : index
    %c0_19 = arith.constant 0 : index
    %19 = vector.load %arg1[%c0_18, %c10, %c0_19] : memref<1x122x8xbf16, #tpu.memory_space<vmem>>, vector<1x100x8xbf16>
    %20 = vector.shape_cast %19 : vector<1x100x8xbf16> to vector<100x8xbf16>
    %c3 = arith.constant 3 : index
    %c0_20 = arith.constant 0 : index
    %c0_21 = arith.constant 0 : index
    %21 = vector.load %arg2[%c3, %c0_20, %c0_21] : memref<9x8x8xbf16, #tpu.memory_space<vmem>>, vector<1x8x8xbf16>
    %22 = vector.shape_cast %21 : vector<1x8x8xbf16> to vector<8x8xbf16>
    %cst_22 = arith.constant dense<0.000000e+00> : vector<100x8xf32>
    %23 = tpu.matmul %20, %22, %cst_22 {dimension_numbers = #tpu.dot_dimension_numbers<[1], [0], [0], [1], [0, 0, 1, 1], [], []>} : vector<100x8xbf16>, vector<8x8xbf16>, vector<100x8xf32> -> vector<100x8xf32>
    %24 = arith.addf %18, %23 : vector<100x8xf32>
    %c0_23 = arith.constant 0 : index
    %c11 = arith.constant 11 : index
    %c0_24 = arith.constant 0 : index
    %25 = vector.load %arg1[%c0_23, %c11, %c0_24] : memref<1x122x8xbf16, #tpu.memory_space<vmem>>, vector<1x100x8xbf16>
    %26 = vector.shape_cast %25 : vector<1x100x8xbf16> to vector<100x8xbf16>
    %c4 = arith.constant 4 : index
    %c0_25 = arith.constant 0 : index
    %c0_26 = arith.constant 0 : index
    %27 = vector.load %arg2[%c4, %c0_25, %c0_26] : memref<9x8x8xbf16, #tpu.memory_space<vmem>>, vector<1x8x8xbf16>
    %28 = vector.shape_cast %27 : vector<1x8x8xbf16> to vector<8x8xbf16>
    %cst_27 = arith.constant dense<0.000000e+00> : vector<100x8xf32>
    %29 = tpu.matmul %26, %28, %cst_27 {dimension_numbers = #tpu.dot_dimension_numbers<[1], [0], [0], [1], [0, 0, 1, 1], [], []>} : vector<100x8xbf16>, vector<8x8xbf16>, vector<100x8xf32> -> vector<100x8xf32>
    %30 = arith.addf %24, %29 : vector<100x8xf32>
    %c0_28 = arith.constant 0 : index
    %c12 = arith.constant 12 : index
    %c0_29 = arith.constant 0 : index
    %31 = vector.load %arg1[%c0_28, %c12, %c0_29] : memref<1x122x8xbf16, #tpu.memory_space<vmem>>, vector<1x100x8xbf16>
    %32 = vector.shape_cast %31 : vector<1x100x8xbf16> to vector<100x8xbf16>
    %c5 = arith.constant 5 : index
    %c0_30 = arith.constant 0 : index
    %c0_31 = arith.constant 0 : index
    %33 = vector.load %arg2[%c5, %c0_30, %c0_31] : memref<9x8x8xbf16, #tpu.memory_space<vmem>>, vector<1x8x8xbf16>
    %34 = vector.shape_cast %33 : vector<1x8x8xbf16> to vector<8x8xbf16>
    %cst_32 = arith.constant dense<0.000000e+00> : vector<100x8xf32>
    %35 = tpu.matmul %32, %34, %cst_32 {dimension_numbers = #tpu.dot_dimension_numbers<[1], [0], [0], [1], [0, 0, 1, 1], [], []>} : vector<100x8xbf16>, vector<8x8xbf16>, vector<100x8xf32> -> vector<100x8xf32>
    %36 = arith.addf %30, %35 : vector<100x8xf32>
    %c0_33 = arith.constant 0 : index
    %c20 = arith.constant 20 : index
    %c0_34 = arith.constant 0 : index
    %37 = vector.load %arg1[%c0_33, %c20, %c0_34] : memref<1x122x8xbf16, #tpu.memory_space<vmem>>, vector<1x100x8xbf16>
    %38 = vector.shape_cast %37 : vector<1x100x8xbf16> to vector<100x8xbf16>
    %c6 = arith.constant 6 : index
    %c0_35 = arith.constant 0 : index
    %c0_36 = arith.constant 0 : index
    %39 = vector.load %arg2[%c6, %c0_35, %c0_36] : memref<9x8x8xbf16, #tpu.memory_space<vmem>>, vector<1x8x8xbf16>
    %40 = vector.shape_cast %39 : vector<1x8x8xbf16> to vector<8x8xbf16>
    %cst_37 = arith.constant dense<0.000000e+00> : vector<100x8xf32>
    %41 = tpu.matmul %38, %40, %cst_37 {dimension_numbers = #tpu.dot_dimension_numbers<[1], [0], [0], [1], [0, 0, 1, 1], [], []>} : vector<100x8xbf16>, vector<8x8xbf16>, vector<100x8xf32> -> vector<100x8xf32>
    %42 = arith.addf %36, %41 : vector<100x8xf32>
    %c0_38 = arith.constant 0 : index
    %c21 = arith.constant 21 : index
    %c0_39 = arith.constant 0 : index
    %43 = vector.load %arg1[%c0_38, %c21, %c0_39] : memref<1x122x8xbf16, #tpu.memory_space<vmem>>, vector<1x100x8xbf16>
    %44 = vector.shape_cast %43 : vector<1x100x8xbf16> to vector<100x8xbf16>
    %c7 = arith.constant 7 : index
    %c0_40 = arith.constant 0 : index
    %c0_41 = arith.constant 0 : index
    %45 = vector.load %arg2[%c7, %c0_40, %c0_41] : memref<9x8x8xbf16, #tpu.memory_space<vmem>>, vector<1x8x8xbf16>
    %46 = vector.shape_cast %45 : vector<1x8x8xbf16> to vector<8x8xbf16>
    %cst_42 = arith.constant dense<0.000000e+00> : vector<100x8xf32>
    %47 = tpu.matmul %44, %46, %cst_42 {dimension_numbers = #tpu.dot_dimension_numbers<[1], [0], [0], [1], [0, 0, 1, 1], [], []>} : vector<100x8xbf16>, vector<8x8xbf16>, vector<100x8xf32> -> vector<100x8xf32>
    %48 = arith.addf %42, %47 : vector<100x8xf32>
    %c0_43 = arith.constant 0 : index
    %c22 = arith.constant 22 : index
    %c0_44 = arith.constant 0 : index
    %49 = vector.load %arg1[%c0_43, %c22, %c0_44] : memref<1x122x8xbf16, #tpu.memory_space<vmem>>, vector<1x100x8xbf16>
    %50 = vector.shape_cast %49 : vector<1x100x8xbf16> to vector<100x8xbf16>
    %c8 = arith.constant 8 : index
    %c0_45 = arith.constant 0 : index
    %c0_46 = arith.constant 0 : index
    %51 = vector.load %arg2[%c8, %c0_45, %c0_46] : memref<9x8x8xbf16, #tpu.memory_space<vmem>>, vector<1x8x8xbf16>
    %52 = vector.shape_cast %51 : vector<1x8x8xbf16> to vector<8x8xbf16>
    %cst_47 = arith.constant dense<0.000000e+00> : vector<100x8xf32>
    %53 = tpu.matmul %50, %52, %cst_47 {dimension_numbers = #tpu.dot_dimension_numbers<[1], [0], [0], [1], [0, 0, 1, 1], [], []>} : vector<100x8xbf16>, vector<8x8xbf16>, vector<100x8xf32> -> vector<100x8xf32>
    %54 = arith.addf %48, %53 : vector<100x8xf32>
    %c0_48 = arith.constant 0 : index
    %c0_49 = arith.constant 0 : index
    %55 = vector.load %arg3[%c0_48, %c0_49] : memref<1x8xf32, #tpu.memory_space<vmem>>, vector<1x8xf32>
    %56 = vector.broadcast %55 : vector<1x8xf32> to vector<100x8xf32>
    %57 = arith.addf %54, %56 : vector<100x8xf32>
    %c0_50 = arith.constant 0 : index
    %c0_51 = arith.constant 0 : index
    %c0_52 = arith.constant 0 : index
    %58 = vector.load %arg4[%c0_50, %c0_51, %c0_52] : memref<1x100x8xf32, #tpu.memory_space<vmem>>, vector<1x100x8xf32>
    %59 = vector.shape_cast %58 : vector<1x100x8xf32> to vector<100x8xf32>
    %60 = vector.shape_cast %57 : vector<100x8xf32> to vector<1x100x8xf32>
    tpu.vector_store %arg4[%c0_50, %c0_51, %c0_52], %60 {strides = array<i32>} : memref<1x100x8xf32, #tpu.memory_space<vmem>>, vector<1x100x8xf32>,
    return
  }
  func.func @transform_0(%arg0: i32) -> (i32, i32, i32) {
    %c0_i32 = arith.constant 0 : i32
    %c0_i32_0 = arith.constant 0 : i32
    %c0_i32_1 = arith.constant 0 : i32
    return %arg0, %c0_i32, %c0_i32_0 : i32, i32, i32
  }
  func.func @transform_1(%arg0: i32) -> (i32, i32, i32) {
    %c0_i32 = arith.constant 0 : i32
    %c0_i32_0 = arith.constant 0 : i32
    %c0_i32_1 = arith.constant 0 : i32
    %c0_i32_2 = arith.constant 0 : i32
    return %c0_i32, %c0_i32_0, %c0_i32_1 : i32, i32, i32
  }
  func.func @transform_2(%arg0: i32) -> (i32, i32) {
    %c0_i32 = arith.constant 0 : i32
    %c0_i32_0 = arith.constant 0 : i32
    %c0_i32_1 = arith.constant 0 : i32
    return %c0_i32, %c0_i32_0 : i32, i32
  }
  func.func @transform_3(%arg0: i32) -> (i32, i32, i32) {
    %c0_i32 = arith.constant 0 : i32
    %c0_i32_0 = arith.constant 0 : i32
    %c0_i32_1 = arith.constant 0 : i32
    return %arg0, %c0_i32, %c0_i32_0 : i32, i32, i32
  }
}

module attributes {stable_mosaic.version = 11 : i64} {
  func.func @_conv3x3_flat_kernel(%arg0: i32, %arg1: memref<1x197x8xbf16, #tpu.memory_space<vmem>>, %arg2: memref<9x8x8xbf16, #tpu.memory_space<vmem>>, %arg3: memref<1x8xf32, #tpu.memory_space<vmem>>, %arg4: memref<1x169x8xf32, #tpu.memory_space<vmem>>) attributes {dimension_semantics = [#tpu.dimension_semantics<parallel>], iteration_bounds = array<i64: 2>, scalar_prefetch = 0 : i64, scratch_operands = 0 : i64, tpu.core_type = #tpu.core_type<tc>, window_params = [{transform_indices = @transform_0, window_bounds = array<i64: 1, 197, 8>}, {pipeline_mode = #tpu.pipeline_mode<synchronous>, transform_indices = @transform_1, window_bounds = array<i64: 9, 8, 8>}, {pipeline_mode = #tpu.pipeline_mode<synchronous>, transform_indices = @transform_2, window_bounds = array<i64: 1, 8>}, {transform_indices = @transform_3, window_bounds = array<i64: 1, 169, 8>}]} {
    %cst = arith.constant 0.000000e+00 : f32
    %0 = vector.broadcast %cst : f32 to vector<169x8xf32>
    %c0 = arith.constant 0 : index
    %c0_0 = arith.constant 0 : index
    %c0_1 = arith.constant 0 : index
    %1 = vector.load %arg1[%c0, %c0_0, %c0_1] : memref<1x197x8xbf16, #tpu.memory_space<vmem>>, vector<1x169x8xbf16>
    %2 = vector.shape_cast %1 : vector<1x169x8xbf16> to vector<169x8xbf16>
    %c0_2 = arith.constant 0 : index
    %c0_3 = arith.constant 0 : index
    %c0_4 = arith.constant 0 : index
    %3 = vector.load %arg2[%c0_2, %c0_3, %c0_4] : memref<9x8x8xbf16, #tpu.memory_space<vmem>>, vector<1x8x8xbf16>
    %4 = vector.shape_cast %3 : vector<1x8x8xbf16> to vector<8x8xbf16>
    %cst_5 = arith.constant dense<0.000000e+00> : vector<169x8xf32>
    %5 = tpu.matmul %2, %4, %cst_5 {dimension_numbers = #tpu.dot_dimension_numbers<[1], [0], [0], [1], [0, 0, 1, 1], [], []>} : vector<169x8xbf16>, vector<8x8xbf16>, vector<169x8xf32> -> vector<169x8xf32>
    %6 = arith.addf %0, %5 : vector<169x8xf32>
    %c0_6 = arith.constant 0 : index
    %c1 = arith.constant 1 : index
    %c0_7 = arith.constant 0 : index
    %7 = vector.load %arg1[%c0_6, %c1, %c0_7] : memref<1x197x8xbf16, #tpu.memory_space<vmem>>, vector<1x169x8xbf16>
    %8 = vector.shape_cast %7 : vector<1x169x8xbf16> to vector<169x8xbf16>
    %c1_8 = arith.constant 1 : index
    %c0_9 = arith.constant 0 : index
    %c0_10 = arith.constant 0 : index
    %9 = vector.load %arg2[%c1_8, %c0_9, %c0_10] : memref<9x8x8xbf16, #tpu.memory_space<vmem>>, vector<1x8x8xbf16>
    %10 = vector.shape_cast %9 : vector<1x8x8xbf16> to vector<8x8xbf16>
    %cst_11 = arith.constant dense<0.000000e+00> : vector<169x8xf32>
    %11 = tpu.matmul %8, %10, %cst_11 {dimension_numbers = #tpu.dot_dimension_numbers<[1], [0], [0], [1], [0, 0, 1, 1], [], []>} : vector<169x8xbf16>, vector<8x8xbf16>, vector<169x8xf32> -> vector<169x8xf32>
    %12 = arith.addf %6, %11 : vector<169x8xf32>
    %c0_12 = arith.constant 0 : index
    %c2 = arith.constant 2 : index
    %c0_13 = arith.constant 0 : index
    %13 = vector.load %arg1[%c0_12, %c2, %c0_13] : memref<1x197x8xbf16, #tpu.memory_space<vmem>>, vector<1x169x8xbf16>
    %14 = vector.shape_cast %13 : vector<1x169x8xbf16> to vector<169x8xbf16>
    %c2_14 = arith.constant 2 : index
    %c0_15 = arith.constant 0 : index
    %c0_16 = arith.constant 0 : index
    %15 = vector.load %arg2[%c2_14, %c0_15, %c0_16] : memref<9x8x8xbf16, #tpu.memory_space<vmem>>, vector<1x8x8xbf16>
    %16 = vector.shape_cast %15 : vector<1x8x8xbf16> to vector<8x8xbf16>
    %cst_17 = arith.constant dense<0.000000e+00> : vector<169x8xf32>
    %17 = tpu.matmul %14, %16, %cst_17 {dimension_numbers = #tpu.dot_dimension_numbers<[1], [0], [0], [1], [0, 0, 1, 1], [], []>} : vector<169x8xbf16>, vector<8x8xbf16>, vector<169x8xf32> -> vector<169x8xf32>
    %18 = arith.addf %12, %17 : vector<169x8xf32>
    %c0_18 = arith.constant 0 : index
    %c13 = arith.constant 13 : index
    %c0_19 = arith.constant 0 : index
    %19 = vector.load %arg1[%c0_18, %c13, %c0_19] : memref<1x197x8xbf16, #tpu.memory_space<vmem>>, vector<1x169x8xbf16>
    %20 = vector.shape_cast %19 : vector<1x169x8xbf16> to vector<169x8xbf16>
    %c3 = arith.constant 3 : index
    %c0_20 = arith.constant 0 : index
    %c0_21 = arith.constant 0 : index
    %21 = vector.load %arg2[%c3, %c0_20, %c0_21] : memref<9x8x8xbf16, #tpu.memory_space<vmem>>, vector<1x8x8xbf16>
    %22 = vector.shape_cast %21 : vector<1x8x8xbf16> to vector<8x8xbf16>
    %cst_22 = arith.constant dense<0.000000e+00> : vector<169x8xf32>
    %23 = tpu.matmul %20, %22, %cst_22 {dimension_numbers = #tpu.dot_dimension_numbers<[1], [0], [0], [1], [0, 0, 1, 1], [], []>} : vector<169x8xbf16>, vector<8x8xbf16>, vector<169x8xf32> -> vector<169x8xf32>
    %24 = arith.addf %18, %23 : vector<169x8xf32>
    %c0_23 = arith.constant 0 : index
    %c14 = arith.constant 14 : index
    %c0_24 = arith.constant 0 : index
    %25 = vector.load %arg1[%c0_23, %c14, %c0_24] : memref<1x197x8xbf16, #tpu.memory_space<vmem>>, vector<1x169x8xbf16>
    %26 = vector.shape_cast %25 : vector<1x169x8xbf16> to vector<169x8xbf16>
    %c4 = arith.constant 4 : index
    %c0_25 = arith.constant 0 : index
    %c0_26 = arith.constant 0 : index
    %27 = vector.load %arg2[%c4, %c0_25, %c0_26] : memref<9x8x8xbf16, #tpu.memory_space<vmem>>, vector<1x8x8xbf16>
    %28 = vector.shape_cast %27 : vector<1x8x8xbf16> to vector<8x8xbf16>
    %cst_27 = arith.constant dense<0.000000e+00> : vector<169x8xf32>
    %29 = tpu.matmul %26, %28, %cst_27 {dimension_numbers = #tpu.dot_dimension_numbers<[1], [0], [0], [1], [0, 0, 1, 1], [], []>} : vector<169x8xbf16>, vector<8x8xbf16>, vector<169x8xf32> -> vector<169x8xf32>
    %30 = arith.addf %24, %29 : vector<169x8xf32>
    %c0_28 = arith.constant 0 : index
    %c15 = arith.constant 15 : index
    %c0_29 = arith.constant 0 : index
    %31 = vector.load %arg1[%c0_28, %c15, %c0_29] : memref<1x197x8xbf16, #tpu.memory_space<vmem>>, vector<1x169x8xbf16>
    %32 = vector.shape_cast %31 : vector<1x169x8xbf16> to vector<169x8xbf16>
    %c5 = arith.constant 5 : index
    %c0_30 = arith.constant 0 : index
    %c0_31 = arith.constant 0 : index
    %33 = vector.load %arg2[%c5, %c0_30, %c0_31] : memref<9x8x8xbf16, #tpu.memory_space<vmem>>, vector<1x8x8xbf16>
    %34 = vector.shape_cast %33 : vector<1x8x8xbf16> to vector<8x8xbf16>
    %cst_32 = arith.constant dense<0.000000e+00> : vector<169x8xf32>
    %35 = tpu.matmul %32, %34, %cst_32 {dimension_numbers = #tpu.dot_dimension_numbers<[1], [0], [0], [1], [0, 0, 1, 1], [], []>} : vector<169x8xbf16>, vector<8x8xbf16>, vector<169x8xf32> -> vector<169x8xf32>
    %36 = arith.addf %30, %35 : vector<169x8xf32>
    %c0_33 = arith.constant 0 : index
    %c26 = arith.constant 26 : index
    %c0_34 = arith.constant 0 : index
    %37 = vector.load %arg1[%c0_33, %c26, %c0_34] : memref<1x197x8xbf16, #tpu.memory_space<vmem>>, vector<1x169x8xbf16>
    %38 = vector.shape_cast %37 : vector<1x169x8xbf16> to vector<169x8xbf16>
    %c6 = arith.constant 6 : index
    %c0_35 = arith.constant 0 : index
    %c0_36 = arith.constant 0 : index
    %39 = vector.load %arg2[%c6, %c0_35, %c0_36] : memref<9x8x8xbf16, #tpu.memory_space<vmem>>, vector<1x8x8xbf16>
    %40 = vector.shape_cast %39 : vector<1x8x8xbf16> to vector<8x8xbf16>
    %cst_37 = arith.constant dense<0.000000e+00> : vector<169x8xf32>
    %41 = tpu.matmul %38, %40, %cst_37 {dimension_numbers = #tpu.dot_dimension_numbers<[1], [0], [0], [1], [0, 0, 1, 1], [], []>} : vector<169x8xbf16>, vector<8x8xbf16>, vector<169x8xf32> -> vector<169x8xf32>
    %42 = arith.addf %36, %41 : vector<169x8xf32>
    %c0_38 = arith.constant 0 : index
    %c27 = arith.constant 27 : index
    %c0_39 = arith.constant 0 : index
    %43 = vector.load %arg1[%c0_38, %c27, %c0_39] : memref<1x197x8xbf16, #tpu.memory_space<vmem>>, vector<1x169x8xbf16>
    %44 = vector.shape_cast %43 : vector<1x169x8xbf16> to vector<169x8xbf16>
    %c7 = arith.constant 7 : index
    %c0_40 = arith.constant 0 : index
    %c0_41 = arith.constant 0 : index
    %45 = vector.load %arg2[%c7, %c0_40, %c0_41] : memref<9x8x8xbf16, #tpu.memory_space<vmem>>, vector<1x8x8xbf16>
    %46 = vector.shape_cast %45 : vector<1x8x8xbf16> to vector<8x8xbf16>
    %cst_42 = arith.constant dense<0.000000e+00> : vector<169x8xf32>
    %47 = tpu.matmul %44, %46, %cst_42 {dimension_numbers = #tpu.dot_dimension_numbers<[1], [0], [0], [1], [0, 0, 1, 1], [], []>} : vector<169x8xbf16>, vector<8x8xbf16>, vector<169x8xf32> -> vector<169x8xf32>
    %48 = arith.addf %42, %47 : vector<169x8xf32>
    %c0_43 = arith.constant 0 : index
    %c28 = arith.constant 28 : index
    %c0_44 = arith.constant 0 : index
    %49 = vector.load %arg1[%c0_43, %c28, %c0_44] : memref<1x197x8xbf16, #tpu.memory_space<vmem>>, vector<1x169x8xbf16>
    %50 = vector.shape_cast %49 : vector<1x169x8xbf16> to vector<169x8xbf16>
    %c8 = arith.constant 8 : index
    %c0_45 = arith.constant 0 : index
    %c0_46 = arith.constant 0 : index
    %51 = vector.load %arg2[%c8, %c0_45, %c0_46] : memref<9x8x8xbf16, #tpu.memory_space<vmem>>, vector<1x8x8xbf16>
    %52 = vector.shape_cast %51 : vector<1x8x8xbf16> to vector<8x8xbf16>
    %cst_47 = arith.constant dense<0.000000e+00> : vector<169x8xf32>
    %53 = tpu.matmul %50, %52, %cst_47 {dimension_numbers = #tpu.dot_dimension_numbers<[1], [0], [0], [1], [0, 0, 1, 1], [], []>} : vector<169x8xbf16>, vector<8x8xbf16>, vector<169x8xf32> -> vector<169x8xf32>
    %54 = arith.addf %48, %53 : vector<169x8xf32>
    %c0_48 = arith.constant 0 : index
    %c0_49 = arith.constant 0 : index
    %55 = vector.load %arg3[%c0_48, %c0_49] : memref<1x8xf32, #tpu.memory_space<vmem>>, vector<1x8xf32>
    %56 = vector.broadcast %55 : vector<1x8xf32> to vector<169x8xf32>
    %57 = arith.addf %54, %56 : vector<169x8xf32>
    %c0_50 = arith.constant 0 : index
    %c0_51 = arith.constant 0 : index
    %c0_52 = arith.constant 0 : index
    %58 = vector.load %arg4[%c0_50, %c0_51, %c0_52] : memref<1x169x8xf32, #tpu.memory_space<vmem>>, vector<1x169x8xf32>
    %59 = vector.shape_cast %58 : vector<1x169x8xf32> to vector<169x8xf32>
    %60 = vector.shape_cast %57 : vector<169x8xf32> to vector<1x169x8xf32>
    tpu.vector_store %arg4[%c0_50, %c0_51, %c0_52], %60 {strides = array<i32>} : memref<1x169x8xf32, #tpu.memory_space<vmem>>, vector<1x169x8xf32>,
    return
  }
  func.func @transform_0(%arg0: i32) -> (i32, i32, i32) {
    %c0_i32 = arith.constant 0 : i32
    %c0_i32_0 = arith.constant 0 : i32
    %c0_i32_1 = arith.constant 0 : i32
    return %arg0, %c0_i32, %c0_i32_0 : i32, i32, i32
  }
  func.func @transform_1(%arg0: i32) -> (i32, i32, i32) {
    %c0_i32 = arith.constant 0 : i32
    %c0_i32_0 = arith.constant 0 : i32
    %c0_i32_1 = arith.constant 0 : i32
    %c0_i32_2 = arith.constant 0 : i32
    return %c0_i32, %c0_i32_0, %c0_i32_1 : i32, i32, i32
  }
  func.func @transform_2(%arg0: i32) -> (i32, i32) {
    %c0_i32 = arith.constant 0 : i32
    %c0_i32_0 = arith.constant 0 : i32
    %c0_i32_1 = arith.constant 0 : i32
    return %c0_i32, %c0_i32_0 : i32, i32
  }
  func.func @transform_3(%arg0: i32) -> (i32, i32, i32) {
    %c0_i32 = arith.constant 0 : i32
    %c0_i32_0 = arith.constant 0 : i32
    %c0_i32_1 = arith.constant 0 : i32
    return %arg0, %c0_i32, %c0_i32_0 : i32, i32, i32
  }
}

module attributes {stable_mosaic.version = 11 : i64} {
  func.func @_conv3x3_flat_kernel(%arg0: i32, %arg1: memref<1x362x16xbf16, #tpu.memory_space<vmem>>, %arg2: memref<9x16x16xbf16, #tpu.memory_space<vmem>>, %arg3: memref<1x16xf32, #tpu.memory_space<vmem>>, %arg4: memref<1x324x16xf32, #tpu.memory_space<vmem>>) attributes {dimension_semantics = [#tpu.dimension_semantics<parallel>], iteration_bounds = array<i64: 2>, scalar_prefetch = 0 : i64, scratch_operands = 0 : i64, tpu.core_type = #tpu.core_type<tc>, window_params = [{transform_indices = @transform_0, window_bounds = array<i64: 1, 362, 16>}, {pipeline_mode = #tpu.pipeline_mode<synchronous>, transform_indices = @transform_1, window_bounds = array<i64: 9, 16, 16>}, {pipeline_mode = #tpu.pipeline_mode<synchronous>, transform_indices = @transform_2, window_bounds = array<i64: 1, 16>}, {transform_indices = @transform_3, window_bounds = array<i64: 1, 324, 16>}]} {
    %cst = arith.constant 0.000000e+00 : f32
    %0 = vector.broadcast %cst : f32 to vector<324x16xf32>
    %c0 = arith.constant 0 : index
    %c0_0 = arith.constant 0 : index
    %c0_1 = arith.constant 0 : index
    %1 = vector.load %arg1[%c0, %c0_0, %c0_1] : memref<1x362x16xbf16, #tpu.memory_space<vmem>>, vector<1x324x16xbf16>
    %2 = vector.shape_cast %1 : vector<1x324x16xbf16> to vector<324x16xbf16>
    %c0_2 = arith.constant 0 : index
    %c0_3 = arith.constant 0 : index
    %c0_4 = arith.constant 0 : index
    %3 = vector.load %arg2[%c0_2, %c0_3, %c0_4] : memref<9x16x16xbf16, #tpu.memory_space<vmem>>, vector<1x16x16xbf16>
    %4 = vector.shape_cast %3 : vector<1x16x16xbf16> to vector<16x16xbf16>
    %cst_5 = arith.constant dense<0.000000e+00> : vector<324x16xf32>
    %5 = tpu.matmul %2, %4, %cst_5 {dimension_numbers = #tpu.dot_dimension_numbers<[1], [0], [0], [1], [0, 0, 1, 1], [], []>} : vector<324x16xbf16>, vector<16x16xbf16>, vector<324x16xf32> -> vector<324x16xf32>
    %6 = arith.addf %0, %5 : vector<324x16xf32>
    %c0_6 = arith.constant 0 : index
    %c1 = arith.constant 1 : index
    %c0_7 = arith.constant 0 : index
    %7 = vector.load %arg1[%c0_6, %c1, %c0_7] : memref<1x362x16xbf16, #tpu.memory_space<vmem>>, vector<1x324x16xbf16>
    %8 = vector.shape_cast %7 : vector<1x324x16xbf16> to vector<324x16xbf16>
    %c1_8 = arith.constant 1 : index
    %c0_9 = arith.constant 0 : index
    %c0_10 = arith.constant 0 : index
    %9 = vector.load %arg2[%c1_8, %c0_9, %c0_10] : memref<9x16x16xbf16, #tpu.memory_space<vmem>>, vector<1x16x16xbf16>
    %10 = vector.shape_cast %9 : vector<1x16x16xbf16> to vector<16x16xbf16>
    %cst_11 = arith.constant dense<0.000000e+00> : vector<324x16xf32>
    %11 = tpu.matmul %8, %10, %cst_11 {dimension_numbers = #tpu.dot_dimension_numbers<[1], [0], [0], [1], [0, 0, 1, 1], [], []>} : vector<324x16xbf16>, vector<16x16xbf16>, vector<324x16xf32> -> vector<324x16xf32>
    %12 = arith.addf %6, %11 : vector<324x16xf32>
    %c0_12 = arith.constant 0 : index
    %c2 = arith.constant 2 : index
    %c0_13 = arith.constant 0 : index
    %13 = vector.load %arg1[%c0_12, %c2, %c0_13] : memref<1x362x16xbf16, #tpu.memory_space<vmem>>, vector<1x324x16xbf16>
    %14 = vector.shape_cast %13 : vector<1x324x16xbf16> to vector<324x16xbf16>
    %c2_14 = arith.constant 2 : index
    %c0_15 = arith.constant 0 : index
    %c0_16 = arith.constant 0 : index
    %15 = vector.load %arg2[%c2_14, %c0_15, %c0_16] : memref<9x16x16xbf16, #tpu.memory_space<vmem>>, vector<1x16x16xbf16>
    %16 = vector.shape_cast %15 : vector<1x16x16xbf16> to vector<16x16xbf16>
    %cst_17 = arith.constant dense<0.000000e+00> : vector<324x16xf32>
    %17 = tpu.matmul %14, %16, %cst_17 {dimension_numbers = #tpu.dot_dimension_numbers<[1], [0], [0], [1], [0, 0, 1, 1], [], []>} : vector<324x16xbf16>, vector<16x16xbf16>, vector<324x16xf32> -> vector<324x16xf32>
    %18 = arith.addf %12, %17 : vector<324x16xf32>
    %c0_18 = arith.constant 0 : index
    %c18 = arith.constant 18 : index
    %c0_19 = arith.constant 0 : index
    %19 = vector.load %arg1[%c0_18, %c18, %c0_19] : memref<1x362x16xbf16, #tpu.memory_space<vmem>>, vector<1x324x16xbf16>
    %20 = vector.shape_cast %19 : vector<1x324x16xbf16> to vector<324x16xbf16>
    %c3 = arith.constant 3 : index
    %c0_20 = arith.constant 0 : index
    %c0_21 = arith.constant 0 : index
    %21 = vector.load %arg2[%c3, %c0_20, %c0_21] : memref<9x16x16xbf16, #tpu.memory_space<vmem>>, vector<1x16x16xbf16>
    %22 = vector.shape_cast %21 : vector<1x16x16xbf16> to vector<16x16xbf16>
    %cst_22 = arith.constant dense<0.000000e+00> : vector<324x16xf32>
    %23 = tpu.matmul %20, %22, %cst_22 {dimension_numbers = #tpu.dot_dimension_numbers<[1], [0], [0], [1], [0, 0, 1, 1], [], []>} : vector<324x16xbf16>, vector<16x16xbf16>, vector<324x16xf32> -> vector<324x16xf32>
    %24 = arith.addf %18, %23 : vector<324x16xf32>
    %c0_23 = arith.constant 0 : index
    %c19 = arith.constant 19 : index
    %c0_24 = arith.constant 0 : index
    %25 = vector.load %arg1[%c0_23, %c19, %c0_24] : memref<1x362x16xbf16, #tpu.memory_space<vmem>>, vector<1x324x16xbf16>
    %26 = vector.shape_cast %25 : vector<1x324x16xbf16> to vector<324x16xbf16>
    %c4 = arith.constant 4 : index
    %c0_25 = arith.constant 0 : index
    %c0_26 = arith.constant 0 : index
    %27 = vector.load %arg2[%c4, %c0_25, %c0_26] : memref<9x16x16xbf16, #tpu.memory_space<vmem>>, vector<1x16x16xbf16>
    %28 = vector.shape_cast %27 : vector<1x16x16xbf16> to vector<16x16xbf16>
    %cst_27 = arith.constant dense<0.000000e+00> : vector<324x16xf32>
    %29 = tpu.matmul %26, %28, %cst_27 {dimension_numbers = #tpu.dot_dimension_numbers<[1], [0], [0], [1], [0, 0, 1, 1], [], []>} : vector<324x16xbf16>, vector<16x16xbf16>, vector<324x16xf32> -> vector<324x16xf32>
    %30 = arith.addf %24, %29 : vector<324x16xf32>
    %c0_28 = arith.constant 0 : index
    %c20 = arith.constant 20 : index
    %c0_29 = arith.constant 0 : index
    %31 = vector.load %arg1[%c0_28, %c20, %c0_29] : memref<1x362x16xbf16, #tpu.memory_space<vmem>>, vector<1x324x16xbf16>
    %32 = vector.shape_cast %31 : vector<1x324x16xbf16> to vector<324x16xbf16>
    %c5 = arith.constant 5 : index
    %c0_30 = arith.constant 0 : index
    %c0_31 = arith.constant 0 : index
    %33 = vector.load %arg2[%c5, %c0_30, %c0_31] : memref<9x16x16xbf16, #tpu.memory_space<vmem>>, vector<1x16x16xbf16>
    %34 = vector.shape_cast %33 : vector<1x16x16xbf16> to vector<16x16xbf16>
    %cst_32 = arith.constant dense<0.000000e+00> : vector<324x16xf32>
    %35 = tpu.matmul %32, %34, %cst_32 {dimension_numbers = #tpu.dot_dimension_numbers<[1], [0], [0], [1], [0, 0, 1, 1], [], []>} : vector<324x16xbf16>, vector<16x16xbf16>, vector<324x16xf32> -> vector<324x16xf32>
    %36 = arith.addf %30, %35 : vector<324x16xf32>
    %c0_33 = arith.constant 0 : index
    %c36 = arith.constant 36 : index
    %c0_34 = arith.constant 0 : index
    %37 = vector.load %arg1[%c0_33, %c36, %c0_34] : memref<1x362x16xbf16, #tpu.memory_space<vmem>>, vector<1x324x16xbf16>
    %38 = vector.shape_cast %37 : vector<1x324x16xbf16> to vector<324x16xbf16>
    %c6 = arith.constant 6 : index
    %c0_35 = arith.constant 0 : index
    %c0_36 = arith.constant 0 : index
    %39 = vector.load %arg2[%c6, %c0_35, %c0_36] : memref<9x16x16xbf16, #tpu.memory_space<vmem>>, vector<1x16x16xbf16>
    %40 = vector.shape_cast %39 : vector<1x16x16xbf16> to vector<16x16xbf16>
    %cst_37 = arith.constant dense<0.000000e+00> : vector<324x16xf32>
    %41 = tpu.matmul %38, %40, %cst_37 {dimension_numbers = #tpu.dot_dimension_numbers<[1], [0], [0], [1], [0, 0, 1, 1], [], []>} : vector<324x16xbf16>, vector<16x16xbf16>, vector<324x16xf32> -> vector<324x16xf32>
    %42 = arith.addf %36, %41 : vector<324x16xf32>
    %c0_38 = arith.constant 0 : index
    %c37 = arith.constant 37 : index
    %c0_39 = arith.constant 0 : index
    %43 = vector.load %arg1[%c0_38, %c37, %c0_39] : memref<1x362x16xbf16, #tpu.memory_space<vmem>>, vector<1x324x16xbf16>
    %44 = vector.shape_cast %43 : vector<1x324x16xbf16> to vector<324x16xbf16>
    %c7 = arith.constant 7 : index
    %c0_40 = arith.constant 0 : index
    %c0_41 = arith.constant 0 : index
    %45 = vector.load %arg2[%c7, %c0_40, %c0_41] : memref<9x16x16xbf16, #tpu.memory_space<vmem>>, vector<1x16x16xbf16>
    %46 = vector.shape_cast %45 : vector<1x16x16xbf16> to vector<16x16xbf16>
    %cst_42 = arith.constant dense<0.000000e+00> : vector<324x16xf32>
    %47 = tpu.matmul %44, %46, %cst_42 {dimension_numbers = #tpu.dot_dimension_numbers<[1], [0], [0], [1], [0, 0, 1, 1], [], []>} : vector<324x16xbf16>, vector<16x16xbf16>, vector<324x16xf32> -> vector<324x16xf32>
    %48 = arith.addf %42, %47 : vector<324x16xf32>
    %c0_43 = arith.constant 0 : index
    %c38 = arith.constant 38 : index
    %c0_44 = arith.constant 0 : index
    %49 = vector.load %arg1[%c0_43, %c38, %c0_44] : memref<1x362x16xbf16, #tpu.memory_space<vmem>>, vector<1x324x16xbf16>
    %50 = vector.shape_cast %49 : vector<1x324x16xbf16> to vector<324x16xbf16>
    %c8 = arith.constant 8 : index
    %c0_45 = arith.constant 0 : index
    %c0_46 = arith.constant 0 : index
    %51 = vector.load %arg2[%c8, %c0_45, %c0_46] : memref<9x16x16xbf16, #tpu.memory_space<vmem>>, vector<1x16x16xbf16>
    %52 = vector.shape_cast %51 : vector<1x16x16xbf16> to vector<16x16xbf16>
    %cst_47 = arith.constant dense<0.000000e+00> : vector<324x16xf32>
    %53 = tpu.matmul %50, %52, %cst_47 {dimension_numbers = #tpu.dot_dimension_numbers<[1], [0], [0], [1], [0, 0, 1, 1], [], []>} : vector<324x16xbf16>, vector<16x16xbf16>, vector<324x16xf32> -> vector<324x16xf32>
    %54 = arith.addf %48, %53 : vector<324x16xf32>
    %c0_48 = arith.constant 0 : index
    %c0_49 = arith.constant 0 : index
    %55 = vector.load %arg3[%c0_48, %c0_49] : memref<1x16xf32, #tpu.memory_space<vmem>>, vector<1x16xf32>
    %56 = vector.broadcast %55 : vector<1x16xf32> to vector<324x16xf32>
    %57 = arith.addf %54, %56 : vector<324x16xf32>
    %c0_50 = arith.constant 0 : index
    %c0_51 = arith.constant 0 : index
    %c0_52 = arith.constant 0 : index
    %58 = vector.load %arg4[%c0_50, %c0_51, %c0_52] : memref<1x324x16xf32, #tpu.memory_space<vmem>>, vector<1x324x16xf32>
    %59 = vector.shape_cast %58 : vector<1x324x16xf32> to vector<324x16xf32>
    %60 = vector.shape_cast %57 : vector<324x16xf32> to vector<1x324x16xf32>
    tpu.vector_store %arg4[%c0_50, %c0_51, %c0_52], %60 {strides = array<i32>} : memref<1x324x16xf32, #tpu.memory_space<vmem>>, vector<1x324x16xf32>,
    return
  }
  func.func @transform_0(%arg0: i32) -> (i32, i32, i32) {
    %c0_i32 = arith.constant 0 : i32
    %c0_i32_0 = arith.constant 0 : i32
    %c0_i32_1 = arith.constant 0 : i32
    return %arg0, %c0_i32, %c0_i32_0 : i32, i32, i32
  }
  func.func @transform_1(%arg0: i32) -> (i32, i32, i32) {
    %c0_i32 = arith.constant 0 : i32
    %c0_i32_0 = arith.constant 0 : i32
    %c0_i32_1 = arith.constant 0 : i32
    %c0_i32_2 = arith.constant 0 : i32
    return %c0_i32, %c0_i32_0, %c0_i32_1 : i32, i32, i32
  }
  func.func @transform_2(%arg0: i32) -> (i32, i32) {
    %c0_i32 = arith.constant 0 : i32
    %c0_i32_0 = arith.constant 0 : i32
    %c0_i32_1 = arith.constant 0 : i32
    return %c0_i32, %c0_i32_0 : i32, i32
  }
  func.func @transform_3(%arg0: i32) -> (i32, i32, i32) {
    %c0_i32 = arith.constant 0 : i32
    %c0_i32_0 = arith.constant 0 : i32
    %c0_i32_1 = arith.constant 0 : i32
    return %arg0, %c0_i32, %c0_i32_0 : i32, i32, i32
  }
}

module attributes {stable_mosaic.version = 11 : i64} {
  func.func @_tail_kernel(%arg0: i32, %arg1: memref<256x8xf32, #tpu.memory_space<vmem>>, %arg2: memref<256x16xf32, #tpu.memory_space<vmem>>, %arg3: memref<1x8xf32, #tpu.memory_space<vmem>>, %arg4: memref<1x8xf32, #tpu.memory_space<vmem>>, %arg5: memref<8x16xbf16, #tpu.memory_space<vmem>>, %arg6: memref<1x16xf32, #tpu.memory_space<vmem>>, %arg7: memref<1x16xf32, #tpu.memory_space<vmem>>, %arg8: memref<1x16xf32, #tpu.memory_space<vmem>>, %arg9: memref<16x32xbf16, #tpu.memory_space<vmem>>, %arg10: memref<1x32xf32, #tpu.memory_space<vmem>>, %arg11: memref<256x32xf32, #tpu.memory_space<vmem>>) attributes {dimension_semantics = [#tpu.dimension_semantics<parallel>], iteration_bounds = array<i64: 2>, scalar_prefetch = 0 : i64, scratch_operands = 0 : i64, tpu.core_type = #tpu.core_type<tc>, window_params = [{transform_indices = @transform_0, window_bounds = array<i64: 256, 8>}, {transform_indices = @transform_1, window_bounds = array<i64: 256, 16>}, {pipeline_mode = #tpu.pipeline_mode<synchronous>, transform_indices = @transform_2, window_bounds = array<i64: 1, 8>}, {pipeline_mode = #tpu.pipeline_mode<synchronous>, transform_indices = @transform_3, window_bounds = array<i64: 1, 8>}, {pipeline_mode = #tpu.pipeline_mode<synchronous>, transform_indices = @transform_4, window_bounds = array<i64: 8, 16>}, {pipeline_mode = #tpu.pipeline_mode<synchronous>, transform_indices = @transform_5, window_bounds = array<i64: 1, 16>}, {pipeline_mode = #tpu.pipeline_mode<synchronous>, transform_indices = @transform_6, window_bounds = array<i64: 1, 16>}, {pipeline_mode = #tpu.pipeline_mode<synchronous>, transform_indices = @transform_7, window_bounds = array<i64: 1, 16>}, {pipeline_mode = #tpu.pipeline_mode<synchronous>, transform_indices = @transform_8, window_bounds = array<i64: 16, 32>}, {pipeline_mode = #tpu.pipeline_mode<synchronous>, transform_indices = @transform_9, window_bounds = array<i64: 1, 32>}, {transform_indices = @transform_10, window_bounds = array<i64: 256, 32>}]} {
    %c0 = arith.constant 0 : index
    %c0_0 = arith.constant 0 : index
    %0 = vector.load %arg1[%c0, %c0_0] : memref<256x8xf32, #tpu.memory_space<vmem>>, vector<256x8xf32>
    %c0_1 = arith.constant 0 : index
    %c0_2 = arith.constant 0 : index
    %1 = vector.load %arg3[%c0_1, %c0_2] : memref<1x8xf32, #tpu.memory_space<vmem>>, vector<1x8xf32>
    %2 = vector.broadcast %1 : vector<1x8xf32> to vector<256x8xf32>
    %3 = arith.mulf %0, %2 : vector<256x8xf32>
    %c0_3 = arith.constant 0 : index
    %c0_4 = arith.constant 0 : index
    %4 = vector.load %arg4[%c0_3, %c0_4] : memref<1x8xf32, #tpu.memory_space<vmem>>, vector<1x8xf32>
    %5 = vector.broadcast %4 : vector<1x8xf32> to vector<256x8xf32>
    %6 = arith.addf %3, %5 : vector<256x8xf32>
    %cst = arith.constant 0.000000e+00 : f32
    %7 = vector.broadcast %cst : f32 to vector<256x8xf32>
    %8 = arith.maximumf %6, %7 : vector<256x8xf32>
    %9 = arith.truncf %8 : vector<256x8xf32> to vector<256x8xbf16>
    %c0_5 = arith.constant 0 : index
    %c0_6 = arith.constant 0 : index
    %10 = vector.load %arg5[%c0_5, %c0_6] : memref<8x16xbf16, #tpu.memory_space<vmem>>, vector<8x16xbf16>
    %cst_7 = arith.constant dense<0.000000e+00> : vector<256x16xf32>
    %11 = tpu.matmul %9, %10, %cst_7 {dimension_numbers = #tpu.dot_dimension_numbers<[1], [0], [0], [1], [0, 0, 1, 1], [], []>} : vector<256x8xbf16>, vector<8x16xbf16>, vector<256x16xf32> -> vector<256x16xf32>
    %c0_8 = arith.constant 0 : index
    %c0_9 = arith.constant 0 : index
    %12 = vector.load %arg6[%c0_8, %c0_9] : memref<1x16xf32, #tpu.memory_space<vmem>>, vector<1x16xf32>
    %13 = vector.broadcast %12 : vector<1x16xf32> to vector<256x16xf32>
    %14 = arith.addf %11, %13 : vector<256x16xf32>
    %c0_10 = arith.constant 0 : index
    %c0_11 = arith.constant 0 : index
    %15 = vector.load %arg2[%c0_10, %c0_11] : memref<256x16xf32, #tpu.memory_space<vmem>>, vector<256x16xf32>
    %16 = arith.addf %14, %15 : vector<256x16xf32>
    %c0_12 = arith.constant 0 : index
    %c0_13 = arith.constant 0 : index
    %17 = vector.load %arg7[%c0_12, %c0_13] : memref<1x16xf32, #tpu.memory_space<vmem>>, vector<1x16xf32>
    %18 = vector.broadcast %17 : vector<1x16xf32> to vector<256x16xf32>
    %19 = arith.mulf %16, %18 : vector<256x16xf32>
    %c0_14 = arith.constant 0 : index
    %c0_15 = arith.constant 0 : index
    %20 = vector.load %arg8[%c0_14, %c0_15] : memref<1x16xf32, #tpu.memory_space<vmem>>, vector<1x16xf32>
    %21 = vector.broadcast %20 : vector<1x16xf32> to vector<256x16xf32>
    %22 = arith.addf %19, %21 : vector<256x16xf32>
    %cst_16 = arith.constant 0.000000e+00 : f32
    %23 = vector.broadcast %cst_16 : f32 to vector<256x16xf32>
    %24 = arith.maximumf %22, %23 : vector<256x16xf32>
    %25 = arith.truncf %24 : vector<256x16xf32> to vector<256x16xbf16>
    %c0_17 = arith.constant 0 : index
    %c0_18 = arith.constant 0 : index
    %26 = vector.load %arg9[%c0_17, %c0_18] : memref<16x32xbf16, #tpu.memory_space<vmem>>, vector<16x32xbf16>
    %cst_19 = arith.constant dense<0.000000e+00> : vector<256x32xf32>
    %27 = tpu.matmul %25, %26, %cst_19 {dimension_numbers = #tpu.dot_dimension_numbers<[1], [0], [0], [1], [0, 0, 1, 1], [], []>} : vector<256x16xbf16>, vector<16x32xbf16>, vector<256x32xf32> -> vector<256x32xf32>
    %c0_20 = arith.constant 0 : index
    %c0_21 = arith.constant 0 : index
    %28 = vector.load %arg10[%c0_20, %c0_21] : memref<1x32xf32, #tpu.memory_space<vmem>>, vector<1x32xf32>
    %29 = vector.broadcast %28 : vector<1x32xf32> to vector<256x32xf32>
    %30 = arith.addf %27, %29 : vector<256x32xf32>
    %c0_22 = arith.constant 0 : index
    %c0_23 = arith.constant 0 : index
    %31 = vector.load %arg11[%c0_22, %c0_23] : memref<256x32xf32, #tpu.memory_space<vmem>>, vector<256x32xf32>
    tpu.vector_store %arg11[%c0_22, %c0_23], %30 {strides = array<i32>} : memref<256x32xf32, #tpu.memory_space<vmem>>, vector<256x32xf32>,
    return
  }
  func.func @transform_0(%arg0: i32) -> (i32, i32) {
    %c0_i32 = arith.constant 0 : i32
    %c0_i32_0 = arith.constant 0 : i32
    return %arg0, %c0_i32 : i32, i32
  }
  func.func @transform_1(%arg0: i32) -> (i32, i32) {
    %c0_i32 = arith.constant 0 : i32
    %c0_i32_0 = arith.constant 0 : i32
    return %arg0, %c0_i32 : i32, i32
  }
  func.func @transform_2(%arg0: i32) -> (i32, i32) {
    %c0_i32 = arith.constant 0 : i32
    %c0_i32_0 = arith.constant 0 : i32
    %c0_i32_1 = arith.constant 0 : i32
    return %c0_i32, %c0_i32_0 : i32, i32
  }
  func.func @transform_3(%arg0: i32) -> (i32, i32) {
    %c0_i32 = arith.constant 0 : i32
    %c0_i32_0 = arith.constant 0 : i32
    %c0_i32_1 = arith.constant 0 : i32
    return %c0_i32, %c0_i32_0 : i32, i32
  }
  func.func @transform_4(%arg0: i32) -> (i32, i32) {
    %c0_i32 = arith.constant 0 : i32
    %c0_i32_0 = arith.constant 0 : i32
    %c0_i32_1 = arith.constant 0 : i32
    return %c0_i32, %c0_i32_0 : i32, i32
  }
  func.func @transform_5(%arg0: i32) -> (i32, i32) {
    %c0_i32 = arith.constant 0 : i32
    %c0_i32_0 = arith.constant 0 : i32
    %c0_i32_1 = arith.constant 0 : i32
    return %c0_i32, %c0_i32_0 : i32, i32
  }
  func.func @transform_6(%arg0: i32) -> (i32, i32) {
    %c0_i32 = arith.constant 0 : i32
    %c0_i32_0 = arith.constant 0 : i32
    %c0_i32_1 = arith.constant 0 : i32
    return %c0_i32, %c0_i32_0 : i32, i32
  }
  func.func @transform_7(%arg0: i32) -> (i32, i32) {
    %c0_i32 = arith.constant 0 : i32
    %c0_i32_0 = arith.constant 0 : i32
    %c0_i32_1 = arith.constant 0 : i32
    return %c0_i32, %c0_i32_0 : i32, i32
  }
  func.func @transform_8(%arg0: i32) -> (i32, i32) {
    %c0_i32 = arith.constant 0 : i32
    %c0_i32_0 = arith.constant 0 : i32
    %c0_i32_1 = arith.constant 0 : i32
    return %c0_i32, %c0_i32_0 : i32, i32
  }
  func.func @transform_9(%arg0: i32) -> (i32, i32) {
    %c0_i32 = arith.constant 0 : i32
    %c0_i32_0 = arith.constant 0 : i32
    %c0_i32_1 = arith.constant 0 : i32
    return %c0_i32, %c0_i32_0 : i32, i32
  }
  func.func @transform_10(%arg0: i32) -> (i32, i32) {
    %c0_i32 = arith.constant 0 : i32
    %c0_i32_0 = arith.constant 0 : i32
    return %arg0, %c0_i32 : i32, i32
  }
}

</mosaic_0001>

<llo_original>
// kernel: pyra_conv_block.5
$region0: #{pyra_conv_block.5}
  #allocation0 [shape = 'u32[]', space=smem, size = 0x4, offset = 0x4, fixed_abs, tag = 'smem constant byte address 0x4 - core index']
  #allocation1 [shape = 'u32[144,128]{1,0:T(1,128)}', space=vmem, size = 0x12000, scoped, tag = 'internal scratch']
  %s0 = inlined_call_operand.vmem [shape: f32[512,16], index: 0, kind: input, shape index: {}]
  %s1 = inlined_call_operand.vmem [shape: f32[1,16], index: 1, kind: input, shape index: {}]
  %s2 = inlined_call_operand.vmem [shape: f32[1,16], index: 2, kind: input, shape index: {}]
  %s3 = inlined_call_operand.vmem [shape: bf16[16,16], index: 3, kind: input, shape index: {}]
  %s4 = inlined_call_operand.vmem [shape: f32[1,16], index: 4, kind: input, shape index: {}]
  %s5 = inlined_call_operand.vmem [shape: f32[1,16], index: 5, kind: input, shape index: {}]
  %s6 = inlined_call_operand.vmem [shape: f32[1,16], index: 6, kind: input, shape index: {}]
  %s7 = inlined_call_operand.vmem [shape: f32[1,16], index: 7, kind: input, shape index: {}]
  %s8 = inlined_call_operand.vmem [shape: f32[1,16], index: 8, kind: input, shape index: {}]
  %s9 = inlined_call_operand.vmem [shape: bf16[16,8], index: 9, kind: input, shape index: {}]
  %s10 = inlined_call_operand.vmem [shape: f32[1,8], index: 10, kind: input, shape index: {}]
  %s11 = inlined_call_operand.vmem [shape: f32[1,8], index: 11, kind: input, shape index: {}]
  %s12 = inlined_call_operand.vmem [shape: f32[1,8], index: 12, kind: input, shape index: {}]
  %s13 = inlined_call_operand.vmem [shape: bf16[512,16], index: 13, kind: output, shape index: {0}]
  %s14 = inlined_call_operand.vmem [shape: bf16[512,8], index: 14, kind: output, shape index: {1}]
  %15 = xla_tuple %s13, %s14
  %s16 = sld [smem:[#allocation0]]
  $region93: #{pyra_conv_block.5} parent=0
    _
  %s18 = ssub.s32 1, %s16
  %s19 = scalar_select 0, %s18, %s16
  loop: start=0, step=1, limit=4
  $region2: #{pyra_conv_block.5} parent=0 // loop_pre_header
    _
  $region3: #{pyra_conv_block.5} parent=0 // loop_header
    %s21 = sphi 0, %s25
    %p22 = scmp.ge.s32.totalorder %s21, 4
    %s31 = sphi 0, %s33
    %s34 = sphi 0, %s31
    %s35 = sphi 0, %s34
    %s51 = sphi 0, %s35
    %s55 = sphi 0, %s55
    %s57 = sphi 0, %s55
    %s58 = sphi 0, %s57
    %s72 = sphi 0, %s58
    %s76 = sphi 0, %s76
    %s78 = sphi 0, %s76
    %s79 = sphi 0, %s78
    %s93 = sphi 0, %s79
    %s97 = sphi 0, %s97
    %s99 = sphi 0, %s97
    %s100 = sphi 0, %s99
    %s114 = sphi 0, %s100
    %s118 = sphi 0, %s118
    %s120 = sphi 0, %s118
    %s121 = sphi 0, %s120
    %s135 = sphi 0, %s121
    %s139 = sphi 0, %s139
    %s141 = sphi 0, %s139
    %s142 = sphi 0, %s141
    %s156 = sphi 0, %s142
    %s160 = sphi 0, %s160
    %s162 = sphi 0, %s160
    %s163 = sphi 0, %s162
    %s177 = sphi 0, %s163
    %s181 = sphi 0, %s181
    %s183 = sphi 0, %s181
    %s184 = sphi 0, %s183
    %s198 = sphi 0, %s184
    %s202 = sphi 0, %s202
    %s204 = sphi 0, %s202
    %s205 = sphi 0, %s204
    %s219 = sphi 0, %s205
    %s223 = sphi 0, %s223
    %s225 = sphi 0, %s223
    %s226 = sphi 0, %s225
    %s240 = sphi 0, %s226
    %s244 = sphi 0, %s244
    %s246 = sphi 0, %s244
    %s247 = sphi 0, %s246
    %s261 = sphi 0, %s247
    %s265 = sphi 0, %s265
    %s267 = sphi 0, %s265
    %s268 = sphi 0, %s267
    %s282 = sphi 0, %s268
    %s286 = sphi 0, %s286
    %s288 = sphi 0, %s286
    %s289 = sphi 0, %s288
    %s303 = sphi 0, %s289
    %s309 = sphi 0, %s311
    %s312 = sphi 0, %s309
    %s313 = sphi 0, %s312
    %s329 = sphi 0, %s313
    %s335 = sphi 0, %s337
    %s338 = sphi 0, %s335
    %s339 = sphi 0, %s338
    %s355 = sphi 0, %s339
  $region4: #{pyra_conv_block.5} parent=0 // loop_header_branch
    %24 = sbr.rel (%p22) target = $region8
  $region5: #{pyra_conv_block.5} parent=0 // loop_body
    %s26 = ssub.s32 %s21, 1
    %s27 = ssub.s32 %s21, 2
    %s28 = sadd.s32 %s21, 1
    %s29 = ssub.s32 %s21, %s28
    %p30 = scmp.eq.s32.totalorder %s29, 0
    %s32 = sadd.s32 %s31, 1
    %s33 = scalar_select %p30, %s31, %s32
    %p36 = pneg %p30
    %p37 = scmp.eq.s32.totalorder %s21, 1
    %p38 = por %p36, %p37
    %p39 = scmp.ne.s32.totalorder %s31, %s34
    %p40 = scmp.eq.s32.totalorder %s21, 0
    %p41 = por %p39, %p40
    %p42 = scmp.ne.s32.totalorder %s31, %s34
    %p43 = scmp.eq.s32.totalorder %s26, 1
    %p44 = por %p42, %p43
    %p45 = scmp.ne.s32.totalorder %s34, %s35
    %p46 = scmp.eq.s32.totalorder %s26, 0
    %p47 = por %p45, %p46
    %p48 = scmp.ne.s32.totalorder %s34, %s35
    %p49 = scmp.eq.s32.totalorder %s27, 1
    %p50 = por %p48, %p49
    %p52 = scmp.ne.s32.totalorder %s35, %s51
    %p53 = scmp.eq.s32.totalorder %s27, 0
    %p54 = por %p52, %p53
    %s56 = sadd.s32 %s55, 1
    %p59 = scmp.eq.s32.totalorder %s21, 1
    %p60 = scmp.ne.s32.totalorder %s55, %s57
    %p61 = scmp.eq.s32.totalorder %s21, 0
    %p62 = por %p60, %p61
    %p63 = scmp.ne.s32.totalorder %s55, %s57
    %p64 = scmp.eq.s32.totalorder %s26, 1
    %p65 = por %p63, %p64
    %p66 = scmp.ne.s32.totalorder %s57, %s58
    %p67 = scmp.eq.s32.totalorder %s26, 0
    %p68 = por %p66, %p67
    %p69 = scmp.ne.s32.totalorder %s57, %s58
    %p70 = scmp.eq.s32.totalorder %s27, 1
    %p71 = por %p69, %p70
    %p73 = scmp.ne.s32.totalorder %s58, %s72
    %p74 = scmp.eq.s32.totalorder %s27, 0
    %p75 = por %p73, %p74
    %s77 = sadd.s32 %s76, 1
    %p80 = scmp.eq.s32.totalorder %s21, 1
    %p81 = scmp.ne.s32.totalorder %s76, %s78
    %p82 = scmp.eq.s32.totalorder %s21, 0
    %p83 = por %p81, %p82
    %p84 = scmp.ne.s32.totalorder %s76, %s78
    %p85 = scmp.eq.s32.totalorder %s26, 1
    %p86 = por %p84, %p85
    %p87 = scmp.ne.s32.totalorder %s78, %s79
    %p88 = scmp.eq.s32.totalorder %s26, 0
    %p89 = por %p87, %p88
    %p90 = scmp.ne.s32.totalorder %s78, %s79
    %p91 = scmp.eq.s32.totalorder %s27, 1
    %p92 = por %p90, %p91
    %p94 = scmp.ne.s32.totalorder %s79, %s93
    %p95 = scmp.eq.s32.totalorder %s27, 0
    %p96 = por %p94, %p95
    %s98 = sadd.s32 %s97, 1
    %p101 = scmp.eq.s32.totalorder %s21, 1
    %p102 = scmp.ne.s32.totalorder %s97, %s99
    %p103 = scmp.eq.s32.totalorder %s21, 0
    %p104 = por %p102, %p103
    %p105 = scmp.ne.s32.totalorder %s97, %s99
    %p106 = scmp.eq.s32.totalorder %s26, 1
    %p107 = por %p105, %p106
    %p108 = scmp.ne.s32.totalorder %s99, %s100
    %p109 = scmp.eq.s32.totalorder %s26, 0
    %p110 = por %p108, %p109
    %p111 = scmp.ne.s32.totalorder %s99, %s100
    %p112 = scmp.eq.s32.totalorder %s27, 1
    %p113 = por %p111, %p112
    %p115 = scmp.ne.s32.totalorder %s100, %s114
    %p116 = scmp.eq.s32.totalorder %s27, 0
    %p117 = por %p115, %p116
    %s119 = sadd.s32 %s118, 1
    %p122 = scmp.eq.s32.totalorder %s21, 1
    %p123 = scmp.ne.s32.totalorder %s118, %s120
    %p124 = scmp.eq.s32.totalorder %s21, 0
    %p125 = por %p123, %p124
    %p126 = scmp.ne.s32.totalorder %s118, %s120
    %p127 = scmp.eq.s32.totalorder %s26, 1
    %p128 = por %p126, %p127
    %p129 = scmp.ne.s32.totalorder %s120, %s121
    %p130 = scmp.eq.s32.totalorder %s26, 0
    %p131 = por %p129, %p130
    %p132 = scmp.ne.s32.totalorder %s120, %s121
    %p133 = scmp.eq.s32.totalorder %s27, 1
    %p134 = por %p132, %p133
    %p136 = scmp.ne.s32.totalorder %s121, %s135
    %p137 = scmp.eq.s32.totalorder %s27, 0
    %p138 = por %p136, %p137
    %s140 = sadd.s32 %s139, 1
    %p143 = scmp.eq.s32.totalorder %s21, 1
    %p144 = scmp.ne.s32.totalorder %s139, %s141
    %p145 = scmp.eq.s32.totalorder %s21, 0
    %p146 = por %p144, %p145
    %p147 = scmp.ne.s32.totalorder %s139, %s141
    %p148 = scmp.eq.s32.totalorder %s26, 1
    %p149 = por %p147, %p148
    %p150 = scmp.ne.s32.totalorder %s141, %s142
    %p151 = scmp.eq.s32.totalorder %s26, 0
    %p152 = por %p150, %p151
    %p153 = scmp.ne.s32.totalorder %s141, %s142
    %p154 = scmp.eq.s32.totalorder %s27, 1
    %p155 = por %p153, %p154
    %p157 = scmp.ne.s32.totalorder %s142, %s156
    %p158 = scmp.eq.s32.totalorder %s27, 0
    %p159 = por %p157, %p158
    %s161 = sadd.s32 %s160, 1
    %p164 = scmp.eq.s32.totalorder %s21, 1
    %p165 = scmp.ne.s32.totalorder %s160, %s162
    %p166 = scmp.eq.s32.totalorder %s21, 0
    %p167 = por %p165, %p166
    %p168 = scmp.ne.s32.totalorder %s160, %s162
    %p169 = scmp.eq.s32.totalorder %s26, 1
    %p170 = por %p168, %p169
    %p171 = scmp.ne.s32.totalorder %s162, %s163
    %p172 = scmp.eq.s32.totalorder %s26, 0
    %p173 = por %p171, %p172
    %p174 = scmp.ne.s32.totalorder %s162, %s163
    %p175 = scmp.eq.s32.totalorder %s27, 1
    %p176 = por %p174, %p175
    %p178 = scmp.ne.s32.totalorder %s163, %s177
    %p179 = scmp.eq.s32.totalorder %s27, 0
    %p180 = por %p178, %p179
    %s182 = sadd.s32 %s181, 1
    %p185 = scmp.eq.s32.totalorder %s21, 1
    %p186 = scmp.ne.s32.totalorder %s181, %s183
    %p187 = scmp.eq.s32.totalorder %s21, 0
    %p188 = por %p186, %p187
    %p189 = scmp.ne.s32.totalorder %s181, %s183
    %p190 = scmp.eq.s32.totalorder %s26, 1
    %p191 = por %p189, %p190
    %p192 = scmp.ne.s32.totalorder %s183, %s184
    %p193 = scmp.eq.s32.totalorder %s26, 0
    %p194 = por %p192, %p193
    %p195 = scmp.ne.s32.totalorder %s183, %s184
    %p196 = scmp.eq.s32.totalorder %s27, 1
    %p197 = por %p195, %p196
    %p199 = scmp.ne.s32.totalorder %s184, %s198
    %p200 = scmp.eq.s32.totalorder %s27, 0
    %p201 = por %p199, %p200
    %s203 = sadd.s32 %s202, 1
    %p206 = scmp.eq.s32.totalorder %s21, 1
    %p207 = scmp.ne.s32.totalorder %s202, %s204
    %p208 = scmp.eq.s32.totalorder %s21, 0
    %p209 = por %p207, %p208
    %p210 = scmp.ne.s32.totalorder %s202, %s204
    %p211 = scmp.eq.s32.totalorder %s26, 1
    %p212 = por %p210, %p211
    %p213 = scmp.ne.s32.totalorder %s204, %s205
    %p214 = scmp.eq.s32.totalorder %s26, 0
    %p215 = por %p213, %p214
    %p216 = scmp.ne.s32.totalorder %s204, %s205
    %p217 = scmp.eq.s32.totalorder %s27, 1
    %p218 = por %p216, %p217
    %p220 = scmp.ne.s32.totalorder %s205, %s219
    %p221 = scmp.eq.s32.totalorder %s27, 0
    %p222 = por %p220, %p221
    %s224 = sadd.s32 %s223, 1
    %p227 = scmp.eq.s32.totalorder %s21, 1
    %p228 = scmp.ne.s32.totalorder %s223, %s225
    %p229 = scmp.eq.s32.totalorder %s21, 0
    %p230 = por %p228, %p229
    %p231 = scmp.ne.s32.totalorder %s223, %s225
    %p232 = scmp.eq.s32.totalorder %s26, 1
    %p233 = por %p231, %p232
    %p234 = scmp.ne.s32.totalorder %s225, %s226
    %p235 = scmp.eq.s32.totalorder %s26, 0
    %p236 = por %p234, %p235
    %p237 = scmp.ne.s32.totalorder %s225, %s226
    %p238 = scmp.eq.s32.totalorder %s27, 1
    %p239 = por %p237, %p238
    %p241 = scmp.ne.s32.totalorder %s226, %s240
    %p242 = scmp.eq.s32.totalorder %s27, 0
    %p243 = por %p241, %p242
    %s245 = sadd.s32 %s244, 1
    %p248 = scmp.eq.s32.totalorder %s21, 1
    %p249 = scmp.ne.s32.totalorder %s244, %s246
    %p250 = scmp.eq.s32.totalorder %s21, 0
    %p251 = por %p249, %p250
    %p252 = scmp.ne.s32.totalorder %s244, %s246
    %p253 = scmp.eq.s32.totalorder %s26, 1
    %p254 = por %p252, %p253
    %p255 = scmp.ne.s32.totalorder %s246, %s247
    %p256 = scmp.eq.s32.totalorder %s26, 0
    %p257 = por %p255, %p256
    %p258 = scmp.ne.s32.totalorder %s246, %s247
    %p259 = scmp.eq.s32.totalorder %s27, 1
    %p260 = por %p258, %p259
    %p262 = scmp.ne.s32.totalorder %s247, %s261
    %p263 = scmp.eq.s32.totalorder %s27, 0
    %p264 = por %p262, %p263
    %s266 = sadd.s32 %s265, 1
    %p269 = scmp.eq.s32.totalorder %s21, 1
    %p270 = scmp.ne.s32.totalorder %s265, %s267
    %p271 = scmp.eq.s32.totalorder %s21, 0
    %p272 = por %p270, %p271
    %p273 = scmp.ne.s32.totalorder %s265, %s267
    %p274 = scmp.eq.s32.totalorder %s26, 1
    %p275 = por %p273, %p274
    %p276 = scmp.ne.s32.totalorder %s267, %s268
    %p277 = scmp.eq.s32.totalorder %s26, 0
    %p278 = por %p276, %p277
    %p279 = scmp.ne.s32.totalorder %s267, %s268
    %p280 = scmp.eq.s32.totalorder %s27, 1
    %p281 = por %p279, %p280
    %p283 = scmp.ne.s32.totalorder %s268, %s282
    %p284 = scmp.eq.s32.totalorder %s27, 0
    %p285 = por %p283, %p284
    %s287 = sadd.s32 %s286, 1
    %p290 = scmp.eq.s32.totalorder %s21, 1
    %p291 = scmp.ne.s32.totalorder %s286, %s288
    %p292 = scmp.eq.s32.totalorder %s21, 0
    %p293 = por %p291, %p292
    %p294 = scmp.ne.s32.totalorder %s286, %s288
    %p295 = scmp.eq.s32.totalorder %s26, 1
    %p296 = por %p294, %p295
    %p297 = scmp.ne.s32.totalorder %s288, %s289
    %p298 = scmp.eq.s32.totalorder %s26, 0
    %p299 = por %p297, %p298
    %p300 = scmp.ne.s32.totalorder %s288, %s289
    %p301 = scmp.eq.s32.totalorder %s27, 1
    %p302 = por %p300, %p301
    %p304 = scmp.ne.s32.totalorder %s289, %s303
    %p305 = scmp.eq.s32.totalorder %s27, 0
    %p306 = por %p304, %p305
    %s307 = ssub.s32 %s21, %s28
    %p308 = scmp.eq.s32.totalorder %s307, 0
    %s310 = sadd.s32 %s309, 1
    %s311 = scalar_select %p308, %s309, %s310
    %p314 = pneg %p308
    %p315 = scmp.eq.s32.totalorder %s21, 1
    %p316 = por %p314, %p315
    %p317 = scmp.ne.s32.totalorder %s309, %s312
    %p318 = scmp.eq.s32.totalorder %s21, 0
    %p319 = por %p317, %p318
    %p320 = scmp.ne.s32.totalorder %s309, %s312
    %p321 = scmp.eq.s32.totalorder %s26, 1
    %p322 = por %p320, %p321
    %p323 = scmp.ne.s32.totalorder %s312, %s313
    %p324 = scmp.eq.s32.totalorder %s26, 0
    %p325 = por %p323, %p324
    %p326 = scmp.ne.s32.totalorder %s312, %s313
    %p327 = scmp.eq.s32.totalorder %s27, 1
    %p328 = por %p326, %p327
    %p330 = scmp.ne.s32.totalorder %s313, %s329
    %p331 = scmp.eq.s32.totalorder %s27, 0
    %p332 = por %p330, %p331
    %s333 = ssub.s32 %s21, %s28
    %p334 = scmp.eq.s32.totalorder %s333, 0
    %s336 = sadd.s32 %s335, 1
    %s337 = scalar_select %p334, %s335, %s336
    %p340 = pneg %p334
    %p341 = scmp.eq.s32.totalorder %s21, 1
    %p342 = por %p340, %p341
    %p343 = scmp.ne.s32.totalorder %s335, %s338
    %p344 = scmp.eq.s32.totalorder %s21, 0
    %p345 = por %p343, %p344
    %p346 = scmp.ne.s32.totalorder %s335, %s338
    %p347 = scmp.eq.s32.totalorder %s26, 1
    %p348 = por %p346, %p347
    %p349 = scmp.ne.s32.totalorder %s338, %s339
    %p350 = scmp.eq.s32.totalorder %s26, 0
    %p351 = por %p349, %p350
    %p352 = scmp.ne.s32.totalorder %s338, %s339
    %p353 = scmp.eq.s32.totalorder %s27, 1
    %p354 = por %p352, %p353
    %p356 = scmp.ne.s32.totalorder %s339, %s355
    %p357 = scmp.eq.s32.totalorder %s27, 0
    %p358 = por %p356, %p357
    %p359 = scmp.le.s32.totalorder 1, %s21
    %p360 = scmp.lt.s32.totalorder %s21, 3
    %p361 = pnand %p359, %p360
    %p362 = pneg %p361
    // Predicated region
    $region9: #{pyra_conv_block.5} parent=5 // pred_check
      _
    $region10: #{pyra_conv_block.5} parent=5 // pred_check_branch
      %364 = sbr.rel (%p361) target = $region12
    $region11: #{pyra_conv_block.5} parent=5 // pred_region
      %s365 = ssub.s32 %s21, 1
      // Predicated region
      $region13: #{pyra_conv_block.5} parent=11 // pred_check
        %p366 = pneg %p68
      $region14: #{pyra_conv_block.5} parent=11 // pred_check_branch
        %368 = sbr.rel (%p366) target = $region16
      $region15: #{pyra_conv_block.5} parent=11 // pred_region
        _
      $region16: #{pyra_conv_block.5} parent=11 // pred_fallthru
        _
      // Predicated region
      $region17: #{pyra_conv_block.5} parent=11 // pred_check
        %p369 = pneg %p89
      $region18: #{pyra_conv_block.5} parent=11 // pred_check_branch
        %371 = sbr.rel (%p369) target = $region20
      $region19: #{pyra_conv_block.5} parent=11 // pred_region
        _
      $region20: #{pyra_conv_block.5} parent=11 // pred_fallthru
        _
      // Predicated region
      $region21: #{pyra_conv_block.5} parent=11 // pred_check
        %p372 = pneg %p110
      $region22: #{pyra_conv_block.5} parent=11 // pred_check_branch
        %374 = sbr.rel (%p372) target = $region24
      $region23: #{pyra_conv_block.5} parent=11 // pred_region
        _
      $region24: #{pyra_conv_block.5} parent=11 // pred_fallthru
        _
      // Predicated region
      $region25: #{pyra_conv_block.5} parent=11 // pred_check
        %p375 = pneg %p131
      $region26: #{pyra_conv_block.5} parent=11 // pred_check_branch
        %377 = sbr.rel (%p375) target = $region28
      $region27: #{pyra_conv_block.5} parent=11 // pred_region
        _
      $region28: #{pyra_conv_block.5} parent=11 // pred_fallthru
        _
      // Predicated region
      $region29: #{pyra_conv_block.5} parent=11 // pred_check
        %p378 = pneg %p152
      $region30: #{pyra_conv_block.5} parent=11 // pred_check_branch
        %380 = sbr.rel (%p378) target = $region32
      $region31: #{pyra_conv_block.5} parent=11 // pred_region
        _
      $region32: #{pyra_conv_block.5} parent=11 // pred_fallthru
        _
      // Predicated region
      $region33: #{pyra_conv_block.5} parent=11 // pred_check
        %p381 = pneg %p173
      $region34: #{pyra_conv_block.5} parent=11 // pred_check_branch
        %383 = sbr.rel (%p381) target = $region36
      $region35: #{pyra_conv_block.5} parent=11 // pred_region
        _
      $region36: #{pyra_conv_block.5} parent=11 // pred_fallthru
        _
      // Predicated region
      $region37: #{pyra_conv_block.5} parent=11 // pred_check
        %p384 = pneg %p194
      $region38: #{pyra_conv_block.5} parent=11 // pred_check_branch
        %386 = sbr.rel (%p384) target = $region40
      $region39: #{pyra_conv_block.5} parent=11 // pred_region
        _
      $region40: #{pyra_conv_block.5} parent=11 // pred_fallthru
        _
      // Predicated region
      $region41: #{pyra_conv_block.5} parent=11 // pred_check
        %p387 = pneg %p215
      $region42: #{pyra_conv_block.5} parent=11 // pred_check_branch
        %389 = sbr.rel (%p387) target = $region44
      $region43: #{pyra_conv_block.5} parent=11 // pred_region
        _
      $region44: #{pyra_conv_block.5} parent=11 // pred_fallthru
        _
      // Predicated region
      $region45: #{pyra_conv_block.5} parent=11 // pred_check
        %p390 = pneg %p236
      $region46: #{pyra_conv_block.5} parent=11 // pred_check_branch
        %392 = sbr.rel (%p390) target = $region48
      $region47: #{pyra_conv_block.5} parent=11 // pred_region
        _
      $region48: #{pyra_conv_block.5} parent=11 // pred_fallthru
        _
      // Predicated region
      $region49: #{pyra_conv_block.5} parent=11 // pred_check
        %p393 = pneg %p257
      $region50: #{pyra_conv_block.5} parent=11 // pred_check_branch
        %395 = sbr.rel (%p393) target = $region52
      $region51: #{pyra_conv_block.5} parent=11 // pred_region
        _
      $region52: #{pyra_conv_block.5} parent=11 // pred_fallthru
        _
      // Predicated region
      $region53: #{pyra_conv_block.5} parent=11 // pred_check
        %p396 = pneg %p278
      $region54: #{pyra_conv_block.5} parent=11 // pred_check_branch
        %398 = sbr.rel (%p396) target = $region56
      $region55: #{pyra_conv_block.5} parent=11 // pred_region
        _
      $region56: #{pyra_conv_block.5} parent=11 // pred_fallthru
        _
      // Predicated region
      $region57: #{pyra_conv_block.5} parent=11 // pred_check
        %p399 = pneg %p299
      $region58: #{pyra_conv_block.5} parent=11 // pred_check_branch
        %401 = sbr.rel (%p399) target = $region60
      $region59: #{pyra_conv_block.5} parent=11 // pred_region
        _
      $region60: #{pyra_conv_block.5} parent=11 // pred_fallthru
        _
    $region12: #{pyra_conv_block.5} parent=5 // pred_fallthru
      _
    %p402 = scmp.lt.s32.totalorder %s21, 2
    // Predicated region
    $region61: #{pyra_conv_block.5} parent=5 // pred_check
      %p403 = pneg %p402
    $region62: #{pyra_conv_block.5} parent=5 // pred_check_branch
      %405 = sbr.rel (%p403) target = $region64
    $region63: #{pyra_conv_block.5} parent=5 // pred_region
      // Predicated region
      $region65: #{pyra_conv_block.5} parent=63 // pred_check
        %p406 = pneg %p41
      $region66: #{pyra_conv_block.5} parent=63 // pred_check_branch
        %408 = sbr.rel (%p406) target = $region68
      $region67: #{pyra_conv_block.5} parent=63 // pred_region
        %s409 = smul.u32 32, %s21
        %p410 = scmp.lt.s32.totalorder %s409, 63
        %s411 = scalar_select %p410, %s409, 63
        %s412 = smul.addr %s411, 8
        %s413 = scalar_lea.vmem %s0, %s412
        %s414 = smul.u32 32, %s21
      $region68: #{pyra_conv_block.5} parent=63 // pred_fallthru
        _
    $region64: #{pyra_conv_block.5} parent=5 // pred_fallthru
      _
    %p415 = scmp.le.s32.totalorder 1, %s21
    %p416 = scmp.lt.s32.totalorder %s21, 3
    %p417 = pnand %p415, %p416
    %p418 = pneg %p417
    // Predicated region
    $region69: #{pyra_conv_block.5} parent=5 // pred_check
      _
    $region70: #{pyra_conv_block.5} parent=5 // pred_check_branch
      %420 = sbr.rel (%p417) target = $region72
    $region71: #{pyra_conv_block.5} parent=5 // pred_region
      %s421 = ssub.s32 %s21, 1
      %s422 = smul.u32 32, %s26
      %p423 = scmp.lt.s32.totalorder %s422, 63
      %s424 = scalar_select %p423, %s422, 63
      %s425 = smul.addr %s424, 8
      %s426 = scalar_lea.vmem %s0, %s425
      %p427 = pneg %p47
      %p428 = pneg %p44
      %p429 = pneg %p68
      %p430 = pneg %p65
      %p431 = pneg %p89
      %p432 = pneg %p86
      %p433 = pneg %p110
      %p434 = pneg %p107
      %p435 = pneg %p131
      %p436 = pneg %p128
      %p437 = pneg %p152
      %p438 = pneg %p149
      %p439 = pneg %p173
      %p440 = pneg %p170
      %p441 = pneg %p194
      %p442 = pneg %p191
      %p443 = pneg %p215
      %p444 = pneg %p212
      %p445 = pneg %p236
      %p446 = pneg %p233
      %p447 = pneg %p257
      %p448 = pneg %p254
      %p449 = pneg %p278
      %p450 = pneg %p275
      %p451 = pneg %p299
      %p452 = pneg %p296
      %p453 = pneg %p325
      %p454 = pneg %p322
      %s455 = smul.u32 32, %s26
      %p456 = scmp.lt.s32.totalorder %s455, 63
      %s457 = scalar_select %p456, %s455, 63
      %s458 = smul.addr %s457, 4
      %s459 = scalar_lea.vmem %s13, %s458
      %p460 = pneg %p351
      %p461 = pneg %p348
      %s462 = smul.u32 32, %s26
      %p463 = scmp.lt.s32.totalorder %s462, 63
      %s464 = scalar_select %p463, %s462, 63
      %s465 = smul.addr %s464, 4
      %s466 = scalar_lea.vmem %s14, %s465
      %s467 = smul.u32 32, %s26
      %p468 = scmp.lt.s32.totalorder %s467, 63
      %s469 = scalar_select %p468, %s467, 63
      %s470 = smul.addr %s469, 8
      %s471 = scalar_lea.vmem %s0, %s470
      %s472 = smul.u32 32, %s26
      %s473 = smul.u32 32, %s26
      %p474 = scmp.lt.s32.totalorder %s473, 63
      %s475 = scalar_select %p474, %s473, 63
      %s476 = smul.addr %s475, 4
      %s477 = scalar_lea.vmem %s13, %s476
      %s478 = smul.u32 32, %s26
      %s479 = smul.u32 32, %s26
      %p480 = scmp.lt.s32.totalorder %s479, 63
      %s481 = scalar_select %p480, %s479, 63
      %s482 = smul.addr %s481, 4
      %s483 = scalar_lea.vmem %s14, %s482
      %s484 = smul.u32 32, %s26
      %v486 = vld [vmem:[%s471] sm:$0xff]
      %v487 = vld [vmem:[%s471 + $0x8] sm:$0xff]
      %v488 = vld [vmem:[%s471 + $0x10] sm:$0xff]
      %v489 = vld [vmem:[%s471 + $0x18] sm:$0xff]
      %v490 = vld [vmem:[%s471 + $0x20] sm:$0xff]
      %v491 = vld [vmem:[%s471 + $0x28] sm:$0xff]
      %v492 = vld [vmem:[%s471 + $0x30] sm:$0xff]
      %v493 = vld [vmem:[%s471 + $0x38] sm:$0xff]
      %v494 = vld [vmem:[%s471 + $0x40] sm:$0xff]
      %v495 = vld [vmem:[%s471 + $0x48] sm:$0xff]
      %v496 = vld [vmem:[%s471 + $0x50] sm:$0xff]
      %v497 = vld [vmem:[%s471 + $0x58] sm:$0xff]
      %v498 = vld [vmem:[%s471 + $0x60] sm:$0xff]
      %v499 = vld [vmem:[%s471 + $0x68] sm:$0xff]
      %v500 = vld [vmem:[%s471 + $0x70] sm:$0xff]
      %v501 = vld [vmem:[%s471 + $0x78] sm:$0xff]
      %v502 = vld [vmem:[%s471 + $0x80] sm:$0xff]
      %v503 = vld [vmem:[%s471 + $0x88] sm:$0xff]
      %v504 = vld [vmem:[%s471 + $0x90] sm:$0xff]
      %v505 = vld [vmem:[%s471 + $0x98] sm:$0xff]
      %v506 = vld [vmem:[%s471 + $0xa0] sm:$0xff]
      %v507 = vld [vmem:[%s471 + $0xa8] sm:$0xff]
      %v508 = vld [vmem:[%s471 + $0xb0] sm:$0xff]
      %v509 = vld [vmem:[%s471 + $0xb8] sm:$0xff]
      %v510 = vld [vmem:[%s471 + $0xc0] sm:$0xff]
      %v511 = vld [vmem:[%s471 + $0xc8] sm:$0xff]
      %v512 = vld [vmem:[%s471 + $0xd0] sm:$0xff]
      %v513 = vld [vmem:[%s471 + $0xd8] sm:$0xff]
      %v514 = vld [vmem:[%s471 + $0xe0] sm:$0xff]
      %v515 = vld [vmem:[%s471 + $0xe8] sm:$0xff]
      %v516 = vld [vmem:[%s471 + $0xf0] sm:$0xff]
      %v517 = vld [vmem:[%s471 + $0xf8] sm:$0xff]
      %v518 = vld [vmem:[%s1] sm:$0x1]
      %v520 = vlaneseq
      %v521 = vshrl.u32 %v520, 7
      %v522 = vsub.s32 0, %v521
      %v523 = vrot.slane %v518, %v522
      %v525 = vmul.f32 %v486, %v523
      %v526 = vmul.f32 %v487, %v523
      %v527 = vmul.f32 %v488, %v523
      %v528 = vmul.f32 %v489, %v523
      %v529 = vmul.f32 %v490, %v523
      %v530 = vmul.f32 %v491, %v523
      %v531 = vmul.f32 %v492, %v523
      %v532 = vmul.f32 %v493, %v523
      %v533 = vmul.f32 %v494, %v523
      %v534 = vmul.f32 %v495, %v523
      %v535 = vmul.f32 %v496, %v523
      %v536 = vmul.f32 %v497, %v523
      %v537 = vmul.f32 %v498, %v523
      %v538 = vmul.f32 %v499, %v523
      %v539 = vmul.f32 %v500, %v523
      %v540 = vmul.f32 %v501, %v523
      %v541 = vmul.f32 %v502, %v523
      %v542 = vmul.f32 %v503, %v523
      %v543 = vmul.f32 %v504, %v523
      %v544 = vmul.f32 %v505, %v523
      %v545 = vmul.f32 %v506, %v523
      %v546 = vmul.f32 %v507, %v523
      %v547 = vmul.f32 %v508, %v523
      %v548 = vmul.f32 %v509, %v523
      %v549 = vmul.f32 %v510, %v523
      %v550 = vmul.f32 %v511, %v523
      %v551 = vmul.f32 %v512, %v523
      %v552 = vmul.f32 %v513, %v523
      %v553 = vmul.f32 %v514, %v523
      %v554 = vmul.f32 %v515, %v523
      %v555 = vmul.f32 %v516, %v523
      %v556 = vmul.f32 %v517, %v523
      %v557 = vld [vmem:[%s2] sm:$0x1]
      %v559 = vlaneseq
      %v560 = vshrl.u32 %v559, 7
      %v561 = vsub.s32 0, %v560
      %v562 = vrot.slane %v557, %v561
      %v564 = vadd.f32 %v525, %v562
      %v565 = vadd.f32 %v526, %v562
      %v566 = vadd.f32 %v527, %v562
      %v567 = vadd.f32 %v528, %v562
      %v568 = vadd.f32 %v529, %v562
      %v569 = vadd.f32 %v530, %v562
      %v570 = vadd.f32 %v531, %v562
      %v571 = vadd.f32 %v532, %v562
      %v572 = vadd.f32 %v533, %v562
      %v573 = vadd.f32 %v534, %v562
      %v574 = vadd.f32 %v535, %v562
      %v575 = vadd.f32 %v536, %v562
      %v576 = vadd.f32 %v537, %v562
      %v577 = vadd.f32 %v538, %v562
      %v578 = vadd.f32 %v539, %v562
      %v579 = vadd.f32 %v540, %v562
      %v580 = vadd.f32 %v541, %v562
      %v581 = vadd.f32 %v542, %v562
      %v582 = vadd.f32 %v543, %v562
      %v583 = vadd.f32 %v544, %v562
      %v584 = vadd.f32 %v545, %v562
      %v585 = vadd.f32 %v546, %v562
      %v586 = vadd.f32 %v547, %v562
      %v587 = vadd.f32 %v548, %v562
      %v588 = vadd.f32 %v549, %v562
      %v589 = vadd.f32 %v550, %v562
      %v590 = vadd.f32 %v551, %v562
      %v591 = vadd.f32 %v552, %v562
      %v592 = vadd.f32 %v553, %v562
      %v593 = vadd.f32 %v554, %v562
      %v594 = vadd.f32 %v555, %v562
      %v595 = vadd.f32 %v556, %v562
      %v596 = vmax.f32 %v564, 0.0
      %v597 = vmax.f32 %v565, 0.0
      %v598 = vmax.f32 %v566, 0.0
      %v599 = vmax.f32 %v567, 0.0
      %v600 = vmax.f32 %v568, 0.0
      %v601 = vmax.f32 %v569, 0.0
      %v602 = vmax.f32 %v570, 0.0
      %v603 = vmax.f32 %v571, 0.0
      %v604 = vmax.f32 %v572, 0.0
      %v605 = vmax.f32 %v573, 0.0
      %v606 = vmax.f32 %v574, 0.0
      %v607 = vmax.f32 %v575, 0.0
      %v608 = vmax.f32 %v576, 0.0
      %v609 = vmax.f32 %v577, 0.0
      %v610 = vmax.f32 %v578, 0.0
      %v611 = vmax.f32 %v579, 0.0
      %v612 = vmax.f32 %v580, 0.0
      %v613 = vmax.f32 %v581, 0.0
      %v614 = vmax.f32 %v582, 0.0
      %v615 = vmax.f32 %v583, 0.0
      %v616 = vmax.f32 %v584, 0.0
      %v617 = vmax.f32 %v585, 0.0
      %v618 = vmax.f32 %v586, 0.0
      %v619 = vmax.f32 %v587, 0.0
      %v620 = vmax.f32 %v588, 0.0
      %v621 = vmax.f32 %v589, 0.0
      %v622 = vmax.f32 %v590, 0.0
      %v623 = vmax.f32 %v591, 0.0
      %v624 = vmax.f32 %v592, 0.0
      %v625 = vmax.f32 %v593, 0.0
      %v626 = vmax.f32 %v594, 0.0
      %v627 = vmax.f32 %v595, 0.0
      %v628 = vpack.c.bf16 %v597, %v596
      %v629 = vpack.c.bf16 %v599, %v598
      %v630 = vpack.c.bf16 %v601, %v600
      %v631 = vpack.c.bf16 %v603, %v602
      %v632 = vpack.c.bf16 %v605, %v604
      %v633 = vpack.c.bf16 %v607, %v606
      %v634 = vpack.c.bf16 %v609, %v608
      %v635 = vpack.c.bf16 %v611, %v610
      %v636 = vpack.c.bf16 %v613, %v612
      %v637 = vpack.c.bf16 %v615, %v614
      %v638 = vpack.c.bf16 %v617, %v616
      %v639 = vpack.c.bf16 %v619, %v618
      %v640 = vpack.c.bf16 %v621, %v620
      %v641 = vpack.c.bf16 %v623, %v622
      %v642 = vpack.c.bf16 %v625, %v624
      %v643 = vpack.c.bf16 %v627, %v626
      %v644 = vld [vmem:[%s3] sm:$0xf]
      %v645 = vld [vmem:[%s3 + $0x4] sm:$0xf]
      %v646 = vld [vmem:[%s4] sm:$0x1]
      %v648 = vlaneseq
      %v649 = vshrl.u32 %v648, 7
      %v650 = vsub.s32 0, %v649
      %v651 = vrot.slane %v646, %v650
      %v655 = vunpack.c.l.b16 %v644
      %v656 = vunpack.c.l.b16 %v645
      %v657 = vpack.c.b16 %v656, %v655
      %vm659 = vcmask 130048
      %v661 = vsel %vm659, %v628, 0
      %v664 = vsel %vm659, %v629, 0
      %v667 = vsel %vm659, %v630, 0
      %v670 = vsel %vm659, %v631, 0
      %v673 = vsel %vm659, %v632, 0
      %v676 = vsel %vm659, %v633, 0
      %v679 = vsel %vm659, %v634, 0
      %v682 = vsel %vm659, %v635, 0
      %v685 = vsel %vm659, %v636, 0
      %v688 = vsel %vm659, %v637, 0
      %v691 = vsel %vm659, %v638, 0
      %v694 = vsel %vm659, %v639, 0
      %v697 = vsel %vm659, %v640, 0
      %v700 = vsel %vm659, %v641, 0
      %v703 = vsel %vm659, %v642, 0
      %v706 = vsel %vm659, %v643, 0
      %708 = vmatprep.subr.bf16.mxu0 0
      %709 = vmatpush1.bf16.msra.mxu0 %v657
      %710 = vmatprep.subr.bf16.mxu0 0
      %711 = vmatpush1.bf16.msra.mxu0 0
      %712 = vmatprep.subr.bf16.mxu0 0
      %713 = vmatpush1.bf16.msra.mxu0 0
      %714 = vmatprep.subr.bf16.mxu0 0
      %715 = vmatpush1.bf16.msra.mxu0 0
      %716 = vmatprep.subr.bf16.mxu0 0
      %717 = vmatpush1.bf16.msra.mxu0 0
      %718 = vmatprep.subr.bf16.mxu0 0
      %719 = vmatpush1.bf16.msra.mxu0 0
      %720 = vmatprep.subr.bf16.mxu0 0
      %721 = vmatpush1.bf16.msra.mxu0 0
      %722 = vmatprep.subr.bf16.mxu0 0
      %723 = vmatpush1.bf16.msra.mxu0 0
      %724 = vmatprep.subr.bf16.mxu0 0
      %725 = vmatpush1.bf16.msra.mxu0 0
      %726 = vmatprep.subr.bf16.mxu0 0
      %727 = vmatpush1.bf16.msra.mxu0 0
      %728 = vmatprep.subr.bf16.mxu0 0
      %729 = vmatpush1.bf16.msra.mxu0 0
      %730 = vmatprep.subr.bf16.mxu0 0
      %731 = vmatpush1.bf16.msra.mxu0 0
      %732 = vmatprep.subr.bf16.mxu0 0
      %733 = vmatpush1.bf16.msra.mxu0 0
      %734 = vmatprep.subr.bf16.mxu0 0
      %735 = vmatpush1.bf16.msra.mxu0 0
      %736 = vmatprep.subr.bf16.mxu0 0
      %737 = vmatpush1.bf16.msra.mxu0 0
      %738 = vmatprep.subr.bf16.mxu0 0
      %739 = vmatpush1.bf16.msra.mxu0 0
      %740 = vmatprep.mubr.bf16.mxu0 0
      %741 = vmatmul.mubr.bf16.gmra.mrb[0].mxu0 %v661
      %v742 = vpop.f32.mrb[0].mxu0
      %v743 = vadd.f32 %v651, %v742
      %v744 = vpop.f32.mrb[0].mxu0
      %v745 = vpop.f32.mrb[0].mxu0
      %v746 = vadd.f32 %v651, %v745
      %v747 = vpop.f32.mrb[0].mxu0
      %748 = vmatprep.mubr.bf16.mxu0 0
      %749 = vmatmul.mubr.bf16.gmra.mrb[0].mxu0 %v664
      %v750 = vpop.f32.mrb[0].mxu0
      %v751 = vadd.f32 %v651, %v750
      %v752 = vpop.f32.mrb[0].mxu0
      %v753 = vpop.f32.mrb[0].mxu0
      %v754 = vadd.f32 %v651, %v753
      %v755 = vpop.f32.mrb[0].mxu0
      %756 = vmatprep.mubr.bf16.mxu0 0
      %757 = vmatmul.mubr.bf16.gmra.mrb[0].mxu0 %v667
      %v758 = vpop.f32.mrb[0].mxu0
      %v759 = vadd.f32 %v651, %v758
      %v760 = vpop.f32.mrb[0].mxu0
      %v761 = vpop.f32.mrb[0].mxu0
      %v762 = vadd.f32 %v651, %v761
      %v763 = vpop.f32.mrb[0].mxu0
      %764 = vmatprep.mubr.bf16.mxu0 0
      %765 = vmatmul.mubr.bf16.gmra.mrb[0].mxu0 %v670
      %v766 = vpop.f32.mrb[0].mxu0
      %v767 = vadd.f32 %v651, %v766
      %v768 = vpop.f32.mrb[0].mxu0
      %v769 = vpop.f32.mrb[0].mxu0
      %v770 = vadd.f32 %v651, %v769
      %v771 = vpop.f32.mrb[0].mxu0
      %772 = vmatprep.mubr.bf16.mxu0 0
      %773 = vmatmul.mubr.bf16.gmra.mrb[0].mxu0 %v673
      %v774 = vpop.f32.mrb[0].mxu0
      %v775 = vadd.f32 %v651, %v774
      %v776 = vpop.f32.mrb[0].mxu0
      %v777 = vpop.f32.mrb[0].mxu0
      %v778 = vadd.f32 %v651, %v777
      %v779 = vpop.f32.mrb[0].mxu0
      %780 = vmatprep.mubr.bf16.mxu0 0
      %781 = vmatmul.mubr.bf16.gmra.mrb[0].mxu0 %v676
      %v782 = vpop.f32.mrb[0].mxu0
      %v783 = vadd.f32 %v651, %v782
      %v784 = vpop.f32.mrb[0].mxu0
      %v785 = vpop.f32.mrb[0].mxu0
      %v786 = vadd.f32 %v651, %v785
      %v787 = vpop.f32.mrb[0].mxu0
      %788 = vmatprep.mubr.bf16.mxu0 0
      %789 = vmatmul.mubr.bf16.gmra.mrb[0].mxu0 %v679
      %v790 = vpop.f32.mrb[0].mxu0
      %v791 = vadd.f32 %v651, %v790
      %v792 = vpop.f32.mrb[0].mxu0
      %v793 = vpop.f32.mrb[0].mxu0
      %v794 = vadd.f32 %v651, %v793
      %v795 = vpop.f32.mrb[0].mxu0
      %796 = vmatprep.mubr.bf16.mxu0 0
      %797 = vmatmul.mubr.bf16.gmra.mrb[0].mxu0 %v682
      %v798 = vpop.f32.mrb[0].mxu0
      %v799 = vadd.f32 %v651, %v798
      %v800 = vpop.f32.mrb[0].mxu0
      %v801 = vpop.f32.mrb[0].mxu0
      %v802 = vadd.f32 %v651, %v801
      %v803 = vpop.f32.mrb[0].mxu0
      %804 = vmatprep.mubr.bf16.mxu0 0
      %805 = vmatmul.mubr.bf16.gmra.mrb[0].mxu0 %v685
      %v806 = vpop.f32.mrb[0].mxu0
      %v807 = vadd.f32 %v651, %v806
      %v808 = vpop.f32.mrb[0].mxu0
      %v809 = vpop.f32.mrb[0].mxu0
      %v810 = vadd.f32 %v651, %v809
      %v811 = vpop.f32.mrb[0].mxu0
      %812 = vmatprep.mubr.bf16.mxu0 0
      %813 = vmatmul.mubr.bf16.gmra.mrb[0].mxu0 %v688
      %v814 = vpop.f32.mrb[0].mxu0
      %v815 = vadd.f32 %v651, %v814
      %v816 = vpop.f32.mrb[0].mxu0
      %v817 = vpop.f32.mrb[0].mxu0
      %v818 = vadd.f32 %v651, %v817
      %v819 = vpop.f32.mrb[0].mxu0
      %820 = vmatprep.mubr.bf16.mxu0 0
      %821 = vmatmul.mubr.bf16.gmra.mrb[0].mxu0 %v691
      %v822 = vpop.f32.mrb[0].mxu0
      %v823 = vadd.f32 %v651, %v822
      %v824 = vpop.f32.mrb[0].mxu0
      %v825 = vpop.f32.mrb[0].mxu0
      %v826 = vadd.f32 %v651, %v825
      %v827 = vpop.f32.mrb[0].mxu0
      %828 = vmatprep.mubr.bf16.mxu0 0
      %829 = vmatmul.mubr.bf16.gmra.mrb[0].mxu0 %v694
      %v830 = vpop.f32.mrb[0].mxu0
      %v831 = vadd.f32 %v651, %v830
      %v832 = vpop.f32.mrb[0].mxu0
      %v833 = vpop.f32.mrb[0].mxu0
      %v834 = vadd.f32 %v651, %v833
      %v835 = vpop.f32.mrb[0].mxu0
      %836 = vmatprep.mubr.bf16.mxu0 0
      %837 = vmatmul.mubr.bf16.gmra.mrb[0].mxu0 %v697
      %v838 = vpop.f32.mrb[0].mxu0
      %v839 = vadd.f32 %v651, %v838
      %v840 = vpop.f32.mrb[0].mxu0
      %v841 = vpop.f32.mrb[0].mxu0
      %v842 = vadd.f32 %v651, %v841
      %v843 = vpop.f32.mrb[0].mxu0
      %844 = vmatprep.mubr.bf16.mxu0 0
      %845 = vmatmul.mubr.bf16.gmra.mrb[0].mxu0 %v700
      %v846 = vpop.f32.mrb[0].mxu0
      %v847 = vadd.f32 %v651, %v846
      %v848 = vpop.f32.mrb[0].mxu0
      %v849 = vpop.f32.mrb[0].mxu0
      %v850 = vadd.f32 %v651, %v849
      %v851 = vpop.f32.mrb[0].mxu0
      %852 = vmatprep.mubr.bf16.mxu0 0
      %853 = vmatmul.mubr.bf16.gmra.mrb[0].mxu0 %v703
      %v854 = vpop.f32.mrb[0].mxu0
      %v855 = vadd.f32 %v651, %v854
      %v856 = vpop.f32.mrb[0].mxu0
      %v857 = vpop.f32.mrb[0].mxu0
      %v858 = vadd.f32 %v651, %v857
      %v859 = vpop.f32.mrb[0].mxu0
      %860 = vmatprep.mubr.bf16.mxu0 0
      %861 = vmatmul.mubr.bf16.gmra.mrb[0].mxu0 %v706
      %v862 = vpop.f32.mrb[0].mxu0
      %v863 = vadd.f32 %v651, %v862
      %v864 = vpop.f32.mrb[0].mxu0
      %v865 = vpop.f32.mrb[0].mxu0
      %v866 = vadd.f32 %v651, %v865
      %v867 = vpop.f32.mrb[0].mxu0
      %868 = vdwg.mxu0
      %v869 = vld [vmem:[%s5] sm:$0x1]
      %v871 = vlaneseq
      %v872 = vshrl.u32 %v871, 7
      %v873 = vsub.s32 0, %v872
      %v874 = vrot.slane %v869, %v873
      %v876 = vmul.f32 %v743, %v874
      %v877 = vmul.f32 %v746, %v874
      %v878 = vmul.f32 %v751, %v874
      %v879 = vmul.f32 %v754, %v874
      %v880 = vmul.f32 %v759, %v874
      %v881 = vmul.f32 %v762, %v874
      %v882 = vmul.f32 %v767, %v874
      %v883 = vmul.f32 %v770, %v874
      %v884 = vmul.f32 %v775, %v874
      %v885 = vmul.f32 %v778, %v874
      %v886 = vmul.f32 %v783, %v874
      %v887 = vmul.f32 %v786, %v874
      %v888 = vmul.f32 %v791, %v874
      %v889 = vmul.f32 %v794, %v874
      %v890 = vmul.f32 %v799, %v874
      %v891 = vmul.f32 %v802, %v874
      %v892 = vmul.f32 %v807, %v874
      %v893 = vmul.f32 %v810, %v874
      %v894 = vmul.f32 %v815, %v874
      %v895 = vmul.f32 %v818, %v874
      %v896 = vmul.f32 %v823, %v874
      %v897 = vmul.f32 %v826, %v874
      %v898 = vmul.f32 %v831, %v874
      %v899 = vmul.f32 %v834, %v874
      %v900 = vmul.f32 %v839, %v874
      %v901 = vmul.f32 %v842, %v874
      %v902 = vmul.f32 %v847, %v874
      %v903 = vmul.f32 %v850, %v874
      %v904 = vmul.f32 %v855, %v874
      %v905 = vmul.f32 %v858, %v874
      %v906 = vmul.f32 %v863, %v874
      %v907 = vmul.f32 %v866, %v874
      %v908 = vld [vmem:[%s6] sm:$0x1]
      %v910 = vlaneseq
      %v911 = vshrl.u32 %v910, 7
      %v912 = vsub.s32 0, %v911
      %v913 = vrot.slane %v908, %v912
      %v915 = vadd.f32 %v876, %v913
      %v916 = vadd.f32 %v877, %v913
      %v917 = vadd.f32 %v878, %v913
      %v918 = vadd.f32 %v879, %v913
      %v919 = vadd.f32 %v880, %v913
      %v920 = vadd.f32 %v881, %v913
      %v921 = vadd.f32 %v882, %v913
      %v922 = vadd.f32 %v883, %v913
      %v923 = vadd.f32 %v884, %v913
      %v924 = vadd.f32 %v885, %v913
      %v925 = vadd.f32 %v886, %v913
      %v926 = vadd.f32 %v887, %v913
      %v927 = vadd.f32 %v888, %v913
      %v928 = vadd.f32 %v889, %v913
      %v929 = vadd.f32 %v890, %v913
      %v930 = vadd.f32 %v891, %v913
      %v931 = vadd.f32 %v892, %v913
      %v932 = vadd.f32 %v893, %v913
      %v933 = vadd.f32 %v894, %v913
      %v934 = vadd.f32 %v895, %v913
      %v935 = vadd.f32 %v896, %v913
      %v936 = vadd.f32 %v897, %v913
      %v937 = vadd.f32 %v898, %v913
      %v938 = vadd.f32 %v899, %v913
      %v939 = vadd.f32 %v900, %v913
      %v940 = vadd.f32 %v901, %v913
      %v941 = vadd.f32 %v902, %v913
      %v942 = vadd.f32 %v903, %v913
      %v943 = vadd.f32 %v904, %v913
      %v944 = vadd.f32 %v905, %v913
      %v945 = vadd.f32 %v906, %v913
      %v946 = vadd.f32 %v907, %v913
      %v947 = vmax.f32 %v915, 0.0
      %v948 = vmax.f32 %v916, 0.0
      %v949 = vmax.f32 %v917, 0.0
      %v950 = vmax.f32 %v918, 0.0
      %v951 = vmax.f32 %v919, 0.0
      %v952 = vmax.f32 %v920, 0.0
      %v953 = vmax.f32 %v921, 0.0
      %v954 = vmax.f32 %v922, 0.0
      %v955 = vmax.f32 %v923, 0.0
      %v956 = vmax.f32 %v924, 0.0
      %v957 = vmax.f32 %v925, 0.0
      %v958 = vmax.f32 %v926, 0.0
      %v959 = vmax.f32 %v927, 0.0
      %v960 = vmax.f32 %v928, 0.0
      %v961 = vmax.f32 %v929, 0.0
      %v962 = vmax.f32 %v930, 0.0
      %v963 = vmax.f32 %v931, 0.0
      %v964 = vmax.f32 %v932, 0.0
      %v965 = vmax.f32 %v933, 0.0
      %v966 = vmax.f32 %v934, 0.0
      %v967 = vmax.f32 %v935, 0.0
      %v968 = vmax.f32 %v936, 0.0
      %v969 = vmax.f32 %v937, 0.0
      %v970 = vmax.f32 %v938, 0.0
      %v971 = vmax.f32 %v939, 0.0
      %v972 = vmax.f32 %v940, 0.0
      %v973 = vmax.f32 %v941, 0.0
      %v974 = vmax.f32 %v942, 0.0
      %v975 = vmax.f32 %v943, 0.0
      %v976 = vmax.f32 %v944, 0.0
      %v977 = vmax.f32 %v945, 0.0
      %v978 = vmax.f32 %v946, 0.0
      %v979 = vpack.c.bf16 %v948, %v947
      %v980 = vpack.c.bf16 %v950, %v949
      %v981 = vpack.c.bf16 %v952, %v951
      %v982 = vpack.c.bf16 %v954, %v953
      %v983 = vpack.c.bf16 %v956, %v955
      %v984 = vpack.c.bf16 %v958, %v957
      %v985 = vpack.c.bf16 %v960, %v959
      %v986 = vpack.c.bf16 %v962, %v961
      %v987 = vpack.c.bf16 %v964, %v963
      %v988 = vpack.c.bf16 %v966, %v965
      %v989 = vpack.c.bf16 %v968, %v967
      %v990 = vpack.c.bf16 %v970, %v969
      %v991 = vpack.c.bf16 %v972, %v971
      %v992 = vpack.c.bf16 %v974, %v973
      %v993 = vpack.c.bf16 %v976, %v975
      %v994 = vpack.c.bf16 %v978, %v977
      %v1011 = vunpack.c.l.b16 %v979
      %v1012 = vunpack.c.h.b16 %v979
      %v1013 = vunpack.c.l.b16 %v980
      %v1014 = vunpack.c.h.b16 %v980
      %v1015 = vunpack.c.l.b16 %v981
      %v1016 = vunpack.c.h.b16 %v981
      %v1017 = vunpack.c.l.b16 %v982
      %v1018 = vunpack.c.h.b16 %v982
      %v1019 = vunpack.c.l.b16 %v983
      %v1020 = vunpack.c.h.b16 %v983
      %v1021 = vunpack.c.l.b16 %v984
      %v1022 = vunpack.c.h.b16 %v984
      %v1023 = vunpack.c.l.b16 %v985
      %v1024 = vunpack.c.h.b16 %v985
      %v1025 = vunpack.c.l.b16 %v986
      %v1026 = vunpack.c.h.b16 %v986
      %v1027 = vunpack.c.l.b16 %v987
      %v1028 = vunpack.c.h.b16 %v987
      %v1029 = vunpack.c.l.b16 %v988
      %v1030 = vunpack.c.h.b16 %v988
      %v1031 = vunpack.c.l.b16 %v989
      %v1032 = vunpack.c.h.b16 %v989
      %v1033 = vunpack.c.l.b16 %v990
      %v1034 = vunpack.c.h.b16 %v990
      %v1035 = vunpack.c.l.b16 %v991
      %v1036 = vunpack.c.h.b16 %v991
      %v1037 = vunpack.c.l.b16 %v992
      %v1038 = vunpack.c.h.b16 %v992
      %v1039 = vunpack.c.l.b16 %v993
      %v1040 = vunpack.c.h.b16 %v993
      %v1041 = vunpack.c.l.b16 %v994
      %v1042 = vunpack.c.h.b16 %v994
      %v1043 = vpack.c.b16 %v1011, %v1011
      %v1044 = vpack.c.b16 %v1012, %v1012
      %v1045 = vpack.c.b16 %v1013, %v1013
      %v1046 = vpack.c.b16 %v1014, %v1014
      %v1047 = vpack.c.b16 %v1015, %v1015
      %v1048 = vpack.c.b16 %v1016, %v1016
      %v1049 = vpack.c.b16 %v1017, %v1017
      %v1050 = vpack.c.b16 %v1018, %v1018
      %v1051 = vpack.c.b16 %v1019, %v1019
      %v1052 = vpack.c.b16 %v1020, %v1020
      %v1053 = vpack.c.b16 %v1021, %v1021
      %v1054 = vpack.c.b16 %v1022, %v1022
      %v1055 = vpack.c.b16 %v1023, %v1023
      %v1056 = vpack.c.b16 %v1024, %v1024
      %v1057 = vpack.c.b16 %v1025, %v1025
      %v1058 = vpack.c.b16 %v1026, %v1026
      %v1059 = vpack.c.b16 %v1027, %v1027
      %v1060 = vpack.c.b16 %v1028, %v1028
      %v1061 = vpack.c.b16 %v1029, %v1029
      %v1062 = vpack.c.b16 %v1030, %v1030
      %v1063 = vpack.c.b16 %v1031, %v1031
      %v1064 = vpack.c.b16 %v1032, %v1032
      %v1065 = vpack.c.b16 %v1033, %v1033
      %v1066 = vpack.c.b16 %v1034, %v1034
      %v1067 = vpack.c.b16 %v1035, %v1035
      %v1068 = vpack.c.b16 %v1036, %v1036
      %v1069 = vpack.c.b16 %v1037, %v1037
      %v1070 = vpack.c.b16 %v1038, %v1038
      %v1071 = vpack.c.b16 %v1039, %v1039
      %v1072 = vpack.c.b16 %v1040, %v1040
      %v1073 = vpack.c.b16 %v1041, %v1041
      %v1074 = vpack.c.b16 %v1042, %v1042
      %vm1107 = vcmask 125952
      %1108 = vst.msk [vmem:[%s477] sm:$0xf] %vm1107, %v1043
      %1109 = vst.msk [vmem:[%s477 + $0x4] sm:$0xf] %vm1107, %v1044
      %1110 = vst.msk [vmem:[%s477 + $0x8] sm:$0xf] %vm1107, %v1045
      %1111 = vst.msk [vmem:[%s477 + $0xc] sm:$0xf] %vm1107, %v1046
      %1112 = vst.msk [vmem:[%s477 + $0x10] sm:$0xf] %vm1107, %v1047
      %1113 = vst.msk [vmem:[%s477 + $0x14] sm:$0xf] %vm1107, %v1048
      %1114 = vst.msk [vmem:[%s477 + $0x18] sm:$0xf] %vm1107, %v1049
      %1115 = vst.msk [vmem:[%s477 + $0x1c] sm:$0xf] %vm1107, %v1050
      %1116 = vst.msk [vmem:[%s477 + $0x20] sm:$0xf] %vm1107, %v1051
      %1117 = vst.msk [vmem:[%s477 + $0x24] sm:$0xf] %vm1107, %v1052
      %1118 = vst.msk [vmem:[%s477 + $0x28] sm:$0xf] %vm1107, %v1053
      %1119 = vst.msk [vmem:[%s477 + $0x2c] sm:$0xf] %vm1107, %v1054
      %1120 = vst.msk [vmem:[%s477 + $0x30] sm:$0xf] %vm1107, %v1055
      %1121 = vst.msk [vmem:[%s477 + $0x34] sm:$0xf] %vm1107, %v1056
      %1122 = vst.msk [vmem:[%s477 + $0x38] sm:$0xf] %vm1107, %v1057
      %1123 = vst.msk [vmem:[%s477 + $0x3c] sm:$0xf] %vm1107, %v1058
      %1124 = vst.msk [vmem:[%s477 + $0x40] sm:$0xf] %vm1107, %v1059
      %1125 = vst.msk [vmem:[%s477 + $0x44] sm:$0xf] %vm1107, %v1060
      %1126 = vst.msk [vmem:[%s477 + $0x48] sm:$0xf] %vm1107, %v1061
      %1127 = vst.msk [vmem:[%s477 + $0x4c] sm:$0xf] %vm1107, %v1062
      %1128 = vst.msk [vmem:[%s477 + $0x50] sm:$0xf] %vm1107, %v1063
      %1129 = vst.msk [vmem:[%s477 + $0x54] sm:$0xf] %vm1107, %v1064
      %1130 = vst.msk [vmem:[%s477 + $0x58] sm:$0xf] %vm1107, %v1065
      %1131 = vst.msk [vmem:[%s477 + $0x5c] sm:$0xf] %vm1107, %v1066
      %1132 = vst.msk [vmem:[%s477 + $0x60] sm:$0xf] %vm1107, %v1067
      %1133 = vst.msk [vmem:[%s477 + $0x64] sm:$0xf] %vm1107, %v1068
      %1134 = vst.msk [vmem:[%s477 + $0x68] sm:$0xf] %vm1107, %v1069
      %1135 = vst.msk [vmem:[%s477 + $0x6c] sm:$0xf] %vm1107, %v1070
      %1136 = vst.msk [vmem:[%s477 + $0x70] sm:$0xf] %vm1107, %v1071
      %1137 = vst.msk [vmem:[%s477 + $0x74] sm:$0xf] %vm1107, %v1072
      %1138 = vst.msk [vmem:[%s477 + $0x78] sm:$0xf] %vm1107, %v1073
      %1139 = vst.msk [vmem:[%s477 + $0x7c] sm:$0xf] %vm1107, %v1074
      %v1140 = vld [vmem:[%s7] sm:$0x1]
      %v1142 = vlaneseq
      %v1143 = vshrl.u32 %v1142, 7
      %v1144 = vsub.s32 0, %v1143
      %v1145 = vrot.slane %v1140, %v1144
      %v1147 = vmul.f32 %v486, %v1145
      %v1148 = vmul.f32 %v487, %v1145
      %v1149 = vmul.f32 %v488, %v1145
      %v1150 = vmul.f32 %v489, %v1145
      %v1151 = vmul.f32 %v490, %v1145
      %v1152 = vmul.f32 %v491, %v1145
      %v1153 = vmul.f32 %v492, %v1145
      %v1154 = vmul.f32 %v493, %v1145
      %v1155 = vmul.f32 %v494, %v1145
      %v1156 = vmul.f32 %v495, %v1145
      %v1157 = vmul.f32 %v496, %v1145
      %v1158 = vmul.f32 %v497, %v1145
      %v1159 = vmul.f32 %v498, %v1145
      %v1160 = vmul.f32 %v499, %v1145
      %v1161 = vmul.f32 %v500, %v1145
      %v1162 = vmul.f32 %v501, %v1145
      %v1163 = vmul.f32 %v502, %v1145
      %v1164 = vmul.f32 %v503, %v1145
      %v1165 = vmul.f32 %v504, %v1145
      %v1166 = vmul.f32 %v505, %v1145
      %v1167 = vmul.f32 %v506, %v1145
      %v1168 = vmul.f32 %v507, %v1145
      %v1169 = vmul.f32 %v508, %v1145
      %v1170 = vmul.f32 %v509, %v1145
      %v1171 = vmul.f32 %v510, %v1145
      %v1172 = vmul.f32 %v511, %v1145
      %v1173 = vmul.f32 %v512, %v1145
      %v1174 = vmul.f32 %v513, %v1145
      %v1175 = vmul.f32 %v514, %v1145
      %v1176 = vmul.f32 %v515, %v1145
      %v1177 = vmul.f32 %v516, %v1145
      %v1178 = vmul.f32 %v517, %v1145
      %v1179 = vld [vmem:[%s8] sm:$0x1]
      %v1181 = vlaneseq
      %v1182 = vshrl.u32 %v1181, 7
      %v1183 = vsub.s32 0, %v1182
      %v1184 = vrot.slane %v1179, %v1183
      %v1186 = vadd.f32 %v1147, %v1184
      %v1187 = vadd.f32 %v1148, %v1184
      %v1188 = vadd.f32 %v1149, %v1184
      %v1189 = vadd.f32 %v1150, %v1184
      %v1190 = vadd.f32 %v1151, %v1184
      %v1191 = vadd.f32 %v1152, %v1184
      %v1192 = vadd.f32 %v1153, %v1184
      %v1193 = vadd.f32 %v1154, %v1184
      %v1194 = vadd.f32 %v1155, %v1184
      %v1195 = vadd.f32 %v1156, %v1184
      %v1196 = vadd.f32 %v1157, %v1184
      %v1197 = vadd.f32 %v1158, %v1184
      %v1198 = vadd.f32 %v1159, %v1184
      %v1199 = vadd.f32 %v1160, %v1184
      %v1200 = vadd.f32 %v1161, %v1184
      %v1201 = vadd.f32 %v1162, %v1184
      %v1202 = vadd.f32 %v1163, %v1184
      %v1203 = vadd.f32 %v1164, %v1184
      %v1204 = vadd.f32 %v1165, %v1184
      %v1205 = vadd.f32 %v1166, %v1184
      %v1206 = vadd.f32 %v1167, %v1184
      %v1207 = vadd.f32 %v1168, %v1184
      %v1208 = vadd.f32 %v1169, %v1184
      %v1209 = vadd.f32 %v1170, %v1184
      %v1210 = vadd.f32 %v1171, %v1184
      %v1211 = vadd.f32 %v1172, %v1184
      %v1212 = vadd.f32 %v1173, %v1184
      %v1213 = vadd.f32 %v1174, %v1184
      %v1214 = vadd.f32 %v1175, %v1184
      %v1215 = vadd.f32 %v1176, %v1184
      %v1216 = vadd.f32 %v1177, %v1184
      %v1217 = vadd.f32 %v1178, %v1184
      %v1218 = vmax.f32 %v1186, 0.0
      %v1219 = vmax.f32 %v1187, 0.0
      %v1220 = vmax.f32 %v1188, 0.0
      %v1221 = vmax.f32 %v1189, 0.0
      %v1222 = vmax.f32 %v1190, 0.0
      %v1223 = vmax.f32 %v1191, 0.0
      %v1224 = vmax.f32 %v1192, 0.0
      %v1225 = vmax.f32 %v1193, 0.0
      %v1226 = vmax.f32 %v1194, 0.0
      %v1227 = vmax.f32 %v1195, 0.0
      %v1228 = vmax.f32 %v1196, 0.0
      %v1229 = vmax.f32 %v1197, 0.0
      %v1230 = vmax.f32 %v1198, 0.0
      %v1231 = vmax.f32 %v1199, 0.0
      %v1232 = vmax.f32 %v1200, 0.0
      %v1233 = vmax.f32 %v1201, 0.0
      %v1234 = vmax.f32 %v1202, 0.0
      %v1235 = vmax.f32 %v1203, 0.0
      %v1236 = vmax.f32 %v1204, 0.0
      %v1237 = vmax.f32 %v1205, 0.0
      %v1238 = vmax.f32 %v1206, 0.0
      %v1239 = vmax.f32 %v1207, 0.0
      %v1240 = vmax.f32 %v1208, 0.0
      %v1241 = vmax.f32 %v1209, 0.0
      %v1242 = vmax.f32 %v1210, 0.0
      %v1243 = vmax.f32 %v1211, 0.0
      %v1244 = vmax.f32 %v1212, 0.0
      %v1245 = vmax.f32 %v1213, 0.0
      %v1246 = vmax.f32 %v1214, 0.0
      %v1247 = vmax.f32 %v1215, 0.0
      %v1248 = vmax.f32 %v1216, 0.0
      %v1249 = vmax.f32 %v1217, 0.0
      %v1250 = vpack.c.bf16 %v1219, %v1218
      %v1251 = vpack.c.bf16 %v1221, %v1220
      %v1252 = vpack.c.bf16 %v1223, %v1222
      %v1253 = vpack.c.bf16 %v1225, %v1224
      %v1254 = vpack.c.bf16 %v1227, %v1226
      %v1255 = vpack.c.bf16 %v1229, %v1228
      %v1256 = vpack.c.bf16 %v1231, %v1230
      %v1257 = vpack.c.bf16 %v1233, %v1232
      %v1258 = vpack.c.bf16 %v1235, %v1234
      %v1259 = vpack.c.bf16 %v1237, %v1236
      %v1260 = vpack.c.bf16 %v1239, %v1238
      %v1261 = vpack.c.bf16 %v1241, %v1240
      %v1262 = vpack.c.bf16 %v1243, %v1242
      %v1263 = vpack.c.bf16 %v1245, %v1244
      %v1264 = vpack.c.bf16 %v1247, %v1246
      %v1265 = vpack.c.bf16 %v1249, %v1248
      %v1266 = vld [vmem:[%s9] sm:$0xf]
      %v1267 = vld [vmem:[%s9 + $0x4] sm:$0xf]
      %v1268 = vld [vmem:[%s10] sm:$0x1]
      %v1270 = vlaneseq
      %v1271 = vshrl.u32 %v1270, 7
      %v1272 = vsub.s32 0, %v1271
      %v1273 = vrot.slane %v1268, %v1272
      %v1277 = vunpack.c.l.b16 %v1266
      %v1278 = vunpack.c.l.b16 %v1267
      %v1279 = vpack.c.b16 %v1278, %v1277
      %v1282 = vsel %vm659, %v1250, 0
      %v1285 = vsel %vm659, %v1251, 0
      %v1288 = vsel %vm659, %v1252, 0
      %v1291 = vsel %vm659, %v1253, 0
      %v1294 = vsel %vm659, %v1254, 0
      %v1297 = vsel %vm659, %v1255, 0
      %v1300 = vsel %vm659, %v1256, 0
      %v1303 = vsel %vm659, %v1257, 0
      %v1306 = vsel %vm659, %v1258, 0
      %v1309 = vsel %vm659, %v1259, 0
      %v1312 = vsel %vm659, %v1260, 0
      %v1315 = vsel %vm659, %v1261, 0
      %v1318 = vsel %vm659, %v1262, 0
      %v1321 = vsel %vm659, %v1263, 0
      %v1324 = vsel %vm659, %v1264, 0
      %v1327 = vsel %vm659, %v1265, 0
      %1329 = vmatprep.subr.bf16.mxu0 0
      %1330 = vmatpush1.bf16.msra.mxu0 %v1279
      %1331 = vmatprep.subr.bf16.mxu0 0
      %1332 = vmatpush1.bf16.msra.mxu0 0
      %1333 = vmatprep.subr.bf16.mxu0 0
      %1334 = vmatpush1.bf16.msra.mxu0 0
      %1335 = vmatprep.subr.bf16.mxu0 0
      %1336 = vmatpush1.bf16.msra.mxu0 0
      %1337 = vmatprep.subr.bf16.mxu0 0
      %1338 = vmatpush1.bf16.msra.mxu0 0
      %1339 = vmatprep.subr.bf16.mxu0 0
      %1340 = vmatpush1.bf16.msra.mxu0 0
      %1341 = vmatprep.subr.bf16.mxu0 0
      %1342 = vmatpush1.bf16.msra.mxu0 0
      %1343 = vmatprep.subr.bf16.mxu0 0
      %1344 = vmatpush1.bf16.msra.mxu0 0
      %1345 = vmatprep.subr.bf16.mxu0 0
      %1346 = vmatpush1.bf16.msra.mxu0 0
      %1347 = vmatprep.subr.bf16.mxu0 0
      %1348 = vmatpush1.bf16.msra.mxu0 0
      %1349 = vmatprep.subr.bf16.mxu0 0
      %1350 = vmatpush1.bf16.msra.mxu0 0
      %1351 = vmatprep.subr.bf16.mxu0 0
      %1352 = vmatpush1.bf16.msra.mxu0 0
      %1353 = vmatprep.subr.bf16.mxu0 0
      %1354 = vmatpush1.bf16.msra.mxu0 0
      %1355 = vmatprep.subr.bf16.mxu0 0
      %1356 = vmatpush1.bf16.msra.mxu0 0
      %1357 = vmatprep.subr.bf16.mxu0 0
      %1358 = vmatpush1.bf16.msra.mxu0 0
      %1359 = vmatprep.subr.bf16.mxu0 0
      %1360 = vmatpush1.bf16.msra.mxu0 0
      %1361 = vmatprep.mubr.bf16.mxu0 0
      %1362 = vmatmul.mubr.bf16.gmra.mrb[0].mxu0 %v1282
      %v1363 = vpop.f32.mrb[0].mxu0
      %v1364 = vadd.f32 %v1273, %v1363
      %v1365 = vpop.f32.mrb[0].mxu0
      %v1366 = vpop.f32.mrb[0].mxu0
      %v1367 = vadd.f32 %v1273, %v1366
      %v1368 = vpop.f32.mrb[0].mxu0
      %1369 = vmatprep.mubr.bf16.mxu0 0
      %1370 = vmatmul.mubr.bf16.gmra.mrb[0].mxu0 %v1285
      %v1371 = vpop.f32.mrb[0].mxu0
      %v1372 = vadd.f32 %v1273, %v1371
      %v1373 = vpop.f32.mrb[0].mxu0
      %v1374 = vpop.f32.mrb[0].mxu0
      %v1375 = vadd.f32 %v1273, %v1374
      %v1376 = vpop.f32.mrb[0].mxu0
      %1377 = vmatprep.mubr.bf16.mxu0 0
      %1378 = vmatmul.mubr.bf16.gmra.mrb[0].mxu0 %v1288
      %v1379 = vpop.f32.mrb[0].mxu0
      %v1380 = vadd.f32 %v1273, %v1379
      %v1381 = vpop.f32.mrb[0].mxu0
      %v1382 = vpop.f32.mrb[0].mxu0
      %v1383 = vadd.f32 %v1273, %v1382
      %v1384 = vpop.f32.mrb[0].mxu0
      %1385 = vmatprep.mubr.bf16.mxu0 0
      %1386 = vmatmul.mubr.bf16.gmra.mrb[0].mxu0 %v1291
      %v1387 = vpop.f32.mrb[0].mxu0
      %v1388 = vadd.f32 %v1273, %v1387
      %v1389 = vpop.f32.mrb[0].mxu0
      %v1390 = vpop.f32.mrb[0].mxu0
      %v1391 = vadd.f32 %v1273, %v1390
      %v1392 = vpop.f32.mrb[0].mxu0
      %1393 = vmatprep.mubr.bf16.mxu0 0
      %1394 = vmatmul.mubr.bf16.gmra.mrb[0].mxu0 %v1294
      %v1395 = vpop.f32.mrb[0].mxu0
      %v1396 = vadd.f32 %v1273, %v1395
      %v1397 = vpop.f32.mrb[0].mxu0
      %v1398 = vpop.f32.mrb[0].mxu0
      %v1399 = vadd.f32 %v1273, %v1398
      %v1400 = vpop.f32.mrb[0].mxu0
      %1401 = vmatprep.mubr.bf16.mxu0 0
      %1402 = vmatmul.mubr.bf16.gmra.mrb[0].mxu0 %v1297
      %v1403 = vpop.f32.mrb[0].mxu0
      %v1404 = vadd.f32 %v1273, %v1403
      %v1405 = vpop.f32.mrb[0].mxu0
      %v1406 = vpop.f32.mrb[0].mxu0
      %v1407 = vadd.f32 %v1273, %v1406
      %v1408 = vpop.f32.mrb[0].mxu0
      %1409 = vmatprep.mubr.bf16.mxu0 0
      %1410 = vmatmul.mubr.bf16.gmra.mrb[0].mxu0 %v1300
      %v1411 = vpop.f32.mrb[0].mxu0
      %v1412 = vadd.f32 %v1273, %v1411
      %v1413 = vpop.f32.mrb[0].mxu0
      %v1414 = vpop.f32.mrb[0].mxu0
      %v1415 = vadd.f32 %v1273, %v1414
      %v1416 = vpop.f32.mrb[0].mxu0
      %1417 = vmatprep.mubr.bf16.mxu0 0
      %1418 = vmatmul.mubr.bf16.gmra.mrb[0].mxu0 %v1303
      %v1419 = vpop.f32.mrb[0].mxu0
      %v1420 = vadd.f32 %v1273, %v1419
      %v1421 = vpop.f32.mrb[0].mxu0
      %v1422 = vpop.f32.mrb[0].mxu0
      %v1423 = vadd.f32 %v1273, %v1422
      %v1424 = vpop.f32.mrb[0].mxu0
      %1425 = vmatprep.mubr.bf16.mxu0 0
      %1426 = vmatmul.mubr.bf16.gmra.mrb[0].mxu0 %v1306
      %v1427 = vpop.f32.mrb[0].mxu0
      %v1428 = vadd.f32 %v1273, %v1427
      %v1429 = vpop.f32.mrb[0].mxu0
      %v1430 = vpop.f32.mrb[0].mxu0
      %v1431 = vadd.f32 %v1273, %v1430
      %v1432 = vpop.f32.mrb[0].mxu0
      %1433 = vmatprep.mubr.bf16.mxu0 0
      %1434 = vmatmul.mubr.bf16.gmra.mrb[0].mxu0 %v1309
      %v1435 = vpop.f32.mrb[0].mxu0
      %v1436 = vadd.f32 %v1273, %v1435
      %v1437 = vpop.f32.mrb[0].mxu0
      %v1438 = vpop.f32.mrb[0].mxu0
      %v1439 = vadd.f32 %v1273, %v1438
      %v1440 = vpop.f32.mrb[0].mxu0
      %1441 = vmatprep.mubr.bf16.mxu0 0
      %1442 = vmatmul.mubr.bf16.gmra.mrb[0].mxu0 %v1312
      %v1443 = vpop.f32.mrb[0].mxu0
      %v1444 = vadd.f32 %v1273, %v1443
      %v1445 = vpop.f32.mrb[0].mxu0
      %v1446 = vpop.f32.mrb[0].mxu0
      %v1447 = vadd.f32 %v1273, %v1446
      %v1448 = vpop.f32.mrb[0].mxu0
      %1449 = vmatprep.mubr.bf16.mxu0 0
      %1450 = vmatmul.mubr.bf16.gmra.mrb[0].mxu0 %v1315
      %v1451 = vpop.f32.mrb[0].mxu0
      %v1452 = vadd.f32 %v1273, %v1451
      %v1453 = vpop.f32.mrb[0].mxu0
      %v1454 = vpop.f32.mrb[0].mxu0
      %v1455 = vadd.f32 %v1273, %v1454
      %v1456 = vpop.f32.mrb[0].mxu0
      %1457 = vmatprep.mubr.bf16.mxu0 0
      %1458 = vmatmul.mubr.bf16.gmra.mrb[0].mxu0 %v1318
      %v1459 = vpop.f32.mrb[0].mxu0
      %v1460 = vadd.f32 %v1273, %v1459
      %v1461 = vpop.f32.mrb[0].mxu0
      %v1462 = vpop.f32.mrb[0].mxu0
      %v1463 = vadd.f32 %v1273, %v1462
      %v1464 = vpop.f32.mrb[0].mxu0
      %1465 = vmatprep.mubr.bf16.mxu0 0
      %1466 = vmatmul.mubr.bf16.gmra.mrb[0].mxu0 %v1321
      %v1467 = vpop.f32.mrb[0].mxu0
      %v1468 = vadd.f32 %v1273, %v1467
      %v1469 = vpop.f32.mrb[0].mxu0
      %v1470 = vpop.f32.mrb[0].mxu0
      %v1471 = vadd.f32 %v1273, %v1470
      %v1472 = vpop.f32.mrb[0].mxu0
      %1473 = vmatprep.mubr.bf16.mxu0 0
      %1474 = vmatmul.mubr.bf16.gmra.mrb[0].mxu0 %v1324
      %v1475 = vpop.f32.mrb[0].mxu0
      %v1476 = vadd.f32 %v1273, %v1475
      %v1477 = vpop.f32.mrb[0].mxu0
      %v1478 = vpop.f32.mrb[0].mxu0
      %v1479 = vadd.f32 %v1273, %v1478
      %v1480 = vpop.f32.mrb[0].mxu0
      %1481 = vmatprep.mubr.bf16.mxu0 0
      %1482 = vmatmul.mubr.bf16.gmra.mrb[0].mxu0 %v1327
      %v1483 = vpop.f32.mrb[0].mxu0
      %v1484 = vadd.f32 %v1273, %v1483
      %v1485 = vpop.f32.mrb[0].mxu0
      %v1486 = vpop.f32.mrb[0].mxu0
      %v1487 = vadd.f32 %v1273, %v1486
      %v1488 = vpop.f32.mrb[0].mxu0
      %1489 = vdwg.mxu0
      %v1490 = vld [vmem:[%s11] sm:$0x1]
      %v1492 = vlaneseq
      %v1493 = vshrl.u32 %v1492, 7
      %v1494 = vsub.s32 0, %v1493
      %v1495 = vrot.slane %v1490, %v1494
      %v1497 = vmul.f32 %v1364, %v1495
      %v1498 = vmul.f32 %v1367, %v1495
      %v1499 = vmul.f32 %v1372, %v1495
      %v1500 = vmul.f32 %v1375, %v1495
      %v1501 = vmul.f32 %v1380, %v1495
      %v1502 = vmul.f32 %v1383, %v1495
      %v1503 = vmul.f32 %v1388, %v1495
      %v1504 = vmul.f32 %v1391, %v1495
      %v1505 = vmul.f32 %v1396, %v1495
      %v1506 = vmul.f32 %v1399, %v1495
      %v1507 = vmul.f32 %v1404, %v1495
      %v1508 = vmul.f32 %v1407, %v1495
      %v1509 = vmul.f32 %v1412, %v1495
      %v1510 = vmul.f32 %v1415, %v1495
      %v1511 = vmul.f32 %v1420, %v1495
      %v1512 = vmul.f32 %v1423, %v1495
      %v1513 = vmul.f32 %v1428, %v1495
      %v1514 = vmul.f32 %v1431, %v1495
      %v1515 = vmul.f32 %v1436, %v1495
      %v1516 = vmul.f32 %v1439, %v1495
      %v1517 = vmul.f32 %v1444, %v1495
      %v1518 = vmul.f32 %v1447, %v1495
      %v1519 = vmul.f32 %v1452, %v1495
      %v1520 = vmul.f32 %v1455, %v1495
      %v1521 = vmul.f32 %v1460, %v1495
      %v1522 = vmul.f32 %v1463, %v1495
      %v1523 = vmul.f32 %v1468, %v1495
      %v1524 = vmul.f32 %v1471, %v1495
      %v1525 = vmul.f32 %v1476, %v1495
      %v1526 = vmul.f32 %v1479, %v1495
      %v1527 = vmul.f32 %v1484, %v1495
      %v1528 = vmul.f32 %v1487, %v1495
      %v1529 = vld [vmem:[%s12] sm:$0x1]
      %v1531 = vlaneseq
      %v1532 = vshrl.u32 %v1531, 7
      %v1533 = vsub.s32 0, %v1532
      %v1534 = vrot.slane %v1529, %v1533
      %v1536 = vadd.f32 %v1497, %v1534
      %v1537 = vadd.f32 %v1498, %v1534
      %v1538 = vadd.f32 %v1499, %v1534
      %v1539 = vadd.f32 %v1500, %v1534
      %v1540 = vadd.f32 %v1501, %v1534
      %v1541 = vadd.f32 %v1502, %v1534
      %v1542 = vadd.f32 %v1503, %v1534
      %v1543 = vadd.f32 %v1504, %v1534
      %v1544 = vadd.f32 %v1505, %v1534
      %v1545 = vadd.f32 %v1506, %v1534
      %v1546 = vadd.f32 %v1507, %v1534
      %v1547 = vadd.f32 %v1508, %v1534
      %v1548 = vadd.f32 %v1509, %v1534
      %v1549 = vadd.f32 %v1510, %v1534
      %v1550 = vadd.f32 %v1511, %v1534
      %v1551 = vadd.f32 %v1512, %v1534
      %v1552 = vadd.f32 %v1513, %v1534
      %v1553 = vadd.f32 %v1514, %v1534
      %v1554 = vadd.f32 %v1515, %v1534
      %v1555 = vadd.f32 %v1516, %v1534
      %v1556 = vadd.f32 %v1517, %v1534
      %v1557 = vadd.f32 %v1518, %v1534
      %v1558 = vadd.f32 %v1519, %v1534
      %v1559 = vadd.f32 %v1520, %v1534
      %v1560 = vadd.f32 %v1521, %v1534
      %v1561 = vadd.f32 %v1522, %v1534
      %v1562 = vadd.f32 %v1523, %v1534
      %v1563 = vadd.f32 %v1524, %v1534
      %v1564 = vadd.f32 %v1525, %v1534
      %v1565 = vadd.f32 %v1526, %v1534
      %v1566 = vadd.f32 %v1527, %v1534
      %v1567 = vadd.f32 %v1528, %v1534
      %v1568 = vmax.f32 %v1536, 0.0
      %v1569 = vmax.f32 %v1537, 0.0
      %v1570 = vmax.f32 %v1538, 0.0
      %v1571 = vmax.f32 %v1539, 0.0
      %v1572 = vmax.f32 %v1540, 0.0
      %v1573 = vmax.f32 %v1541, 0.0
      %v1574 = vmax.f32 %v1542, 0.0
      %v1575 = vmax.f32 %v1543, 0.0
      %v1576 = vmax.f32 %v1544, 0.0
      %v1577 = vmax.f32 %v1545, 0.0
      %v1578 = vmax.f32 %v1546, 0.0
      %v1579 = vmax.f32 %v1547, 0.0
      %v1580 = vmax.f32 %v1548, 0.0
      %v1581 = vmax.f32 %v1549, 0.0
      %v1582 = vmax.f32 %v1550, 0.0
      %v1583 = vmax.f32 %v1551, 0.0
      %v1584 = vmax.f32 %v1552, 0.0
      %v1585 = vmax.f32 %v1553, 0.0
      %v1586 = vmax.f32 %v1554, 0.0
      %v1587 = vmax.f32 %v1555, 0.0
      %v1588 = vmax.f32 %v1556, 0.0
      %v1589 = vmax.f32 %v1557, 0.0
      %v1590 = vmax.f32 %v1558, 0.0
      %v1591 = vmax.f32 %v1559, 0.0
      %v1592 = vmax.f32 %v1560, 0.0
      %v1593 = vmax.f32 %v1561, 0.0
      %v1594 = vmax.f32 %v1562, 0.0
      %v1595 = vmax.f32 %v1563, 0.0
      %v1596 = vmax.f32 %v1564, 0.0
      %v1597 = vmax.f32 %v1565, 0.0
      %v1598 = vmax.f32 %v1566, 0.0
      %v1599 = vmax.f32 %v1567, 0.0
      %v1600 = vpack.c.bf16 %v1569, %v1568
      %v1601 = vpack.c.bf16 %v1571, %v1570
      %v1602 = vpack.c.bf16 %v1573, %v1572
      %v1603 = vpack.c.bf16 %v1575, %v1574
      %v1604 = vpack.c.bf16 %v1577, %v1576
      %v1605 = vpack.c.bf16 %v1579, %v1578
      %v1606 = vpack.c.bf16 %v1581, %v1580
      %v1607 = vpack.c.bf16 %v1583, %v1582
      %v1608 = vpack.c.bf16 %v1585, %v1584
      %v1609 = vpack.c.bf16 %v1587, %v1586
      %v1610 = vpack.c.bf16 %v1589, %v1588
      %v1611 = vpack.c.bf16 %v1591, %v1590
      %v1612 = vpack.c.bf16 %v1593, %v1592
      %v1613 = vpack.c.bf16 %v1595, %v1594
      %v1614 = vpack.c.bf16 %v1597, %v1596
      %v1615 = vpack.c.bf16 %v1599, %v1598
      %v1632 = vunpack.c.l.b16 %v1600
      %v1633 = vunpack.c.h.b16 %v1600
      %v1634 = vunpack.c.l.b16 %v1601
      %v1635 = vunpack.c.h.b16 %v1601
      %v1636 = vunpack.c.l.b16 %v1602
      %v1637 = vunpack.c.h.b16 %v1602
      %v1638 = vunpack.c.l.b16 %v1603
      %v1639 = vunpack.c.h.b16 %v1603
      %v1640 = vunpack.c.l.b16 %v1604
      %v1641 = vunpack.c.h.b16 %v1604
      %v1642 = vunpack.c.l.b16 %v1605
      %v1643 = vunpack.c.h.b16 %v1605
      %v1644 = vunpack.c.l.b16 %v1606
      %v1645 = vunpack.c.h.b16 %v1606
      %v1646 = vunpack.c.l.b16 %v1607
      %v1647 = vunpack.c.h.b16 %v1607
      %v1648 = vunpack.c.l.b16 %v1608
      %v1649 = vunpack.c.h.b16 %v1608
      %v1650 = vunpack.c.l.b16 %v1609
      %v1651 = vunpack.c.h.b16 %v1609
      %v1652 = vunpack.c.l.b16 %v1610
      %v1653 = vunpack.c.h.b16 %v1610
      %v1654 = vunpack.c.l.b16 %v1611
      %v1655 = vunpack.c.h.b16 %v1611
      %v1656 = vunpack.c.l.b16 %v1612
      %v1657 = vunpack.c.h.b16 %v1612
      %v1658 = vunpack.c.l.b16 %v1613
      %v1659 = vunpack.c.h.b16 %v1613
      %v1660 = vunpack.c.l.b16 %v1614
      %v1661 = vunpack.c.h.b16 %v1614
      %v1662 = vunpack.c.l.b16 %v1615
      %v1663 = vunpack.c.h.b16 %v1615
      %v1664 = vpack.c.b16 %v1632, %v1632
      %v1665 = vpack.c.b16 %v1633, %v1633
      %v1666 = vpack.c.b16 %v1634, %v1634
      %v1667 = vpack.c.b16 %v1635, %v1635
      %v1668 = vpack.c.b16 %v1636, %v1636
      %v1669 = vpack.c.b16 %v1637, %v1637
      %v1670 = vpack.c.b16 %v1638, %v1638
      %v1671 = vpack.c.b16 %v1639, %v1639
      %v1672 = vpack.c.b16 %v1640, %v1640
      %v1673 = vpack.c.b16 %v1641, %v1641
      %v1674 = vpack.c.b16 %v1642, %v1642
      %v1675 = vpack.c.b16 %v1643, %v1643
      %v1676 = vpack.c.b16 %v1644, %v1644
      %v1677 = vpack.c.b16 %v1645, %v1645
      %v1678 = vpack.c.b16 %v1646, %v1646
      %v1679 = vpack.c.b16 %v1647, %v1647
      %v1680 = vpack.c.b16 %v1648, %v1648
      %v1681 = vpack.c.b16 %v1649, %v1649
      %v1682 = vpack.c.b16 %v1650, %v1650
      %v1683 = vpack.c.b16 %v1651, %v1651
      %v1684 = vpack.c.b16 %v1652, %v1652
      %v1685 = vpack.c.b16 %v1653, %v1653
      %v1686 = vpack.c.b16 %v1654, %v1654
      %v1687 = vpack.c.b16 %v1655, %v1655
      %v1688 = vpack.c.b16 %v1656, %v1656
      %v1689 = vpack.c.b16 %v1657, %v1657
      %v1690 = vpack.c.b16 %v1658, %v1658
      %v1691 = vpack.c.b16 %v1659, %v1659
      %v1692 = vpack.c.b16 %v1660, %v1660
      %v1693 = vpack.c.b16 %v1661, %v1661
      %v1694 = vpack.c.b16 %v1662, %v1662
      %v1695 = vpack.c.b16 %v1663, %v1663
      %vm1728 = vcmask 60416
      %1729 = vst.msk [vmem:[%s483] sm:$0xf] %vm1728, %v1664
      %1730 = vst.msk [vmem:[%s483 + $0x4] sm:$0xf] %vm1728, %v1665
      %1731 = vst.msk [vmem:[%s483 + $0x8] sm:$0xf] %vm1728, %v1666
      %1732 = vst.msk [vmem:[%s483 + $0xc] sm:$0xf] %vm1728, %v1667
      %1733 = vst.msk [vmem:[%s483 + $0x10] sm:$0xf] %vm1728, %v1668
      %1734 = vst.msk [vmem:[%s483 + $0x14] sm:$0xf] %vm1728, %v1669
      %1735 = vst.msk [vmem:[%s483 + $0x18] sm:$0xf] %vm1728, %v1670
      %1736 = vst.msk [vmem:[%s483 + $0x1c] sm:$0xf] %vm1728, %v1671
      %1737 = vst.msk [vmem:[%s483 + $0x20] sm:$0xf] %vm1728, %v1672
      %1738 = vst.msk [vmem:[%s483 + $0x24] sm:$0xf] %vm1728, %v1673
      %1739 = vst.msk [vmem:[%s483 + $0x28] sm:$0xf] %vm1728, %v1674
      %1740 = vst.msk [vmem:[%s483 + $0x2c] sm:$0xf] %vm1728, %v1675
      %1741 = vst.msk [vmem:[%s483 + $0x30] sm:$0xf] %vm1728, %v1676
      %1742 = vst.msk [vmem:[%s483 + $0x34] sm:$0xf] %vm1728, %v1677
      %1743 = vst.msk [vmem:[%s483 + $0x38] sm:$0xf] %vm1728, %v1678
      %1744 = vst.msk [vmem:[%s483 + $0x3c] sm:$0xf] %vm1728, %v1679
      %1745 = vst.msk [vmem:[%s483 + $0x40] sm:$0xf] %vm1728, %v1680
      %1746 = vst.msk [vmem:[%s483 + $0x44] sm:$0xf] %vm1728, %v1681
      %1747 = vst.msk [vmem:[%s483 + $0x48] sm:$0xf] %vm1728, %v1682
      %1748 = vst.msk [vmem:[%s483 + $0x4c] sm:$0xf] %vm1728, %v1683
      %1749 = vst.msk [vmem:[%s483 + $0x50] sm:$0xf] %vm1728, %v1684
      %1750 = vst.msk [vmem:[%s483 + $0x54] sm:$0xf] %vm1728, %v1685
      %1751 = vst.msk [vmem:[%s483 + $0x58] sm:$0xf] %vm1728, %v1686
      %1752 = vst.msk [vmem:[%s483 + $0x5c] sm:$0xf] %vm1728, %v1687
      %1753 = vst.msk [vmem:[%s483 + $0x60] sm:$0xf] %vm1728, %v1688
      %1754 = vst.msk [vmem:[%s483 + $0x64] sm:$0xf] %vm1728, %v1689
      %1755 = vst.msk [vmem:[%s483 + $0x68] sm:$0xf] %vm1728, %v1690
      %1756 = vst.msk [vmem:[%s483 + $0x6c] sm:$0xf] %vm1728, %v1691
      %1757 = vst.msk [vmem:[%s483 + $0x70] sm:$0xf] %vm1728, %v1692
      %1758 = vst.msk [vmem:[%s483 + $0x74] sm:$0xf] %vm1728, %v1693
      %1759 = vst.msk [vmem:[%s483 + $0x78] sm:$0xf] %vm1728, %v1694
      %1760 = vst.msk [vmem:[%s483 + $0x7c] sm:$0xf] %vm1728, %v1695
      %s1761 = smul.u32 32, %s26
      %p1762 = scmp.lt.s32.totalorder %s1761, 63
      %s1763 = scalar_select %p1762, %s1761, 63
      %s1764 = smul.addr %s1763, 4
      %s1765 = scalar_lea.vmem %s13, %s1764
      %s1766 = smul.u32 32, %s26
      %p1767 = scmp.lt.s32.totalorder %s1766, 63
      %s1768 = scalar_select %p1767, %s1766, 63
      %s1769 = smul.addr %s1768, 4
      %s1770 = scalar_lea.vmem %s14, %s1769
      // Predicated region
      $region73: #{pyra_conv_block.5} parent=71 // pred_check
        %p1771 = pneg %p322
      $region74: #{pyra_conv_block.5} parent=71 // pred_check_branch
        %1773 = sbr.rel (%p1771) target = $region76
      $region75: #{pyra_conv_block.5} parent=71 // pred_region
        %s1774 = smul.u32 32, %s26
      $region76: #{pyra_conv_block.5} parent=71 // pred_fallthru
        _
      // Predicated region
      $region77: #{pyra_conv_block.5} parent=71 // pred_check
        %p1775 = pneg %p348
      $region78: #{pyra_conv_block.5} parent=71 // pred_check_branch
        %1777 = sbr.rel (%p1775) target = $region80
      $region79: #{pyra_conv_block.5} parent=71 // pred_region
        %s1778 = smul.u32 32, %s26
      $region80: #{pyra_conv_block.5} parent=71 // pred_fallthru
        _
    $region72: #{pyra_conv_block.5} parent=5 // pred_fallthru
      _
    %p1779 = scmp.le.s32.totalorder 2, %s21
    // Predicated region
    $region81: #{pyra_conv_block.5} parent=5 // pred_check
      %p1780 = pneg %p1779
    $region82: #{pyra_conv_block.5} parent=5 // pred_check_branch
      %1782 = sbr.rel (%p1780) target = $region84
    $region83: #{pyra_conv_block.5} parent=5 // pred_region
      %s1783 = ssub.s32 %s21, 2
      // Predicated region
      $region85: #{pyra_conv_block.5} parent=83 // pred_check
        %p1784 = pneg %p328
      $region86: #{pyra_conv_block.5} parent=83 // pred_check_branch
        %1786 = sbr.rel (%p1784) target = $region88
      $region87: #{pyra_conv_block.5} parent=83 // pred_region
        %s1787 = smul.u32 32, %s27
        %p1788 = scmp.lt.s32.totalorder %s1787, 63
        %s1789 = scalar_select %p1788, %s1787, 63
        %s1790 = smul.addr %s1789, 4
        %s1791 = scalar_lea.vmem %s13, %s1790
      $region88: #{pyra_conv_block.5} parent=83 // pred_fallthru
        _
      // Predicated region
      $region89: #{pyra_conv_block.5} parent=83 // pred_check
        %p1792 = pneg %p354
      $region90: #{pyra_conv_block.5} parent=83 // pred_check_branch
        %1794 = sbr.rel (%p1792) target = $region92
      $region91: #{pyra_conv_block.5} parent=83 // pred_region
        %s1795 = smul.u32 32, %s27
        %p1796 = scmp.lt.s32.totalorder %s1795, 63
        %s1797 = scalar_select %p1796, %s1795, 63
        %s1798 = smul.addr %s1797, 4
        %s1799 = scalar_lea.vmem %s14, %s1798
      $region92: #{pyra_conv_block.5} parent=83 // pred_fallthru
        _
    $region84: #{pyra_conv_block.5} parent=5 // pred_fallthru
      _
  $region6: #{pyra_conv_block.5} parent=0 // loop_footer
    %s25 = sadd.s32 1, %s21
  $region7: #{pyra_conv_block.5} parent=0 // loop_footer_branch
    %20 = sbr.rel target = $region3
  $region8: #{pyra_conv_block.5} parent=0 // loop_exit
    _

// kernel: pyra_conv_block.8
$region0: #{pyra_conv_block.8}
  #allocation0 [shape = 'u32[]', space=smem, size = 0x4, offset = 0x4, fixed_abs, tag = 'smem constant byte address 0x4 - core index']
  #allocation1 [shape = 'u32[144,128]{1,0:T(1,128)}', space=vmem, size = 0x12000, scoped, tag = 'internal scratch']
  %s0 = inlined_call_operand.vmem [shape: bf16[2,122,8], index: 0, kind: input, shape index: {}]
  %s1 = inlined_call_operand.vmem [shape: bf16[9,8,8], index: 1, kind: input, shape index: {}]
  %s2 = inlined_call_operand.vmem [shape: f32[1,8], index: 2, kind: input, shape index: {}]
  %s3 = inlined_call_operand.vmem [shape: f32[2,100,8], index: 3, kind: output, shape index: {}]
  %s4 = sld [smem:[#allocation0]]
  $region45: #{pyra_conv_block.8} parent=0
    _
  %s6 = ssub.s32 1, %s4
  %s7 = scalar_select 0, %s6, %s4
  loop: start=0, step=1, limit=4
  $region2: #{pyra_conv_block.8} parent=0 // loop_pre_header
    _
  $region3: #{pyra_conv_block.8} parent=0 // loop_header
    %s9 = sphi 0, %s13
    %p10 = scmp.ge.s32.totalorder %s9, 4
    %s19 = sphi 0, %s21
    %s22 = sphi 0, %s19
    %s23 = sphi 0, %s22
    %s39 = sphi 0, %s23
    %s43 = sphi 0, %s43
    %s45 = sphi 0, %s43
    %s46 = sphi 0, %s45
    %s60 = sphi 0, %s46
    %s64 = sphi 0, %s64
    %s66 = sphi 0, %s64
    %s67 = sphi 0, %s66
    %s81 = sphi 0, %s67
    %s87 = sphi 0, %s89
    %s90 = sphi 0, %s87
    %s91 = sphi 0, %s90
    %s107 = sphi 0, %s91
  $region4: #{pyra_conv_block.8} parent=0 // loop_header_branch
    %12 = sbr.rel (%p10) target = $region8
  $region5: #{pyra_conv_block.8} parent=0 // loop_body
    %s14 = ssub.s32 %s9, 1
    %s15 = ssub.s32 %s9, 2
    %s16 = sadd.s32 %s9, 1
    %s17 = ssub.s32 %s9, %s16
    %p18 = scmp.eq.s32.totalorder %s17, 0
    %s20 = sadd.s32 %s19, 1
    %s21 = scalar_select %p18, %s19, %s20
    %p24 = pneg %p18
    %p25 = scmp.eq.s32.totalorder %s9, 1
    %p26 = por %p24, %p25
    %p27 = scmp.ne.s32.totalorder %s19, %s22
    %p28 = scmp.eq.s32.totalorder %s9, 0
    %p29 = por %p27, %p28
    %p30 = scmp.ne.s32.totalorder %s19, %s22
    %p31 = scmp.eq.s32.totalorder %s14, 1
    %p32 = por %p30, %p31
    %p33 = scmp.ne.s32.totalorder %s22, %s23
    %p34 = scmp.eq.s32.totalorder %s14, 0
    %p35 = por %p33, %p34
    %p36 = scmp.ne.s32.totalorder %s22, %s23
    %p37 = scmp.eq.s32.totalorder %s15, 1
    %p38 = por %p36, %p37
    %p40 = scmp.ne.s32.totalorder %s23, %s39
    %p41 = scmp.eq.s32.totalorder %s15, 0
    %p42 = por %p40, %p41
    %s44 = sadd.s32 %s43, 1
    %p47 = scmp.eq.s32.totalorder %s9, 1
    %p48 = scmp.ne.s32.totalorder %s43, %s45
    %p49 = scmp.eq.s32.totalorder %s9, 0
    %p50 = por %p48, %p49
    %p51 = scmp.ne.s32.totalorder %s43, %s45
    %p52 = scmp.eq.s32.totalorder %s14, 1
    %p53 = por %p51, %p52
    %p54 = scmp.ne.s32.totalorder %s45, %s46
    %p55 = scmp.eq.s32.totalorder %s14, 0
    %p56 = por %p54, %p55
    %p57 = scmp.ne.s32.totalorder %s45, %s46
    %p58 = scmp.eq.s32.totalorder %s15, 1
    %p59 = por %p57, %p58
    %p61 = scmp.ne.s32.totalorder %s46, %s60
    %p62 = scmp.eq.s32.totalorder %s15, 0
    %p63 = por %p61, %p62
    %s65 = sadd.s32 %s64, 1
    %p68 = scmp.eq.s32.totalorder %s9, 1
    %p69 = scmp.ne.s32.totalorder %s64, %s66
    %p70 = scmp.eq.s32.totalorder %s9, 0
    %p71 = por %p69, %p70
    %p72 = scmp.ne.s32.totalorder %s64, %s66
    %p73 = scmp.eq.s32.totalorder %s14, 1
    %p74 = por %p72, %p73
    %p75 = scmp.ne.s32.totalorder %s66, %s67
    %p76 = scmp.eq.s32.totalorder %s14, 0
    %p77 = por %p75, %p76
    %p78 = scmp.ne.s32.totalorder %s66, %s67
    %p79 = scmp.eq.s32.totalorder %s15, 1
    %p80 = por %p78, %p79
    %p82 = scmp.ne.s32.totalorder %s67, %s81
    %p83 = scmp.eq.s32.totalorder %s15, 0
    %p84 = por %p82, %p83
    %s85 = ssub.s32 %s9, %s16
    %p86 = scmp.eq.s32.totalorder %s85, 0
    %s88 = sadd.s32 %s87, 1
    %s89 = scalar_select %p86, %s87, %s88
    %p92 = pneg %p86
    %p93 = scmp.eq.s32.totalorder %s9, 1
    %p94 = por %p92, %p93
    %p95 = scmp.ne.s32.totalorder %s87, %s90
    %p96 = scmp.eq.s32.totalorder %s9, 0
    %p97 = por %p95, %p96
    %p98 = scmp.ne.s32.totalorder %s87, %s90
    %p99 = scmp.eq.s32.totalorder %s14, 1
    %p100 = por %p98, %p99
    %p101 = scmp.ne.s32.totalorder %s90, %s91
    %p102 = scmp.eq.s32.totalorder %s14, 0
    %p103 = por %p101, %p102
    %p104 = scmp.ne.s32.totalorder %s90, %s91
    %p105 = scmp.eq.s32.totalorder %s15, 1
    %p106 = por %p104, %p105
    %p108 = scmp.ne.s32.totalorder %s91, %s107
    %p109 = scmp.eq.s32.totalorder %s15, 0
    %p110 = por %p108, %p109
    %p111 = scmp.le.s32.totalorder 1, %s9
    %p112 = scmp.lt.s32.totalorder %s9, 3
    %p113 = pnand %p111, %p112
    %p114 = pneg %p113
    // Predicated region
    $region9: #{pyra_conv_block.8} parent=5 // pred_check
      _
    $region10: #{pyra_conv_block.8} parent=5 // pred_check_branch
      %116 = sbr.rel (%p113) target = $region12
    $region11: #{pyra_conv_block.8} parent=5 // pred_region
      %s117 = ssub.s32 %s9, 1
      // Predicated region
      $region13: #{pyra_conv_block.8} parent=11 // pred_check
        %p118 = pneg %p56
      $region14: #{pyra_conv_block.8} parent=11 // pred_check_branch
        %120 = sbr.rel (%p118) target = $region16
      $region15: #{pyra_conv_block.8} parent=11 // pred_region
        _
      $region16: #{pyra_conv_block.8} parent=11 // pred_fallthru
        _
      // Predicated region
      $region17: #{pyra_conv_block.8} parent=11 // pred_check
        %p121 = pneg %p77
      $region18: #{pyra_conv_block.8} parent=11 // pred_check_branch
        %123 = sbr.rel (%p121) target = $region20
      $region19: #{pyra_conv_block.8} parent=11 // pred_region
        _
      $region20: #{pyra_conv_block.8} parent=11 // pred_fallthru
        _
    $region12: #{pyra_conv_block.8} parent=5 // pred_fallthru
      _
    %p124 = scmp.lt.s32.totalorder %s9, 2
    // Predicated region
    $region21: #{pyra_conv_block.8} parent=5 // pred_check
      %p125 = pneg %p124
    $region22: #{pyra_conv_block.8} parent=5 // pred_check_branch
      %127 = sbr.rel (%p125) target = $region24
    $region23: #{pyra_conv_block.8} parent=5 // pred_region
      // Predicated region
      $region25: #{pyra_conv_block.8} parent=23 // pred_check
        %p128 = pneg %p29
      $region26: #{pyra_conv_block.8} parent=23 // pred_check_branch
        %130 = sbr.rel (%p128) target = $region28
      $region27: #{pyra_conv_block.8} parent=23 // pred_region
        %p131 = scmp.lt.s32.totalorder %s9, 1
        %s132 = scalar_select %p131, %s9, 1
        %s133 = smul.addr %s132, 16
        %s134 = smul.addr %s133, 4
        %s135 = scalar_lea.vmem %s0, %s134
      $region28: #{pyra_conv_block.8} parent=23 // pred_fallthru
        _
    $region24: #{pyra_conv_block.8} parent=5 // pred_fallthru
      _
    %p136 = scmp.le.s32.totalorder 1, %s9
    %p137 = scmp.lt.s32.totalorder %s9, 3
    %p138 = pnand %p136, %p137
    %p139 = pneg %p138
    // Predicated region
    $region29: #{pyra_conv_block.8} parent=5 // pred_check
      _
    $region30: #{pyra_conv_block.8} parent=5 // pred_check_branch
      %141 = sbr.rel (%p138) target = $region32
    $region31: #{pyra_conv_block.8} parent=5 // pred_region
      %s142 = ssub.s32 %s9, 1
      %p143 = scmp.lt.s32.totalorder %s14, 1
      %s144 = scalar_select %p143, %s14, 1
      %s145 = smul.addr %s144, 16
      %s146 = smul.addr %s145, 4
      %s147 = scalar_lea.vmem %s0, %s146
      %p148 = pneg %p35
      %p149 = pneg %p32
      %p150 = pneg %p56
      %p151 = pneg %p53
      %p152 = pneg %p77
      %p153 = pneg %p74
      %p154 = pneg %p103
      %p155 = pneg %p100
      %p156 = scmp.lt.s32.totalorder %s14, 1
      %s157 = scalar_select %p156, %s14, 1
      %s158 = smul.addr %s157, 13
      %s159 = smul.addr %s158, 8
      %s160 = scalar_lea.vmem %s3, %s159
      %p161 = scmp.lt.s32.totalorder %s14, 1
      %s162 = scalar_select %p161, %s14, 1
      %s163 = smul.addr %s162, 16
      %s164 = smul.addr %s163, 4
      %s165 = scalar_lea.vmem %s0, %s164
      %p166 = scmp.lt.s32.totalorder %s14, 1
      %s167 = scalar_select %p166, %s14, 1
      %s168 = smul.addr %s167, 13
      %s169 = smul.addr %s168, 8
      %s170 = scalar_lea.vmem %s3, %s169
      %v172 = vld [vmem:[%s165] sm:$0xf]
      %v173 = vld [vmem:[%s165 + $0x4] sm:$0xf]
      %v174 = vld [vmem:[%s165 + $0x8] sm:$0xf]
      %v175 = vld [vmem:[%s165 + $0xc] sm:$0xf]
      %v176 = vld [vmem:[%s165 + $0x10] sm:$0xf]
      %v177 = vld [vmem:[%s165 + $0x14] sm:$0xf]
      %v178 = vld [vmem:[%s165 + $0x18] sm:$0xf]
      %v179 = vld [vmem:[%s165 + $0x1c] sm:$0xf]
      %v180 = vld [vmem:[%s165 + $0x20] sm:$0xf]
      %v181 = vld [vmem:[%s165 + $0x24] sm:$0xf]
      %v182 = vld [vmem:[%s165 + $0x28] sm:$0xf]
      %v183 = vld [vmem:[%s165 + $0x2c] sm:$0xf]
      %v184 = vld [vmem:[%s165 + $0x30] sm:$0x3]
      %v185 = vld [vmem:[%s1] sm:$0xf]
      %v186 = vld [vmem:[%s165 + $0x30] sm:$0x7]
      %s187 = scalar_lea.vmem %s1, 4
      %v188 = vld [vmem:[%s187] sm:$0xf]
      %v202 = vunpack.c.l.b16 %v172
      %v203 = vunpack.c.l.b16 %v173
      %v204 = vunpack.c.l.b16 %v174
      %v205 = vunpack.c.l.b16 %v175
      %v206 = vunpack.c.l.b16 %v176
      %v207 = vunpack.c.l.b16 %v177
      %v208 = vunpack.c.l.b16 %v178
      %v209 = vunpack.c.l.b16 %v179
      %v210 = vunpack.c.l.b16 %v180
      %v211 = vunpack.c.l.b16 %v181
      %v212 = vunpack.c.l.b16 %v182
      %v213 = vunpack.c.l.b16 %v183
      %v214 = vunpack.c.l.b16 %v186
      %v215 = vpack.c.b16 %v203, %v202
      %v216 = vpack.c.b16 %v205, %v204
      %v217 = vpack.c.b16 %v207, %v206
      %v218 = vpack.c.b16 %v209, %v208
      %v219 = vpack.c.b16 %v211, %v210
      %v220 = vpack.c.b16 %v213, %v212
      %v221 = vpack.c.b16 %v214, %v214
      %vm222 = vsmask.f32 7424
      %v224 = vshrl.u32 %v215, 16
      %v226 = vshll.u32 %v215, 16
      %v228 = vrot.slane %v226, 1
      %v229 = vor.u32 %v224, %v228
      %v231 = vshll.u32 %v216, 16
      %v233 = vrot.slane %v231, 1
      %v234 = vsel %vm222, %v229, %v233
      %v235 = vshrl.u32 %v216, 16
      %v237 = vor.u32 %v235, %v233
      %v239 = vshll.u32 %v217, 16
      %v241 = vrot.slane %v239, 1
      %v242 = vsel %vm222, %v237, %v241
      %v243 = vshrl.u32 %v217, 16
      %v245 = vor.u32 %v243, %v241
      %v247 = vshll.u32 %v218, 16
      %v249 = vrot.slane %v247, 1
      %v250 = vsel %vm222, %v245, %v249
      %v251 = vshrl.u32 %v218, 16
      %v253 = vor.u32 %v251, %v249
      %v255 = vshll.u32 %v219, 16
      %v257 = vrot.slane %v255, 1
      %v258 = vsel %vm222, %v253, %v257
      %v259 = vshrl.u32 %v219, 16
      %v261 = vor.u32 %v259, %v257
      %v263 = vshll.u32 %v220, 16
      %v265 = vrot.slane %v263, 1
      %v266 = vsel %vm222, %v261, %v265
      %v267 = vshrl.u32 %v220, 16
      %v269 = vor.u32 %v267, %v265
      %v271 = vshll.u32 %v221, 16
      %v273 = vrot.slane %v271, 1
      %v274 = vsel %vm222, %v269, %v273
      %v275 = vshrl.u32 %v221, 16
      %v277 = vor.u32 %v275, %v273
      %vm278 = vcmask 64512
      %v280 = vsel %vm278, %v234, 0
      %v283 = vsel %vm278, %v242, 0
      %v286 = vsel %vm278, %v250, 0
      %v289 = vsel %vm278, %v258, 0
      %v292 = vsel %vm278, %v266, 0
      %v295 = vsel %vm278, %v274, 0
      %v298 = vsel %vm278, %v277, 0
      %vm300 = vcmask 1043456
      %v302 = vsel %vm300, %v188, 0
      %304 = vmatprep.subr.bf16.mxu0 0
      %305 = vmatpush1.bf16.msra.mxu0 %v302
      %306 = vmatprep.subr.bf16.mxu0 0
      %307 = vmatpush1.bf16.msra.mxu0 0
      %308 = vmatprep.subr.bf16.mxu0 0
      %309 = vmatpush1.bf16.msra.mxu0 0
      %310 = vmatprep.subr.bf16.mxu0 0
      %311 = vmatpush1.bf16.msra.mxu0 0
      %312 = vmatprep.subr.bf16.mxu0 0
      %313 = vmatpush1.bf16.msra.mxu0 0
      %314 = vmatprep.subr.bf16.mxu0 0
      %315 = vmatpush1.bf16.msra.mxu0 0
      %316 = vmatprep.subr.bf16.mxu0 0
      %317 = vmatpush1.bf16.msra.mxu0 0
      %318 = vmatprep.subr.bf16.mxu0 0
      %319 = vmatpush1.bf16.msra.mxu0 0
      %320 = vmatprep.subr.bf16.mxu0 0
      %321 = vmatpush1.bf16.msra.mxu0 0
      %322 = vmatprep.subr.bf16.mxu0 0
      %323 = vmatpush1.bf16.msra.mxu0 0
      %324 = vmatprep.subr.bf16.mxu0 0
      %325 = vmatpush1.bf16.msra.mxu0 0
      %326 = vmatprep.subr.bf16.mxu0 0
      %327 = vmatpush1.bf16.msra.mxu0 0
      %328 = vmatprep.subr.bf16.mxu0 0
      %329 = vmatpush1.bf16.msra.mxu0 0
      %330 = vmatprep.subr.bf16.mxu0 0
      %331 = vmatpush1.bf16.msra.mxu0 0
      %332 = vmatprep.subr.bf16.mxu0 0
      %333 = vmatpush1.bf16.msra.mxu0 0
      %334 = vmatprep.subr.bf16.mxu0 0
      %335 = vmatpush1.bf16.msra.mxu0 0
      %336 = vmatprep.mubr.bf16.mxu0 0
      %337 = vmatmul.mubr.bf16.gmra.mrb[0].mxu0 %v280
      %v338 = vpop.f32.mrb[0].mxu0
      %v339 = vadd.f32 0.0, %v338
      %v340 = vpop.f32.mrb[0].mxu0
      %v341 = vpop.f32.mrb[0].mxu0
      %v342 = vadd.f32 0.0, %v341
      %v343 = vpop.f32.mrb[0].mxu0
      %344 = vmatprep.mubr.bf16.mxu0 0
      %345 = vmatmul.mubr.bf16.gmra.mrb[0].mxu0 %v283
      %v346 = vpop.f32.mrb[0].mxu0
      %v347 = vadd.f32 0.0, %v346
      %v348 = vpop.f32.mrb[0].mxu0
      %v349 = vpop.f32.mrb[0].mxu0
      %v350 = vadd.f32 0.0, %v349
      %v351 = vpop.f32.mrb[0].mxu0
      %352 = vmatprep.mubr.bf16.mxu0 0
      %353 = vmatmul.mubr.bf16.gmra.mrb[0].mxu0 %v286
      %v354 = vpop.f32.mrb[0].mxu0
      %v355 = vadd.f32 0.0, %v354
      %v356 = vpop.f32.mrb[0].mxu0
      %v357 = vpop.f32.mrb[0].mxu0
      %v358 = vadd.f32 0.0, %v357
      %v359 = vpop.f32.mrb[0].mxu0
      %360 = vmatprep.mubr.bf16.mxu0 0
      %361 = vmatmul.mubr.bf16.gmra.mrb[0].mxu0 %v289
      %v362 = vpop.f32.mrb[0].mxu0
      %v363 = vadd.f32 0.0, %v362
      %v364 = vpop.f32.mrb[0].mxu0
      %v365 = vpop.f32.mrb[0].mxu0
      %v366 = vadd.f32 0.0, %v365
      %v367 = vpop.f32.mrb[0].mxu0
      %368 = vmatprep.mubr.bf16.mxu0 0
      %369 = vmatmul.mubr.bf16.gmra.mrb[0].mxu0 %v292
      %v370 = vpop.f32.mrb[0].mxu0
      %v371 = vadd.f32 0.0, %v370
      %v372 = vpop.f32.mrb[0].mxu0
      %v373 = vpop.f32.mrb[0].mxu0
      %v374 = vadd.f32 0.0, %v373
      %v375 = vpop.f32.mrb[0].mxu0
      %376 = vmatprep.mubr.bf16.mxu0 0
      %377 = vmatmul.mubr.bf16.gmra.mrb[0].mxu0 %v295
      %v378 = vpop.f32.mrb[0].mxu0
      %v379 = vadd.f32 0.0, %v378
      %v380 = vpop.f32.mrb[0].mxu0
      %v381 = vpop.f32.mrb[0].mxu0
      %v382 = vadd.f32 0.0, %v381
      %v383 = vpop.f32.mrb[0].mxu0
      %384 = vmatprep.mubr.bf16.mxu0 0
      %385 = vmatmul.mubr.bf16.gmra.mrb[0].mxu0 %v298
      %v386 = vpop.f32.mrb[0].mxu0
      %v387 = vadd.f32 0.0, %v386
      %v388 = vpop.f32.mrb[0].mxu0
      %v389 = vpop.f32.mrb[0].mxu0
      %v390 = vpop.f32.mrb[0].mxu0
      %391 = vdwg.mxu0
      %v393 = vunpack.c.l.b16 %v184
      %v394 = vpack.c.b16 %v393, %v393
      %v395 = vsel %vm278, %v215, 0
      %v397 = vsel %vm278, %v216, 0
      %v399 = vsel %vm278, %v217, 0
      %v401 = vsel %vm278, %v218, 0
      %v403 = vsel %vm278, %v219, 0
      %v405 = vsel %vm278, %v220, 0
      %v408 = vsel %vm278, %v394, 0
      %v411 = vsel %vm300, %v185, 0
      %413 = vmatprep.subr.bf16.mxu0 0
      %414 = vmatpush1.bf16.msra.mxu0 %v411
      %415 = vmatprep.subr.bf16.mxu0 0
      %416 = vmatpush1.bf16.msra.mxu0 0
      %417 = vmatprep.subr.bf16.mxu0 0
      %418 = vmatpush1.bf16.msra.mxu0 0
      %419 = vmatprep.subr.bf16.mxu0 0
      %420 = vmatpush1.bf16.msra.mxu0 0
      %421 = vmatprep.subr.bf16.mxu0 0
      %422 = vmatpush1.bf16.msra.mxu0 0
      %423 = vmatprep.subr.bf16.mxu0 0
      %424 = vmatpush1.bf16.msra.mxu0 0
      %425 = vmatprep.subr.bf16.mxu0 0
      %426 = vmatpush1.bf16.msra.mxu0 0
      %427 = vmatprep.subr.bf16.mxu0 0
      %428 = vmatpush1.bf16.msra.mxu0 0
      %429 = vmatprep.subr.bf16.mxu0 0
      %430 = vmatpush1.bf16.msra.mxu0 0
      %431 = vmatprep.subr.bf16.mxu0 0
      %432 = vmatpush1.bf16.msra.mxu0 0
      %433 = vmatprep.subr.bf16.mxu0 0
      %434 = vmatpush1.bf16.msra.mxu0 0
      %435 = vmatprep.subr.bf16.mxu0 0
      %436 = vmatpush1.bf16.msra.mxu0 0
      %437 = vmatprep.subr.bf16.mxu0 0
      %438 = vmatpush1.bf16.msra.mxu0 0
      %439 = vmatprep.subr.bf16.mxu0 0
      %440 = vmatpush1.bf16.msra.mxu0 0
      %441 = vmatprep.subr.bf16.mxu0 0
      %442 = vmatpush1.bf16.msra.mxu0 0
      %443 = vmatprep.subr.bf16.mxu0 0
      %444 = vmatpush1.bf16.msra.mxu0 0
      %445 = vmatprep.mubr.bf16.mxu0 0
      %446 = vmatmul.mubr.bf16.gmra.mrb[0].mxu0 %v395
      %v447 = vpop.f32.mrb[0].mxu0
      %v448 = vadd.f32 %v339, %v447
      %v449 = vpop.f32.mrb[0].mxu0
      %v450 = vpop.f32.mrb[0].mxu0
      %v451 = vadd.f32 %v342, %v450
      %v452 = vpop.f32.mrb[0].mxu0
      %453 = vmatprep.mubr.bf16.mxu0 0
      %454 = vmatmul.mubr.bf16.gmra.mrb[0].mxu0 %v397
      %v455 = vpop.f32.mrb[0].mxu0
      %v456 = vadd.f32 %v347, %v455
      %v457 = vpop.f32.mrb[0].mxu0
      %v458 = vpop.f32.mrb[0].mxu0
      %v459 = vadd.f32 %v350, %v458
      %v460 = vpop.f32.mrb[0].mxu0
      %461 = vmatprep.mubr.bf16.mxu0 0
      %462 = vmatmul.mubr.bf16.gmra.mrb[0].mxu0 %v399
      %v463 = vpop.f32.mrb[0].mxu0
      %v464 = vadd.f32 %v355, %v463
      %v465 = vpop.f32.mrb[0].mxu0
      %v466 = vpop.f32.mrb[0].mxu0
      %v467 = vadd.f32 %v358, %v466
      %v468 = vpop.f32.mrb[0].mxu0
      %469 = vmatprep.mubr.bf16.mxu0 0
      %470 = vmatmul.mubr.bf16.gmra.mrb[0].mxu0 %v401
      %v471 = vpop.f32.mrb[0].mxu0
      %v472 = vadd.f32 %v363, %v471
      %v473 = vpop.f32.mrb[0].mxu0
      %v474 = vpop.f32.mrb[0].mxu0
      %v475 = vadd.f32 %v366, %v474
      %v476 = vpop.f32.mrb[0].mxu0
      %477 = vmatprep.mubr.bf16.mxu0 0
      %478 = vmatmul.mubr.bf16.gmra.mrb[0].mxu0 %v403
      %v479 = vpop.f32.mrb[0].mxu0
      %v480 = vadd.f32 %v371, %v479
      %v481 = vpop.f32.mrb[0].mxu0
      %v482 = vpop.f32.mrb[0].mxu0
      %v483 = vadd.f32 %v374, %v482
      %v484 = vpop.f32.mrb[0].mxu0
      %485 = vmatprep.mubr.bf16.mxu0 0
      %486 = vmatmul.mubr.bf16.gmra.mrb[0].mxu0 %v405
      %v487 = vpop.f32.mrb[0].mxu0
      %v488 = vadd.f32 %v379, %v487
      %v489 = vpop.f32.mrb[0].mxu0
      %v490 = vpop.f32.mrb[0].mxu0
      %v491 = vadd.f32 %v382, %v490
      %v492 = vpop.f32.mrb[0].mxu0
      %493 = vmatprep.mubr.bf16.mxu0 0
      %494 = vmatmul.mubr.bf16.gmra.mrb[0].mxu0 %v408
      %v495 = vpop.f32.mrb[0].mxu0
      %v496 = vadd.f32 %v387, %v495
      %v497 = vpop.f32.mrb[0].mxu0
      %v498 = vpop.f32.mrb[0].mxu0
      %v499 = vpop.f32.mrb[0].mxu0
      %500 = vdwg.mxu0
      %v501 = vld [vmem:[%s165] sm:$0xe]
      %s502 = scalar_lea.vmem %s1, 8
      %v503 = vld [vmem:[%s502] sm:$0xf]
      %v505 = vunpack.c.l.b16 %v501
      %v506 = vpack.c.b16 %v203, %v505
      %vm507 = vcmask 1046528
      %v508 = vrot.slane %v506, 1
      %v509 = vrot.slane %v216, 1
      %v510 = vsel %vm507, %v508, %v509
      %v511 = vrot.slane %v217, 1
      %v512 = vsel %vm507, %v509, %v511
      %v513 = vrot.slane %v218, 1
      %v514 = vsel %vm507, %v511, %v513
      %v515 = vrot.slane %v219, 1
      %v516 = vsel %vm507, %v513, %v515
      %v517 = vrot.slane %v220, 1
      %v518 = vsel %vm507, %v515, %v517
      %v519 = vrot.slane %v221, 1
      %v520 = vsel %vm507, %v517, %v519
      %v522 = vsel %vm278, %v510, 0
      %v525 = vsel %vm278, %v512, 0
      %v528 = vsel %vm278, %v514, 0
      %v531 = vsel %vm278, %v516, 0
      %v534 = vsel %vm278, %v518, 0
      %v537 = vsel %vm278, %v520, 0
      %v540 = vsel %vm278, %v519, 0
      %v543 = vsel %vm300, %v503, 0
      %545 = vmatprep.subr.bf16.mxu0 0
      %546 = vmatpush1.bf16.msra.mxu0 %v543
      %547 = vmatprep.subr.bf16.mxu0 0
      %548 = vmatpush1.bf16.msra.mxu0 0
      %549 = vmatprep.subr.bf16.mxu0 0
      %550 = vmatpush1.bf16.msra.mxu0 0
      %551 = vmatprep.subr.bf16.mxu0 0
      %552 = vmatpush1.bf16.msra.mxu0 0
      %553 = vmatprep.subr.bf16.mxu0 0
      %554 = vmatpush1.bf16.msra.mxu0 0
      %555 = vmatprep.subr.bf16.mxu0 0
      %556 = vmatpush1.bf16.msra.mxu0 0
      %557 = vmatprep.subr.bf16.mxu0 0
      %558 = vmatpush1.bf16.msra.mxu0 0
      %559 = vmatprep.subr.bf16.mxu0 0
      %560 = vmatpush1.bf16.msra.mxu0 0
      %561 = vmatprep.subr.bf16.mxu0 0
      %562 = vmatpush1.bf16.msra.mxu0 0
      %563 = vmatprep.subr.bf16.mxu0 0
      %564 = vmatpush1.bf16.msra.mxu0 0
      %565 = vmatprep.subr.bf16.mxu0 0
      %566 = vmatpush1.bf16.msra.mxu0 0
      %567 = vmatprep.subr.bf16.mxu0 0
      %568 = vmatpush1.bf16.msra.mxu0 0
      %569 = vmatprep.subr.bf16.mxu0 0
      %570 = vmatpush1.bf16.msra.mxu0 0
      %571 = vmatprep.subr.bf16.mxu0 0
      %572 = vmatpush1.bf16.msra.mxu0 0
      %573 = vmatprep.subr.bf16.mxu0 0
      %574 = vmatpush1.bf16.msra.mxu0 0
      %575 = vmatprep.subr.bf16.mxu0 0
      %576 = vmatpush1.bf16.msra.mxu0 0
      %577 = vmatprep.mubr.bf16.mxu0 0
      %578 = vmatmul.mubr.bf16.gmra.mrb[0].mxu0 %v522
      %v579 = vpop.f32.mrb[0].mxu0
      %v580 = vadd.f32 0.0, %v579
      %v581 = vpop.f32.mrb[0].mxu0
      %v582 = vpop.f32.mrb[0].mxu0
      %v583 = vadd.f32 0.0, %v582
      %v584 = vpop.f32.mrb[0].mxu0
      %585 = vmatprep.mubr.bf16.mxu0 0
      %586 = vmatmul.mubr.bf16.gmra.mrb[0].mxu0 %v525
      %v587 = vpop.f32.mrb[0].mxu0
      %v588 = vadd.f32 0.0, %v587
      %v589 = vpop.f32.mrb[0].mxu0
      %v590 = vpop.f32.mrb[0].mxu0
      %v591 = vadd.f32 0.0, %v590
      %v592 = vpop.f32.mrb[0].mxu0
      %593 = vmatprep.mubr.bf16.mxu0 0
      %594 = vmatmul.mubr.bf16.gmra.mrb[0].mxu0 %v528
      %v595 = vpop.f32.mrb[0].mxu0
      %v596 = vadd.f32 0.0, %v595
      %v597 = vpop.f32.mrb[0].mxu0
      %v598 = vpop.f32.mrb[0].mxu0
      %v599 = vadd.f32 0.0, %v598
      %v600 = vpop.f32.mrb[0].mxu0
      %601 = vmatprep.mubr.bf16.mxu0 0
      %602 = vmatmul.mubr.bf16.gmra.mrb[0].mxu0 %v531
      %v603 = vpop.f32.mrb[0].mxu0
      %v604 = vadd.f32 0.0, %v603
      %v605 = vpop.f32.mrb[0].mxu0
      %v606 = vpop.f32.mrb[0].mxu0
      %v607 = vadd.f32 0.0, %v606
      %v608 = vpop.f32.mrb[0].mxu0
      %609 = vmatprep.mubr.bf16.mxu0 0
      %610 = vmatmul.mubr.bf16.gmra.mrb[0].mxu0 %v534
      %v611 = vpop.f32.mrb[0].mxu0
      %v612 = vadd.f32 0.0, %v611
      %v613 = vpop.f32.mrb[0].mxu0
      %v614 = vpop.f32.mrb[0].mxu0
      %v615 = vadd.f32 0.0, %v614
      %v616 = vpop.f32.mrb[0].mxu0
      %617 = vmatprep.mubr.bf16.mxu0 0
      %618 = vmatmul.mubr.bf16.gmra.mrb[0].mxu0 %v537
      %v619 = vpop.f32.mrb[0].mxu0
      %v620 = vadd.f32 0.0, %v619
      %v621 = vpop.f32.mrb[0].mxu0
      %v622 = vpop.f32.mrb[0].mxu0
      %v623 = vadd.f32 0.0, %v622
      %v624 = vpop.f32.mrb[0].mxu0
      %625 = vmatprep.mubr.bf16.mxu0 0
      %626 = vmatmul.mubr.bf16.gmra.mrb[0].mxu0 %v540
      %v627 = vpop.f32.mrb[0].mxu0
      %v628 = vadd.f32 0.0, %v627
      %v629 = vpop.f32.mrb[0].mxu0
      %v630 = vpop.f32.mrb[0].mxu0
      %v631 = vpop.f32.mrb[0].mxu0
      %632 = vdwg.mxu0
      %v633 = vadd.f32 %v448, %v580
      %v634 = vadd.f32 %v451, %v583
      %v635 = vadd.f32 %v456, %v588
      %v636 = vadd.f32 %v459, %v591
      %v637 = vadd.f32 %v464, %v596
      %v638 = vadd.f32 %v467, %v599
      %v639 = vadd.f32 %v472, %v604
      %v640 = vadd.f32 %v475, %v607
      %v641 = vadd.f32 %v480, %v612
      %v642 = vadd.f32 %v483, %v615
      %v643 = vadd.f32 %v488, %v620
      %v644 = vadd.f32 %v491, %v623
      %v645 = vadd.f32 %v496, %v628
      %v646 = vld [vmem:[%s165 + $0x4] sm:$0xe]
      %v647 = vld [vmem:[%s165 + $0x8] sm:$0xf]
      %v648 = vld [vmem:[%s165 + $0xc] sm:$0xf]
      %v649 = vld [vmem:[%s165 + $0x10] sm:$0xf]
      %v650 = vld [vmem:[%s165 + $0x14] sm:$0xf]
      %v651 = vld [vmem:[%s165 + $0x18] sm:$0xf]
      %v652 = vld [vmem:[%s165 + $0x1c] sm:$0xf]
      %v653 = vld [vmem:[%s165 + $0x20] sm:$0xf]
      %v654 = vld [vmem:[%s165 + $0x24] sm:$0xf]
      %v655 = vld [vmem:[%s165 + $0x28] sm:$0xf]
      %v656 = vld [vmem:[%s165 + $0x2c] sm:$0xf]
      %v657 = vld [vmem:[%s165 + $0x30] sm:$0xf]
      %v658 = vld [vmem:[%s165 + $0x34] sm:$0x7]
      %s659 = scalar_lea.vmem %s1, 12
      %v660 = vld [vmem:[%s659] sm:$0xf]
      %v674 = vunpack.c.l.b16 %v646
      %v675 = vunpack.c.l.b16 %v647
      %v676 = vunpack.c.l.b16 %v648
      %v677 = vunpack.c.l.b16 %v649
      %v678 = vunpack.c.l.b16 %v650
      %v679 = vunpack.c.l.b16 %v651
      %v680 = vunpack.c.l.b16 %v652
      %v681 = vunpack.c.l.b16 %v653
      %v682 = vunpack.c.l.b16 %v654
      %v683 = vunpack.c.l.b16 %v655
      %v684 = vunpack.c.l.b16 %v656
      %v685 = vunpack.c.l.b16 %v657
      %v686 = vunpack.c.l.b16 %v658
      %v687 = vpack.c.b16 %v675, %v674
      %v688 = vpack.c.b16 %v677, %v676
      %v689 = vpack.c.b16 %v679, %v678
      %v690 = vpack.c.b16 %v681, %v680
      %v691 = vpack.c.b16 %v683, %v682
      %v692 = vpack.c.b16 %v685, %v684
      %v693 = vpack.c.b16 %v686, %v686
      %v694 = vrot.slane %v687, 1
      %v695 = vrot.slane %v688, 1
      %v696 = vsel %vm507, %v694, %v695
      %v697 = vrot.slane %v689, 1
      %v698 = vsel %vm507, %v695, %v697
      %v699 = vrot.slane %v690, 1
      %v700 = vsel %vm507, %v697, %v699
      %v701 = vrot.slane %v691, 1
      %v702 = vsel %vm507, %v699, %v701
      %v703 = vrot.slane %v692, 1
      %v704 = vsel %vm507, %v701, %v703
      %v705 = vrot.slane %v693, 1
      %v706 = vsel %vm507, %v703, %v705
      %v708 = vsel %vm278, %v696, 0
      %v711 = vsel %vm278, %v698, 0
      %v714 = vsel %vm278, %v700, 0
      %v717 = vsel %vm278, %v702, 0
      %v720 = vsel %vm278, %v704, 0
      %v723 = vsel %vm278, %v706, 0
      %v726 = vsel %vm278, %v705, 0
      %v729 = vsel %vm300, %v660, 0
      %731 = vmatprep.subr.bf16.mxu0 0
      %732 = vmatpush1.bf16.msra.mxu0 %v729
      %733 = vmatprep.subr.bf16.mxu0 0
      %734 = vmatpush1.bf16.msra.mxu0 0
      %735 = vmatprep.subr.bf16.mxu0 0
      %736 = vmatpush1.bf16.msra.mxu0 0
      %737 = vmatprep.subr.bf16.mxu0 0
      %738 = vmatpush1.bf16.msra.mxu0 0
      %739 = vmatprep.subr.bf16.mxu0 0
      %740 = vmatpush1.bf16.msra.mxu0 0
      %741 = vmatprep.subr.bf16.mxu0 0
      %742 = vmatpush1.bf16.msra.mxu0 0
      %743 = vmatprep.subr.bf16.mxu0 0
      %744 = vmatpush1.bf16.msra.mxu0 0
      %745 = vmatprep.subr.bf16.mxu0 0
      %746 = vmatpush1.bf16.msra.mxu0 0
      %747 = vmatprep.subr.bf16.mxu0 0
      %748 = vmatpush1.bf16.msra.mxu0 0
      %749 = vmatprep.subr.bf16.mxu0 0
      %750 = vmatpush1.bf16.msra.mxu0 0
      %751 = vmatprep.subr.bf16.mxu0 0
      %752 = vmatpush1.bf16.msra.mxu0 0
      %753 = vmatprep.subr.bf16.mxu0 0
      %754 = vmatpush1.bf16.msra.mxu0 0
      %755 = vmatprep.subr.bf16.mxu0 0
      %756 = vmatpush1.bf16.msra.mxu0 0
      %757 = vmatprep.subr.bf16.mxu0 0
      %758 = vmatpush1.bf16.msra.mxu0 0
      %759 = vmatprep.subr.bf16.mxu0 0
      %760 = vmatpush1.bf16.msra.mxu0 0
      %761 = vmatprep.subr.bf16.mxu0 0
      %762 = vmatpush1.bf16.msra.mxu0 0
      %763 = vmatprep.mubr.bf16.mxu0 0
      %764 = vmatmul.mubr.bf16.gmra.mrb[0].mxu0 %v708
      %v765 = vpop.f32.mrb[0].mxu0
      %v766 = vadd.f32 0.0, %v765
      %v767 = vpop.f32.mrb[0].mxu0
      %v768 = vpop.f32.mrb[0].mxu0
      %v769 = vadd.f32 0.0, %v768
      %v770 = vpop.f32.mrb[0].mxu0
      %771 = vmatprep.mubr.bf16.mxu0 0
      %772 = vmatmul.mubr.bf16.gmra.mrb[0].mxu0 %v711
      %v773 = vpop.f32.mrb[0].mxu0
      %v774 = vadd.f32 0.0, %v773
      %v775 = vpop.f32.mrb[0].mxu0
      %v776 = vpop.f32.mrb[0].mxu0
      %v777 = vadd.f32 0.0, %v776
      %v778 = vpop.f32.mrb[0].mxu0
      %779 = vmatprep.mubr.bf16.mxu0 0
      %780 = vmatmul.mubr.bf16.gmra.mrb[0].mxu0 %v714
      %v781 = vpop.f32.mrb[0].mxu0
      %v782 = vadd.f32 0.0, %v781
      %v783 = vpop.f32.mrb[0].mxu0
      %v784 = vpop.f32.mrb[0].mxu0
      %v785 = vadd.f32 0.0, %v784
      %v786 = vpop.f32.mrb[0].mxu0
      %787 = vmatprep.mubr.bf16.mxu0 0
      %788 = vmatmul.mubr.bf16.gmra.mrb[0].mxu0 %v717
      %v789 = vpop.f32.mrb[0].mxu0
      %v790 = vadd.f32 0.0, %v789
      %v791 = vpop.f32.mrb[0].mxu0
      %v792 = vpop.f32.mrb[0].mxu0
      %v793 = vadd.f32 0.0, %v792
      %v794 = vpop.f32.mrb[0].mxu0
      %795 = vmatprep.mubr.bf16.mxu0 0
      %796 = vmatmul.mubr.bf16.gmra.mrb[0].mxu0 %v720
      %v797 = vpop.f32.mrb[0].mxu0
      %v798 = vadd.f32 0.0, %v797
      %v799 = vpop.f32.mrb[0].mxu0
      %v800 = vpop.f32.mrb[0].mxu0
      %v801 = vadd.f32 0.0, %v800
      %v802 = vpop.f32.mrb[0].mxu0
      %803 = vmatprep.mubr.bf16.mxu0 0
      %804 = vmatmul.mubr.bf16.gmra.mrb[0].mxu0 %v723
      %v805 = vpop.f32.mrb[0].mxu0
      %v806 = vadd.f32 0.0, %v805
      %v807 = vpop.f32.mrb[0].mxu0
      %v808 = vpop.f32.mrb[0].mxu0
      %v809 = vadd.f32 0.0, %v808
      %v810 = vpop.f32.mrb[0].mxu0
      %811 = vmatprep.mubr.bf16.mxu0 0
      %812 = vmatmul.mubr.bf16.gmra.mrb[0].mxu0 %v726
      %v813 = vpop.f32.mrb[0].mxu0
      %v814 = vadd.f32 0.0, %v813
      %v815 = vpop.f32.mrb[0].mxu0
      %v816 = vpop.f32.mrb[0].mxu0
      %v817 = vpop.f32.mrb[0].mxu0
      %818 = vdwg.mxu0
      %v819 = vadd.f32 %v633, %v766
      %v820 = vadd.f32 %v634, %v769
      %v821 = vadd.f32 %v635, %v774
      %v822 = vadd.f32 %v636, %v777
      %v823 = vadd.f32 %v637, %v782
      %v824 = vadd.f32 %v638, %v785
      %v825 = vadd.f32 %v639, %v790
      %v826 = vadd.f32 %v640, %v793
      %v827 = vadd.f32 %v641, %v798
      %v828 = vadd.f32 %v642, %v801
      %v829 = vadd.f32 %v643, %v806
      %v830 = vadd.f32 %v644, %v809
      %v831 = vadd.f32 %v645, %v814
      %v832 = vld [vmem:[%s165 + $0x34] sm:$0xf]
      %s833 = scalar_lea.vmem %s1, 16
      %v834 = vld [vmem:[%s833] sm:$0xf]
      %v836 = vunpack.c.l.b16 %v832
      %v837 = vpack.c.b16 %v836, %v836
      %vm838 = vsmask.f32 6400
      %v840 = vshrl.u32 %v687, 16
      %v842 = vrot.slane %v840, 1
      %v843 = vshll.u32 %v687, 16
      %v845 = vrot.slane %v843, 2
      %v846 = vor.u32 %v842, %v845
      %v848 = vshrl.u32 %v688, 16
      %v850 = vrot.slane %v848, 1
      %v851 = vshll.u32 %v688, 16
      %v853 = vrot.slane %v851, 2
      %v854 = vor.u32 %v850, %v853
      %v855 = vsel %vm838, %v846, %v854
      %v857 = vshrl.u32 %v689, 16
      %v859 = vrot.slane %v857, 1
      %v860 = vshll.u32 %v689, 16
      %v862 = vrot.slane %v860, 2
      %v863 = vor.u32 %v859, %v862
      %v864 = vsel %vm838, %v854, %v863
      %v866 = vshrl.u32 %v690, 16
      %v868 = vrot.slane %v866, 1
      %v869 = vshll.u32 %v690, 16
      %v871 = vrot.slane %v869, 2
      %v872 = vor.u32 %v868, %v871
      %v873 = vsel %vm838, %v863, %v872
      %v875 = vshrl.u32 %v691, 16
      %v877 = vrot.slane %v875, 1
      %v878 = vshll.u32 %v691, 16
      %v880 = vrot.slane %v878, 2
      %v881 = vor.u32 %v877, %v880
      %v882 = vsel %vm838, %v872, %v881
      %v884 = vshrl.u32 %v692, 16
      %v886 = vrot.slane %v884, 1
      %v887 = vshll.u32 %v692, 16
      %v889 = vrot.slane %v887, 2
      %v890 = vor.u32 %v886, %v889
      %v891 = vsel %vm838, %v881, %v890
      %v893 = vshrl.u32 %v837, 16
      %v895 = vrot.slane %v893, 1
      %v896 = vshll.u32 %v837, 16
      %v898 = vrot.slane %v896, 2
      %v899 = vor.u32 %v895, %v898
      %v900 = vsel %vm838, %v890, %v899
      %v902 = vsel %vm278, %v855, 0
      %v905 = vsel %vm278, %v864, 0
      %v908 = vsel %vm278, %v873, 0
      %v911 = vsel %vm278, %v882, 0
      %v914 = vsel %vm278, %v891, 0
      %v917 = vsel %vm278, %v900, 0
      %v920 = vsel %vm278, %v899, 0
      %v923 = vsel %vm300, %v834, 0
      %925 = vmatprep.subr.bf16.mxu0 0
      %926 = vmatpush1.bf16.msra.mxu0 %v923
      %927 = vmatprep.subr.bf16.mxu0 0
      %928 = vmatpush1.bf16.msra.mxu0 0
      %929 = vmatprep.subr.bf16.mxu0 0
      %930 = vmatpush1.bf16.msra.mxu0 0
      %931 = vmatprep.subr.bf16.mxu0 0
      %932 = vmatpush1.bf16.msra.mxu0 0
      %933 = vmatprep.subr.bf16.mxu0 0
      %934 = vmatpush1.bf16.msra.mxu0 0
      %935 = vmatprep.subr.bf16.mxu0 0
      %936 = vmatpush1.bf16.msra.mxu0 0
      %937 = vmatprep.subr.bf16.mxu0 0
      %938 = vmatpush1.bf16.msra.mxu0 0
      %939 = vmatprep.subr.bf16.mxu0 0
      %940 = vmatpush1.bf16.msra.mxu0 0
      %941 = vmatprep.subr.bf16.mxu0 0
      %942 = vmatpush1.bf16.msra.mxu0 0
      %943 = vmatprep.subr.bf16.mxu0 0
      %944 = vmatpush1.bf16.msra.mxu0 0
      %945 = vmatprep.subr.bf16.mxu0 0
      %946 = vmatpush1.bf16.msra.mxu0 0
      %947 = vmatprep.subr.bf16.mxu0 0
      %948 = vmatpush1.bf16.msra.mxu0 0
      %949 = vmatprep.subr.bf16.mxu0 0
      %950 = vmatpush1.bf16.msra.mxu0 0
      %951 = vmatprep.subr.bf16.mxu0 0
      %952 = vmatpush1.bf16.msra.mxu0 0
      %953 = vmatprep.subr.bf16.mxu0 0
      %954 = vmatpush1.bf16.msra.mxu0 0
      %955 = vmatprep.subr.bf16.mxu0 0
      %956 = vmatpush1.bf16.msra.mxu0 0
      %957 = vmatprep.mubr.bf16.mxu0 0
      %958 = vmatmul.mubr.bf16.gmra.mrb[0].mxu0 %v902
      %v959 = vpop.f32.mrb[0].mxu0
      %v960 = vadd.f32 0.0, %v959
      %v961 = vpop.f32.mrb[0].mxu0
      %v962 = vpop.f32.mrb[0].mxu0
      %v963 = vadd.f32 0.0, %v962
      %v964 = vpop.f32.mrb[0].mxu0
      %965 = vmatprep.mubr.bf16.mxu0 0
      %966 = vmatmul.mubr.bf16.gmra.mrb[0].mxu0 %v905
      %v967 = vpop.f32.mrb[0].mxu0
      %v968 = vadd.f32 0.0, %v967
      %v969 = vpop.f32.mrb[0].mxu0
      %v970 = vpop.f32.mrb[0].mxu0
      %v971 = vadd.f32 0.0, %v970
      %v972 = vpop.f32.mrb[0].mxu0
      %973 = vmatprep.mubr.bf16.mxu0 0
      %974 = vmatmul.mubr.bf16.gmra.mrb[0].mxu0 %v908
      %v975 = vpop.f32.mrb[0].mxu0
      %v976 = vadd.f32 0.0, %v975
      %v977 = vpop.f32.mrb[0].mxu0
      %v978 = vpop.f32.mrb[0].mxu0
      %v979 = vadd.f32 0.0, %v978
      %v980 = vpop.f32.mrb[0].mxu0
      %981 = vmatprep.mubr.bf16.mxu0 0
      %982 = vmatmul.mubr.bf16.gmra.mrb[0].mxu0 %v911
      %v983 = vpop.f32.mrb[0].mxu0
      %v984 = vadd.f32 0.0, %v983
      %v985 = vpop.f32.mrb[0].mxu0
      %v986 = vpop.f32.mrb[0].mxu0
      %v987 = vadd.f32 0.0, %v986
      %v988 = vpop.f32.mrb[0].mxu0
      %989 = vmatprep.mubr.bf16.mxu0 0
      %990 = vmatmul.mubr.bf16.gmra.mrb[0].mxu0 %v914
      %v991 = vpop.f32.mrb[0].mxu0
      %v992 = vadd.f32 0.0, %v991
      %v993 = vpop.f32.mrb[0].mxu0
      %v994 = vpop.f32.mrb[0].mxu0
      %v995 = vadd.f32 0.0, %v994
      %v996 = vpop.f32.mrb[0].mxu0
      %997 = vmatprep.mubr.bf16.mxu0 0
      %998 = vmatmul.mubr.bf16.gmra.mrb[0].mxu0 %v917
      %v999 = vpop.f32.mrb[0].mxu0
      %v1000 = vadd.f32 0.0, %v999
      %v1001 = vpop.f32.mrb[0].mxu0
      %v1002 = vpop.f32.mrb[0].mxu0
      %v1003 = vadd.f32 0.0, %v1002
      %v1004 = vpop.f32.mrb[0].mxu0
      %1005 = vmatprep.mubr.bf16.mxu0 0
      %1006 = vmatmul.mubr.bf16.gmra.mrb[0].mxu0 %v920
      %v1007 = vpop.f32.mrb[0].mxu0
      %v1008 = vadd.f32 0.0, %v1007
      %v1009 = vpop.f32.mrb[0].mxu0
      %v1010 = vpop.f32.mrb[0].mxu0
      %v1011 = vpop.f32.mrb[0].mxu0
      %1012 = vdwg.mxu0
      %v1013 = vadd.f32 %v819, %v960
      %v1014 = vadd.f32 %v820, %v963
      %v1015 = vadd.f32 %v821, %v968
      %v1016 = vadd.f32 %v822, %v971
      %v1017 = vadd.f32 %v823, %v976
      %v1018 = vadd.f32 %v824, %v979
      %v1019 = vadd.f32 %v825, %v984
      %v1020 = vadd.f32 %v826, %v987
      %v1021 = vadd.f32 %v827, %v992
      %v1022 = vadd.f32 %v828, %v995
      %v1023 = vadd.f32 %v829, %v1000
      %v1024 = vadd.f32 %v830, %v1003
      %v1025 = vadd.f32 %v831, %v1008
      %v1026 = vld [vmem:[%s165 + $0x4] sm:$0xc]
      %s1027 = scalar_lea.vmem %s1, 20
      %v1028 = vld [vmem:[%s1027] sm:$0xf]
      %v1030 = vunpack.c.l.b16 %v1026
      %v1031 = vpack.c.b16 %v675, %v1030
      %vm1032 = vcmask 1045504
      %v1033 = vrot.slane %v1031, 2
      %v1034 = vrot.slane %v688, 2
      %v1035 = vsel %vm1032, %v1033, %v1034
      %v1036 = vrot.slane %v689, 2
      %v1037 = vsel %vm1032, %v1034, %v1036
      %v1038 = vrot.slane %v690, 2
      %v1039 = vsel %vm1032, %v1036, %v1038
      %v1040 = vrot.slane %v691, 2
      %v1041 = vsel %vm1032, %v1038, %v1040
      %v1042 = vrot.slane %v692, 2
      %v1043 = vsel %vm1032, %v1040, %v1042
      %v1044 = vrot.slane %v837, 2
      %v1045 = vsel %vm1032, %v1042, %v1044
      %v1047 = vsel %vm278, %v1035, 0
      %v1050 = vsel %vm278, %v1037, 0
      %v1053 = vsel %vm278, %v1039, 0
      %v1056 = vsel %vm278, %v1041, 0
      %v1059 = vsel %vm278, %v1043, 0
      %v1062 = vsel %vm278, %v1045, 0
      %v1065 = vsel %vm278, %v1044, 0
      %v1068 = vsel %vm300, %v1028, 0
      %1070 = vmatprep.subr.bf16.mxu0 0
      %1071 = vmatpush1.bf16.msra.mxu0 %v1068
      %1072 = vmatprep.subr.bf16.mxu0 0
      %1073 = vmatpush1.bf16.msra.mxu0 0
      %1074 = vmatprep.subr.bf16.mxu0 0
      %1075 = vmatpush1.bf16.msra.mxu0 0
      %1076 = vmatprep.subr.bf16.mxu0 0
      %1077 = vmatpush1.bf16.msra.mxu0 0
      %1078 = vmatprep.subr.bf16.mxu0 0
      %1079 = vmatpush1.bf16.msra.mxu0 0
      %1080 = vmatprep.subr.bf16.mxu0 0
      %1081 = vmatpush1.bf16.msra.mxu0 0
      %1082 = vmatprep.subr.bf16.mxu0 0
      %1083 = vmatpush1.bf16.msra.mxu0 0
      %1084 = vmatprep.subr.bf16.mxu0 0
      %1085 = vmatpush1.bf16.msra.mxu0 0
      %1086 = vmatprep.subr.bf16.mxu0 0
      %1087 = vmatpush1.bf16.msra.mxu0 0
      %1088 = vmatprep.subr.bf16.mxu0 0
      %1089 = vmatpush1.bf16.msra.mxu0 0
      %1090 = vmatprep.subr.bf16.mxu0 0
      %1091 = vmatpush1.bf16.msra.mxu0 0
      %1092 = vmatprep.subr.bf16.mxu0 0
      %1093 = vmatpush1.bf16.msra.mxu0 0
      %1094 = vmatprep.subr.bf16.mxu0 0
      %1095 = vmatpush1.bf16.msra.mxu0 0
      %1096 = vmatprep.subr.bf16.mxu0 0
      %1097 = vmatpush1.bf16.msra.mxu0 0
      %1098 = vmatprep.subr.bf16.mxu0 0
      %1099 = vmatpush1.bf16.msra.mxu0 0
      %1100 = vmatprep.subr.bf16.mxu0 0
      %1101 = vmatpush1.bf16.msra.mxu0 0
      %1102 = vmatprep.mubr.bf16.mxu0 0
      %1103 = vmatmul.mubr.bf16.gmra.mrb[0].mxu0 %v1047
      %v1104 = vpop.f32.mrb[0].mxu0
      %v1105 = vadd.f32 0.0, %v1104
      %v1106 = vpop.f32.mrb[0].mxu0
      %v1107 = vpop.f32.mrb[0].mxu0
      %v1108 = vadd.f32 0.0, %v1107
      %v1109 = vpop.f32.mrb[0].mxu0
      %1110 = vmatprep.mubr.bf16.mxu0 0
      %1111 = vmatmul.mubr.bf16.gmra.mrb[0].mxu0 %v1050
      %v1112 = vpop.f32.mrb[0].mxu0
      %v1113 = vadd.f32 0.0, %v1112
      %v1114 = vpop.f32.mrb[0].mxu0
      %v1115 = vpop.f32.mrb[0].mxu0
      %v1116 = vadd.f32 0.0, %v1115
      %v1117 = vpop.f32.mrb[0].mxu0
      %1118 = vmatprep.mubr.bf16.mxu0 0
      %1119 = vmatmul.mubr.bf16.gmra.mrb[0].mxu0 %v1053
      %v1120 = vpop.f32.mrb[0].mxu0
      %v1121 = vadd.f32 0.0, %v1120
      %v1122 = vpop.f32.mrb[0].mxu0
      %v1123 = vpop.f32.mrb[0].mxu0
      %v1124 = vadd.f32 0.0, %v1123
      %v1125 = vpop.f32.mrb[0].mxu0
      %1126 = vmatprep.mubr.bf16.mxu0 0
      %1127 = vmatmul.mubr.bf16.gmra.mrb[0].mxu0 %v1056
      %v1128 = vpop.f32.mrb[0].mxu0
      %v1129 = vadd.f32 0.0, %v1128
      %v1130 = vpop.f32.mrb[0].mxu0
      %v1131 = vpop.f32.mrb[0].mxu0
      %v1132 = vadd.f32 0.0, %v1131
      %v1133 = vpop.f32.mrb[0].mxu0
      %1134 = vmatprep.mubr.bf16.mxu0 0
      %1135 = vmatmul.mubr.bf16.gmra.mrb[0].mxu0 %v1059
      %v1136 = vpop.f32.mrb[0].mxu0
      %v1137 = vadd.f32 0.0, %v1136
      %v1138 = vpop.f32.mrb[0].mxu0
      %v1139 = vpop.f32.mrb[0].mxu0
      %v1140 = vadd.f32 0.0, %v1139
      %v1141 = vpop.f32.mrb[0].mxu0
      %1142 = vmatprep.mubr.bf16.mxu0 0
      %1143 = vmatmul.mubr.bf16.gmra.mrb[0].mxu0 %v1062
      %v1144 = vpop.f32.mrb[0].mxu0
      %v1145 = vadd.f32 0.0, %v1144
      %v1146 = vpop.f32.mrb[0].mxu0
      %v1147 = vpop.f32.mrb[0].mxu0
      %v1148 = vadd.f32 0.0, %v1147
      %v1149 = vpop.f32.mrb[0].mxu0
      %1150 = vmatprep.mubr.bf16.mxu0 0
      %1151 = vmatmul.mubr.bf16.gmra.mrb[0].mxu0 %v1065
      %v1152 = vpop.f32.mrb[0].mxu0
      %v1153 = vadd.f32 0.0, %v1152
      %v1154 = vpop.f32.mrb[0].mxu0
      %v1155 = vpop.f32.mrb[0].mxu0
      %v1156 = vpop.f32.mrb[0].mxu0
      %1157 = vdwg.mxu0
      %v1158 = vadd.f32 %v1013, %v1105
      %v1159 = vadd.f32 %v1014, %v1108
      %v1160 = vadd.f32 %v1015, %v1113
      %v1161 = vadd.f32 %v1016, %v1116
      %v1162 = vadd.f32 %v1017, %v1121
      %v1163 = vadd.f32 %v1018, %v1124
      %v1164 = vadd.f32 %v1019, %v1129
      %v1165 = vadd.f32 %v1020, %v1132
      %v1166 = vadd.f32 %v1021, %v1137
      %v1167 = vadd.f32 %v1022, %v1140
      %v1168 = vadd.f32 %v1023, %v1145
      %v1169 = vadd.f32 %v1024, %v1148
      %v1170 = vadd.f32 %v1025, %v1153
      %v1171 = vld [vmem:[%s165 + $0x8] sm:$0xc]
      %v1172 = vld [vmem:[%s165 + $0xc] sm:$0xf]
      %v1173 = vld [vmem:[%s165 + $0x10] sm:$0xf]
      %v1174 = vld [vmem:[%s165 + $0x14] sm:$0xf]
      %v1175 = vld [vmem:[%s165 + $0x18] sm:$0xf]
      %v1176 = vld [vmem:[%s165 + $0x1c] sm:$0xf]
      %v1177 = vld [vmem:[%s165 + $0x20] sm:$0xf]
      %v1178 = vld [vmem:[%s165 + $0x24] sm:$0xf]
      %v1179 = vld [vmem:[%s165 + $0x28] sm:$0xf]
      %v1180 = vld [vmem:[%s165 + $0x2c] sm:$0xf]
      %v1181 = vld [vmem:[%s165 + $0x30] sm:$0xf]
      %v1182 = vld [vmem:[%s165 + $0x34] sm:$0xf]
      %v1183 = vld [vmem:[%s165 + $0x38] sm:$0xf]
      %s1184 = scalar_lea.vmem %s1, 24
      %v1185 = vld [vmem:[%s1184] sm:$0xf]
      %v1199 = vunpack.c.l.b16 %v1171
      %v1200 = vunpack.c.l.b16 %v1172
      %v1201 = vunpack.c.l.b16 %v1173
      %v1202 = vunpack.c.l.b16 %v1174
      %v1203 = vunpack.c.l.b16 %v1175
      %v1204 = vunpack.c.l.b16 %v1176
      %v1205 = vunpack.c.l.b16 %v1177
      %v1206 = vunpack.c.l.b16 %v1178
      %v1207 = vunpack.c.l.b16 %v1179
      %v1208 = vunpack.c.l.b16 %v1180
      %v1209 = vunpack.c.l.b16 %v1181
      %v1210 = vunpack.c.l.b16 %v1182
      %v1211 = vunpack.c.l.b16 %v1183
      %v1212 = vpack.c.b16 %v1200, %v1199
      %v1213 = vpack.c.b16 %v1202, %v1201
      %v1214 = vpack.c.b16 %v1204, %v1203
      %v1215 = vpack.c.b16 %v1206, %v1205
      %v1216 = vpack.c.b16 %v1208, %v1207
      %v1217 = vpack.c.b16 %v1210, %v1209
      %v1218 = vpack.c.b16 %v1211, %v1211
      %v1219 = vrot.slane %v1212, 2
      %v1220 = vrot.slane %v1213, 2
      %v1221 = vsel %vm1032, %v1219, %v1220
      %v1222 = vrot.slane %v1214, 2
      %v1223 = vsel %vm1032, %v1220, %v1222
      %v1224 = vrot.slane %v1215, 2
      %v1225 = vsel %vm1032, %v1222, %v1224
      %v1226 = vrot.slane %v1216, 2
      %v1227 = vsel %vm1032, %v1224, %v1226
      %v1228 = vrot.slane %v1217, 2
      %v1229 = vsel %vm1032, %v1226, %v1228
      %v1230 = vrot.slane %v1218, 2
      %v1231 = vsel %vm1032, %v1228, %v1230
      %v1233 = vsel %vm278, %v1221, 0
      %v1236 = vsel %vm278, %v1223, 0
      %v1239 = vsel %vm278, %v1225, 0
      %v1242 = vsel %vm278, %v1227, 0
      %v1245 = vsel %vm278, %v1229, 0
      %v1248 = vsel %vm278, %v1231, 0
      %v1251 = vsel %vm278, %v1230, 0
      %v1254 = vsel %vm300, %v1185, 0
      %1256 = vmatprep.subr.bf16.mxu0 0
      %1257 = vmatpush1.bf16.msra.mxu0 %v1254
      %1258 = vmatprep.subr.bf16.mxu0 0
      %1259 = vmatpush1.bf16.msra.mxu0 0
      %1260 = vmatprep.subr.bf16.mxu0 0
      %1261 = vmatpush1.bf16.msra.mxu0 0
      %1262 = vmatprep.subr.bf16.mxu0 0
      %1263 = vmatpush1.bf16.msra.mxu0 0
      %1264 = vmatprep.subr.bf16.mxu0 0
      %1265 = vmatpush1.bf16.msra.mxu0 0
      %1266 = vmatprep.subr.bf16.mxu0 0
      %1267 = vmatpush1.bf16.msra.mxu0 0
      %1268 = vmatprep.subr.bf16.mxu0 0
      %1269 = vmatpush1.bf16.msra.mxu0 0
      %1270 = vmatprep.subr.bf16.mxu0 0
      %1271 = vmatpush1.bf16.msra.mxu0 0
      %1272 = vmatprep.subr.bf16.mxu0 0
      %1273 = vmatpush1.bf16.msra.mxu0 0
      %1274 = vmatprep.subr.bf16.mxu0 0
      %1275 = vmatpush1.bf16.msra.mxu0 0
      %1276 = vmatprep.subr.bf16.mxu0 0
      %1277 = vmatpush1.bf16.msra.mxu0 0
      %1278 = vmatprep.subr.bf16.mxu0 0
      %1279 = vmatpush1.bf16.msra.mxu0 0
      %1280 = vmatprep.subr.bf16.mxu0 0
      %1281 = vmatpush1.bf16.msra.mxu0 0
      %1282 = vmatprep.subr.bf16.mxu0 0
      %1283 = vmatpush1.bf16.msra.mxu0 0
      %1284 = vmatprep.subr.bf16.mxu0 0
      %1285 = vmatpush1.bf16.msra.mxu0 0
      %1286 = vmatprep.subr.bf16.mxu0 0
      %1287 = vmatpush1.bf16.msra.mxu0 0
      %1288 = vmatprep.mubr.bf16.mxu0 0
      %1289 = vmatmul.mubr.bf16.gmra.mrb[0].mxu0 %v1233
      %v1290 = vpop.f32.mrb[0].mxu0
      %v1291 = vadd.f32 0.0, %v1290
      %v1292 = vpop.f32.mrb[0].mxu0
      %v1293 = vpop.f32.mrb[0].mxu0
      %v1294 = vadd.f32 0.0, %v1293
      %v1295 = vpop.f32.mrb[0].mxu0
      %1296 = vmatprep.mubr.bf16.mxu0 0
      %1297 = vmatmul.mubr.bf16.gmra.mrb[0].mxu0 %v1236
      %v1298 = vpop.f32.mrb[0].mxu0
      %v1299 = vadd.f32 0.0, %v1298
      %v1300 = vpop.f32.mrb[0].mxu0
      %v1301 = vpop.f32.mrb[0].mxu0
      %v1302 = vadd.f32 0.0, %v1301
      %v1303 = vpop.f32.mrb[0].mxu0
      %1304 = vmatprep.mubr.bf16.mxu0 0
      %1305 = vmatmul.mubr.bf16.gmra.mrb[0].mxu0 %v1239
      %v1306 = vpop.f32.mrb[0].mxu0
      %v1307 = vadd.f32 0.0, %v1306
      %v1308 = vpop.f32.mrb[0].mxu0
      %v1309 = vpop.f32.mrb[0].mxu0
      %v1310 = vadd.f32 0.0, %v1309
      %v1311 = vpop.f32.mrb[0].mxu0
      %1312 = vmatprep.mubr.bf16.mxu0 0
      %1313 = vmatmul.mubr.bf16.gmra.mrb[0].mxu0 %v1242
      %v1314 = vpop.f32.mrb[0].mxu0
      %v1315 = vadd.f32 0.0, %v1314
      %v1316 = vpop.f32.mrb[0].mxu0
      %v1317 = vpop.f32.mrb[0].mxu0
      %v1318 = vadd.f32 0.0, %v1317
      %v1319 = vpop.f32.mrb[0].mxu0
      %1320 = vmatprep.mubr.bf16.mxu0 0
      %1321 = vmatmul.mubr.bf16.gmra.mrb[0].mxu0 %v1245
      %v1322 = vpop.f32.mrb[0].mxu0
      %v1323 = vadd.f32 0.0, %v1322
      %v1324 = vpop.f32.mrb[0].mxu0
      %v1325 = vpop.f32.mrb[0].mxu0
      %v1326 = vadd.f32 0.0, %v1325
      %v1327 = vpop.f32.mrb[0].mxu0
      %1328 = vmatprep.mubr.bf16.mxu0 0
      %1329 = vmatmul.mubr.bf16.gmra.mrb[0].mxu0 %v1248
      %v1330 = vpop.f32.mrb[0].mxu0
      %v1331 = vadd.f32 0.0, %v1330
      %v1332 = vpop.f32.mrb[0].mxu0
      %v1333 = vpop.f32.mrb[0].mxu0
      %v1334 = vadd.f32 0.0, %v1333
      %v1335 = vpop.f32.mrb[0].mxu0
      %1336 = vmatprep.mubr.bf16.mxu0 0
      %1337 = vmatmul.mubr.bf16.gmra.mrb[0].mxu0 %v1251
      %v1338 = vpop.f32.mrb[0].mxu0
      %v1339 = vadd.f32 0.0, %v1338
      %v1340 = vpop.f32.mrb[0].mxu0
      %v1341 = vpop.f32.mrb[0].mxu0
      %v1342 = vpop.f32.mrb[0].mxu0
      %1343 = vdwg.mxu0
      %v1344 = vadd.f32 %v1158, %v1291
      %v1345 = vadd.f32 %v1159, %v1294
      %v1346 = vadd.f32 %v1160, %v1299
      %v1347 = vadd.f32 %v1161, %v1302
      %v1348 = vadd.f32 %v1162, %v1307
      %v1349 = vadd.f32 %v1163, %v1310
      %v1350 = vadd.f32 %v1164, %v1315
      %v1351 = vadd.f32 %v1165, %v1318
      %v1352 = vadd.f32 %v1166, %v1323
      %v1353 = vadd.f32 %v1167, %v1326
      %v1354 = vadd.f32 %v1168, %v1331
      %v1355 = vadd.f32 %v1169, %v1334
      %v1356 = vadd.f32 %v1170, %v1339
      %v1357 = vld [vmem:[%s165 + $0x8] sm:$0xc]
      %v1358 = vld [vmem:[%s165 + $0xc] sm:$0xf]
      %v1359 = vld [vmem:[%s165 + $0x10] sm:$0xf]
      %v1360 = vld [vmem:[%s165 + $0x14] sm:$0xf]
      %v1361 = vld [vmem:[%s165 + $0x18] sm:$0xf]
      %v1362 = vld [vmem:[%s165 + $0x1c] sm:$0xf]
      %v1363 = vld [vmem:[%s165 + $0x20] sm:$0xf]
      %v1364 = vld [vmem:[%s165 + $0x24] sm:$0xf]
      %v1365 = vld [vmem:[%s165 + $0x28] sm:$0xf]
      %v1366 = vld [vmem:[%s165 + $0x2c] sm:$0xf]
      %v1367 = vld [vmem:[%s165 + $0x30] sm:$0xf]
      %v1368 = vld [vmem:[%s165 + $0x34] sm:$0xf]
      %v1369 = vld [vmem:[%s165 + $0x38] sm:$0xf]
      %v1370 = vld [vmem:[%s165 + $0x3c] sm:$0x1]
      %s1371 = scalar_lea.vmem %s1, 28
      %v1372 = vld [vmem:[%s1371] sm:$0xf]
      %v1387 = vunpack.c.l.b16 %v1357
      %v1388 = vunpack.c.l.b16 %v1358
      %v1389 = vunpack.c.l.b16 %v1359
      %v1390 = vunpack.c.l.b16 %v1360
      %v1391 = vunpack.c.l.b16 %v1361
      %v1392 = vunpack.c.l.b16 %v1362
      %v1393 = vunpack.c.l.b16 %v1363
      %v1394 = vunpack.c.l.b16 %v1364
      %v1395 = vunpack.c.l.b16 %v1365
      %v1396 = vunpack.c.l.b16 %v1366
      %v1397 = vunpack.c.l.b16 %v1367
      %v1398 = vunpack.c.l.b16 %v1368
      %v1399 = vunpack.c.l.b16 %v1369
      %v1400 = vunpack.c.l.b16 %v1370
      %v1401 = vpack.c.b16 %v1388, %v1387
      %v1402 = vpack.c.b16 %v1390, %v1389
      %v1403 = vpack.c.b16 %v1392, %v1391
      %v1404 = vpack.c.b16 %v1394, %v1393
      %v1405 = vpack.c.b16 %v1396, %v1395
      %v1406 = vpack.c.b16 %v1398, %v1397
      %v1407 = vpack.c.b16 %v1400, %v1399
      %vm1408 = vsmask.f32 5376
      %v1410 = vshrl.u32 %v1401, 16
      %v1412 = vrot.slane %v1410, 2
      %v1413 = vshll.u32 %v1401, 16
      %v1415 = vrot.slane %v1413, 3
      %v1416 = vor.u32 %v1412, %v1415
      %v1418 = vshrl.u32 %v1402, 16
      %v1420 = vrot.slane %v1418, 2
      %v1421 = vshll.u32 %v1402, 16
      %v1423 = vrot.slane %v1421, 3
      %v1424 = vor.u32 %v1420, %v1423
      %v1425 = vsel %vm1408, %v1416, %v1424
      %v1427 = vshrl.u32 %v1403, 16
      %v1429 = vrot.slane %v1427, 2
      %v1430 = vshll.u32 %v1403, 16
      %v1432 = vrot.slane %v1430, 3
      %v1433 = vor.u32 %v1429, %v1432
      %v1434 = vsel %vm1408, %v1424, %v1433
      %v1436 = vshrl.u32 %v1404, 16
      %v1438 = vrot.slane %v1436, 2
      %v1439 = vshll.u32 %v1404, 16
      %v1441 = vrot.slane %v1439, 3
      %v1442 = vor.u32 %v1438, %v1441
      %v1443 = vsel %vm1408, %v1433, %v1442
      %v1445 = vshrl.u32 %v1405, 16
      %v1447 = vrot.slane %v1445, 2
      %v1448 = vshll.u32 %v1405, 16
      %v1450 = vrot.slane %v1448, 3
      %v1451 = vor.u32 %v1447, %v1450
      %v1452 = vsel %vm1408, %v1442, %v1451
      %v1454 = vshrl.u32 %v1406, 16
      %v1456 = vrot.slane %v1454, 2
      %v1457 = vshll.u32 %v1406, 16
      %v1459 = vrot.slane %v1457, 3
      %v1460 = vor.u32 %v1456, %v1459
      %v1461 = vsel %vm1408, %v1451, %v1460
      %v1463 = vshrl.u32 %v1407, 16
      %v1465 = vrot.slane %v1463, 2
      %v1466 = vshll.u32 %v1407, 16
      %v1468 = vrot.slane %v1466, 3
      %v1469 = vor.u32 %v1465, %v1468
      %v1470 = vsel %vm1408, %v1460, %v1469
      %v1472 = vsel %vm278, %v1425, 0
      %v1475 = vsel %vm278, %v1434, 0
      %v1478 = vsel %vm278, %v1443, 0
      %v1481 = vsel %vm278, %v1452, 0
      %v1484 = vsel %vm278, %v1461, 0
      %v1487 = vsel %vm278, %v1470, 0
      %v1490 = vsel %vm278, %v1469, 0
      %v1493 = vsel %vm300, %v1372, 0
      %1495 = vmatprep.subr.bf16.mxu0 0
      %1496 = vmatpush1.bf16.msra.mxu0 %v1493
      %1497 = vmatprep.subr.bf16.mxu0 0
      %1498 = vmatpush1.bf16.msra.mxu0 0
      %1499 = vmatprep.subr.bf16.mxu0 0
      %1500 = vmatpush1.bf16.msra.mxu0 0
      %1501 = vmatprep.subr.bf16.mxu0 0
      %1502 = vmatpush1.bf16.msra.mxu0 0
      %1503 = vmatprep.subr.bf16.mxu0 0
      %1504 = vmatpush1.bf16.msra.mxu0 0
      %1505 = vmatprep.subr.bf16.mxu0 0
      %1506 = vmatpush1.bf16.msra.mxu0 0
      %1507 = vmatprep.subr.bf16.mxu0 0
      %1508 = vmatpush1.bf16.msra.mxu0 0
      %1509 = vmatprep.subr.bf16.mxu0 0
      %1510 = vmatpush1.bf16.msra.mxu0 0
      %1511 = vmatprep.subr.bf16.mxu0 0
      %1512 = vmatpush1.bf16.msra.mxu0 0
      %1513 = vmatprep.subr.bf16.mxu0 0
      %1514 = vmatpush1.bf16.msra.mxu0 0
      %1515 = vmatprep.subr.bf16.mxu0 0
      %1516 = vmatpush1.bf16.msra.mxu0 0
      %1517 = vmatprep.subr.bf16.mxu0 0
      %1518 = vmatpush1.bf16.msra.mxu0 0
      %1519 = vmatprep.subr.bf16.mxu0 0
      %1520 = vmatpush1.bf16.msra.mxu0 0
      %1521 = vmatprep.subr.bf16.mxu0 0
      %1522 = vmatpush1.bf16.msra.mxu0 0
      %1523 = vmatprep.subr.bf16.mxu0 0
      %1524 = vmatpush1.bf16.msra.mxu0 0
      %1525 = vmatprep.subr.bf16.mxu0 0
      %1526 = vmatpush1.bf16.msra.mxu0 0
      %1527 = vmatprep.mubr.bf16.mxu0 0
      %1528 = vmatmul.mubr.bf16.gmra.mrb[0].mxu0 %v1472
      %v1529 = vpop.f32.mrb[0].mxu0
      %v1530 = vadd.f32 0.0, %v1529
      %v1531 = vpop.f32.mrb[0].mxu0
      %v1532 = vpop.f32.mrb[0].mxu0
      %v1533 = vadd.f32 0.0, %v1532
      %v1534 = vpop.f32.mrb[0].mxu0
      %1535 = vmatprep.mubr.bf16.mxu0 0
      %1536 = vmatmul.mubr.bf16.gmra.mrb[0].mxu0 %v1475
      %v1537 = vpop.f32.mrb[0].mxu0
      %v1538 = vadd.f32 0.0, %v1537
      %v1539 = vpop.f32.mrb[0].mxu0
      %v1540 = vpop.f32.mrb[0].mxu0
      %v1541 = vadd.f32 0.0, %v1540
      %v1542 = vpop.f32.mrb[0].mxu0
      %1543 = vmatprep.mubr.bf16.mxu0 0
      %1544 = vmatmul.mubr.bf16.gmra.mrb[0].mxu0 %v1478
      %v1545 = vpop.f32.mrb[0].mxu0
      %v1546 = vadd.f32 0.0, %v1545
      %v1547 = vpop.f32.mrb[0].mxu0
      %v1548 = vpop.f32.mrb[0].mxu0
      %v1549 = vadd.f32 0.0, %v1548
      %v1550 = vpop.f32.mrb[0].mxu0
      %1551 = vmatprep.mubr.bf16.mxu0 0
      %1552 = vmatmul.mubr.bf16.gmra.mrb[0].mxu0 %v1481
      %v1553 = vpop.f32.mrb[0].mxu0
      %v1554 = vadd.f32 0.0, %v1553
      %v1555 = vpop.f32.mrb[0].mxu0
      %v1556 = vpop.f32.mrb[0].mxu0
      %v1557 = vadd.f32 0.0, %v1556
      %v1558 = vpop.f32.mrb[0].mxu0
      %1559 = vmatprep.mubr.bf16.mxu0 0
      %1560 = vmatmul.mubr.bf16.gmra.mrb[0].mxu0 %v1484
      %v1561 = vpop.f32.mrb[0].mxu0
      %v1562 = vadd.f32 0.0, %v1561
      %v1563 = vpop.f32.mrb[0].mxu0
      %v1564 = vpop.f32.mrb[0].mxu0
      %v1565 = vadd.f32 0.0, %v1564
      %v1566 = vpop.f32.mrb[0].mxu0
      %1567 = vmatprep.mubr.bf16.mxu0 0
      %1568 = vmatmul.mubr.bf16.gmra.mrb[0].mxu0 %v1487
      %v1569 = vpop.f32.mrb[0].mxu0
      %v1570 = vadd.f32 0.0, %v1569
      %v1571 = vpop.f32.mrb[0].mxu0
      %v1572 = vpop.f32.mrb[0].mxu0
      %v1573 = vadd.f32 0.0, %v1572
      %v1574 = vpop.f32.mrb[0].mxu0
      %1575 = vmatprep.mubr.bf16.mxu0 0
      %1576 = vmatmul.mubr.bf16.gmra.mrb[0].mxu0 %v1490
      %v1577 = vpop.f32.mrb[0].mxu0
      %v1578 = vadd.f32 0.0, %v1577
      %v1579 = vpop.f32.mrb[0].mxu0
      %v1580 = vpop.f32.mrb[0].mxu0
      %v1581 = vpop.f32.mrb[0].mxu0
      %1582 = vdwg.mxu0
      %v1583 = vadd.f32 %v1344, %v1530
      %v1584 = vadd.f32 %v1345, %v1533
      %v1585 = vadd.f32 %v1346, %v1538
      %v1586 = vadd.f32 %v1347, %v1541
      %v1587 = vadd.f32 %v1348, %v1546
      %v1588 = vadd.f32 %v1349, %v1549
      %v1589 = vadd.f32 %v1350, %v1554
      %v1590 = vadd.f32 %v1351, %v1557
      %v1591 = vadd.f32 %v1352, %v1562
      %v1592 = vadd.f32 %v1353, %v1565
      %v1593 = vadd.f32 %v1354, %v1570
      %v1594 = vadd.f32 %v1355, %v1573
      %v1595 = vadd.f32 %v1356, %v1578
      %v1596 = vld [vmem:[%s165 + $0x8] sm:$0x8]
      %s1597 = scalar_lea.vmem %s1, 32
      %v1598 = vld [vmem:[%s1597] sm:$0xf]
      %v1600 = vunpack.c.l.b16 %v1596
      %v1601 = vpack.c.b16 %v1388, %v1600
      %vm1602 = vcmask 1044480
      %v1603 = vrot.slane %v1601, 3
      %v1604 = vrot.slane %v1402, 3
      %v1605 = vsel %vm1602, %v1603, %v1604
      %v1606 = vrot.slane %v1403, 3
      %v1607 = vsel %vm1602, %v1604, %v1606
      %v1608 = vrot.slane %v1404, 3
      %v1609 = vsel %vm1602, %v1606, %v1608
      %v1610 = vrot.slane %v1405, 3
      %v1611 = vsel %vm1602, %v1608, %v1610
      %v1612 = vrot.slane %v1406, 3
      %v1613 = vsel %vm1602, %v1610, %v1612
      %v1614 = vrot.slane %v1407, 3
      %v1615 = vsel %vm1602, %v1612, %v1614
      %v1617 = vsel %vm278, %v1605, 0
      %v1620 = vsel %vm278, %v1607, 0
      %v1623 = vsel %vm278, %v1609, 0
      %v1626 = vsel %vm278, %v1611, 0
      %v1629 = vsel %vm278, %v1613, 0
      %v1632 = vsel %vm278, %v1615, 0
      %v1635 = vsel %vm278, %v1614, 0
      %v1638 = vsel %vm300, %v1598, 0
      %1640 = vmatprep.subr.bf16.mxu0 0
      %1641 = vmatpush1.bf16.msra.mxu0 %v1638
      %1642 = vmatprep.subr.bf16.mxu0 0
      %1643 = vmatpush1.bf16.msra.mxu0 0
      %1644 = vmatprep.subr.bf16.mxu0 0
      %1645 = vmatpush1.bf16.msra.mxu0 0
      %1646 = vmatprep.subr.bf16.mxu0 0
      %1647 = vmatpush1.bf16.msra.mxu0 0
      %1648 = vmatprep.subr.bf16.mxu0 0
      %1649 = vmatpush1.bf16.msra.mxu0 0
      %1650 = vmatprep.subr.bf16.mxu0 0
      %1651 = vmatpush1.bf16.msra.mxu0 0
      %1652 = vmatprep.subr.bf16.mxu0 0
      %1653 = vmatpush1.bf16.msra.mxu0 0
      %1654 = vmatprep.subr.bf16.mxu0 0
      %1655 = vmatpush1.bf16.msra.mxu0 0
      %1656 = vmatprep.subr.bf16.mxu0 0
      %1657 = vmatpush1.bf16.msra.mxu0 0
      %1658 = vmatprep.subr.bf16.mxu0 0
      %1659 = vmatpush1.bf16.msra.mxu0 0
      %1660 = vmatprep.subr.bf16.mxu0 0
      %1661 = vmatpush1.bf16.msra.mxu0 0
      %1662 = vmatprep.subr.bf16.mxu0 0
      %1663 = vmatpush1.bf16.msra.mxu0 0
      %1664 = vmatprep.subr.bf16.mxu0 0
      %1665 = vmatpush1.bf16.msra.mxu0 0
      %1666 = vmatprep.subr.bf16.mxu0 0
      %1667 = vmatpush1.bf16.msra.mxu0 0
      %1668 = vmatprep.subr.bf16.mxu0 0
      %1669 = vmatpush1.bf16.msra.mxu0 0
      %1670 = vmatprep.subr.bf16.mxu0 0
      %1671 = vmatpush1.bf16.msra.mxu0 0
      %1672 = vmatprep.mubr.bf16.mxu0 0
      %1673 = vmatmul.mubr.bf16.gmra.mrb[0].mxu0 %v1617
      %v1674 = vpop.f32.mrb[0].mxu0
      %v1675 = vadd.f32 0.0, %v1674
      %v1676 = vpop.f32.mrb[0].mxu0
      %v1677 = vpop.f32.mrb[0].mxu0
      %v1678 = vadd.f32 0.0, %v1677
      %v1679 = vpop.f32.mrb[0].mxu0
      %1680 = vmatprep.mubr.bf16.mxu0 0
      %1681 = vmatmul.mubr.bf16.gmra.mrb[0].mxu0 %v1620
      %v1682 = vpop.f32.mrb[0].mxu0
      %v1683 = vadd.f32 0.0, %v1682
      %v1684 = vpop.f32.mrb[0].mxu0
      %v1685 = vpop.f32.mrb[0].mxu0
      %v1686 = vadd.f32 0.0, %v1685
      %v1687 = vpop.f32.mrb[0].mxu0
      %1688 = vmatprep.mubr.bf16.mxu0 0
      %1689 = vmatmul.mubr.bf16.gmra.mrb[0].mxu0 %v1623
      %v1690 = vpop.f32.mrb[0].mxu0
      %v1691 = vadd.f32 0.0, %v1690
      %v1692 = vpop.f32.mrb[0].mxu0
      %v1693 = vpop.f32.mrb[0].mxu0
      %v1694 = vadd.f32 0.0, %v1693
      %v1695 = vpop.f32.mrb[0].mxu0
      %1696 = vmatprep.mubr.bf16.mxu0 0
      %1697 = vmatmul.mubr.bf16.gmra.mrb[0].mxu0 %v1626
      %v1698 = vpop.f32.mrb[0].mxu0
      %v1699 = vadd.f32 0.0, %v1698
      %v1700 = vpop.f32.mrb[0].mxu0
      %v1701 = vpop.f32.mrb[0].mxu0
      %v1702 = vadd.f32 0.0, %v1701
      %v1703 = vpop.f32.mrb[0].mxu0
      %1704 = vmatprep.mubr.bf16.mxu0 0
      %1705 = vmatmul.mubr.bf16.gmra.mrb[0].mxu0 %v1629
      %v1706 = vpop.f32.mrb[0].mxu0
      %v1707 = vadd.f32 0.0, %v1706
      %v1708 = vpop.f32.mrb[0].mxu0
      %v1709 = vpop.f32.mrb[0].mxu0
      %v1710 = vadd.f32 0.0, %v1709
      %v1711 = vpop.f32.mrb[0].mxu0
      %1712 = vmatprep.mubr.bf16.mxu0 0
      %1713 = vmatmul.mubr.bf16.gmra.mrb[0].mxu0 %v1632
      %v1714 = vpop.f32.mrb[0].mxu0
      %v1715 = vadd.f32 0.0, %v1714
      %v1716 = vpop.f32.mrb[0].mxu0
      %v1717 = vpop.f32.mrb[0].mxu0
      %v1718 = vadd.f32 0.0, %v1717
      %v1719 = vpop.f32.mrb[0].mxu0
      %1720 = vmatprep.mubr.bf16.mxu0 0
      %1721 = vmatmul.mubr.bf16.gmra.mrb[0].mxu0 %v1635
      %v1722 = vpop.f32.mrb[0].mxu0
      %v1723 = vadd.f32 0.0, %v1722
      %v1724 = vpop.f32.mrb[0].mxu0
      %v1725 = vpop.f32.mrb[0].mxu0
      %v1726 = vpop.f32.mrb[0].mxu0
      %1727 = vdwg.mxu0
      %v1728 = vadd.f32 %v1583, %v1675
      %v1729 = vadd.f32 %v1584, %v1678
      %v1730 = vadd.f32 %v1585, %v1683
      %v1731 = vadd.f32 %v1586, %v1686
      %v1732 = vadd.f32 %v1587, %v1691
      %v1733 = vadd.f32 %v1588, %v1694
      %v1734 = vadd.f32 %v1589, %v1699
      %v1735 = vadd.f32 %v1590, %v1702
      %v1736 = vadd.f32 %v1591, %v1707
      %v1737 = vadd.f32 %v1592, %v1710
      %v1738 = vadd.f32 %v1593, %v1715
      %v1739 = vadd.f32 %v1594, %v1718
      %v1740 = vadd.f32 %v1595, %v1723
      %v1741 = vld [vmem:[%s2] sm:$0x1]
      %v1743 = vlaneseq
      %v1744 = vshrl.u32 %v1743, 7
      %v1745 = vsub.s32 0, %v1744
      %v1746 = vrot.slane %v1741, %v1745
      %v1748 = vadd.f32 %v1728, %v1746
      %v1749 = vadd.f32 %v1729, %v1746
      %v1750 = vadd.f32 %v1730, %v1746
      %v1751 = vadd.f32 %v1731, %v1746
      %v1752 = vadd.f32 %v1732, %v1746
      %v1753 = vadd.f32 %v1733, %v1746
      %v1754 = vadd.f32 %v1734, %v1746
      %v1755 = vadd.f32 %v1735, %v1746
      %v1756 = vadd.f32 %v1736, %v1746
      %v1757 = vadd.f32 %v1737, %v1746
      %v1758 = vadd.f32 %v1738, %v1746
      %v1759 = vadd.f32 %v1739, %v1746
      %v1760 = vadd.f32 %v1740, %v1746
      %1761 = vst.msk [vmem:[%s170] sm:$0xff] %vm278, %v1748
      %1762 = vst.msk [vmem:[%s170 + $0x8] sm:$0xff] %vm278, %v1749
      %1763 = vst.msk [vmem:[%s170 + $0x10] sm:$0xff] %vm278, %v1750
      %1764 = vst.msk [vmem:[%s170 + $0x18] sm:$0xff] %vm278, %v1751
      %1765 = vst.msk [vmem:[%s170 + $0x20] sm:$0xff] %vm278, %v1752
      %1766 = vst.msk [vmem:[%s170 + $0x28] sm:$0xff] %vm278, %v1753
      %1767 = vst.msk [vmem:[%s170 + $0x30] sm:$0xff] %vm278, %v1754
      %1768 = vst.msk [vmem:[%s170 + $0x38] sm:$0xff] %vm278, %v1755
      %1769 = vst.msk [vmem:[%s170 + $0x40] sm:$0xff] %vm278, %v1756
      %1770 = vst.msk [vmem:[%s170 + $0x48] sm:$0xff] %vm278, %v1757
      %1771 = vst.msk [vmem:[%s170 + $0x50] sm:$0xff] %vm278, %v1758
      %1772 = vst.msk [vmem:[%s170 + $0x58] sm:$0xff] %vm278, %v1759
      %vm1773 = vcmask 60416
      %1774 = vst.msk [vmem:[%s170 + $0x60] sm:$0xf] %vm1773, %v1760
      %p1775 = scmp.lt.s32.totalorder %s14, 1
      %s1776 = scalar_select %p1775, %s14, 1
      %s1777 = smul.addr %s1776, 13
      %s1778 = smul.addr %s1777, 8
      %s1779 = scalar_lea.vmem %s3, %s1778
      // Predicated region
      $region33: #{pyra_conv_block.8} parent=31 // pred_check
        %p1780 = pneg %p100
      $region34: #{pyra_conv_block.8} parent=31 // pred_check_branch
        %1782 = sbr.rel (%p1780) target = $region36
      $region35: #{pyra_conv_block.8} parent=31 // pred_region
        _
      $region36: #{pyra_conv_block.8} parent=31 // pred_fallthru
        _
    $region32: #{pyra_conv_block.8} parent=5 // pred_fallthru
      _
    %p1783 = scmp.le.s32.totalorder 2, %s9
    // Predicated region
    $region37: #{pyra_conv_block.8} parent=5 // pred_check
      %p1784 = pneg %p1783
    $region38: #{pyra_conv_block.8} parent=5 // pred_check_branch
      %1786 = sbr.rel (%p1784) target = $region40
    $region39: #{pyra_conv_block.8} parent=5 // pred_region
      %s1787 = ssub.s32 %s9, 2
      // Predicated region
      $region41: #{pyra_conv_block.8} parent=39 // pred_check
        %p1788 = pneg %p106
      $region42: #{pyra_conv_block.8} parent=39 // pred_check_branch
        %1790 = sbr.rel (%p1788) target = $region44
      $region43: #{pyra_conv_block.8} parent=39 // pred_region
        %p1791 = scmp.lt.s32.totalorder %s15, 1
        %s1792 = scalar_select %p1791, %s15, 1
        %s1793 = smul.addr %s1792, 13
        %s1794 = smul.addr %s1793, 8
        %s1795 = scalar_lea.vmem %s3, %s1794
      $region44: #{pyra_conv_block.8} parent=39 // pred_fallthru
        _
    $region40: #{pyra_conv_block.8} parent=5 // pred_fallthru
      _
  $region6: #{pyra_conv_block.8} parent=0 // loop_footer
    %s13 = sadd.s32 1, %s9
  $region7: #{pyra_conv_block.8} parent=0 // loop_footer_branch
    %8 = sbr.rel target = $region3
  $region8: #{pyra_conv_block.8} parent=0 // loop_exit
    _

// kernel: pyra_conv_block.7
$region0: #{pyra_conv_block.7}
  #allocation0 [shape = 'u32[]', space=smem, size = 0x4, offset = 0x4, fixed_abs, tag = 'smem constant byte address 0x4 - core index']
  #allocation1 [shape = 'u32[144,128]{1,0:T(1,128)}', space=vmem, size = 0x12000, scoped, tag = 'internal scratch']
  %s0 = inlined_call_operand.vmem [shape: bf16[2,197,8], index: 0, kind: input, shape index: {}]
  %s1 = inlined_call_operand.vmem [shape: bf16[9,8,8], index: 1, kind: input, shape index: {}]
  %s2 = inlined_call_operand.vmem [shape: f32[1,8], index: 2, kind: input, shape index: {}]
  %s3 = inlined_call_operand.vmem [shape: f32[2,169,8], index: 3, kind: output, shape index: {}]
  %s4 = sld [smem:[#allocation0]]
  $region45: #{pyra_conv_block.7} parent=0
    _
  %s6 = ssub.s32 1, %s4
  %s7 = scalar_select 0, %s6, %s4
  loop: start=0, step=1, limit=4
  $region2: #{pyra_conv_block.7} parent=0 // loop_pre_header
    _
  $region3: #{pyra_conv_block.7} parent=0 // loop_header
    %s9 = sphi 0, %s13
    %p10 = scmp.ge.s32.totalorder %s9, 4
    %s19 = sphi 0, %s21
    %s22 = sphi 0, %s19
    %s23 = sphi 0, %s22
    %s39 = sphi 0, %s23
    %s43 = sphi 0, %s43
    %s45 = sphi 0, %s43
    %s46 = sphi 0, %s45
    %s60 = sphi 0, %s46
    %s64 = sphi 0, %s64
    %s66 = sphi 0, %s64
    %s67 = sphi 0, %s66
    %s81 = sphi 0, %s67
    %s87 = sphi 0, %s89
    %s90 = sphi 0, %s87
    %s91 = sphi 0, %s90
    %s107 = sphi 0, %s91
  $region4: #{pyra_conv_block.7} parent=0 // loop_header_branch
    %12 = sbr.rel (%p10) target = $region8
  $region5: #{pyra_conv_block.7} parent=0 // loop_body
    %s14 = ssub.s32 %s9, 1
    %s15 = ssub.s32 %s9, 2
    %s16 = sadd.s32 %s9, 1
    %s17 = ssub.s32 %s9, %s16
    %p18 = scmp.eq.s32.totalorder %s17, 0
    %s20 = sadd.s32 %s19, 1
    %s21 = scalar_select %p18, %s19, %s20
    %p24 = pneg %p18
    %p25 = scmp.eq.s32.totalorder %s9, 1
    %p26 = por %p24, %p25
    %p27 = scmp.ne.s32.totalorder %s19, %s22
    %p28 = scmp.eq.s32.totalorder %s9, 0
    %p29 = por %p27, %p28
    %p30 = scmp.ne.s32.totalorder %s19, %s22
    %p31 = scmp.eq.s32.totalorder %s14, 1
    %p32 = por %p30, %p31
    %p33 = scmp.ne.s32.totalorder %s22, %s23
    %p34 = scmp.eq.s32.totalorder %s14, 0
    %p35 = por %p33, %p34
    %p36 = scmp.ne.s32.totalorder %s22, %s23
    %p37 = scmp.eq.s32.totalorder %s15, 1
    %p38 = por %p36, %p37
    %p40 = scmp.ne.s32.totalorder %s23, %s39
    %p41 = scmp.eq.s32.totalorder %s15, 0
    %p42 = por %p40, %p41
    %s44 = sadd.s32 %s43, 1
    %p47 = scmp.eq.s32.totalorder %s9, 1
    %p48 = scmp.ne.s32.totalorder %s43, %s45
    %p49 = scmp.eq.s32.totalorder %s9, 0
    %p50 = por %p48, %p49
    %p51 = scmp.ne.s32.totalorder %s43, %s45
    %p52 = scmp.eq.s32.totalorder %s14, 1
    %p53 = por %p51, %p52
    %p54 = scmp.ne.s32.totalorder %s45, %s46
    %p55 = scmp.eq.s32.totalorder %s14, 0
    %p56 = por %p54, %p55
    %p57 = scmp.ne.s32.totalorder %s45, %s46
    %p58 = scmp.eq.s32.totalorder %s15, 1
    %p59 = por %p57, %p58
    %p61 = scmp.ne.s32.totalorder %s46, %s60
    %p62 = scmp.eq.s32.totalorder %s15, 0
    %p63 = por %p61, %p62
    %s65 = sadd.s32 %s64, 1
    %p68 = scmp.eq.s32.totalorder %s9, 1
    %p69 = scmp.ne.s32.totalorder %s64, %s66
    %p70 = scmp.eq.s32.totalorder %s9, 0
    %p71 = por %p69, %p70
    %p72 = scmp.ne.s32.totalorder %s64, %s66
    %p73 = scmp.eq.s32.totalorder %s14, 1
    %p74 = por %p72, %p73
    %p75 = scmp.ne.s32.totalorder %s66, %s67
    %p76 = scmp.eq.s32.totalorder %s14, 0
    %p77 = por %p75, %p76
    %p78 = scmp.ne.s32.totalorder %s66, %s67
    %p79 = scmp.eq.s32.totalorder %s15, 1
    %p80 = por %p78, %p79
    %p82 = scmp.ne.s32.totalorder %s67, %s81
    %p83 = scmp.eq.s32.totalorder %s15, 0
    %p84 = por %p82, %p83
    %s85 = ssub.s32 %s9, %s16
    %p86 = scmp.eq.s32.totalorder %s85, 0
    %s88 = sadd.s32 %s87, 1
    %s89 = scalar_select %p86, %s87, %s88
    %p92 = pneg %p86
    %p93 = scmp.eq.s32.totalorder %s9, 1
    %p94 = por %p92, %p93
    %p95 = scmp.ne.s32.totalorder %s87, %s90
    %p96 = scmp.eq.s32.totalorder %s9, 0
    %p97 = por %p95, %p96
    %p98 = scmp.ne.s32.totalorder %s87, %s90
    %p99 = scmp.eq.s32.totalorder %s14, 1
    %p100 = por %p98, %p99
    %p101 = scmp.ne.s32.totalorder %s90, %s91
    %p102 = scmp.eq.s32.totalorder %s14, 0
    %p103 = por %p101, %p102
    %p104 = scmp.ne.s32.totalorder %s90, %s91
    %p105 = scmp.eq.s32.totalorder %s15, 1
    %p106 = por %p104, %p105
    %p108 = scmp.ne.s32.totalorder %s91, %s107
    %p109 = scmp.eq.s32.totalorder %s15, 0
    %p110 = por %p108, %p109
    %p111 = scmp.le.s32.totalorder 1, %s9
    %p112 = scmp.lt.s32.totalorder %s9, 3
    %p113 = pnand %p111, %p112
    %p114 = pneg %p113
    // Predicated region
    $region9: #{pyra_conv_block.7} parent=5 // pred_check
      _
    $region10: #{pyra_conv_block.7} parent=5 // pred_check_branch
      %116 = sbr.rel (%p113) target = $region12
    $region11: #{pyra_conv_block.7} parent=5 // pred_region
      %s117 = ssub.s32 %s9, 1
      // Predicated region
      $region13: #{pyra_conv_block.7} parent=11 // pred_check
        %p118 = pneg %p56
      $region14: #{pyra_conv_block.7} parent=11 // pred_check_branch
        %120 = sbr.rel (%p118) target = $region16
      $region15: #{pyra_conv_block.7} parent=11 // pred_region
        _
      $region16: #{pyra_conv_block.7} parent=11 // pred_fallthru
        _
      // Predicated region
      $region17: #{pyra_conv_block.7} parent=11 // pred_check
        %p121 = pneg %p77
      $region18: #{pyra_conv_block.7} parent=11 // pred_check_branch
        %123 = sbr.rel (%p121) target = $region20
      $region19: #{pyra_conv_block.7} parent=11 // pred_region
        _
      $region20: #{pyra_conv_block.7} parent=11 // pred_fallthru
        _
    $region12: #{pyra_conv_block.7} parent=5 // pred_fallthru
      _
    %p124 = scmp.lt.s32.totalorder %s9, 2
    // Predicated region
    $region21: #{pyra_conv_block.7} parent=5 // pred_check
      %p125 = pneg %p124
    $region22: #{pyra_conv_block.7} parent=5 // pred_check_branch
      %127 = sbr.rel (%p125) target = $region24
    $region23: #{pyra_conv_block.7} parent=5 // pred_region
      // Predicated region
      $region25: #{pyra_conv_block.7} parent=23 // pred_check
        %p128 = pneg %p29
      $region26: #{pyra_conv_block.7} parent=23 // pred_check_branch
        %130 = sbr.rel (%p128) target = $region28
      $region27: #{pyra_conv_block.7} parent=23 // pred_region
        %p131 = scmp.lt.s32.totalorder %s9, 1
        %s132 = scalar_select %p131, %s9, 1
        %s133 = smul.addr %s132, 25
        %s134 = smul.addr %s133, 4
        %s135 = scalar_lea.vmem %s0, %s134
      $region28: #{pyra_conv_block.7} parent=23 // pred_fallthru
        _
    $region24: #{pyra_conv_block.7} parent=5 // pred_fallthru
      _
    %p136 = scmp.le.s32.totalorder 1, %s9
    %p137 = scmp.lt.s32.totalorder %s9, 3
    %p138 = pnand %p136, %p137
    %p139 = pneg %p138
    // Predicated region
    $region29: #{pyra_conv_block.7} parent=5 // pred_check
      _
    $region30: #{pyra_conv_block.7} parent=5 // pred_check_branch
      %141 = sbr.rel (%p138) target = $region32
    $region31: #{pyra_conv_block.7} parent=5 // pred_region
      %s142 = ssub.s32 %s9, 1
      %p143 = scmp.lt.s32.totalorder %s14, 1
      %s144 = scalar_select %p143, %s14, 1
      %s145 = smul.addr %s144, 25
      %s146 = smul.addr %s145, 4
      %s147 = scalar_lea.vmem %s0, %s146
      %p148 = pneg %p35
      %p149 = pneg %p32
      %p150 = pneg %p56
      %p151 = pneg %p53
      %p152 = pneg %p77
      %p153 = pneg %p74
      %p154 = pneg %p103
      %p155 = pneg %p100
      %p156 = scmp.lt.s32.totalorder %s14, 1
      %s157 = scalar_select %p156, %s14, 1
      %s158 = smul.addr %s157, 22
      %s159 = smul.addr %s158, 8
      %s160 = scalar_lea.vmem %s3, %s159
      %p161 = scmp.lt.s32.totalorder %s14, 1
      %s162 = scalar_select %p161, %s14, 1
      %s163 = smul.addr %s162, 25
      %s164 = smul.addr %s163, 4
      %s165 = scalar_lea.vmem %s0, %s164
      %p166 = scmp.lt.s32.totalorder %s14, 1
      %s167 = scalar_select %p166, %s14, 1
      %s168 = smul.addr %s167, 22
      %s169 = smul.addr %s168, 8
      %s170 = scalar_lea.vmem %s3, %s169
      %v172 = vld [vmem:[%s165] sm:$0xf]
      %v173 = vld [vmem:[%s165 + $0x4] sm:$0xf]
      %v174 = vld [vmem:[%s165 + $0x8] sm:$0xf]
      %v175 = vld [vmem:[%s165 + $0xc] sm:$0xf]
      %v176 = vld [vmem:[%s165 + $0x10] sm:$0xf]
      %v177 = vld [vmem:[%s165 + $0x14] sm:$0xf]
      %v178 = vld [vmem:[%s165 + $0x18] sm:$0xf]
      %v179 = vld [vmem:[%s165 + $0x1c] sm:$0xf]
      %v180 = vld [vmem:[%s165 + $0x20] sm:$0xf]
      %v181 = vld [vmem:[%s165 + $0x24] sm:$0xf]
      %v182 = vld [vmem:[%s165 + $0x28] sm:$0xf]
      %v183 = vld [vmem:[%s165 + $0x2c] sm:$0xf]
      %v184 = vld [vmem:[%s165 + $0x30] sm:$0xf]
      %v185 = vld [vmem:[%s165 + $0x34] sm:$0xf]
      %v186 = vld [vmem:[%s165 + $0x38] sm:$0xf]
      %v187 = vld [vmem:[%s165 + $0x3c] sm:$0xf]
      %v188 = vld [vmem:[%s165 + $0x40] sm:$0xf]
      %v189 = vld [vmem:[%s165 + $0x44] sm:$0xf]
      %v190 = vld [vmem:[%s165 + $0x48] sm:$0xf]
      %v191 = vld [vmem:[%s165 + $0x4c] sm:$0xf]
      %v192 = vld [vmem:[%s165 + $0x50] sm:$0xf]
      %v193 = vld [vmem:[%s165 + $0x54] sm:$0x1]
      %v194 = vld [vmem:[%s1] sm:$0xf]
      %s195 = scalar_lea.vmem %s1, 4
      %v196 = vld [vmem:[%s195] sm:$0xf]
      %v219 = vunpack.c.l.b16 %v172
      %v220 = vunpack.c.l.b16 %v173
      %v221 = vunpack.c.l.b16 %v174
      %v222 = vunpack.c.l.b16 %v175
      %v223 = vunpack.c.l.b16 %v176
      %v224 = vunpack.c.l.b16 %v177
      %v225 = vunpack.c.l.b16 %v178
      %v226 = vunpack.c.l.b16 %v179
      %v227 = vunpack.c.l.b16 %v180
      %v228 = vunpack.c.l.b16 %v181
      %v229 = vunpack.c.l.b16 %v182
      %v230 = vunpack.c.l.b16 %v183
      %v231 = vunpack.c.l.b16 %v184
      %v232 = vunpack.c.l.b16 %v185
      %v233 = vunpack.c.l.b16 %v186
      %v234 = vunpack.c.l.b16 %v187
      %v235 = vunpack.c.l.b16 %v188
      %v236 = vunpack.c.l.b16 %v189
      %v237 = vunpack.c.l.b16 %v190
      %v238 = vunpack.c.l.b16 %v191
      %v239 = vunpack.c.l.b16 %v192
      %v240 = vunpack.c.l.b16 %v193
      %v241 = vpack.c.b16 %v220, %v219
      %v242 = vpack.c.b16 %v222, %v221
      %v243 = vpack.c.b16 %v224, %v223
      %v244 = vpack.c.b16 %v226, %v225
      %v245 = vpack.c.b16 %v228, %v227
      %v246 = vpack.c.b16 %v230, %v229
      %v247 = vpack.c.b16 %v232, %v231
      %v248 = vpack.c.b16 %v234, %v233
      %v249 = vpack.c.b16 %v236, %v235
      %v250 = vpack.c.b16 %v238, %v237
      %v251 = vpack.c.b16 %v240, %v239
      %vm252 = vsmask.f32 7424
      %v254 = vshrl.u32 %v241, 16
      %v256 = vshll.u32 %v241, 16
      %v258 = vrot.slane %v256, 1
      %v259 = vor.u32 %v254, %v258
      %v261 = vshll.u32 %v242, 16
      %v263 = vrot.slane %v261, 1
      %v264 = vsel %vm252, %v259, %v263
      %v265 = vshrl.u32 %v242, 16
      %v267 = vor.u32 %v265, %v263
      %v269 = vshll.u32 %v243, 16
      %v271 = vrot.slane %v269, 1
      %v272 = vsel %vm252, %v267, %v271
      %v273 = vshrl.u32 %v243, 16
      %v275 = vor.u32 %v273, %v271
      %v277 = vshll.u32 %v244, 16
      %v279 = vrot.slane %v277, 1
      %v280 = vsel %vm252, %v275, %v279
      %v281 = vshrl.u32 %v244, 16
      %v283 = vor.u32 %v281, %v279
      %v285 = vshll.u32 %v245, 16
      %v287 = vrot.slane %v285, 1
      %v288 = vsel %vm252, %v283, %v287
      %v289 = vshrl.u32 %v245, 16
      %v291 = vor.u32 %v289, %v287
      %v293 = vshll.u32 %v246, 16
      %v295 = vrot.slane %v293, 1
      %v296 = vsel %vm252, %v291, %v295
      %v297 = vshrl.u32 %v246, 16
      %v299 = vor.u32 %v297, %v295
      %v301 = vshll.u32 %v247, 16
      %v303 = vrot.slane %v301, 1
      %v304 = vsel %vm252, %v299, %v303
      %v305 = vshrl.u32 %v247, 16
      %v307 = vor.u32 %v305, %v303
      %v309 = vshll.u32 %v248, 16
      %v311 = vrot.slane %v309, 1
      %v312 = vsel %vm252, %v307, %v311
      %v313 = vshrl.u32 %v248, 16
      %v315 = vor.u32 %v313, %v311
      %v317 = vshll.u32 %v249, 16
      %v319 = vrot.slane %v317, 1
      %v320 = vsel %vm252, %v315, %v319
      %v321 = vshrl.u32 %v249, 16
      %v323 = vor.u32 %v321, %v319
      %v325 = vshll.u32 %v250, 16
      %v327 = vrot.slane %v325, 1
      %v328 = vsel %vm252, %v323, %v327
      %v329 = vshrl.u32 %v250, 16
      %v331 = vor.u32 %v329, %v327
      %v333 = vshll.u32 %v251, 16
      %v335 = vrot.slane %v333, 1
      %v336 = vsel %vm252, %v331, %v335
      %v337 = vshrl.u32 %v251, 16
      %v339 = vor.u32 %v337, %v335
      %vm340 = vcmask 64512
      %v342 = vsel %vm340, %v264, 0
      %v345 = vsel %vm340, %v272, 0
      %v348 = vsel %vm340, %v280, 0
      %v351 = vsel %vm340, %v288, 0
      %v354 = vsel %vm340, %v296, 0
      %v357 = vsel %vm340, %v304, 0
      %v360 = vsel %vm340, %v312, 0
      %v363 = vsel %vm340, %v320, 0
      %v366 = vsel %vm340, %v328, 0
      %v369 = vsel %vm340, %v336, 0
      %v372 = vsel %vm340, %v339, 0
      %vm374 = vcmask 1043456
      %v376 = vsel %vm374, %v196, 0
      %378 = vmatprep.subr.bf16.mxu0 0
      %379 = vmatpush1.bf16.msra.mxu0 %v376
      %380 = vmatprep.subr.bf16.mxu0 0
      %381 = vmatpush1.bf16.msra.mxu0 0
      %382 = vmatprep.subr.bf16.mxu0 0
      %383 = vmatpush1.bf16.msra.mxu0 0
      %384 = vmatprep.subr.bf16.mxu0 0
      %385 = vmatpush1.bf16.msra.mxu0 0
      %386 = vmatprep.subr.bf16.mxu0 0
      %387 = vmatpush1.bf16.msra.mxu0 0
      %388 = vmatprep.subr.bf16.mxu0 0
      %389 = vmatpush1.bf16.msra.mxu0 0
      %390 = vmatprep.subr.bf16.mxu0 0
      %391 = vmatpush1.bf16.msra.mxu0 0
      %392 = vmatprep.subr.bf16.mxu0 0
      %393 = vmatpush1.bf16.msra.mxu0 0
      %394 = vmatprep.subr.bf16.mxu0 0
      %395 = vmatpush1.bf16.msra.mxu0 0
      %396 = vmatprep.subr.bf16.mxu0 0
      %397 = vmatpush1.bf16.msra.mxu0 0
      %398 = vmatprep.subr.bf16.mxu0 0
      %399 = vmatpush1.bf16.msra.mxu0 0
      %400 = vmatprep.subr.bf16.mxu0 0
      %401 = vmatpush1.bf16.msra.mxu0 0
      %402 = vmatprep.subr.bf16.mxu0 0
      %403 = vmatpush1.bf16.msra.mxu0 0
      %404 = vmatprep.subr.bf16.mxu0 0
      %405 = vmatpush1.bf16.msra.mxu0 0
      %406 = vmatprep.subr.bf16.mxu0 0
      %407 = vmatpush1.bf16.msra.mxu0 0
      %408 = vmatprep.subr.bf16.mxu0 0
      %409 = vmatpush1.bf16.msra.mxu0 0
      %410 = vmatprep.mubr.bf16.mxu0 0
      %411 = vmatmul.mubr.bf16.gmra.mrb[0].mxu0 %v342
      %v412 = vpop.f32.mrb[0].mxu0
      %v413 = vadd.f32 0.0, %v412
      %v414 = vpop.f32.mrb[0].mxu0
      %v415 = vpop.f32.mrb[0].mxu0
      %v416 = vadd.f32 0.0, %v415
      %v417 = vpop.f32.mrb[0].mxu0
      %418 = vmatprep.mubr.bf16.mxu0 0
      %419 = vmatmul.mubr.bf16.gmra.mrb[0].mxu0 %v345
      %v420 = vpop.f32.mrb[0].mxu0
      %v421 = vadd.f32 0.0, %v420
      %v422 = vpop.f32.mrb[0].mxu0
      %v423 = vpop.f32.mrb[0].mxu0
      %v424 = vadd.f32 0.0, %v423
      %v425 = vpop.f32.mrb[0].mxu0
      %426 = vmatprep.mubr.bf16.mxu0 0
      %427 = vmatmul.mubr.bf16.gmra.mrb[0].mxu0 %v348
      %v428 = vpop.f32.mrb[0].mxu0
      %v429 = vadd.f32 0.0, %v428
      %v430 = vpop.f32.mrb[0].mxu0
      %v431 = vpop.f32.mrb[0].mxu0
      %v432 = vadd.f32 0.0, %v431
      %v433 = vpop.f32.mrb[0].mxu0
      %434 = vmatprep.mubr.bf16.mxu0 0
      %435 = vmatmul.mubr.bf16.gmra.mrb[0].mxu0 %v351
      %v436 = vpop.f32.mrb[0].mxu0
      %v437 = vadd.f32 0.0, %v436
      %v438 = vpop.f32.mrb[0].mxu0
      %v439 = vpop.f32.mrb[0].mxu0
      %v440 = vadd.f32 0.0, %v439
      %v441 = vpop.f32.mrb[0].mxu0
      %442 = vmatprep.mubr.bf16.mxu0 0
      %443 = vmatmul.mubr.bf16.gmra.mrb[0].mxu0 %v354
      %v444 = vpop.f32.mrb[0].mxu0
      %v445 = vadd.f32 0.0, %v444
      %v446 = vpop.f32.mrb[0].mxu0
      %v447 = vpop.f32.mrb[0].mxu0
      %v448 = vadd.f32 0.0, %v447
      %v449 = vpop.f32.mrb[0].mxu0
      %450 = vmatprep.mubr.bf16.mxu0 0
      %451 = vmatmul.mubr.bf16.gmra.mrb[0].mxu0 %v357
      %v452 = vpop.f32.mrb[0].mxu0
      %v453 = vadd.f32 0.0, %v452
      %v454 = vpop.f32.mrb[0].mxu0
      %v455 = vpop.f32.mrb[0].mxu0
      %v456 = vadd.f32 0.0, %v455
      %v457 = vpop.f32.mrb[0].mxu0
      %458 = vmatprep.mubr.bf16.mxu0 0
      %459 = vmatmul.mubr.bf16.gmra.mrb[0].mxu0 %v360
      %v460 = vpop.f32.mrb[0].mxu0
      %v461 = vadd.f32 0.0, %v460
      %v462 = vpop.f32.mrb[0].mxu0
      %v463 = vpop.f32.mrb[0].mxu0
      %v464 = vadd.f32 0.0, %v463
      %v465 = vpop.f32.mrb[0].mxu0
      %466 = vmatprep.mubr.bf16.mxu0 0
      %467 = vmatmul.mubr.bf16.gmra.mrb[0].mxu0 %v363
      %v468 = vpop.f32.mrb[0].mxu0
      %v469 = vadd.f32 0.0, %v468
      %v470 = vpop.f32.mrb[0].mxu0
      %v471 = vpop.f32.mrb[0].mxu0
      %v472 = vadd.f32 0.0, %v471
      %v473 = vpop.f32.mrb[0].mxu0
      %474 = vmatprep.mubr.bf16.mxu0 0
      %475 = vmatmul.mubr.bf16.gmra.mrb[0].mxu0 %v366
      %v476 = vpop.f32.mrb[0].mxu0
      %v477 = vadd.f32 0.0, %v476
      %v478 = vpop.f32.mrb[0].mxu0
      %v479 = vpop.f32.mrb[0].mxu0
      %v480 = vadd.f32 0.0, %v479
      %v481 = vpop.f32.mrb[0].mxu0
      %482 = vmatprep.mubr.bf16.mxu0 0
      %483 = vmatmul.mubr.bf16.gmra.mrb[0].mxu0 %v369
      %v484 = vpop.f32.mrb[0].mxu0
      %v485 = vadd.f32 0.0, %v484
      %v486 = vpop.f32.mrb[0].mxu0
      %v487 = vpop.f32.mrb[0].mxu0
      %v488 = vadd.f32 0.0, %v487
      %v489 = vpop.f32.mrb[0].mxu0
      %490 = vmatprep.mubr.bf16.mxu0 0
      %491 = vmatmul.mubr.bf16.gmra.mrb[0].mxu0 %v372
      %v492 = vpop.f32.mrb[0].mxu0
      %v493 = vadd.f32 0.0, %v492
      %v494 = vpop.f32.mrb[0].mxu0
      %v495 = vpop.f32.mrb[0].mxu0
      %v496 = vadd.f32 0.0, %v495
      %v497 = vpop.f32.mrb[0].mxu0
      %498 = vdwg.mxu0
      %v499 = vsel %vm340, %v241, 0
      %v501 = vsel %vm340, %v242, 0
      %v503 = vsel %vm340, %v243, 0
      %v505 = vsel %vm340, %v244, 0
      %v507 = vsel %vm340, %v245, 0
      %v509 = vsel %vm340, %v246, 0
      %v511 = vsel %vm340, %v247, 0
      %v513 = vsel %vm340, %v248, 0
      %v515 = vsel %vm340, %v249, 0
      %v517 = vsel %vm340, %v250, 0
      %v519 = vsel %vm340, %v251, 0
      %v522 = vsel %vm374, %v194, 0
      %524 = vmatprep.subr.bf16.mxu0 0
      %525 = vmatpush1.bf16.msra.mxu0 %v522
      %526 = vmatprep.subr.bf16.mxu0 0
      %527 = vmatpush1.bf16.msra.mxu0 0
      %528 = vmatprep.subr.bf16.mxu0 0
      %529 = vmatpush1.bf16.msra.mxu0 0
      %530 = vmatprep.subr.bf16.mxu0 0
      %531 = vmatpush1.bf16.msra.mxu0 0
      %532 = vmatprep.subr.bf16.mxu0 0
      %533 = vmatpush1.bf16.msra.mxu0 0
      %534 = vmatprep.subr.bf16.mxu0 0
      %535 = vmatpush1.bf16.msra.mxu0 0
      %536 = vmatprep.subr.bf16.mxu0 0
      %537 = vmatpush1.bf16.msra.mxu0 0
      %538 = vmatprep.subr.bf16.mxu0 0
      %539 = vmatpush1.bf16.msra.mxu0 0
      %540 = vmatprep.subr.bf16.mxu0 0
      %541 = vmatpush1.bf16.msra.mxu0 0
      %542 = vmatprep.subr.bf16.mxu0 0
      %543 = vmatpush1.bf16.msra.mxu0 0
      %544 = vmatprep.subr.bf16.mxu0 0
      %545 = vmatpush1.bf16.msra.mxu0 0
      %546 = vmatprep.subr.bf16.mxu0 0
      %547 = vmatpush1.bf16.msra.mxu0 0
      %548 = vmatprep.subr.bf16.mxu0 0
      %549 = vmatpush1.bf16.msra.mxu0 0
      %550 = vmatprep.subr.bf16.mxu0 0
      %551 = vmatpush1.bf16.msra.mxu0 0
      %552 = vmatprep.subr.bf16.mxu0 0
      %553 = vmatpush1.bf16.msra.mxu0 0
      %554 = vmatprep.subr.bf16.mxu0 0
      %555 = vmatpush1.bf16.msra.mxu0 0
      %556 = vmatprep.mubr.bf16.mxu0 0
      %557 = vmatmul.mubr.bf16.gmra.mrb[0].mxu0 %v499
      %v558 = vpop.f32.mrb[0].mxu0
      %v559 = vadd.f32 %v413, %v558
      %v560 = vpop.f32.mrb[0].mxu0
      %v561 = vpop.f32.mrb[0].mxu0
      %v562 = vadd.f32 %v416, %v561
      %v563 = vpop.f32.mrb[0].mxu0
      %564 = vmatprep.mubr.bf16.mxu0 0
      %565 = vmatmul.mubr.bf16.gmra.mrb[0].mxu0 %v501
      %v566 = vpop.f32.mrb[0].mxu0
      %v567 = vadd.f32 %v421, %v566
      %v568 = vpop.f32.mrb[0].mxu0
      %v569 = vpop.f32.mrb[0].mxu0
      %v570 = vadd.f32 %v424, %v569
      %v571 = vpop.f32.mrb[0].mxu0
      %572 = vmatprep.mubr.bf16.mxu0 0
      %573 = vmatmul.mubr.bf16.gmra.mrb[0].mxu0 %v503
      %v574 = vpop.f32.mrb[0].mxu0
      %v575 = vadd.f32 %v429, %v574
      %v576 = vpop.f32.mrb[0].mxu0
      %v577 = vpop.f32.mrb[0].mxu0
      %v578 = vadd.f32 %v432, %v577
      %v579 = vpop.f32.mrb[0].mxu0
      %580 = vmatprep.mubr.bf16.mxu0 0
      %581 = vmatmul.mubr.bf16.gmra.mrb[0].mxu0 %v505
      %v582 = vpop.f32.mrb[0].mxu0
      %v583 = vadd.f32 %v437, %v582
      %v584 = vpop.f32.mrb[0].mxu0
      %v585 = vpop.f32.mrb[0].mxu0
      %v586 = vadd.f32 %v440, %v585
      %v587 = vpop.f32.mrb[0].mxu0
      %588 = vmatprep.mubr.bf16.mxu0 0
      %589 = vmatmul.mubr.bf16.gmra.mrb[0].mxu0 %v507
      %v590 = vpop.f32.mrb[0].mxu0
      %v591 = vadd.f32 %v445, %v590
      %v592 = vpop.f32.mrb[0].mxu0
      %v593 = vpop.f32.mrb[0].mxu0
      %v594 = vadd.f32 %v448, %v593
      %v595 = vpop.f32.mrb[0].mxu0
      %596 = vmatprep.mubr.bf16.mxu0 0
      %597 = vmatmul.mubr.bf16.gmra.mrb[0].mxu0 %v509
      %v598 = vpop.f32.mrb[0].mxu0
      %v599 = vadd.f32 %v453, %v598
      %v600 = vpop.f32.mrb[0].mxu0
      %v601 = vpop.f32.mrb[0].mxu0
      %v602 = vadd.f32 %v456, %v601
      %v603 = vpop.f32.mrb[0].mxu0
      %604 = vmatprep.mubr.bf16.mxu0 0
      %605 = vmatmul.mubr.bf16.gmra.mrb[0].mxu0 %v511
      %v606 = vpop.f32.mrb[0].mxu0
      %v607 = vadd.f32 %v461, %v606
      %v608 = vpop.f32.mrb[0].mxu0
      %v609 = vpop.f32.mrb[0].mxu0
      %v610 = vadd.f32 %v464, %v609
      %v611 = vpop.f32.mrb[0].mxu0
      %612 = vmatprep.mubr.bf16.mxu0 0
      %613 = vmatmul.mubr.bf16.gmra.mrb[0].mxu0 %v513
      %v614 = vpop.f32.mrb[0].mxu0
      %v615 = vadd.f32 %v469, %v614
      %v616 = vpop.f32.mrb[0].mxu0
      %v617 = vpop.f32.mrb[0].mxu0
      %v618 = vadd.f32 %v472, %v617
      %v619 = vpop.f32.mrb[0].mxu0
      %620 = vmatprep.mubr.bf16.mxu0 0
      %621 = vmatmul.mubr.bf16.gmra.mrb[0].mxu0 %v515
      %v622 = vpop.f32.mrb[0].mxu0
      %v623 = vadd.f32 %v477, %v622
      %v624 = vpop.f32.mrb[0].mxu0
      %v625 = vpop.f32.mrb[0].mxu0
      %v626 = vadd.f32 %v480, %v625
      %v627 = vpop.f32.mrb[0].mxu0
      %628 = vmatprep.mubr.bf16.mxu0 0
      %629 = vmatmul.mubr.bf16.gmra.mrb[0].mxu0 %v517
      %v630 = vpop.f32.mrb[0].mxu0
      %v631 = vadd.f32 %v485, %v630
      %v632 = vpop.f32.mrb[0].mxu0
      %v633 = vpop.f32.mrb[0].mxu0
      %v634 = vadd.f32 %v488, %v633
      %v635 = vpop.f32.mrb[0].mxu0
      %636 = vmatprep.mubr.bf16.mxu0 0
      %637 = vmatmul.mubr.bf16.gmra.mrb[0].mxu0 %v519
      %v638 = vpop.f32.mrb[0].mxu0
      %v639 = vadd.f32 %v493, %v638
      %v640 = vpop.f32.mrb[0].mxu0
      %v641 = vpop.f32.mrb[0].mxu0
      %v642 = vadd.f32 %v496, %v641
      %v643 = vpop.f32.mrb[0].mxu0
      %644 = vdwg.mxu0
      %v645 = vld [vmem:[%s165] sm:$0xe]
      %v646 = vld [vmem:[%s165 + $0x54] sm:$0x3]
      %s647 = scalar_lea.vmem %s1, 8
      %v648 = vld [vmem:[%s647] sm:$0xf]
      %v651 = vunpack.c.l.b16 %v645
      %v652 = vunpack.c.l.b16 %v646
      %v653 = vpack.c.b16 %v220, %v651
      %v654 = vpack.c.b16 %v652, %v239
      %vm655 = vcmask 1046528
      %v656 = vrot.slane %v653, 1
      %v657 = vrot.slane %v242, 1
      %v658 = vsel %vm655, %v656, %v657
      %v659 = vrot.slane %v243, 1
      %v660 = vsel %vm655, %v657, %v659
      %v661 = vrot.slane %v244, 1
      %v662 = vsel %vm655, %v659, %v661
      %v663 = vrot.slane %v245, 1
      %v664 = vsel %vm655, %v661, %v663
      %v665 = vrot.slane %v246, 1
      %v666 = vsel %vm655, %v663, %v665
      %v667 = vrot.slane %v247, 1
      %v668 = vsel %vm655, %v665, %v667
      %v669 = vrot.slane %v248, 1
      %v670 = vsel %vm655, %v667, %v669
      %v671 = vrot.slane %v249, 1
      %v672 = vsel %vm655, %v669, %v671
      %v673 = vrot.slane %v250, 1
      %v674 = vsel %vm655, %v671, %v673
      %v675 = vrot.slane %v654, 1
      %v676 = vsel %vm655, %v673, %v675
      %v678 = vsel %vm340, %v658, 0
      %v681 = vsel %vm340, %v660, 0
      %v684 = vsel %vm340, %v662, 0
      %v687 = vsel %vm340, %v664, 0
      %v690 = vsel %vm340, %v666, 0
      %v693 = vsel %vm340, %v668, 0
      %v696 = vsel %vm340, %v670, 0
      %v699 = vsel %vm340, %v672, 0
      %v702 = vsel %vm340, %v674, 0
      %v705 = vsel %vm340, %v676, 0
      %v708 = vsel %vm340, %v675, 0
      %v711 = vsel %vm374, %v648, 0
      %713 = vmatprep.subr.bf16.mxu0 0
      %714 = vmatpush1.bf16.msra.mxu0 %v711
      %715 = vmatprep.subr.bf16.mxu0 0
      %716 = vmatpush1.bf16.msra.mxu0 0
      %717 = vmatprep.subr.bf16.mxu0 0
      %718 = vmatpush1.bf16.msra.mxu0 0
      %719 = vmatprep.subr.bf16.mxu0 0
      %720 = vmatpush1.bf16.msra.mxu0 0
      %721 = vmatprep.subr.bf16.mxu0 0
      %722 = vmatpush1.bf16.msra.mxu0 0
      %723 = vmatprep.subr.bf16.mxu0 0
      %724 = vmatpush1.bf16.msra.mxu0 0
      %725 = vmatprep.subr.bf16.mxu0 0
      %726 = vmatpush1.bf16.msra.mxu0 0
      %727 = vmatprep.subr.bf16.mxu0 0
      %728 = vmatpush1.bf16.msra.mxu0 0
      %729 = vmatprep.subr.bf16.mxu0 0
      %730 = vmatpush1.bf16.msra.mxu0 0
      %731 = vmatprep.subr.bf16.mxu0 0
      %732 = vmatpush1.bf16.msra.mxu0 0
      %733 = vmatprep.subr.bf16.mxu0 0
      %734 = vmatpush1.bf16.msra.mxu0 0
      %735 = vmatprep.subr.bf16.mxu0 0
      %736 = vmatpush1.bf16.msra.mxu0 0
      %737 = vmatprep.subr.bf16.mxu0 0
      %738 = vmatpush1.bf16.msra.mxu0 0
      %739 = vmatprep.subr.bf16.mxu0 0
      %740 = vmatpush1.bf16.msra.mxu0 0
      %741 = vmatprep.subr.bf16.mxu0 0
      %742 = vmatpush1.bf16.msra.mxu0 0
      %743 = vmatprep.subr.bf16.mxu0 0
      %744 = vmatpush1.bf16.msra.mxu0 0
      %745 = vmatprep.mubr.bf16.mxu0 0
      %746 = vmatmul.mubr.bf16.gmra.mrb[0].mxu0 %v678
      %v747 = vpop.f32.mrb[0].mxu0
      %v748 = vadd.f32 0.0, %v747
      %v749 = vpop.f32.mrb[0].mxu0
      %v750 = vpop.f32.mrb[0].mxu0
      %v751 = vadd.f32 0.0, %v750
      %v752 = vpop.f32.mrb[0].mxu0
      %753 = vmatprep.mubr.bf16.mxu0 0
      %754 = vmatmul.mubr.bf16.gmra.mrb[0].mxu0 %v681
      %v755 = vpop.f32.mrb[0].mxu0
      %v756 = vadd.f32 0.0, %v755
      %v757 = vpop.f32.mrb[0].mxu0
      %v758 = vpop.f32.mrb[0].mxu0
      %v759 = vadd.f32 0.0, %v758
      %v760 = vpop.f32.mrb[0].mxu0
      %761 = vmatprep.mubr.bf16.mxu0 0
      %762 = vmatmul.mubr.bf16.gmra.mrb[0].mxu0 %v684
      %v763 = vpop.f32.mrb[0].mxu0
      %v764 = vadd.f32 0.0, %v763
      %v765 = vpop.f32.mrb[0].mxu0
      %v766 = vpop.f32.mrb[0].mxu0
      %v767 = vadd.f32 0.0, %v766
      %v768 = vpop.f32.mrb[0].mxu0
      %769 = vmatprep.mubr.bf16.mxu0 0
      %770 = vmatmul.mubr.bf16.gmra.mrb[0].mxu0 %v687
      %v771 = vpop.f32.mrb[0].mxu0
      %v772 = vadd.f32 0.0, %v771
      %v773 = vpop.f32.mrb[0].mxu0
      %v774 = vpop.f32.mrb[0].mxu0
      %v775 = vadd.f32 0.0, %v774
      %v776 = vpop.f32.mrb[0].mxu0
      %777 = vmatprep.mubr.bf16.mxu0 0
      %778 = vmatmul.mubr.bf16.gmra.mrb[0].mxu0 %v690
      %v779 = vpop.f32.mrb[0].mxu0
      %v780 = vadd.f32 0.0, %v779
      %v781 = vpop.f32.mrb[0].mxu0
      %v782 = vpop.f32.mrb[0].mxu0
      %v783 = vadd.f32 0.0, %v782
      %v784 = vpop.f32.mrb[0].mxu0
      %785 = vmatprep.mubr.bf16.mxu0 0
      %786 = vmatmul.mubr.bf16.gmra.mrb[0].mxu0 %v693
      %v787 = vpop.f32.mrb[0].mxu0
      %v788 = vadd.f32 0.0, %v787
      %v789 = vpop.f32.mrb[0].mxu0
      %v790 = vpop.f32.mrb[0].mxu0
      %v791 = vadd.f32 0.0, %v790
      %v792 = vpop.f32.mrb[0].mxu0
      %793 = vmatprep.mubr.bf16.mxu0 0
      %794 = vmatmul.mubr.bf16.gmra.mrb[0].mxu0 %v696
      %v795 = vpop.f32.mrb[0].mxu0
      %v796 = vadd.f32 0.0, %v795
      %v797 = vpop.f32.mrb[0].mxu0
      %v798 = vpop.f32.mrb[0].mxu0
      %v799 = vadd.f32 0.0, %v798
      %v800 = vpop.f32.mrb[0].mxu0
      %801 = vmatprep.mubr.bf16.mxu0 0
      %802 = vmatmul.mubr.bf16.gmra.mrb[0].mxu0 %v699
      %v803 = vpop.f32.mrb[0].mxu0
      %v804 = vadd.f32 0.0, %v803
      %v805 = vpop.f32.mrb[0].mxu0
      %v806 = vpop.f32.mrb[0].mxu0
      %v807 = vadd.f32 0.0, %v806
      %v808 = vpop.f32.mrb[0].mxu0
      %809 = vmatprep.mubr.bf16.mxu0 0
      %810 = vmatmul.mubr.bf16.gmra.mrb[0].mxu0 %v702
      %v811 = vpop.f32.mrb[0].mxu0
      %v812 = vadd.f32 0.0, %v811
      %v813 = vpop.f32.mrb[0].mxu0
      %v814 = vpop.f32.mrb[0].mxu0
      %v815 = vadd.f32 0.0, %v814
      %v816 = vpop.f32.mrb[0].mxu0
      %817 = vmatprep.mubr.bf16.mxu0 0
      %818 = vmatmul.mubr.bf16.gmra.mrb[0].mxu0 %v705
      %v819 = vpop.f32.mrb[0].mxu0
      %v820 = vadd.f32 0.0, %v819
      %v821 = vpop.f32.mrb[0].mxu0
      %v822 = vpop.f32.mrb[0].mxu0
      %v823 = vadd.f32 0.0, %v822
      %v824 = vpop.f32.mrb[0].mxu0
      %825 = vmatprep.mubr.bf16.mxu0 0
      %826 = vmatmul.mubr.bf16.gmra.mrb[0].mxu0 %v708
      %v827 = vpop.f32.mrb[0].mxu0
      %v828 = vadd.f32 0.0, %v827
      %v829 = vpop.f32.mrb[0].mxu0
      %v830 = vpop.f32.mrb[0].mxu0
      %v831 = vadd.f32 0.0, %v830
      %v832 = vpop.f32.mrb[0].mxu0
      %833 = vdwg.mxu0
      %v834 = vadd.f32 %v559, %v748
      %v835 = vadd.f32 %v562, %v751
      %v836 = vadd.f32 %v567, %v756
      %v837 = vadd.f32 %v570, %v759
      %v838 = vadd.f32 %v575, %v764
      %v839 = vadd.f32 %v578, %v767
      %v840 = vadd.f32 %v583, %v772
      %v841 = vadd.f32 %v586, %v775
      %v842 = vadd.f32 %v591, %v780
      %v843 = vadd.f32 %v594, %v783
      %v844 = vadd.f32 %v599, %v788
      %v845 = vadd.f32 %v602, %v791
      %v846 = vadd.f32 %v607, %v796
      %v847 = vadd.f32 %v610, %v799
      %v848 = vadd.f32 %v615, %v804
      %v849 = vadd.f32 %v618, %v807
      %v850 = vadd.f32 %v623, %v812
      %v851 = vadd.f32 %v626, %v815
      %v852 = vadd.f32 %v631, %v820
      %v853 = vadd.f32 %v634, %v823
      %v854 = vadd.f32 %v639, %v828
      %v855 = vadd.f32 %v642, %v831
      %v856 = vld [vmem:[%s165 + $0x4] sm:$0xc]
      %v857 = vld [vmem:[%s165 + $0x8] sm:$0xf]
      %v858 = vld [vmem:[%s165 + $0xc] sm:$0xf]
      %v859 = vld [vmem:[%s165 + $0x10] sm:$0xf]
      %v860 = vld [vmem:[%s165 + $0x14] sm:$0xf]
      %v861 = vld [vmem:[%s165 + $0x18] sm:$0xf]
      %v862 = vld [vmem:[%s165 + $0x1c] sm:$0xf]
      %v863 = vld [vmem:[%s165 + $0x20] sm:$0xf]
      %v864 = vld [vmem:[%s165 + $0x24] sm:$0xf]
      %v865 = vld [vmem:[%s165 + $0x28] sm:$0xf]
      %v866 = vld [vmem:[%s165 + $0x2c] sm:$0xf]
      %v867 = vld [vmem:[%s165 + $0x30] sm:$0xf]
      %v868 = vld [vmem:[%s165 + $0x34] sm:$0xf]
      %v869 = vld [vmem:[%s165 + $0x38] sm:$0xf]
      %v870 = vld [vmem:[%s165 + $0x3c] sm:$0xf]
      %v871 = vld [vmem:[%s165 + $0x40] sm:$0xf]
      %v872 = vld [vmem:[%s165 + $0x44] sm:$0xf]
      %v873 = vld [vmem:[%s165 + $0x48] sm:$0xf]
      %v874 = vld [vmem:[%s165 + $0x4c] sm:$0xf]
      %v875 = vld [vmem:[%s165 + $0x50] sm:$0xf]
      %v876 = vld [vmem:[%s165 + $0x54] sm:$0xf]
      %v877 = vld [vmem:[%s165 + $0x58] sm:$0x7]
      %s878 = scalar_lea.vmem %s1, 12
      %v879 = vld [vmem:[%s878] sm:$0xf]
      %v902 = vunpack.c.l.b16 %v856
      %v903 = vunpack.c.l.b16 %v857
      %v904 = vunpack.c.l.b16 %v858
      %v905 = vunpack.c.l.b16 %v859
      %v906 = vunpack.c.l.b16 %v860
      %v907 = vunpack.c.l.b16 %v861
      %v908 = vunpack.c.l.b16 %v862
      %v909 = vunpack.c.l.b16 %v863
      %v910 = vunpack.c.l.b16 %v864
      %v911 = vunpack.c.l.b16 %v865
      %v912 = vunpack.c.l.b16 %v866
      %v913 = vunpack.c.l.b16 %v867
      %v914 = vunpack.c.l.b16 %v868
      %v915 = vunpack.c.l.b16 %v869
      %v916 = vunpack.c.l.b16 %v870
      %v917 = vunpack.c.l.b16 %v871
      %v918 = vunpack.c.l.b16 %v872
      %v919 = vunpack.c.l.b16 %v873
      %v920 = vunpack.c.l.b16 %v874
      %v921 = vunpack.c.l.b16 %v875
      %v922 = vunpack.c.l.b16 %v876
      %v923 = vunpack.c.l.b16 %v877
      %v924 = vpack.c.b16 %v903, %v902
      %v925 = vpack.c.b16 %v905, %v904
      %v926 = vpack.c.b16 %v907, %v906
      %v927 = vpack.c.b16 %v909, %v908
      %v928 = vpack.c.b16 %v911, %v910
      %v929 = vpack.c.b16 %v913, %v912
      %v930 = vpack.c.b16 %v915, %v914
      %v931 = vpack.c.b16 %v917, %v916
      %v932 = vpack.c.b16 %v919, %v918
      %v933 = vpack.c.b16 %v921, %v920
      %v934 = vpack.c.b16 %v923, %v922
      %vm935 = vsmask.f32 5376
      %v937 = vshrl.u32 %v924, 16
      %v939 = vrot.slane %v937, 2
      %v940 = vshll.u32 %v924, 16
      %v942 = vrot.slane %v940, 3
      %v943 = vor.u32 %v939, %v942
      %v945 = vshrl.u32 %v925, 16
      %v947 = vrot.slane %v945, 2
      %v948 = vshll.u32 %v925, 16
      %v950 = vrot.slane %v948, 3
      %v951 = vor.u32 %v947, %v950
      %v952 = vsel %vm935, %v943, %v951
      %v954 = vshrl.u32 %v926, 16
      %v956 = vrot.slane %v954, 2
      %v957 = vshll.u32 %v926, 16
      %v959 = vrot.slane %v957, 3
      %v960 = vor.u32 %v956, %v959
      %v961 = vsel %vm935, %v951, %v960
      %v963 = vshrl.u32 %v927, 16
      %v965 = vrot.slane %v963, 2
      %v966 = vshll.u32 %v927, 16
      %v968 = vrot.slane %v966, 3
      %v969 = vor.u32 %v965, %v968
      %v970 = vsel %vm935, %v960, %v969
      %v972 = vshrl.u32 %v928, 16
      %v974 = vrot.slane %v972, 2
      %v975 = vshll.u32 %v928, 16
      %v977 = vrot.slane %v975, 3
      %v978 = vor.u32 %v974, %v977
      %v979 = vsel %vm935, %v969, %v978
      %v981 = vshrl.u32 %v929, 16
      %v983 = vrot.slane %v981, 2
      %v984 = vshll.u32 %v929, 16
      %v986 = vrot.slane %v984, 3
      %v987 = vor.u32 %v983, %v986
      %v988 = vsel %vm935, %v978, %v987
      %v990 = vshrl.u32 %v930, 16
      %v992 = vrot.slane %v990, 2
      %v993 = vshll.u32 %v930, 16
      %v995 = vrot.slane %v993, 3
      %v996 = vor.u32 %v992, %v995
      %v997 = vsel %vm935, %v987, %v996
      %v999 = vshrl.u32 %v931, 16
      %v1001 = vrot.slane %v999, 2
      %v1002 = vshll.u32 %v931, 16
      %v1004 = vrot.slane %v1002, 3
      %v1005 = vor.u32 %v1001, %v1004
      %v1006 = vsel %vm935, %v996, %v1005
      %v1008 = vshrl.u32 %v932, 16
      %v1010 = vrot.slane %v1008, 2
      %v1011 = vshll.u32 %v932, 16
      %v1013 = vrot.slane %v1011, 3
      %v1014 = vor.u32 %v1010, %v1013
      %v1015 = vsel %vm935, %v1005, %v1014
      %v1017 = vshrl.u32 %v933, 16
      %v1019 = vrot.slane %v1017, 2
      %v1020 = vshll.u32 %v933, 16
      %v1022 = vrot.slane %v1020, 3
      %v1023 = vor.u32 %v1019, %v1022
      %v1024 = vsel %vm935, %v1014, %v1023
      %v1026 = vshrl.u32 %v934, 16
      %v1028 = vrot.slane %v1026, 2
      %v1029 = vshll.u32 %v934, 16
      %v1031 = vrot.slane %v1029, 3
      %v1032 = vor.u32 %v1028, %v1031
      %v1033 = vsel %vm935, %v1023, %v1032
      %v1035 = vsel %vm340, %v952, 0
      %v1038 = vsel %vm340, %v961, 0
      %v1041 = vsel %vm340, %v970, 0
      %v1044 = vsel %vm340, %v979, 0
      %v1047 = vsel %vm340, %v988, 0
      %v1050 = vsel %vm340, %v997, 0
      %v1053 = vsel %vm340, %v1006, 0
      %v1056 = vsel %vm340, %v1015, 0
      %v1059 = vsel %vm340, %v1024, 0
      %v1062 = vsel %vm340, %v1033, 0
      %v1065 = vsel %vm340, %v1032, 0
      %v1068 = vsel %vm374, %v879, 0
      %1070 = vmatprep.subr.bf16.mxu0 0
      %1071 = vmatpush1.bf16.msra.mxu0 %v1068
      %1072 = vmatprep.subr.bf16.mxu0 0
      %1073 = vmatpush1.bf16.msra.mxu0 0
      %1074 = vmatprep.subr.bf16.mxu0 0
      %1075 = vmatpush1.bf16.msra.mxu0 0
      %1076 = vmatprep.subr.bf16.mxu0 0
      %1077 = vmatpush1.bf16.msra.mxu0 0
      %1078 = vmatprep.subr.bf16.mxu0 0
      %1079 = vmatpush1.bf16.msra.mxu0 0
      %1080 = vmatprep.subr.bf16.mxu0 0
      %1081 = vmatpush1.bf16.msra.mxu0 0
      %1082 = vmatprep.subr.bf16.mxu0 0
      %1083 = vmatpush1.bf16.msra.mxu0 0
      %1084 = vmatprep.subr.bf16.mxu0 0
      %1085 = vmatpush1.bf16.msra.mxu0 0
      %1086 = vmatprep.subr.bf16.mxu0 0
      %1087 = vmatpush1.bf16.msra.mxu0 0
      %1088 = vmatprep.subr.bf16.mxu0 0
      %1089 = vmatpush1.bf16.msra.mxu0 0
      %1090 = vmatprep.subr.bf16.mxu0 0
      %1091 = vmatpush1.bf16.msra.mxu0 0
      %1092 = vmatprep.subr.bf16.mxu0 0
      %1093 = vmatpush1.bf16.msra.mxu0 0
      %1094 = vmatprep.subr.bf16.mxu0 0
      %1095 = vmatpush1.bf16.msra.mxu0 0
      %1096 = vmatprep.subr.bf16.mxu0 0
      %1097 = vmatpush1.bf16.msra.mxu0 0
      %1098 = vmatprep.subr.bf16.mxu0 0
      %1099 = vmatpush1.bf16.msra.mxu0 0
      %1100 = vmatprep.subr.bf16.mxu0 0
      %1101 = vmatpush1.bf16.msra.mxu0 0
      %1102 = vmatprep.mubr.bf16.mxu0 0
      %1103 = vmatmul.mubr.bf16.gmra.mrb[0].mxu0 %v1035
      %v1104 = vpop.f32.mrb[0].mxu0
      %v1105 = vadd.f32 0.0, %v1104
      %v1106 = vpop.f32.mrb[0].mxu0
      %v1107 = vpop.f32.mrb[0].mxu0
      %v1108 = vadd.f32 0.0, %v1107
      %v1109 = vpop.f32.mrb[0].mxu0
      %1110 = vmatprep.mubr.bf16.mxu0 0
      %1111 = vmatmul.mubr.bf16.gmra.mrb[0].mxu0 %v1038
      %v1112 = vpop.f32.mrb[0].mxu0
      %v1113 = vadd.f32 0.0, %v1112
      %v1114 = vpop.f32.mrb[0].mxu0
      %v1115 = vpop.f32.mrb[0].mxu0
      %v1116 = vadd.f32 0.0, %v1115
      %v1117 = vpop.f32.mrb[0].mxu0
      %1118 = vmatprep.mubr.bf16.mxu0 0
      %1119 = vmatmul.mubr.bf16.gmra.mrb[0].mxu0 %v1041
      %v1120 = vpop.f32.mrb[0].mxu0
      %v1121 = vadd.f32 0.0, %v1120
      %v1122 = vpop.f32.mrb[0].mxu0
      %v1123 = vpop.f32.mrb[0].mxu0
      %v1124 = vadd.f32 0.0, %v1123
      %v1125 = vpop.f32.mrb[0].mxu0
      %1126 = vmatprep.mubr.bf16.mxu0 0
      %1127 = vmatmul.mubr.bf16.gmra.mrb[0].mxu0 %v1044
      %v1128 = vpop.f32.mrb[0].mxu0
      %v1129 = vadd.f32 0.0, %v1128
      %v1130 = vpop.f32.mrb[0].mxu0
      %v1131 = vpop.f32.mrb[0].mxu0
      %v1132 = vadd.f32 0.0, %v1131
      %v1133 = vpop.f32.mrb[0].mxu0
      %1134 = vmatprep.mubr.bf16.mxu0 0
      %1135 = vmatmul.mubr.bf16.gmra.mrb[0].mxu0 %v1047
      %v1136 = vpop.f32.mrb[0].mxu0
      %v1137 = vadd.f32 0.0, %v1136
      %v1138 = vpop.f32.mrb[0].mxu0
      %v1139 = vpop.f32.mrb[0].mxu0
      %v1140 = vadd.f32 0.0, %v1139
      %v1141 = vpop.f32.mrb[0].mxu0
      %1142 = vmatprep.mubr.bf16.mxu0 0
      %1143 = vmatmul.mubr.bf16.gmra.mrb[0].mxu0 %v1050
      %v1144 = vpop.f32.mrb[0].mxu0
      %v1145 = vadd.f32 0.0, %v1144
      %v1146 = vpop.f32.mrb[0].mxu0
      %v1147 = vpop.f32.mrb[0].mxu0
      %v1148 = vadd.f32 0.0, %v1147
      %v1149 = vpop.f32.mrb[0].mxu0
      %1150 = vmatprep.mubr.bf16.mxu0 0
      %1151 = vmatmul.mubr.bf16.gmra.mrb[0].mxu0 %v1053
      %v1152 = vpop.f32.mrb[0].mxu0
      %v1153 = vadd.f32 0.0, %v1152
      %v1154 = vpop.f32.mrb[0].mxu0
      %v1155 = vpop.f32.mrb[0].mxu0
      %v1156 = vadd.f32 0.0, %v1155
      %v1157 = vpop.f32.mrb[0].mxu0
      %1158 = vmatprep.mubr.bf16.mxu0 0
      %1159 = vmatmul.mubr.bf16.gmra.mrb[0].mxu0 %v1056
      %v1160 = vpop.f32.mrb[0].mxu0
      %v1161 = vadd.f32 0.0, %v1160
      %v1162 = vpop.f32.mrb[0].mxu0
      %v1163 = vpop.f32.mrb[0].mxu0
      %v1164 = vadd.f32 0.0, %v1163
      %v1165 = vpop.f32.mrb[0].mxu0
      %1166 = vmatprep.mubr.bf16.mxu0 0
      %1167 = vmatmul.mubr.bf16.gmra.mrb[0].mxu0 %v1059
      %v1168 = vpop.f32.mrb[0].mxu0
      %v1169 = vadd.f32 0.0, %v1168
      %v1170 = vpop.f32.mrb[0].mxu0
      %v1171 = vpop.f32.mrb[0].mxu0
      %v1172 = vadd.f32 0.0, %v1171
      %v1173 = vpop.f32.mrb[0].mxu0
      %1174 = vmatprep.mubr.bf16.mxu0 0
      %1175 = vmatmul.mubr.bf16.gmra.mrb[0].mxu0 %v1062
      %v1176 = vpop.f32.mrb[0].mxu0
      %v1177 = vadd.f32 0.0, %v1176
      %v1178 = vpop.f32.mrb[0].mxu0
      %v1179 = vpop.f32.mrb[0].mxu0
      %v1180 = vadd.f32 0.0, %v1179
      %v1181 = vpop.f32.mrb[0].mxu0
      %1182 = vmatprep.mubr.bf16.mxu0 0
      %1183 = vmatmul.mubr.bf16.gmra.mrb[0].mxu0 %v1065
      %v1184 = vpop.f32.mrb[0].mxu0
      %v1185 = vadd.f32 0.0, %v1184
      %v1186 = vpop.f32.mrb[0].mxu0
      %v1187 = vpop.f32.mrb[0].mxu0
      %v1188 = vadd.f32 0.0, %v1187
      %v1189 = vpop.f32.mrb[0].mxu0
      %1190 = vdwg.mxu0
      %v1191 = vadd.f32 %v834, %v1105
      %v1192 = vadd.f32 %v835, %v1108
      %v1193 = vadd.f32 %v836, %v1113
      %v1194 = vadd.f32 %v837, %v1116
      %v1195 = vadd.f32 %v838, %v1121
      %v1196 = vadd.f32 %v839, %v1124
      %v1197 = vadd.f32 %v840, %v1129
      %v1198 = vadd.f32 %v841, %v1132
      %v1199 = vadd.f32 %v842, %v1137
      %v1200 = vadd.f32 %v843, %v1140
      %v1201 = vadd.f32 %v844, %v1145
      %v1202 = vadd.f32 %v845, %v1148
      %v1203 = vadd.f32 %v846, %v1153
      %v1204 = vadd.f32 %v847, %v1156
      %v1205 = vadd.f32 %v848, %v1161
      %v1206 = vadd.f32 %v849, %v1164
      %v1207 = vadd.f32 %v850, %v1169
      %v1208 = vadd.f32 %v851, %v1172
      %v1209 = vadd.f32 %v852, %v1177
      %v1210 = vadd.f32 %v853, %v1180
      %v1211 = vadd.f32 %v854, %v1185
      %v1212 = vadd.f32 %v855, %v1188
      %v1213 = vld [vmem:[%s165 + $0x4] sm:$0x8]
      %v1214 = vld [vmem:[%s165 + $0x58] sm:$0xf]
      %s1215 = scalar_lea.vmem %s1, 16
      %v1216 = vld [vmem:[%s1215] sm:$0xf]
      %v1219 = vunpack.c.l.b16 %v1213
      %v1220 = vunpack.c.l.b16 %v1214
      %v1221 = vpack.c.b16 %v903, %v1219
      %v1222 = vpack.c.b16 %v1220, %v922
      %vm1223 = vcmask 1044480
      %v1224 = vrot.slane %v1221, 3
      %v1225 = vrot.slane %v925, 3
      %v1226 = vsel %vm1223, %v1224, %v1225
      %v1227 = vrot.slane %v926, 3
      %v1228 = vsel %vm1223, %v1225, %v1227
      %v1229 = vrot.slane %v927, 3
      %v1230 = vsel %vm1223, %v1227, %v1229
      %v1231 = vrot.slane %v928, 3
      %v1232 = vsel %vm1223, %v1229, %v1231
      %v1233 = vrot.slane %v929, 3
      %v1234 = vsel %vm1223, %v1231, %v1233
      %v1235 = vrot.slane %v930, 3
      %v1236 = vsel %vm1223, %v1233, %v1235
      %v1237 = vrot.slane %v931, 3
      %v1238 = vsel %vm1223, %v1235, %v1237
      %v1239 = vrot.slane %v932, 3
      %v1240 = vsel %vm1223, %v1237, %v1239
      %v1241 = vrot.slane %v933, 3
      %v1242 = vsel %vm1223, %v1239, %v1241
      %v1243 = vrot.slane %v1222, 3
      %v1244 = vsel %vm1223, %v1241, %v1243
      %v1246 = vsel %vm340, %v1226, 0
      %v1249 = vsel %vm340, %v1228, 0
      %v1252 = vsel %vm340, %v1230, 0
      %v1255 = vsel %vm340, %v1232, 0
      %v1258 = vsel %vm340, %v1234, 0
      %v1261 = vsel %vm340, %v1236, 0
      %v1264 = vsel %vm340, %v1238, 0
      %v1267 = vsel %vm340, %v1240, 0
      %v1270 = vsel %vm340, %v1242, 0
      %v1273 = vsel %vm340, %v1244, 0
      %v1276 = vsel %vm340, %v1243, 0
      %v1279 = vsel %vm374, %v1216, 0
      %1281 = vmatprep.subr.bf16.mxu0 0
      %1282 = vmatpush1.bf16.msra.mxu0 %v1279
      %1283 = vmatprep.subr.bf16.mxu0 0
      %1284 = vmatpush1.bf16.msra.mxu0 0
      %1285 = vmatprep.subr.bf16.mxu0 0
      %1286 = vmatpush1.bf16.msra.mxu0 0
      %1287 = vmatprep.subr.bf16.mxu0 0
      %1288 = vmatpush1.bf16.msra.mxu0 0
      %1289 = vmatprep.subr.bf16.mxu0 0
      %1290 = vmatpush1.bf16.msra.mxu0 0
      %1291 = vmatprep.subr.bf16.mxu0 0
      %1292 = vmatpush1.bf16.msra.mxu0 0
      %1293 = vmatprep.subr.bf16.mxu0 0
      %1294 = vmatpush1.bf16.msra.mxu0 0
      %1295 = vmatprep.subr.bf16.mxu0 0
      %1296 = vmatpush1.bf16.msra.mxu0 0
      %1297 = vmatprep.subr.bf16.mxu0 0
      %1298 = vmatpush1.bf16.msra.mxu0 0
      %1299 = vmatprep.subr.bf16.mxu0 0
      %1300 = vmatpush1.bf16.msra.mxu0 0
      %1301 = vmatprep.subr.bf16.mxu0 0
      %1302 = vmatpush1.bf16.msra.mxu0 0
      %1303 = vmatprep.subr.bf16.mxu0 0
      %1304 = vmatpush1.bf16.msra.mxu0 0
      %1305 = vmatprep.subr.bf16.mxu0 0
      %1306 = vmatpush1.bf16.msra.mxu0 0
      %1307 = vmatprep.subr.bf16.mxu0 0
      %1308 = vmatpush1.bf16.msra.mxu0 0
      %1309 = vmatprep.subr.bf16.mxu0 0
      %1310 = vmatpush1.bf16.msra.mxu0 0
      %1311 = vmatprep.subr.bf16.mxu0 0
      %1312 = vmatpush1.bf16.msra.mxu0 0
      %1313 = vmatprep.mubr.bf16.mxu0 0
      %1314 = vmatmul.mubr.bf16.gmra.mrb[0].mxu0 %v1246
      %v1315 = vpop.f32.mrb[0].mxu0
      %v1316 = vadd.f32 0.0, %v1315
      %v1317 = vpop.f32.mrb[0].mxu0
      %v1318 = vpop.f32.mrb[0].mxu0
      %v1319 = vadd.f32 0.0, %v1318
      %v1320 = vpop.f32.mrb[0].mxu0
      %1321 = vmatprep.mubr.bf16.mxu0 0
      %1322 = vmatmul.mubr.bf16.gmra.mrb[0].mxu0 %v1249
      %v1323 = vpop.f32.mrb[0].mxu0
      %v1324 = vadd.f32 0.0, %v1323
      %v1325 = vpop.f32.mrb[0].mxu0
      %v1326 = vpop.f32.mrb[0].mxu0
      %v1327 = vadd.f32 0.0, %v1326
      %v1328 = vpop.f32.mrb[0].mxu0
      %1329 = vmatprep.mubr.bf16.mxu0 0
      %1330 = vmatmul.mubr.bf16.gmra.mrb[0].mxu0 %v1252
      %v1331 = vpop.f32.mrb[0].mxu0
      %v1332 = vadd.f32 0.0, %v1331
      %v1333 = vpop.f32.mrb[0].mxu0
      %v1334 = vpop.f32.mrb[0].mxu0
      %v1335 = vadd.f32 0.0, %v1334
      %v1336 = vpop.f32.mrb[0].mxu0
      %1337 = vmatprep.mubr.bf16.mxu0 0
      %1338 = vmatmul.mubr.bf16.gmra.mrb[0].mxu0 %v1255
      %v1339 = vpop.f32.mrb[0].mxu0
      %v1340 = vadd.f32 0.0, %v1339
      %v1341 = vpop.f32.mrb[0].mxu0
      %v1342 = vpop.f32.mrb[0].mxu0
      %v1343 = vadd.f32 0.0, %v1342
      %v1344 = vpop.f32.mrb[0].mxu0
      %1345 = vmatprep.mubr.bf16.mxu0 0
      %1346 = vmatmul.mubr.bf16.gmra.mrb[0].mxu0 %v1258
      %v1347 = vpop.f32.mrb[0].mxu0
      %v1348 = vadd.f32 0.0, %v1347
      %v1349 = vpop.f32.mrb[0].mxu0
      %v1350 = vpop.f32.mrb[0].mxu0
      %v1351 = vadd.f32 0.0, %v1350
      %v1352 = vpop.f32.mrb[0].mxu0
      %1353 = vmatprep.mubr.bf16.mxu0 0
      %1354 = vmatmul.mubr.bf16.gmra.mrb[0].mxu0 %v1261
      %v1355 = vpop.f32.mrb[0].mxu0
      %v1356 = vadd.f32 0.0, %v1355
      %v1357 = vpop.f32.mrb[0].mxu0
      %v1358 = vpop.f32.mrb[0].mxu0
      %v1359 = vadd.f32 0.0, %v1358
      %v1360 = vpop.f32.mrb[0].mxu0
      %1361 = vmatprep.mubr.bf16.mxu0 0
      %1362 = vmatmul.mubr.bf16.gmra.mrb[0].mxu0 %v1264
      %v1363 = vpop.f32.mrb[0].mxu0
      %v1364 = vadd.f32 0.0, %v1363
      %v1365 = vpop.f32.mrb[0].mxu0
      %v1366 = vpop.f32.mrb[0].mxu0
      %v1367 = vadd.f32 0.0, %v1366
      %v1368 = vpop.f32.mrb[0].mxu0
      %1369 = vmatprep.mubr.bf16.mxu0 0
      %1370 = vmatmul.mubr.bf16.gmra.mrb[0].mxu0 %v1267
      %v1371 = vpop.f32.mrb[0].mxu0
      %v1372 = vadd.f32 0.0, %v1371
      %v1373 = vpop.f32.mrb[0].mxu0
      %v1374 = vpop.f32.mrb[0].mxu0
      %v1375 = vadd.f32 0.0, %v1374
      %v1376 = vpop.f32.mrb[0].mxu0
      %1377 = vmatprep.mubr.bf16.mxu0 0
      %1378 = vmatmul.mubr.bf16.gmra.mrb[0].mxu0 %v1270
      %v1379 = vpop.f32.mrb[0].mxu0
      %v1380 = vadd.f32 0.0, %v1379
      %v1381 = vpop.f32.mrb[0].mxu0
      %v1382 = vpop.f32.mrb[0].mxu0
      %v1383 = vadd.f32 0.0, %v1382
      %v1384 = vpop.f32.mrb[0].mxu0
      %1385 = vmatprep.mubr.bf16.mxu0 0
      %1386 = vmatmul.mubr.bf16.gmra.mrb[0].mxu0 %v1273
      %v1387 = vpop.f32.mrb[0].mxu0
      %v1388 = vadd.f32 0.0, %v1387
      %v1389 = vpop.f32.mrb[0].mxu0
      %v1390 = vpop.f32.mrb[0].mxu0
      %v1391 = vadd.f32 0.0, %v1390
      %v1392 = vpop.f32.mrb[0].mxu0
      %1393 = vmatprep.mubr.bf16.mxu0 0
      %1394 = vmatmul.mubr.bf16.gmra.mrb[0].mxu0 %v1276
      %v1395 = vpop.f32.mrb[0].mxu0
      %v1396 = vadd.f32 0.0, %v1395
      %v1397 = vpop.f32.mrb[0].mxu0
      %v1398 = vpop.f32.mrb[0].mxu0
      %v1399 = vadd.f32 0.0, %v1398
      %v1400 = vpop.f32.mrb[0].mxu0
      %1401 = vdwg.mxu0
      %v1402 = vadd.f32 %v1191, %v1316
      %v1403 = vadd.f32 %v1192, %v1319
      %v1404 = vadd.f32 %v1193, %v1324
      %v1405 = vadd.f32 %v1194, %v1327
      %v1406 = vadd.f32 %v1195, %v1332
      %v1407 = vadd.f32 %v1196, %v1335
      %v1408 = vadd.f32 %v1197, %v1340
      %v1409 = vadd.f32 %v1198, %v1343
      %v1410 = vadd.f32 %v1199, %v1348
      %v1411 = vadd.f32 %v1200, %v1351
      %v1412 = vadd.f32 %v1201, %v1356
      %v1413 = vadd.f32 %v1202, %v1359
      %v1414 = vadd.f32 %v1203, %v1364
      %v1415 = vadd.f32 %v1204, %v1367
      %v1416 = vadd.f32 %v1205, %v1372
      %v1417 = vadd.f32 %v1206, %v1375
      %v1418 = vadd.f32 %v1207, %v1380
      %v1419 = vadd.f32 %v1208, %v1383
      %v1420 = vadd.f32 %v1209, %v1388
      %v1421 = vadd.f32 %v1210, %v1391
      %v1422 = vadd.f32 %v1211, %v1396
      %v1423 = vadd.f32 %v1212, %v1399
      %s1424 = scalar_lea.vmem %s1, 20
      %v1425 = vld [vmem:[%s1424] sm:$0xf]
      %vm1426 = vsmask.f32 4352
      %v1428 = vshrl.u32 %v1221, 16
      %v1430 = vrot.slane %v1428, 3
      %v1431 = vshll.u32 %v1221, 16
      %v1433 = vrot.slane %v1431, 4
      %v1434 = vor.u32 %v1430, %v1433
      %v1435 = vrot.slane %v945, 3
      %v1436 = vrot.slane %v948, 4
      %v1437 = vor.u32 %v1435, %v1436
      %v1438 = vsel %vm1426, %v1434, %v1437
      %v1439 = vrot.slane %v954, 3
      %v1440 = vrot.slane %v957, 4
      %v1441 = vor.u32 %v1439, %v1440
      %v1442 = vsel %vm1426, %v1437, %v1441
      %v1443 = vrot.slane %v963, 3
      %v1444 = vrot.slane %v966, 4
      %v1445 = vor.u32 %v1443, %v1444
      %v1446 = vsel %vm1426, %v1441, %v1445
      %v1447 = vrot.slane %v972, 3
      %v1448 = vrot.slane %v975, 4
      %v1449 = vor.u32 %v1447, %v1448
      %v1450 = vsel %vm1426, %v1445, %v1449
      %v1451 = vrot.slane %v981, 3
      %v1452 = vrot.slane %v984, 4
      %v1453 = vor.u32 %v1451, %v1452
      %v1454 = vsel %vm1426, %v1449, %v1453
      %v1455 = vrot.slane %v990, 3
      %v1456 = vrot.slane %v993, 4
      %v1457 = vor.u32 %v1455, %v1456
      %v1458 = vsel %vm1426, %v1453, %v1457
      %v1459 = vrot.slane %v999, 3
      %v1460 = vrot.slane %v1002, 4
      %v1461 = vor.u32 %v1459, %v1460
      %v1462 = vsel %vm1426, %v1457, %v1461
      %v1463 = vrot.slane %v1008, 3
      %v1464 = vrot.slane %v1011, 4
      %v1465 = vor.u32 %v1463, %v1464
      %v1466 = vsel %vm1426, %v1461, %v1465
      %v1467 = vrot.slane %v1017, 3
      %v1468 = vrot.slane %v1020, 4
      %v1469 = vor.u32 %v1467, %v1468
      %v1470 = vsel %vm1426, %v1465, %v1469
      %v1472 = vshrl.u32 %v1222, 16
      %v1474 = vrot.slane %v1472, 3
      %v1475 = vshll.u32 %v1222, 16
      %v1477 = vrot.slane %v1475, 4
      %v1478 = vor.u32 %v1474, %v1477
      %v1479 = vsel %vm1426, %v1469, %v1478
      %v1481 = vsel %vm340, %v1438, 0
      %v1484 = vsel %vm340, %v1442, 0
      %v1487 = vsel %vm340, %v1446, 0
      %v1490 = vsel %vm340, %v1450, 0
      %v1493 = vsel %vm340, %v1454, 0
      %v1496 = vsel %vm340, %v1458, 0
      %v1499 = vsel %vm340, %v1462, 0
      %v1502 = vsel %vm340, %v1466, 0
      %v1505 = vsel %vm340, %v1470, 0
      %v1508 = vsel %vm340, %v1479, 0
      %v1511 = vsel %vm340, %v1478, 0
      %v1514 = vsel %vm374, %v1425, 0
      %1516 = vmatprep.subr.bf16.mxu0 0
      %1517 = vmatpush1.bf16.msra.mxu0 %v1514
      %1518 = vmatprep.subr.bf16.mxu0 0
      %1519 = vmatpush1.bf16.msra.mxu0 0
      %1520 = vmatprep.subr.bf16.mxu0 0
      %1521 = vmatpush1.bf16.msra.mxu0 0
      %1522 = vmatprep.subr.bf16.mxu0 0
      %1523 = vmatpush1.bf16.msra.mxu0 0
      %1524 = vmatprep.subr.bf16.mxu0 0
      %1525 = vmatpush1.bf16.msra.mxu0 0
      %1526 = vmatprep.subr.bf16.mxu0 0
      %1527 = vmatpush1.bf16.msra.mxu0 0
      %1528 = vmatprep.subr.bf16.mxu0 0
      %1529 = vmatpush1.bf16.msra.mxu0 0
      %1530 = vmatprep.subr.bf16.mxu0 0
      %1531 = vmatpush1.bf16.msra.mxu0 0
      %1532 = vmatprep.subr.bf16.mxu0 0
      %1533 = vmatpush1.bf16.msra.mxu0 0
      %1534 = vmatprep.subr.bf16.mxu0 0
      %1535 = vmatpush1.bf16.msra.mxu0 0
      %1536 = vmatprep.subr.bf16.mxu0 0
      %1537 = vmatpush1.bf16.msra.mxu0 0
      %1538 = vmatprep.subr.bf16.mxu0 0
      %1539 = vmatpush1.bf16.msra.mxu0 0
      %1540 = vmatprep.subr.bf16.mxu0 0
      %1541 = vmatpush1.bf16.msra.mxu0 0
      %1542 = vmatprep.subr.bf16.mxu0 0
      %1543 = vmatpush1.bf16.msra.mxu0 0
      %1544 = vmatprep.subr.bf16.mxu0 0
      %1545 = vmatpush1.bf16.msra.mxu0 0
      %1546 = vmatprep.subr.bf16.mxu0 0
      %1547 = vmatpush1.bf16.msra.mxu0 0
      %1548 = vmatprep.mubr.bf16.mxu0 0
      %1549 = vmatmul.mubr.bf16.gmra.mrb[0].mxu0 %v1481
      %v1550 = vpop.f32.mrb[0].mxu0
      %v1551 = vadd.f32 0.0, %v1550
      %v1552 = vpop.f32.mrb[0].mxu0
      %v1553 = vpop.f32.mrb[0].mxu0
      %v1554 = vadd.f32 0.0, %v1553
      %v1555 = vpop.f32.mrb[0].mxu0
      %1556 = vmatprep.mubr.bf16.mxu0 0
      %1557 = vmatmul.mubr.bf16.gmra.mrb[0].mxu0 %v1484
      %v1558 = vpop.f32.mrb[0].mxu0
      %v1559 = vadd.f32 0.0, %v1558
      %v1560 = vpop.f32.mrb[0].mxu0
      %v1561 = vpop.f32.mrb[0].mxu0
      %v1562 = vadd.f32 0.0, %v1561
      %v1563 = vpop.f32.mrb[0].mxu0
      %1564 = vmatprep.mubr.bf16.mxu0 0
      %1565 = vmatmul.mubr.bf16.gmra.mrb[0].mxu0 %v1487
      %v1566 = vpop.f32.mrb[0].mxu0
      %v1567 = vadd.f32 0.0, %v1566
      %v1568 = vpop.f32.mrb[0].mxu0
      %v1569 = vpop.f32.mrb[0].mxu0
      %v1570 = vadd.f32 0.0, %v1569
      %v1571 = vpop.f32.mrb[0].mxu0
      %1572 = vmatprep.mubr.bf16.mxu0 0
      %1573 = vmatmul.mubr.bf16.gmra.mrb[0].mxu0 %v1490
      %v1574 = vpop.f32.mrb[0].mxu0
      %v1575 = vadd.f32 0.0, %v1574
      %v1576 = vpop.f32.mrb[0].mxu0
      %v1577 = vpop.f32.mrb[0].mxu0
      %v1578 = vadd.f32 0.0, %v1577
      %v1579 = vpop.f32.mrb[0].mxu0
      %1580 = vmatprep.mubr.bf16.mxu0 0
      %1581 = vmatmul.mubr.bf16.gmra.mrb[0].mxu0 %v1493
      %v1582 = vpop.f32.mrb[0].mxu0
      %v1583 = vadd.f32 0.0, %v1582
      %v1584 = vpop.f32.mrb[0].mxu0
      %v1585 = vpop.f32.mrb[0].mxu0
      %v1586 = vadd.f32 0.0, %v1585
      %v1587 = vpop.f32.mrb[0].mxu0
      %1588 = vmatprep.mubr.bf16.mxu0 0
      %1589 = vmatmul.mubr.bf16.gmra.mrb[0].mxu0 %v1496
      %v1590 = vpop.f32.mrb[0].mxu0
      %v1591 = vadd.f32 0.0, %v1590
      %v1592 = vpop.f32.mrb[0].mxu0
      %v1593 = vpop.f32.mrb[0].mxu0
      %v1594 = vadd.f32 0.0, %v1593
      %v1595 = vpop.f32.mrb[0].mxu0
      %1596 = vmatprep.mubr.bf16.mxu0 0
      %1597 = vmatmul.mubr.bf16.gmra.mrb[0].mxu0 %v1499
      %v1598 = vpop.f32.mrb[0].mxu0
      %v1599 = vadd.f32 0.0, %v1598
      %v1600 = vpop.f32.mrb[0].mxu0
      %v1601 = vpop.f32.mrb[0].mxu0
      %v1602 = vadd.f32 0.0, %v1601
      %v1603 = vpop.f32.mrb[0].mxu0
      %1604 = vmatprep.mubr.bf16.mxu0 0
      %1605 = vmatmul.mubr.bf16.gmra.mrb[0].mxu0 %v1502
      %v1606 = vpop.f32.mrb[0].mxu0
      %v1607 = vadd.f32 0.0, %v1606
      %v1608 = vpop.f32.mrb[0].mxu0
      %v1609 = vpop.f32.mrb[0].mxu0
      %v1610 = vadd.f32 0.0, %v1609
      %v1611 = vpop.f32.mrb[0].mxu0
      %1612 = vmatprep.mubr.bf16.mxu0 0
      %1613 = vmatmul.mubr.bf16.gmra.mrb[0].mxu0 %v1505
      %v1614 = vpop.f32.mrb[0].mxu0
      %v1615 = vadd.f32 0.0, %v1614
      %v1616 = vpop.f32.mrb[0].mxu0
      %v1617 = vpop.f32.mrb[0].mxu0
      %v1618 = vadd.f32 0.0, %v1617
      %v1619 = vpop.f32.mrb[0].mxu0
      %1620 = vmatprep.mubr.bf16.mxu0 0
      %1621 = vmatmul.mubr.bf16.gmra.mrb[0].mxu0 %v1508
      %v1622 = vpop.f32.mrb[0].mxu0
      %v1623 = vadd.f32 0.0, %v1622
      %v1624 = vpop.f32.mrb[0].mxu0
      %v1625 = vpop.f32.mrb[0].mxu0
      %v1626 = vadd.f32 0.0, %v1625
      %v1627 = vpop.f32.mrb[0].mxu0
      %1628 = vmatprep.mubr.bf16.mxu0 0
      %1629 = vmatmul.mubr.bf16.gmra.mrb[0].mxu0 %v1511
      %v1630 = vpop.f32.mrb[0].mxu0
      %v1631 = vadd.f32 0.0, %v1630
      %v1632 = vpop.f32.mrb[0].mxu0
      %v1633 = vpop.f32.mrb[0].mxu0
      %v1634 = vadd.f32 0.0, %v1633
      %v1635 = vpop.f32.mrb[0].mxu0
      %1636 = vdwg.mxu0
      %v1637 = vadd.f32 %v1402, %v1551
      %v1638 = vadd.f32 %v1403, %v1554
      %v1639 = vadd.f32 %v1404, %v1559
      %v1640 = vadd.f32 %v1405, %v1562
      %v1641 = vadd.f32 %v1406, %v1567
      %v1642 = vadd.f32 %v1407, %v1570
      %v1643 = vadd.f32 %v1408, %v1575
      %v1644 = vadd.f32 %v1409, %v1578
      %v1645 = vadd.f32 %v1410, %v1583
      %v1646 = vadd.f32 %v1411, %v1586
      %v1647 = vadd.f32 %v1412, %v1591
      %v1648 = vadd.f32 %v1413, %v1594
      %v1649 = vadd.f32 %v1414, %v1599
      %v1650 = vadd.f32 %v1415, %v1602
      %v1651 = vadd.f32 %v1416, %v1607
      %v1652 = vadd.f32 %v1417, %v1610
      %v1653 = vadd.f32 %v1418, %v1615
      %v1654 = vadd.f32 %v1419, %v1618
      %v1655 = vadd.f32 %v1420, %v1623
      %v1656 = vadd.f32 %v1421, %v1626
      %v1657 = vadd.f32 %v1422, %v1631
      %v1658 = vadd.f32 %v1423, %v1634
      %v1659 = vld [vmem:[%s165 + $0xc] sm:$0xe]
      %v1660 = vld [vmem:[%s165 + $0x10] sm:$0xf]
      %v1661 = vld [vmem:[%s165 + $0x14] sm:$0xf]
      %v1662 = vld [vmem:[%s165 + $0x18] sm:$0xf]
      %v1663 = vld [vmem:[%s165 + $0x1c] sm:$0xf]
      %v1664 = vld [vmem:[%s165 + $0x20] sm:$0xf]
      %v1665 = vld [vmem:[%s165 + $0x24] sm:$0xf]
      %v1666 = vld [vmem:[%s165 + $0x28] sm:$0xf]
      %v1667 = vld [vmem:[%s165 + $0x2c] sm:$0xf]
      %v1668 = vld [vmem:[%s165 + $0x30] sm:$0xf]
      %v1669 = vld [vmem:[%s165 + $0x34] sm:$0xf]
      %v1670 = vld [vmem:[%s165 + $0x38] sm:$0xf]
      %v1671 = vld [vmem:[%s165 + $0x3c] sm:$0xf]
      %v1672 = vld [vmem:[%s165 + $0x40] sm:$0xf]
      %v1673 = vld [vmem:[%s165 + $0x44] sm:$0xf]
      %v1674 = vld [vmem:[%s165 + $0x48] sm:$0xf]
      %v1675 = vld [vmem:[%s165 + $0x4c] sm:$0xf]
      %v1676 = vld [vmem:[%s165 + $0x50] sm:$0xf]
      %v1677 = vld [vmem:[%s165 + $0x54] sm:$0xf]
      %v1678 = vld [vmem:[%s165 + $0x58] sm:$0xf]
      %v1679 = vld [vmem:[%s165 + $0x5c] sm:$0xf]
      %v1680 = vld [vmem:[%s165 + $0x60] sm:$0x3]
      %s1681 = scalar_lea.vmem %s1, 24
      %v1682 = vld [vmem:[%s1681] sm:$0xf]
      %v1705 = vunpack.c.l.b16 %v1659
      %v1706 = vunpack.c.l.b16 %v1660
      %v1707 = vunpack.c.l.b16 %v1661
      %v1708 = vunpack.c.l.b16 %v1662
      %v1709 = vunpack.c.l.b16 %v1663
      %v1710 = vunpack.c.l.b16 %v1664
      %v1711 = vunpack.c.l.b16 %v1665
      %v1712 = vunpack.c.l.b16 %v1666
      %v1713 = vunpack.c.l.b16 %v1667
      %v1714 = vunpack.c.l.b16 %v1668
      %v1715 = vunpack.c.l.b16 %v1669
      %v1716 = vunpack.c.l.b16 %v1670
      %v1717 = vunpack.c.l.b16 %v1671
      %v1718 = vunpack.c.l.b16 %v1672
      %v1719 = vunpack.c.l.b16 %v1673
      %v1720 = vunpack.c.l.b16 %v1674
      %v1721 = vunpack.c.l.b16 %v1675
      %v1722 = vunpack.c.l.b16 %v1676
      %v1723 = vunpack.c.l.b16 %v1677
      %v1724 = vunpack.c.l.b16 %v1678
      %v1725 = vunpack.c.l.b16 %v1679
      %v1726 = vunpack.c.l.b16 %v1680
      %v1727 = vpack.c.b16 %v1706, %v1705
      %v1728 = vpack.c.b16 %v1708, %v1707
      %v1729 = vpack.c.b16 %v1710, %v1709
      %v1730 = vpack.c.b16 %v1712, %v1711
      %v1731 = vpack.c.b16 %v1714, %v1713
      %v1732 = vpack.c.b16 %v1716, %v1715
      %v1733 = vpack.c.b16 %v1718, %v1717
      %v1734 = vpack.c.b16 %v1720, %v1719
      %v1735 = vpack.c.b16 %v1722, %v1721
      %v1736 = vpack.c.b16 %v1724, %v1723
      %v1737 = vpack.c.b16 %v1726, %v1725
      %v1738 = vrot.slane %v1727, 1
      %v1739 = vrot.slane %v1728, 1
      %v1740 = vsel %vm655, %v1738, %v1739
      %v1741 = vrot.slane %v1729, 1
      %v1742 = vsel %vm655, %v1739, %v1741
      %v1743 = vrot.slane %v1730, 1
      %v1744 = vsel %vm655, %v1741, %v1743
      %v1745 = vrot.slane %v1731, 1
      %v1746 = vsel %vm655, %v1743, %v1745
      %v1747 = vrot.slane %v1732, 1
      %v1748 = vsel %vm655, %v1745, %v1747
      %v1749 = vrot.slane %v1733, 1
      %v1750 = vsel %vm655, %v1747, %v1749
      %v1751 = vrot.slane %v1734, 1
      %v1752 = vsel %vm655, %v1749, %v1751
      %v1753 = vrot.slane %v1735, 1
      %v1754 = vsel %vm655, %v1751, %v1753
      %v1755 = vrot.slane %v1736, 1
      %v1756 = vsel %vm655, %v1753, %v1755
      %v1757 = vrot.slane %v1737, 1
      %v1758 = vsel %vm655, %v1755, %v1757
      %v1760 = vsel %vm340, %v1740, 0
      %v1763 = vsel %vm340, %v1742, 0
      %v1766 = vsel %vm340, %v1744, 0
      %v1769 = vsel %vm340, %v1746, 0
      %v1772 = vsel %vm340, %v1748, 0
      %v1775 = vsel %vm340, %v1750, 0
      %v1778 = vsel %vm340, %v1752, 0
      %v1781 = vsel %vm340, %v1754, 0
      %v1784 = vsel %vm340, %v1756, 0
      %v1787 = vsel %vm340, %v1758, 0
      %v1790 = vsel %vm340, %v1757, 0
      %v1793 = vsel %vm374, %v1682, 0
      %1795 = vmatprep.subr.bf16.mxu0 0
      %1796 = vmatpush1.bf16.msra.mxu0 %v1793
      %1797 = vmatprep.subr.bf16.mxu0 0
      %1798 = vmatpush1.bf16.msra.mxu0 0
      %1799 = vmatprep.subr.bf16.mxu0 0
      %1800 = vmatpush1.bf16.msra.mxu0 0
      %1801 = vmatprep.subr.bf16.mxu0 0
      %1802 = vmatpush1.bf16.msra.mxu0 0
      %1803 = vmatprep.subr.bf16.mxu0 0
      %1804 = vmatpush1.bf16.msra.mxu0 0
      %1805 = vmatprep.subr.bf16.mxu0 0
      %1806 = vmatpush1.bf16.msra.mxu0 0
      %1807 = vmatprep.subr.bf16.mxu0 0
      %1808 = vmatpush1.bf16.msra.mxu0 0
      %1809 = vmatprep.subr.bf16.mxu0 0
      %1810 = vmatpush1.bf16.msra.mxu0 0
      %1811 = vmatprep.subr.bf16.mxu0 0
      %1812 = vmatpush1.bf16.msra.mxu0 0
      %1813 = vmatprep.subr.bf16.mxu0 0
      %1814 = vmatpush1.bf16.msra.mxu0 0
      %1815 = vmatprep.subr.bf16.mxu0 0
      %1816 = vmatpush1.bf16.msra.mxu0 0
      %1817 = vmatprep.subr.bf16.mxu0 0
      %1818 = vmatpush1.bf16.msra.mxu0 0
      %1819 = vmatprep.subr.bf16.mxu0 0
      %1820 = vmatpush1.bf16.msra.mxu0 0
      %1821 = vmatprep.subr.bf16.mxu0 0
      %1822 = vmatpush1.bf16.msra.mxu0 0
      %1823 = vmatprep.subr.bf16.mxu0 0
      %1824 = vmatpush1.bf16.msra.mxu0 0
      %1825 = vmatprep.subr.bf16.mxu0 0
      %1826 = vmatpush1.bf16.msra.mxu0 0
      %1827 = vmatprep.mubr.bf16.mxu0 0
      %1828 = vmatmul.mubr.bf16.gmra.mrb[0].mxu0 %v1760
      %v1829 = vpop.f32.mrb[0].mxu0
      %v1830 = vadd.f32 0.0, %v1829
      %v1831 = vpop.f32.mrb[0].mxu0
      %v1832 = vpop.f32.mrb[0].mxu0
      %v1833 = vadd.f32 0.0, %v1832
      %v1834 = vpop.f32.mrb[0].mxu0
      %1835 = vmatprep.mubr.bf16.mxu0 0
      %1836 = vmatmul.mubr.bf16.gmra.mrb[0].mxu0 %v1763
      %v1837 = vpop.f32.mrb[0].mxu0
      %v1838 = vadd.f32 0.0, %v1837
      %v1839 = vpop.f32.mrb[0].mxu0
      %v1840 = vpop.f32.mrb[0].mxu0
      %v1841 = vadd.f32 0.0, %v1840
      %v1842 = vpop.f32.mrb[0].mxu0
      %1843 = vmatprep.mubr.bf16.mxu0 0
      %1844 = vmatmul.mubr.bf16.gmra.mrb[0].mxu0 %v1766
      %v1845 = vpop.f32.mrb[0].mxu0
      %v1846 = vadd.f32 0.0, %v1845
      %v1847 = vpop.f32.mrb[0].mxu0
      %v1848 = vpop.f32.mrb[0].mxu0
      %v1849 = vadd.f32 0.0, %v1848
      %v1850 = vpop.f32.mrb[0].mxu0
      %1851 = vmatprep.mubr.bf16.mxu0 0
      %1852 = vmatmul.mubr.bf16.gmra.mrb[0].mxu0 %v1769
      %v1853 = vpop.f32.mrb[0].mxu0
      %v1854 = vadd.f32 0.0, %v1853
      %v1855 = vpop.f32.mrb[0].mxu0
      %v1856 = vpop.f32.mrb[0].mxu0
      %v1857 = vadd.f32 0.0, %v1856
      %v1858 = vpop.f32.mrb[0].mxu0
      %1859 = vmatprep.mubr.bf16.mxu0 0
      %1860 = vmatmul.mubr.bf16.gmra.mrb[0].mxu0 %v1772
      %v1861 = vpop.f32.mrb[0].mxu0
      %v1862 = vadd.f32 0.0, %v1861
      %v1863 = vpop.f32.mrb[0].mxu0
      %v1864 = vpop.f32.mrb[0].mxu0
      %v1865 = vadd.f32 0.0, %v1864
      %v1866 = vpop.f32.mrb[0].mxu0
      %1867 = vmatprep.mubr.bf16.mxu0 0
      %1868 = vmatmul.mubr.bf16.gmra.mrb[0].mxu0 %v1775
      %v1869 = vpop.f32.mrb[0].mxu0
      %v1870 = vadd.f32 0.0, %v1869
      %v1871 = vpop.f32.mrb[0].mxu0
      %v1872 = vpop.f32.mrb[0].mxu0
      %v1873 = vadd.f32 0.0, %v1872
      %v1874 = vpop.f32.mrb[0].mxu0
      %1875 = vmatprep.mubr.bf16.mxu0 0
      %1876 = vmatmul.mubr.bf16.gmra.mrb[0].mxu0 %v1778
      %v1877 = vpop.f32.mrb[0].mxu0
      %v1878 = vadd.f32 0.0, %v1877
      %v1879 = vpop.f32.mrb[0].mxu0
      %v1880 = vpop.f32.mrb[0].mxu0
      %v1881 = vadd.f32 0.0, %v1880
      %v1882 = vpop.f32.mrb[0].mxu0
      %1883 = vmatprep.mubr.bf16.mxu0 0
      %1884 = vmatmul.mubr.bf16.gmra.mrb[0].mxu0 %v1781
      %v1885 = vpop.f32.mrb[0].mxu0
      %v1886 = vadd.f32 0.0, %v1885
      %v1887 = vpop.f32.mrb[0].mxu0
      %v1888 = vpop.f32.mrb[0].mxu0
      %v1889 = vadd.f32 0.0, %v1888
      %v1890 = vpop.f32.mrb[0].mxu0
      %1891 = vmatprep.mubr.bf16.mxu0 0
      %1892 = vmatmul.mubr.bf16.gmra.mrb[0].mxu0 %v1784
      %v1893 = vpop.f32.mrb[0].mxu0
      %v1894 = vadd.f32 0.0, %v1893
      %v1895 = vpop.f32.mrb[0].mxu0
      %v1896 = vpop.f32.mrb[0].mxu0
      %v1897 = vadd.f32 0.0, %v1896
      %v1898 = vpop.f32.mrb[0].mxu0
      %1899 = vmatprep.mubr.bf16.mxu0 0
      %1900 = vmatmul.mubr.bf16.gmra.mrb[0].mxu0 %v1787
      %v1901 = vpop.f32.mrb[0].mxu0
      %v1902 = vadd.f32 0.0, %v1901
      %v1903 = vpop.f32.mrb[0].mxu0
      %v1904 = vpop.f32.mrb[0].mxu0
      %v1905 = vadd.f32 0.0, %v1904
      %v1906 = vpop.f32.mrb[0].mxu0
      %1907 = vmatprep.mubr.bf16.mxu0 0
      %1908 = vmatmul.mubr.bf16.gmra.mrb[0].mxu0 %v1790
      %v1909 = vpop.f32.mrb[0].mxu0
      %v1910 = vadd.f32 0.0, %v1909
      %v1911 = vpop.f32.mrb[0].mxu0
      %v1912 = vpop.f32.mrb[0].mxu0
      %v1913 = vadd.f32 0.0, %v1912
      %v1914 = vpop.f32.mrb[0].mxu0
      %1915 = vdwg.mxu0
      %v1916 = vadd.f32 %v1637, %v1830
      %v1917 = vadd.f32 %v1638, %v1833
      %v1918 = vadd.f32 %v1639, %v1838
      %v1919 = vadd.f32 %v1640, %v1841
      %v1920 = vadd.f32 %v1641, %v1846
      %v1921 = vadd.f32 %v1642, %v1849
      %v1922 = vadd.f32 %v1643, %v1854
      %v1923 = vadd.f32 %v1644, %v1857
      %v1924 = vadd.f32 %v1645, %v1862
      %v1925 = vadd.f32 %v1646, %v1865
      %v1926 = vadd.f32 %v1647, %v1870
      %v1927 = vadd.f32 %v1648, %v1873
      %v1928 = vadd.f32 %v1649, %v1878
      %v1929 = vadd.f32 %v1650, %v1881
      %v1930 = vadd.f32 %v1651, %v1886
      %v1931 = vadd.f32 %v1652, %v1889
      %v1932 = vadd.f32 %v1653, %v1894
      %v1933 = vadd.f32 %v1654, %v1897
      %v1934 = vadd.f32 %v1655, %v1902
      %v1935 = vadd.f32 %v1656, %v1905
      %v1936 = vadd.f32 %v1657, %v1910
      %v1937 = vadd.f32 %v1658, %v1913
      %s1938 = scalar_lea.vmem %s1, 28
      %v1939 = vld [vmem:[%s1938] sm:$0xf]
      %vm1940 = vsmask.f32 6400
      %v1942 = vshrl.u32 %v1727, 16
      %v1944 = vrot.slane %v1942, 1
      %v1945 = vshll.u32 %v1727, 16
      %v1947 = vrot.slane %v1945, 2
      %v1948 = vor.u32 %v1944, %v1947
      %v1950 = vshrl.u32 %v1728, 16
      %v1952 = vrot.slane %v1950, 1
      %v1953 = vshll.u32 %v1728, 16
      %v1955 = vrot.slane %v1953, 2
      %v1956 = vor.u32 %v1952, %v1955
      %v1957 = vsel %vm1940, %v1948, %v1956
      %v1959 = vshrl.u32 %v1729, 16
      %v1961 = vrot.slane %v1959, 1
      %v1962 = vshll.u32 %v1729, 16
      %v1964 = vrot.slane %v1962, 2
      %v1965 = vor.u32 %v1961, %v1964
      %v1966 = vsel %vm1940, %v1956, %v1965
      %v1968 = vshrl.u32 %v1730, 16
      %v1970 = vrot.slane %v1968, 1
      %v1971 = vshll.u32 %v1730, 16
      %v1973 = vrot.slane %v1971, 2
      %v1974 = vor.u32 %v1970, %v1973
      %v1975 = vsel %vm1940, %v1965, %v1974
      %v1977 = vshrl.u32 %v1731, 16
      %v1979 = vrot.slane %v1977, 1
      %v1980 = vshll.u32 %v1731, 16
      %v1982 = vrot.slane %v1980, 2
      %v1983 = vor.u32 %v1979, %v1982
      %v1984 = vsel %vm1940, %v1974, %v1983
      %v1986 = vshrl.u32 %v1732, 16
      %v1988 = vrot.slane %v1986, 1
      %v1989 = vshll.u32 %v1732, 16
      %v1991 = vrot.slane %v1989, 2
      %v1992 = vor.u32 %v1988, %v1991
      %v1993 = vsel %vm1940, %v1983, %v1992
      %v1995 = vshrl.u32 %v1733, 16
      %v1997 = vrot.slane %v1995, 1
      %v1998 = vshll.u32 %v1733, 16
      %v2000 = vrot.slane %v1998, 2
      %v2001 = vor.u32 %v1997, %v2000
      %v2002 = vsel %vm1940, %v1992, %v2001
      %v2004 = vshrl.u32 %v1734, 16
      %v2006 = vrot.slane %v2004, 1
      %v2007 = vshll.u32 %v1734, 16
      %v2009 = vrot.slane %v2007, 2
      %v2010 = vor.u32 %v2006, %v2009
      %v2011 = vsel %vm1940, %v2001, %v2010
      %v2013 = vshrl.u32 %v1735, 16
      %v2015 = vrot.slane %v2013, 1
      %v2016 = vshll.u32 %v1735, 16
      %v2018 = vrot.slane %v2016, 2
      %v2019 = vor.u32 %v2015, %v2018
      %v2020 = vsel %vm1940, %v2010, %v2019
      %v2022 = vshrl.u32 %v1736, 16
      %v2024 = vrot.slane %v2022, 1
      %v2025 = vshll.u32 %v1736, 16
      %v2027 = vrot.slane %v2025, 2
      %v2028 = vor.u32 %v2024, %v2027
      %v2029 = vsel %vm1940, %v2019, %v2028
      %v2031 = vshrl.u32 %v1737, 16
      %v2033 = vrot.slane %v2031, 1
      %v2034 = vshll.u32 %v1737, 16
      %v2036 = vrot.slane %v2034, 2
      %v2037 = vor.u32 %v2033, %v2036
      %v2038 = vsel %vm1940, %v2028, %v2037
      %v2040 = vsel %vm340, %v1957, 0
      %v2043 = vsel %vm340, %v1966, 0
      %v2046 = vsel %vm340, %v1975, 0
      %v2049 = vsel %vm340, %v1984, 0
      %v2052 = vsel %vm340, %v1993, 0
      %v2055 = vsel %vm340, %v2002, 0
      %v2058 = vsel %vm340, %v2011, 0
      %v2061 = vsel %vm340, %v2020, 0
      %v2064 = vsel %vm340, %v2029, 0
      %v2067 = vsel %vm340, %v2038, 0
      %v2070 = vsel %vm340, %v2037, 0
      %v2073 = vsel %vm374, %v1939, 0
      %2075 = vmatprep.subr.bf16.mxu0 0
      %2076 = vmatpush1.bf16.msra.mxu0 %v2073
      %2077 = vmatprep.subr.bf16.mxu0 0
      %2078 = vmatpush1.bf16.msra.mxu0 0
      %2079 = vmatprep.subr.bf16.mxu0 0
      %2080 = vmatpush1.bf16.msra.mxu0 0
      %2081 = vmatprep.subr.bf16.mxu0 0
      %2082 = vmatpush1.bf16.msra.mxu0 0
      %2083 = vmatprep.subr.bf16.mxu0 0
      %2084 = vmatpush1.bf16.msra.mxu0 0
      %2085 = vmatprep.subr.bf16.mxu0 0
      %2086 = vmatpush1.bf16.msra.mxu0 0
      %2087 = vmatprep.subr.bf16.mxu0 0
      %2088 = vmatpush1.bf16.msra.mxu0 0
      %2089 = vmatprep.subr.bf16.mxu0 0
      %2090 = vmatpush1.bf16.msra.mxu0 0
      %2091 = vmatprep.subr.bf16.mxu0 0
      %2092 = vmatpush1.bf16.msra.mxu0 0
      %2093 = vmatprep.subr.bf16.mxu0 0
      %2094 = vmatpush1.bf16.msra.mxu0 0
      %2095 = vmatprep.subr.bf16.mxu0 0
      %2096 = vmatpush1.bf16.msra.mxu0 0
      %2097 = vmatprep.subr.bf16.mxu0 0
      %2098 = vmatpush1.bf16.msra.mxu0 0
      %2099 = vmatprep.subr.bf16.mxu0 0
      %2100 = vmatpush1.bf16.msra.mxu0 0
      %2101 = vmatprep.subr.bf16.mxu0 0
      %2102 = vmatpush1.bf16.msra.mxu0 0
      %2103 = vmatprep.subr.bf16.mxu0 0
      %2104 = vmatpush1.bf16.msra.mxu0 0
      %2105 = vmatprep.subr.bf16.mxu0 0
      %2106 = vmatpush1.bf16.msra.mxu0 0
      %2107 = vmatprep.mubr.bf16.mxu0 0
      %2108 = vmatmul.mubr.bf16.gmra.mrb[0].mxu0 %v2040
      %v2109 = vpop.f32.mrb[0].mxu0
      %v2110 = vadd.f32 0.0, %v2109
      %v2111 = vpop.f32.mrb[0].mxu0
      %v2112 = vpop.f32.mrb[0].mxu0
      %v2113 = vadd.f32 0.0, %v2112
      %v2114 = vpop.f32.mrb[0].mxu0
      %2115 = vmatprep.mubr.bf16.mxu0 0
      %2116 = vmatmul.mubr.bf16.gmra.mrb[0].mxu0 %v2043
      %v2117 = vpop.f32.mrb[0].mxu0
      %v2118 = vadd.f32 0.0, %v2117
      %v2119 = vpop.f32.mrb[0].mxu0
      %v2120 = vpop.f32.mrb[0].mxu0
      %v2121 = vadd.f32 0.0, %v2120
      %v2122 = vpop.f32.mrb[0].mxu0
      %2123 = vmatprep.mubr.bf16.mxu0 0
      %2124 = vmatmul.mubr.bf16.gmra.mrb[0].mxu0 %v2046
      %v2125 = vpop.f32.mrb[0].mxu0
      %v2126 = vadd.f32 0.0, %v2125
      %v2127 = vpop.f32.mrb[0].mxu0
      %v2128 = vpop.f32.mrb[0].mxu0
      %v2129 = vadd.f32 0.0, %v2128
      %v2130 = vpop.f32.mrb[0].mxu0
      %2131 = vmatprep.mubr.bf16.mxu0 0
      %2132 = vmatmul.mubr.bf16.gmra.mrb[0].mxu0 %v2049
      %v2133 = vpop.f32.mrb[0].mxu0
      %v2134 = vadd.f32 0.0, %v2133
      %v2135 = vpop.f32.mrb[0].mxu0
      %v2136 = vpop.f32.mrb[0].mxu0
      %v2137 = vadd.f32 0.0, %v2136
      %v2138 = vpop.f32.mrb[0].mxu0
      %2139 = vmatprep.mubr.bf16.mxu0 0
      %2140 = vmatmul.mubr.bf16.gmra.mrb[0].mxu0 %v2052
      %v2141 = vpop.f32.mrb[0].mxu0
      %v2142 = vadd.f32 0.0, %v2141
      %v2143 = vpop.f32.mrb[0].mxu0
      %v2144 = vpop.f32.mrb[0].mxu0
      %v2145 = vadd.f32 0.0, %v2144
      %v2146 = vpop.f32.mrb[0].mxu0
      %2147 = vmatprep.mubr.bf16.mxu0 0
      %2148 = vmatmul.mubr.bf16.gmra.mrb[0].mxu0 %v2055
      %v2149 = vpop.f32.mrb[0].mxu0
      %v2150 = vadd.f32 0.0, %v2149
      %v2151 = vpop.f32.mrb[0].mxu0
      %v2152 = vpop.f32.mrb[0].mxu0
      %v2153 = vadd.f32 0.0, %v2152
      %v2154 = vpop.f32.mrb[0].mxu0
      %2155 = vmatprep.mubr.bf16.mxu0 0
      %2156 = vmatmul.mubr.bf16.gmra.mrb[0].mxu0 %v2058
      %v2157 = vpop.f32.mrb[0].mxu0
      %v2158 = vadd.f32 0.0, %v2157
      %v2159 = vpop.f32.mrb[0].mxu0
      %v2160 = vpop.f32.mrb[0].mxu0
      %v2161 = vadd.f32 0.0, %v2160
      %v2162 = vpop.f32.mrb[0].mxu0
      %2163 = vmatprep.mubr.bf16.mxu0 0
      %2164 = vmatmul.mubr.bf16.gmra.mrb[0].mxu0 %v2061
      %v2165 = vpop.f32.mrb[0].mxu0
      %v2166 = vadd.f32 0.0, %v2165
      %v2167 = vpop.f32.mrb[0].mxu0
      %v2168 = vpop.f32.mrb[0].mxu0
      %v2169 = vadd.f32 0.0, %v2168
      %v2170 = vpop.f32.mrb[0].mxu0
      %2171 = vmatprep.mubr.bf16.mxu0 0
      %2172 = vmatmul.mubr.bf16.gmra.mrb[0].mxu0 %v2064
      %v2173 = vpop.f32.mrb[0].mxu0
      %v2174 = vadd.f32 0.0, %v2173
      %v2175 = vpop.f32.mrb[0].mxu0
      %v2176 = vpop.f32.mrb[0].mxu0
      %v2177 = vadd.f32 0.0, %v2176
      %v2178 = vpop.f32.mrb[0].mxu0
      %2179 = vmatprep.mubr.bf16.mxu0 0
      %2180 = vmatmul.mubr.bf16.gmra.mrb[0].mxu0 %v2067
      %v2181 = vpop.f32.mrb[0].mxu0
      %v2182 = vadd.f32 0.0, %v2181
      %v2183 = vpop.f32.mrb[0].mxu0
      %v2184 = vpop.f32.mrb[0].mxu0
      %v2185 = vadd.f32 0.0, %v2184
      %v2186 = vpop.f32.mrb[0].mxu0
      %2187 = vmatprep.mubr.bf16.mxu0 0
      %2188 = vmatmul.mubr.bf16.gmra.mrb[0].mxu0 %v2070
      %v2189 = vpop.f32.mrb[0].mxu0
      %v2190 = vadd.f32 0.0, %v2189
      %v2191 = vpop.f32.mrb[0].mxu0
      %v2192 = vpop.f32.mrb[0].mxu0
      %v2193 = vadd.f32 0.0, %v2192
      %v2194 = vpop.f32.mrb[0].mxu0
      %2195 = vdwg.mxu0
      %v2196 = vadd.f32 %v1916, %v2110
      %v2197 = vadd.f32 %v1917, %v2113
      %v2198 = vadd.f32 %v1918, %v2118
      %v2199 = vadd.f32 %v1919, %v2121
      %v2200 = vadd.f32 %v1920, %v2126
      %v2201 = vadd.f32 %v1921, %v2129
      %v2202 = vadd.f32 %v1922, %v2134
      %v2203 = vadd.f32 %v1923, %v2137
      %v2204 = vadd.f32 %v1924, %v2142
      %v2205 = vadd.f32 %v1925, %v2145
      %v2206 = vadd.f32 %v1926, %v2150
      %v2207 = vadd.f32 %v1927, %v2153
      %v2208 = vadd.f32 %v1928, %v2158
      %v2209 = vadd.f32 %v1929, %v2161
      %v2210 = vadd.f32 %v1930, %v2166
      %v2211 = vadd.f32 %v1931, %v2169
      %v2212 = vadd.f32 %v1932, %v2174
      %v2213 = vadd.f32 %v1933, %v2177
      %v2214 = vadd.f32 %v1934, %v2182
      %v2215 = vadd.f32 %v1935, %v2185
      %v2216 = vadd.f32 %v1936, %v2190
      %v2217 = vadd.f32 %v1937, %v2193
      %v2218 = vld [vmem:[%s165 + $0xc] sm:$0xc]
      %v2219 = vld [vmem:[%s165 + $0x60] sm:$0x7]
      %s2220 = scalar_lea.vmem %s1, 32
      %v2221 = vld [vmem:[%s2220] sm:$0xf]
      %v2224 = vunpack.c.l.b16 %v2218
      %v2225 = vunpack.c.l.b16 %v2219
      %v2226 = vpack.c.b16 %v1706, %v2224
      %v2227 = vpack.c.b16 %v2225, %v1725
      %vm2228 = vcmask 1045504
      %v2229 = vrot.slane %v2226, 2
      %v2230 = vrot.slane %v1728, 2
      %v2231 = vsel %vm2228, %v2229, %v2230
      %v2232 = vrot.slane %v1729, 2
      %v2233 = vsel %vm2228, %v2230, %v2232
      %v2234 = vrot.slane %v1730, 2
      %v2235 = vsel %vm2228, %v2232, %v2234
      %v2236 = vrot.slane %v1731, 2
      %v2237 = vsel %vm2228, %v2234, %v2236
      %v2238 = vrot.slane %v1732, 2
      %v2239 = vsel %vm2228, %v2236, %v2238
      %v2240 = vrot.slane %v1733, 2
      %v2241 = vsel %vm2228, %v2238, %v2240
      %v2242 = vrot.slane %v1734, 2
      %v2243 = vsel %vm2228, %v2240, %v2242
      %v2244 = vrot.slane %v1735, 2
      %v2245 = vsel %vm2228, %v2242, %v2244
      %v2246 = vrot.slane %v1736, 2
      %v2247 = vsel %vm2228, %v2244, %v2246
      %v2248 = vrot.slane %v2227, 2
      %v2249 = vsel %vm2228, %v2246, %v2248
      %v2251 = vsel %vm340, %v2231, 0
      %v2254 = vsel %vm340, %v2233, 0
      %v2257 = vsel %vm340, %v2235, 0
      %v2260 = vsel %vm340, %v2237, 0
      %v2263 = vsel %vm340, %v2239, 0
      %v2266 = vsel %vm340, %v2241, 0
      %v2269 = vsel %vm340, %v2243, 0
      %v2272 = vsel %vm340, %v2245, 0
      %v2275 = vsel %vm340, %v2247, 0
      %v2278 = vsel %vm340, %v2249, 0
      %v2281 = vsel %vm340, %v2248, 0
      %v2284 = vsel %vm374, %v2221, 0
      %2286 = vmatprep.subr.bf16.mxu0 0
      %2287 = vmatpush1.bf16.msra.mxu0 %v2284
      %2288 = vmatprep.subr.bf16.mxu0 0
      %2289 = vmatpush1.bf16.msra.mxu0 0
      %2290 = vmatprep.subr.bf16.mxu0 0
      %2291 = vmatpush1.bf16.msra.mxu0 0
      %2292 = vmatprep.subr.bf16.mxu0 0
      %2293 = vmatpush1.bf16.msra.mxu0 0
      %2294 = vmatprep.subr.bf16.mxu0 0
      %2295 = vmatpush1.bf16.msra.mxu0 0
      %2296 = vmatprep.subr.bf16.mxu0 0
      %2297 = vmatpush1.bf16.msra.mxu0 0
      %2298 = vmatprep.subr.bf16.mxu0 0
      %2299 = vmatpush1.bf16.msra.mxu0 0
      %2300 = vmatprep.subr.bf16.mxu0 0
      %2301 = vmatpush1.bf16.msra.mxu0 0
      %2302 = vmatprep.subr.bf16.mxu0 0
      %2303 = vmatpush1.bf16.msra.mxu0 0
      %2304 = vmatprep.subr.bf16.mxu0 0
      %2305 = vmatpush1.bf16.msra.mxu0 0
      %2306 = vmatprep.subr.bf16.mxu0 0
      %2307 = vmatpush1.bf16.msra.mxu0 0
      %2308 = vmatprep.subr.bf16.mxu0 0
      %2309 = vmatpush1.bf16.msra.mxu0 0
      %2310 = vmatprep.subr.bf16.mxu0 0
      %2311 = vmatpush1.bf16.msra.mxu0 0
      %2312 = vmatprep.subr.bf16.mxu0 0
      %2313 = vmatpush1.bf16.msra.mxu0 0
      %2314 = vmatprep.subr.bf16.mxu0 0
      %2315 = vmatpush1.bf16.msra.mxu0 0
      %2316 = vmatprep.subr.bf16.mxu0 0
      %2317 = vmatpush1.bf16.msra.mxu0 0
      %2318 = vmatprep.mubr.bf16.mxu0 0
      %2319 = vmatmul.mubr.bf16.gmra.mrb[0].mxu0 %v2251
      %v2320 = vpop.f32.mrb[0].mxu0
      %v2321 = vadd.f32 0.0, %v2320
      %v2322 = vpop.f32.mrb[0].mxu0
      %v2323 = vpop.f32.mrb[0].mxu0
      %v2324 = vadd.f32 0.0, %v2323
      %v2325 = vpop.f32.mrb[0].mxu0
      %2326 = vmatprep.mubr.bf16.mxu0 0
      %2327 = vmatmul.mubr.bf16.gmra.mrb[0].mxu0 %v2254
      %v2328 = vpop.f32.mrb[0].mxu0
      %v2329 = vadd.f32 0.0, %v2328
      %v2330 = vpop.f32.mrb[0].mxu0
      %v2331 = vpop.f32.mrb[0].mxu0
      %v2332 = vadd.f32 0.0, %v2331
      %v2333 = vpop.f32.mrb[0].mxu0
      %2334 = vmatprep.mubr.bf16.mxu0 0
      %2335 = vmatmul.mubr.bf16.gmra.mrb[0].mxu0 %v2257
      %v2336 = vpop.f32.mrb[0].mxu0
      %v2337 = vadd.f32 0.0, %v2336
      %v2338 = vpop.f32.mrb[0].mxu0
      %v2339 = vpop.f32.mrb[0].mxu0
      %v2340 = vadd.f32 0.0, %v2339
      %v2341 = vpop.f32.mrb[0].mxu0
      %2342 = vmatprep.mubr.bf16.mxu0 0
      %2343 = vmatmul.mubr.bf16.gmra.mrb[0].mxu0 %v2260
      %v2344 = vpop.f32.mrb[0].mxu0
      %v2345 = vadd.f32 0.0, %v2344
      %v2346 = vpop.f32.mrb[0].mxu0
      %v2347 = vpop.f32.mrb[0].mxu0
      %v2348 = vadd.f32 0.0, %v2347
      %v2349 = vpop.f32.mrb[0].mxu0
      %2350 = vmatprep.mubr.bf16.mxu0 0
      %2351 = vmatmul.mubr.bf16.gmra.mrb[0].mxu0 %v2263
      %v2352 = vpop.f32.mrb[0].mxu0
      %v2353 = vadd.f32 0.0, %v2352
      %v2354 = vpop.f32.mrb[0].mxu0
      %v2355 = vpop.f32.mrb[0].mxu0
      %v2356 = vadd.f32 0.0, %v2355
      %v2357 = vpop.f32.mrb[0].mxu0
      %2358 = vmatprep.mubr.bf16.mxu0 0
      %2359 = vmatmul.mubr.bf16.gmra.mrb[0].mxu0 %v2266
      %v2360 = vpop.f32.mrb[0].mxu0
      %v2361 = vadd.f32 0.0, %v2360
      %v2362 = vpop.f32.mrb[0].mxu0
      %v2363 = vpop.f32.mrb[0].mxu0
      %v2364 = vadd.f32 0.0, %v2363
      %v2365 = vpop.f32.mrb[0].mxu0
      %2366 = vmatprep.mubr.bf16.mxu0 0
      %2367 = vmatmul.mubr.bf16.gmra.mrb[0].mxu0 %v2269
      %v2368 = vpop.f32.mrb[0].mxu0
      %v2369 = vadd.f32 0.0, %v2368
      %v2370 = vpop.f32.mrb[0].mxu0
      %v2371 = vpop.f32.mrb[0].mxu0
      %v2372 = vadd.f32 0.0, %v2371
      %v2373 = vpop.f32.mrb[0].mxu0
      %2374 = vmatprep.mubr.bf16.mxu0 0
      %2375 = vmatmul.mubr.bf16.gmra.mrb[0].mxu0 %v2272
      %v2376 = vpop.f32.mrb[0].mxu0
      %v2377 = vadd.f32 0.0, %v2376
      %v2378 = vpop.f32.mrb[0].mxu0
      %v2379 = vpop.f32.mrb[0].mxu0
      %v2380 = vadd.f32 0.0, %v2379
      %v2381 = vpop.f32.mrb[0].mxu0
      %2382 = vmatprep.mubr.bf16.mxu0 0
      %2383 = vmatmul.mubr.bf16.gmra.mrb[0].mxu0 %v2275
      %v2384 = vpop.f32.mrb[0].mxu0
      %v2385 = vadd.f32 0.0, %v2384
      %v2386 = vpop.f32.mrb[0].mxu0
      %v2387 = vpop.f32.mrb[0].mxu0
      %v2388 = vadd.f32 0.0, %v2387
      %v2389 = vpop.f32.mrb[0].mxu0
      %2390 = vmatprep.mubr.bf16.mxu0 0
      %2391 = vmatmul.mubr.bf16.gmra.mrb[0].mxu0 %v2278
      %v2392 = vpop.f32.mrb[0].mxu0
      %v2393 = vadd.f32 0.0, %v2392
      %v2394 = vpop.f32.mrb[0].mxu0
      %v2395 = vpop.f32.mrb[0].mxu0
      %v2396 = vadd.f32 0.0, %v2395
      %v2397 = vpop.f32.mrb[0].mxu0
      %2398 = vmatprep.mubr.bf16.mxu0 0
      %2399 = vmatmul.mubr.bf16.gmra.mrb[0].mxu0 %v2281
      %v2400 = vpop.f32.mrb[0].mxu0
      %v2401 = vadd.f32 0.0, %v2400
      %v2402 = vpop.f32.mrb[0].mxu0
      %v2403 = vpop.f32.mrb[0].mxu0
      %v2404 = vadd.f32 0.0, %v2403
      %v2405 = vpop.f32.mrb[0].mxu0
      %2406 = vdwg.mxu0
      %v2407 = vadd.f32 %v2196, %v2321
      %v2408 = vadd.f32 %v2197, %v2324
      %v2409 = vadd.f32 %v2198, %v2329
      %v2410 = vadd.f32 %v2199, %v2332
      %v2411 = vadd.f32 %v2200, %v2337
      %v2412 = vadd.f32 %v2201, %v2340
      %v2413 = vadd.f32 %v2202, %v2345
      %v2414 = vadd.f32 %v2203, %v2348
      %v2415 = vadd.f32 %v2204, %v2353
      %v2416 = vadd.f32 %v2205, %v2356
      %v2417 = vadd.f32 %v2206, %v2361
      %v2418 = vadd.f32 %v2207, %v2364
      %v2419 = vadd.f32 %v2208, %v2369
      %v2420 = vadd.f32 %v2209, %v2372
      %v2421 = vadd.f32 %v2210, %v2377
      %v2422 = vadd.f32 %v2211, %v2380
      %v2423 = vadd.f32 %v2212, %v2385
      %v2424 = vadd.f32 %v2213, %v2388
      %v2425 = vadd.f32 %v2214, %v2393
      %v2426 = vadd.f32 %v2215, %v2396
      %v2427 = vadd.f32 %v2216, %v2401
      %v2428 = vadd.f32 %v2217, %v2404
      %v2429 = vld [vmem:[%s2] sm:$0x1]
      %v2431 = vlaneseq
      %v2432 = vshrl.u32 %v2431, 7
      %v2433 = vsub.s32 0, %v2432
      %v2434 = vrot.slane %v2429, %v2433
      %v2436 = vadd.f32 %v2407, %v2434
      %v2437 = vadd.f32 %v2408, %v2434
      %v2438 = vadd.f32 %v2409, %v2434
      %v2439 = vadd.f32 %v2410, %v2434
      %v2440 = vadd.f32 %v2411, %v2434
      %v2441 = vadd.f32 %v2412, %v2434
      %v2442 = vadd.f32 %v2413, %v2434
      %v2443 = vadd.f32 %v2414, %v2434
      %v2444 = vadd.f32 %v2415, %v2434
      %v2445 = vadd.f32 %v2416, %v2434
      %v2446 = vadd.f32 %v2417, %v2434
      %v2447 = vadd.f32 %v2418, %v2434
      %v2448 = vadd.f32 %v2419, %v2434
      %v2449 = vadd.f32 %v2420, %v2434
      %v2450 = vadd.f32 %v2421, %v2434
      %v2451 = vadd.f32 %v2422, %v2434
      %v2452 = vadd.f32 %v2423, %v2434
      %v2453 = vadd.f32 %v2424, %v2434
      %v2454 = vadd.f32 %v2425, %v2434
      %v2455 = vadd.f32 %v2426, %v2434
      %v2456 = vadd.f32 %v2427, %v2434
      %v2457 = vadd.f32 %v2428, %v2434
      %2458 = vst.msk [vmem:[%s170] sm:$0xff] %vm340, %v2436
      %2459 = vst.msk [vmem:[%s170 + $0x8] sm:$0xff] %vm340, %v2437
      %2460 = vst.msk [vmem:[%s170 + $0x10] sm:$0xff] %vm340, %v2438
      %2461 = vst.msk [vmem:[%s170 + $0x18] sm:$0xff] %vm340, %v2439
      %2462 = vst.msk [vmem:[%s170 + $0x20] sm:$0xff] %vm340, %v2440
      %2463 = vst.msk [vmem:[%s170 + $0x28] sm:$0xff] %vm340, %v2441
      %2464 = vst.msk [vmem:[%s170 + $0x30] sm:$0xff] %vm340, %v2442
      %2465 = vst.msk [vmem:[%s170 + $0x38] sm:$0xff] %vm340, %v2443
      %2466 = vst.msk [vmem:[%s170 + $0x40] sm:$0xff] %vm340, %v2444
      %2467 = vst.msk [vmem:[%s170 + $0x48] sm:$0xff] %vm340, %v2445
      %2468 = vst.msk [vmem:[%s170 + $0x50] sm:$0xff] %vm340, %v2446
      %2469 = vst.msk [vmem:[%s170 + $0x58] sm:$0xff] %vm340, %v2447
      %2470 = vst.msk [vmem:[%s170 + $0x60] sm:$0xff] %vm340, %v2448
      %2471 = vst.msk [vmem:[%s170 + $0x68] sm:$0xff] %vm340, %v2449
      %2472 = vst.msk [vmem:[%s170 + $0x70] sm:$0xff] %vm340, %v2450
      %2473 = vst.msk [vmem:[%s170 + $0x78] sm:$0xff] %vm340, %v2451
      %2474 = vst.msk [vmem:[%s170 + $0x80] sm:$0xff] %vm340, %v2452
      %2475 = vst.msk [vmem:[%s170 + $0x88] sm:$0xff] %vm340, %v2453
      %2476 = vst.msk [vmem:[%s170 + $0x90] sm:$0xff] %vm340, %v2454
      %2477 = vst.msk [vmem:[%s170 + $0x98] sm:$0xff] %vm340, %v2455
      %2478 = vst.msk [vmem:[%s170 + $0xa0] sm:$0xff] %vm340, %v2456
      %vm2479 = vcmask 57344
      %2480 = vst.msk [vmem:[%s170 + $0xa8] sm:$0x1] %vm2479, %v2457
      %p2481 = scmp.lt.s32.totalorder %s14, 1
      %s2482 = scalar_select %p2481, %s14, 1
      %s2483 = smul.addr %s2482, 22
      %s2484 = smul.addr %s2483, 8
      %s2485 = scalar_lea.vmem %s3, %s2484
      // Predicated region
      $region33: #{pyra_conv_block.7} parent=31 // pred_check
        %p2486 = pneg %p100
      $region34: #{pyra_conv_block.7} parent=31 // pred_check_branch
        %2488 = sbr.rel (%p2486) target = $region36
      $region35: #{pyra_conv_block.7} parent=31 // pred_region
        _
      $region36: #{pyra_conv_block.7} parent=31 // pred_fallthru
        _
    $region32: #{pyra_conv_block.7} parent=5 // pred_fallthru
      _
    %p2489 = scmp.le.s32.totalorder 2, %s9
    // Predicated region
    $region37: #{pyra_conv_block.7} parent=5 // pred_check
      %p2490 = pneg %p2489
    $region38: #{pyra_conv_block.7} parent=5 // pred_check_branch
      %2492 = sbr.rel (%p2490) target = $region40
    $region39: #{pyra_conv_block.7} parent=5 // pred_region
      %s2493 = ssub.s32 %s9, 2
      // Predicated region
      $region41: #{pyra_conv_block.7} parent=39 // pred_check
        %p2494 = pneg %p106
      $region42: #{pyra_conv_block.7} parent=39 // pred_check_branch
        %2496 = sbr.rel (%p2494) target = $region44
      $region43: #{pyra_conv_block.7} parent=39 // pred_region
        %p2497 = scmp.lt.s32.totalorder %s15, 1
        %s2498 = scalar_select %p2497, %s15, 1
        %s2499 = smul.addr %s2498, 22
        %s2500 = smul.addr %s2499, 8
        %s2501 = scalar_lea.vmem %s3, %s2500
      $region44: #{pyra_conv_block.7} parent=39 // pred_fallthru
        _
    $region40: #{pyra_conv_block.7} parent=5 // pred_fallthru
      _
  $region6: #{pyra_conv_block.7} parent=0 // loop_footer
    %s13 = sadd.s32 1, %s9
  $region7: #{pyra_conv_block.7} parent=0 // loop_footer_branch
    %8 = sbr.rel target = $region3
  $region8: #{pyra_conv_block.7} parent=0 // loop_exit
    _

// kernel: pyra_conv_block.9
$region0: #{pyra_conv_block.9}
  #allocation0 [shape = 'u32[]', space=smem, size = 0x4, offset = 0x4, fixed_abs, tag = 'smem constant byte address 0x4 - core index']
  #allocation1 [shape = 'u32[144,128]{1,0:T(1,128)}', space=vmem, size = 0x12000, scoped, tag = 'internal scratch']
  %s0 = inlined_call_operand.vmem [shape: f32[512,8], index: 0, kind: input, shape index: {}]
  %s1 = inlined_call_operand.vmem [shape: f32[512,16], index: 1, kind: input, shape index: {}]
  %s2 = inlined_call_operand.vmem [shape: f32[1,8], index: 2, kind: input, shape index: {}]
  %s3 = inlined_call_operand.vmem [shape: f32[1,8], index: 3, kind: input, shape index: {}]
  %s4 = inlined_call_operand.vmem [shape: bf16[8,16], index: 4, kind: input, shape index: {}]
  %s5 = inlined_call_operand.vmem [shape: f32[1,16], index: 5, kind: input, shape index: {}]
  %s6 = inlined_call_operand.vmem [shape: f32[1,16], index: 6, kind: input, shape index: {}]
  %s7 = inlined_call_operand.vmem [shape: f32[1,16], index: 7, kind: input, shape index: {}]
  %s8 = inlined_call_operand.vmem [shape: bf16[16,32], index: 8, kind: input, shape index: {}]
  %s9 = inlined_call_operand.vmem [shape: f32[1,32], index: 9, kind: input, shape index: {}]
  %s10 = inlined_call_operand.hbm [shape: f32[512,32], index: 10, kind: output, shape index: {}]
  %s11 = sld [smem:[#allocation0]]
  $region73: #{pyra_conv_block.9} parent=0
    _
  %s13 = ssub.s32 1, %s11
  %s14 = scalar_select 0, %s13, %s11
  $region1: #{pyra_conv_block.9} parent=0
    #allocation2 [shape = 'u8[262144]{0}', space=vmem, size = 0x40000, scoped, tag = 'output window, operand 0']
    #allocation3 [shape = 's32[2]{0}', space=sflag, size = 0x8, scoped, tag = 'scoped memory for pyra_conv_block.9']
    %15 = vsyncpa [#allocation3], 0
    %s16 = scalar_lea.sflag [#allocation3], 1
    %17 = vsyncpa %s16, 0
    loop: start=0, step=1, limit=4
    $region2: #{pyra_conv_block.9} parent=1 // loop_pre_header
      _
    $region3: #{pyra_conv_block.9} parent=1 // loop_header
      %s19 = sphi 0, %s23
      %p20 = scmp.ge.s32.totalorder %s19, 4
      %s29 = sphi 0, %s31
      %s32 = sphi 0, %s29
      %s33 = sphi 0, %s32
      %s49 = sphi 0, %s33
      %s55 = sphi 0, %s57
      %s58 = sphi 0, %s55
      %s59 = sphi 0, %s58
      %s75 = sphi 0, %s59
      %s79 = sphi 0, %s79
      %s81 = sphi 0, %s79
      %s82 = sphi 0, %s81
      %s96 = sphi 0, %s82
      %s100 = sphi 0, %s100
      %s102 = sphi 0, %s100
      %s103 = sphi 0, %s102
      %s117 = sphi 0, %s103
      %s121 = sphi 0, %s121
      %s123 = sphi 0, %s121
      %s124 = sphi 0, %s123
      %s138 = sphi 0, %s124
      %s142 = sphi 0, %s142
      %s144 = sphi 0, %s142
      %s145 = sphi 0, %s144
      %s159 = sphi 0, %s145
      %s163 = sphi 0, %s163
      %s165 = sphi 0, %s163
      %s166 = sphi 0, %s165
      %s180 = sphi 0, %s166
      %s184 = sphi 0, %s184
      %s186 = sphi 0, %s184
      %s187 = sphi 0, %s186
      %s201 = sphi 0, %s187
      %s205 = sphi 0, %s205
      %s207 = sphi 0, %s205
      %s208 = sphi 0, %s207
      %s222 = sphi 0, %s208
      %s226 = sphi 0, %s226
      %s228 = sphi 0, %s226
      %s229 = sphi 0, %s228
      %s243 = sphi 0, %s229
      %s249 = sphi 0, %s251
      %s252 = sphi 0, %s249
      %s253 = sphi 0, %s252
      %s269 = sphi 0, %s253
    $region4: #{pyra_conv_block.9} parent=1 // loop_header_branch
      %22 = sbr.rel (%p20) target = $region8
    $region5: #{pyra_conv_block.9} parent=1 // loop_body
      %s24 = ssub.s32 %s19, 1
      %s25 = ssub.s32 %s19, 2
      %s26 = sadd.s32 %s19, 1
      %s27 = ssub.s32 %s19, %s26
      %p28 = scmp.eq.s32.totalorder %s27, 0
      %s30 = sadd.s32 %s29, 1
      %s31 = scalar_select %p28, %s29, %s30
      %p34 = pneg %p28
      %p35 = scmp.eq.s32.totalorder %s19, 1
      %p36 = por %p34, %p35
      %p37 = scmp.ne.s32.totalorder %s29, %s32
      %p38 = scmp.eq.s32.totalorder %s19, 0
      %p39 = por %p37, %p38
      %p40 = scmp.ne.s32.totalorder %s29, %s32
      %p41 = scmp.eq.s32.totalorder %s24, 1
      %p42 = por %p40, %p41
      %p43 = scmp.ne.s32.totalorder %s32, %s33
      %p44 = scmp.eq.s32.totalorder %s24, 0
      %p45 = por %p43, %p44
      %p46 = scmp.ne.s32.totalorder %s32, %s33
      %p47 = scmp.eq.s32.totalorder %s25, 1
      %p48 = por %p46, %p47
      %p50 = scmp.ne.s32.totalorder %s33, %s49
      %p51 = scmp.eq.s32.totalorder %s25, 0
      %p52 = por %p50, %p51
      %s53 = ssub.s32 %s19, %s26
      %p54 = scmp.eq.s32.totalorder %s53, 0
      %s56 = sadd.s32 %s55, 1
      %s57 = scalar_select %p54, %s55, %s56
      %p60 = pneg %p54
      %p61 = scmp.eq.s32.totalorder %s19, 1
      %p62 = por %p60, %p61
      %p63 = scmp.ne.s32.totalorder %s55, %s58
      %p64 = scmp.eq.s32.totalorder %s19, 0
      %p65 = por %p63, %p64
      %p66 = scmp.ne.s32.totalorder %s55, %s58
      %p67 = scmp.eq.s32.totalorder %s24, 1
      %p68 = por %p66, %p67
      %p69 = scmp.ne.s32.totalorder %s58, %s59
      %p70 = scmp.eq.s32.totalorder %s24, 0
      %p71 = por %p69, %p70
      %p72 = scmp.ne.s32.totalorder %s58, %s59
      %p73 = scmp.eq.s32.totalorder %s25, 1
      %p74 = por %p72, %p73
      %p76 = scmp.ne.s32.totalorder %s59, %s75
      %p77 = scmp.eq.s32.totalorder %s25, 0
      %p78 = por %p76, %p77
      %s80 = sadd.s32 %s79, 1
      %p83 = scmp.eq.s32.totalorder %s19, 1
      %p84 = scmp.ne.s32.totalorder %s79, %s81
      %p85 = scmp.eq.s32.totalorder %s19, 0
      %p86 = por %p84, %p85
      %p87 = scmp.ne.s32.totalorder %s79, %s81
      %p88 = scmp.eq.s32.totalorder %s24, 1
      %p89 = por %p87, %p88
      %p90 = scmp.ne.s32.totalorder %s81, %s82
      %p91 = scmp.eq.s32.totalorder %s24, 0
      %p92 = por %p90, %p91
      %p93 = scmp.ne.s32.totalorder %s81, %s82
      %p94 = scmp.eq.s32.totalorder %s25, 1
      %p95 = por %p93, %p94
      %p97 = scmp.ne.s32.totalorder %s82, %s96
      %p98 = scmp.eq.s32.totalorder %s25, 0
      %p99 = por %p97, %p98
      %s101 = sadd.s32 %s100, 1
      %p104 = scmp.eq.s32.totalorder %s19, 1
      %p105 = scmp.ne.s32.totalorder %s100, %s102
      %p106 = scmp.eq.s32.totalorder %s19, 0
      %p107 = por %p105, %p106
      %p108 = scmp.ne.s32.totalorder %s100, %s102
      %p109 = scmp.eq.s32.totalorder %s24, 1
      %p110 = por %p108, %p109
      %p111 = scmp.ne.s32.totalorder %s102, %s103
      %p112 = scmp.eq.s32.totalorder %s24, 0
      %p113 = por %p111, %p112
      %p114 = scmp.ne.s32.totalorder %s102, %s103
      %p115 = scmp.eq.s32.totalorder %s25, 1
      %p116 = por %p114, %p115
      %p118 = scmp.ne.s32.totalorder %s103, %s117
      %p119 = scmp.eq.s32.totalorder %s25, 0
      %p120 = por %p118, %p119
      %s122 = sadd.s32 %s121, 1
      %p125 = scmp.eq.s32.totalorder %s19, 1
      %p126 = scmp.ne.s32.totalorder %s121, %s123
      %p127 = scmp.eq.s32.totalorder %s19, 0
      %p128 = por %p126, %p127
      %p129 = scmp.ne.s32.totalorder %s121, %s123
      %p130 = scmp.eq.s32.totalorder %s24, 1
      %p131 = por %p129, %p130
      %p132 = scmp.ne.s32.totalorder %s123, %s124
      %p133 = scmp.eq.s32.totalorder %s24, 0
      %p134 = por %p132, %p133
      %p135 = scmp.ne.s32.totalorder %s123, %s124
      %p136 = scmp.eq.s32.totalorder %s25, 1
      %p137 = por %p135, %p136
      %p139 = scmp.ne.s32.totalorder %s124, %s138
      %p140 = scmp.eq.s32.totalorder %s25, 0
      %p141 = por %p139, %p140
      %s143 = sadd.s32 %s142, 1
      %p146 = scmp.eq.s32.totalorder %s19, 1
      %p147 = scmp.ne.s32.totalorder %s142, %s144
      %p148 = scmp.eq.s32.totalorder %s19, 0
      %p149 = por %p147, %p148
      %p150 = scmp.ne.s32.totalorder %s142, %s144
      %p151 = scmp.eq.s32.totalorder %s24, 1
      %p152 = por %p150, %p151
      %p153 = scmp.ne.s32.totalorder %s144, %s145
      %p154 = scmp.eq.s32.totalorder %s24, 0
      %p155 = por %p153, %p154
      %p156 = scmp.ne.s32.totalorder %s144, %s145
      %p157 = scmp.eq.s32.totalorder %s25, 1
      %p158 = por %p156, %p157
      %p160 = scmp.ne.s32.totalorder %s145, %s159
      %p161 = scmp.eq.s32.totalorder %s25, 0
      %p162 = por %p160, %p161
      %s164 = sadd.s32 %s163, 1
      %p167 = scmp.eq.s32.totalorder %s19, 1
      %p168 = scmp.ne.s32.totalorder %s163, %s165
      %p169 = scmp.eq.s32.totalorder %s19, 0
      %p170 = por %p168, %p169
      %p171 = scmp.ne.s32.totalorder %s163, %s165
      %p172 = scmp.eq.s32.totalorder %s24, 1
      %p173 = por %p171, %p172
      %p174 = scmp.ne.s32.totalorder %s165, %s166
      %p175 = scmp.eq.s32.totalorder %s24, 0
      %p176 = por %p174, %p175
      %p177 = scmp.ne.s32.totalorder %s165, %s166
      %p178 = scmp.eq.s32.totalorder %s25, 1
      %p179 = por %p177, %p178
      %p181 = scmp.ne.s32.totalorder %s166, %s180
      %p182 = scmp.eq.s32.totalorder %s25, 0
      %p183 = por %p181, %p182
      %s185 = sadd.s32 %s184, 1
      %p188 = scmp.eq.s32.totalorder %s19, 1
      %p189 = scmp.ne.s32.totalorder %s184, %s186
      %p190 = scmp.eq.s32.totalorder %s19, 0
      %p191 = por %p189, %p190
      %p192 = scmp.ne.s32.totalorder %s184, %s186
      %p193 = scmp.eq.s32.totalorder %s24, 1
      %p194 = por %p192, %p193
      %p195 = scmp.ne.s32.totalorder %s186, %s187
      %p196 = scmp.eq.s32.totalorder %s24, 0
      %p197 = por %p195, %p196
      %p198 = scmp.ne.s32.totalorder %s186, %s187
      %p199 = scmp.eq.s32.totalorder %s25, 1
      %p200 = por %p198, %p199
      %p202 = scmp.ne.s32.totalorder %s187, %s201
      %p203 = scmp.eq.s32.totalorder %s25, 0
      %p204 = por %p202, %p203
      %s206 = sadd.s32 %s205, 1
      %p209 = scmp.eq.s32.totalorder %s19, 1
      %p210 = scmp.ne.s32.totalorder %s205, %s207
      %p211 = scmp.eq.s32.totalorder %s19, 0
      %p212 = por %p210, %p211
      %p213 = scmp.ne.s32.totalorder %s205, %s207
      %p214 = scmp.eq.s32.totalorder %s24, 1
      %p215 = por %p213, %p214
      %p216 = scmp.ne.s32.totalorder %s207, %s208
      %p217 = scmp.eq.s32.totalorder %s24, 0
      %p218 = por %p216, %p217
      %p219 = scmp.ne.s32.totalorder %s207, %s208
      %p220 = scmp.eq.s32.totalorder %s25, 1
      %p221 = por %p219, %p220
      %p223 = scmp.ne.s32.totalorder %s208, %s222
      %p224 = scmp.eq.s32.totalorder %s25, 0
      %p225 = por %p223, %p224
      %s227 = sadd.s32 %s226, 1
      %p230 = scmp.eq.s32.totalorder %s19, 1
      %p231 = scmp.ne.s32.totalorder %s226, %s228
      %p232 = scmp.eq.s32.totalorder %s19, 0
      %p233 = por %p231, %p232
      %p234 = scmp.ne.s32.totalorder %s226, %s228
      %p235 = scmp.eq.s32.totalorder %s24, 1
      %p236 = por %p234, %p235
      %p237 = scmp.ne.s32.totalorder %s228, %s229
      %p238 = scmp.eq.s32.totalorder %s24, 0
      %p239 = por %p237, %p238
      %p240 = scmp.ne.s32.totalorder %s228, %s229
      %p241 = scmp.eq.s32.totalorder %s25, 1
      %p242 = por %p240, %p241
      %p244 = scmp.ne.s32.totalorder %s229, %s243
      %p245 = scmp.eq.s32.totalorder %s25, 0
      %p246 = por %p244, %p245
      %s247 = ssub.s32 %s19, %s26
      %p248 = scmp.eq.s32.totalorder %s247, 0
      %s250 = sadd.s32 %s249, 1
      %s251 = scalar_select %p248, %s249, %s250
      %p254 = pneg %p248
      %p255 = scmp.eq.s32.totalorder %s19, 1
      %p256 = por %p254, %p255
      %p257 = scmp.ne.s32.totalorder %s249, %s252
      %p258 = scmp.eq.s32.totalorder %s19, 0
      %p259 = por %p257, %p258
      %p260 = scmp.ne.s32.totalorder %s249, %s252
      %p261 = scmp.eq.s32.totalorder %s24, 1
      %p262 = por %p260, %p261
      %p263 = scmp.ne.s32.totalorder %s252, %s253
      %p264 = scmp.eq.s32.totalorder %s24, 0
      %p265 = por %p263, %p264
      %p266 = scmp.ne.s32.totalorder %s252, %s253
      %p267 = scmp.eq.s32.totalorder %s25, 1
      %p268 = por %p266, %p267
      %p270 = scmp.ne.s32.totalorder %s253, %s269
      %p271 = scmp.eq.s32.totalorder %s25, 0
      %p272 = por %p270, %p271
      %p273 = scmp.le.s32.totalorder 1, %s19
      %p274 = scmp.lt.s32.totalorder %s19, 3
      %p275 = pnand %p273, %p274
      %p276 = pneg %p275
      // Predicated region
      $region9: #{pyra_conv_block.9} parent=5 // pred_check
        _
      $region10: #{pyra_conv_block.9} parent=5 // pred_check_branch
        %278 = sbr.rel (%p275) target = $region12
      $region11: #{pyra_conv_block.9} parent=5 // pred_region
        %s279 = ssub.s32 %s19, 1
        // Predicated region
        $region13: #{pyra_conv_block.9} parent=11 // pred_check
          %p280 = pneg %p92
        $region14: #{pyra_conv_block.9} parent=11 // pred_check_branch
          %282 = sbr.rel (%p280) target = $region16
        $region15: #{pyra_conv_block.9} parent=11 // pred_region
          _
        $region16: #{pyra_conv_block.9} parent=11 // pred_fallthru
          _
        // Predicated region
        $region17: #{pyra_conv_block.9} parent=11 // pred_check
          %p283 = pneg %p113
        $region18: #{pyra_conv_block.9} parent=11 // pred_check_branch
          %285 = sbr.rel (%p283) target = $region20
        $region19: #{pyra_conv_block.9} parent=11 // pred_region
          _
        $region20: #{pyra_conv_block.9} parent=11 // pred_fallthru
          _
        // Predicated region
        $region21: #{pyra_conv_block.9} parent=11 // pred_check
          %p286 = pneg %p134
        $region22: #{pyra_conv_block.9} parent=11 // pred_check_branch
          %288 = sbr.rel (%p286) target = $region24
        $region23: #{pyra_conv_block.9} parent=11 // pred_region
          _
        $region24: #{pyra_conv_block.9} parent=11 // pred_fallthru
          _
        // Predicated region
        $region25: #{pyra_conv_block.9} parent=11 // pred_check
          %p289 = pneg %p155
        $region26: #{pyra_conv_block.9} parent=11 // pred_check_branch
          %291 = sbr.rel (%p289) target = $region28
        $region27: #{pyra_conv_block.9} parent=11 // pred_region
          _
        $region28: #{pyra_conv_block.9} parent=11 // pred_fallthru
          _
        // Predicated region
        $region29: #{pyra_conv_block.9} parent=11 // pred_check
          %p292 = pneg %p176
        $region30: #{pyra_conv_block.9} parent=11 // pred_check_branch
          %294 = sbr.rel (%p292) target = $region32
        $region31: #{pyra_conv_block.9} parent=11 // pred_region
          _
        $region32: #{pyra_conv_block.9} parent=11 // pred_fallthru
          _
        // Predicated region
        $region33: #{pyra_conv_block.9} parent=11 // pred_check
          %p295 = pneg %p197
        $region34: #{pyra_conv_block.9} parent=11 // pred_check_branch
          %297 = sbr.rel (%p295) target = $region36
        $region35: #{pyra_conv_block.9} parent=11 // pred_region
          _
        $region36: #{pyra_conv_block.9} parent=11 // pred_fallthru
          _
        // Predicated region
        $region37: #{pyra_conv_block.9} parent=11 // pred_check
          %p298 = pneg %p218
        $region38: #{pyra_conv_block.9} parent=11 // pred_check_branch
          %300 = sbr.rel (%p298) target = $region40
        $region39: #{pyra_conv_block.9} parent=11 // pred_region
          _
        $region40: #{pyra_conv_block.9} parent=11 // pred_fallthru
          _
        // Predicated region
        $region41: #{pyra_conv_block.9} parent=11 // pred_check
          %p301 = pneg %p239
        $region42: #{pyra_conv_block.9} parent=11 // pred_check_branch
          %303 = sbr.rel (%p301) target = $region44
        $region43: #{pyra_conv_block.9} parent=11 // pred_region
          _
        $region44: #{pyra_conv_block.9} parent=11 // pred_fallthru
          _
      $region12: #{pyra_conv_block.9} parent=5 // pred_fallthru
        _
      %p304 = scmp.lt.s32.totalorder %s19, 2
      // Predicated region
      $region45: #{pyra_conv_block.9} parent=5 // pred_check
        %p305 = pneg %p304
      $region46: #{pyra_conv_block.9} parent=5 // pred_check_branch
        %307 = sbr.rel (%p305) target = $region48
      $region47: #{pyra_conv_block.9} parent=5 // pred_region
        // Predicated region
        $region49: #{pyra_conv_block.9} parent=47 // pred_check
          %p308 = pneg %p39
        $region50: #{pyra_conv_block.9} parent=47 // pred_check_branch
          %310 = sbr.rel (%p308) target = $region52
        $region51: #{pyra_conv_block.9} parent=47 // pred_region
          %s311 = smul.u32 32, %s19
          %p312 = scmp.lt.s32.totalorder %s311, 63
          %s313 = scalar_select %p312, %s311, 63
          %s314 = smul.addr %s313, 8
          %s315 = scalar_lea.vmem %s0, %s314
          %s316 = smul.u32 32, %s19
        $region52: #{pyra_conv_block.9} parent=47 // pred_fallthru
          _
        // Predicated region
        $region53: #{pyra_conv_block.9} parent=47 // pred_check
          %p317 = pneg %p65
        $region54: #{pyra_conv_block.9} parent=47 // pred_check_branch
          %319 = sbr.rel (%p317) target = $region56
        $region55: #{pyra_conv_block.9} parent=47 // pred_region
          %s320 = smul.u32 32, %s19
          %p321 = scmp.lt.s32.totalorder %s320, 63
          %s322 = scalar_select %p321, %s320, 63
          %s323 = smul.addr %s322, 8
          %s324 = scalar_lea.vmem %s1, %s323
          %s325 = smul.u32 32, %s19
        $region56: #{pyra_conv_block.9} parent=47 // pred_fallthru
          _
      $region48: #{pyra_conv_block.9} parent=5 // pred_fallthru
        _
      %p326 = scmp.le.s32.totalorder 1, %s19
      %p327 = scmp.lt.s32.totalorder %s19, 3
      %p328 = pnand %p326, %p327
      %p329 = pneg %p328
      // Predicated region
      $region57: #{pyra_conv_block.9} parent=5 // pred_check
        _
      $region58: #{pyra_conv_block.9} parent=5 // pred_check_branch
        %331 = sbr.rel (%p328) target = $region60
      $region59: #{pyra_conv_block.9} parent=5 // pred_region
        %s332 = ssub.s32 %s19, 1
        %s333 = smul.u32 32, %s24
        %p334 = scmp.lt.s32.totalorder %s333, 63
        %s335 = scalar_select %p334, %s333, 63
        %s336 = smul.addr %s335, 8
        %s337 = scalar_lea.vmem %s0, %s336
        %p338 = pneg %p45
        %p339 = pneg %p42
        %s340 = smul.u32 32, %s24
        %p341 = scmp.lt.s32.totalorder %s340, 63
        %s342 = scalar_select %p341, %s340, 63
        %s343 = smul.addr %s342, 8
        %s344 = scalar_lea.vmem %s1, %s343
        %p345 = pneg %p71
        %p346 = pneg %p68
        %p347 = pneg %p92
        %p348 = pneg %p89
        %p349 = pneg %p113
        %p350 = pneg %p110
        %p351 = pneg %p134
        %p352 = pneg %p131
        %p353 = pneg %p155
        %p354 = pneg %p152
        %p355 = pneg %p176
        %p356 = pneg %p173
        %p357 = pneg %p197
        %p358 = pneg %p194
        %p359 = pneg %p218
        %p360 = pneg %p215
        %p361 = pneg %p239
        %p362 = pneg %p236
        %p363 = pneg %p265
        %p364 = pneg %p262
        %s365 = sand.u32 %s252, 1
        %s366 = scalar_lea.sflag [#allocation3], %s365
        %s367 = sand.u32 %s252, 1
        %s368 = smul.addr %s367, 256
        %s369 = scalar_lea.vmem [#allocation2], %s368
        %s370 = smul.u32 32, %s24
        %p371 = scmp.lt.s32.totalorder %s370, 63
        %s372 = scalar_select %p371, %s370, 63
        %s373 = smul.addr %s372, 8
        %s374 = scalar_lea.vmem %s0, %s373
        %s375 = smul.u32 32, %s24
        %s376 = smul.u32 32, %s24
        %p377 = scmp.lt.s32.totalorder %s376, 63
        %s378 = scalar_select %p377, %s376, 63
        %s379 = smul.addr %s378, 8
        %s380 = scalar_lea.vmem %s1, %s379
        %s381 = smul.u32 32, %s24
        %s382 = smul.u32 32, %s24
        %v384 = vld [vmem:[%s374] sm:$0xff]
        %v385 = vld [vmem:[%s374 + $0x8] sm:$0xff]
        %v386 = vld [vmem:[%s374 + $0x10] sm:$0xff]
        %v387 = vld [vmem:[%s374 + $0x18] sm:$0xff]
        %v388 = vld [vmem:[%s374 + $0x20] sm:$0xff]
        %v389 = vld [vmem:[%s374 + $0x28] sm:$0xff]
        %v390 = vld [vmem:[%s374 + $0x30] sm:$0xff]
        %v391 = vld [vmem:[%s374 + $0x38] sm:$0xff]
        %v392 = vld [vmem:[%s374 + $0x40] sm:$0xff]
        %v393 = vld [vmem:[%s374 + $0x48] sm:$0xff]
        %v394 = vld [vmem:[%s374 + $0x50] sm:$0xff]
        %v395 = vld [vmem:[%s374 + $0x58] sm:$0xff]
        %v396 = vld [vmem:[%s374 + $0x60] sm:$0xff]
        %v397 = vld [vmem:[%s374 + $0x68] sm:$0xff]
        %v398 = vld [vmem:[%s374 + $0x70] sm:$0xff]
        %v399 = vld [vmem:[%s374 + $0x78] sm:$0xff]
        %v400 = vld [vmem:[%s374 + $0x80] sm:$0xff]
        %v401 = vld [vmem:[%s374 + $0x88] sm:$0xff]
        %v402 = vld [vmem:[%s374 + $0x90] sm:$0xff]
        %v403 = vld [vmem:[%s374 + $0x98] sm:$0xff]
        %v404 = vld [vmem:[%s374 + $0xa0] sm:$0xff]
        %v405 = vld [vmem:[%s374 + $0xa8] sm:$0xff]
        %v406 = vld [vmem:[%s374 + $0xb0] sm:$0xff]
        %v407 = vld [vmem:[%s374 + $0xb8] sm:$0xff]
        %v408 = vld [vmem:[%s374 + $0xc0] sm:$0xff]
        %v409 = vld [vmem:[%s374 + $0xc8] sm:$0xff]
        %v410 = vld [vmem:[%s374 + $0xd0] sm:$0xff]
        %v411 = vld [vmem:[%s374 + $0xd8] sm:$0xff]
        %v412 = vld [vmem:[%s374 + $0xe0] sm:$0xff]
        %v413 = vld [vmem:[%s374 + $0xe8] sm:$0xff]
        %v414 = vld [vmem:[%s374 + $0xf0] sm:$0xff]
        %v415 = vld [vmem:[%s374 + $0xf8] sm:$0xff]
        %v416 = vld [vmem:[%s2] sm:$0x1]
        %v418 = vlaneseq
        %v419 = vshrl.u32 %v418, 7
        %v420 = vsub.s32 0, %v419
        %v421 = vrot.slane %v416, %v420
        %v423 = vmul.f32 %v384, %v421
        %v424 = vmul.f32 %v385, %v421
        %v425 = vmul.f32 %v386, %v421
        %v426 = vmul.f32 %v387, %v421
        %v427 = vmul.f32 %v388, %v421
        %v428 = vmul.f32 %v389, %v421
        %v429 = vmul.f32 %v390, %v421
        %v430 = vmul.f32 %v391, %v421
        %v431 = vmul.f32 %v392, %v421
        %v432 = vmul.f32 %v393, %v421
        %v433 = vmul.f32 %v394, %v421
        %v434 = vmul.f32 %v395, %v421
        %v435 = vmul.f32 %v396, %v421
        %v436 = vmul.f32 %v397, %v421
        %v437 = vmul.f32 %v398, %v421
        %v438 = vmul.f32 %v399, %v421
        %v439 = vmul.f32 %v400, %v421
        %v440 = vmul.f32 %v401, %v421
        %v441 = vmul.f32 %v402, %v421
        %v442 = vmul.f32 %v403, %v421
        %v443 = vmul.f32 %v404, %v421
        %v444 = vmul.f32 %v405, %v421
        %v445 = vmul.f32 %v406, %v421
        %v446 = vmul.f32 %v407, %v421
        %v447 = vmul.f32 %v408, %v421
        %v448 = vmul.f32 %v409, %v421
        %v449 = vmul.f32 %v410, %v421
        %v450 = vmul.f32 %v411, %v421
        %v451 = vmul.f32 %v412, %v421
        %v452 = vmul.f32 %v413, %v421
        %v453 = vmul.f32 %v414, %v421
        %v454 = vmul.f32 %v415, %v421
        %v455 = vld [vmem:[%s3] sm:$0x1]
        %v457 = vlaneseq
        %v458 = vshrl.u32 %v457, 7
        %v459 = vsub.s32 0, %v458
        %v460 = vrot.slane %v455, %v459
        %v462 = vadd.f32 %v423, %v460
        %v463 = vadd.f32 %v424, %v460
        %v464 = vadd.f32 %v425, %v460
        %v465 = vadd.f32 %v426, %v460
        %v466 = vadd.f32 %v427, %v460
        %v467 = vadd.f32 %v428, %v460
        %v468 = vadd.f32 %v429, %v460
        %v469 = vadd.f32 %v430, %v460
        %v470 = vadd.f32 %v431, %v460
        %v471 = vadd.f32 %v432, %v460
        %v472 = vadd.f32 %v433, %v460
        %v473 = vadd.f32 %v434, %v460
        %v474 = vadd.f32 %v435, %v460
        %v475 = vadd.f32 %v436, %v460
        %v476 = vadd.f32 %v437, %v460
        %v477 = vadd.f32 %v438, %v460
        %v478 = vadd.f32 %v439, %v460
        %v479 = vadd.f32 %v440, %v460
        %v480 = vadd.f32 %v441, %v460
        %v481 = vadd.f32 %v442, %v460
        %v482 = vadd.f32 %v443, %v460
        %v483 = vadd.f32 %v444, %v460
        %v484 = vadd.f32 %v445, %v460
        %v485 = vadd.f32 %v446, %v460
        %v486 = vadd.f32 %v447, %v460
        %v487 = vadd.f32 %v448, %v460
        %v488 = vadd.f32 %v449, %v460
        %v489 = vadd.f32 %v450, %v460
        %v490 = vadd.f32 %v451, %v460
        %v491 = vadd.f32 %v452, %v460
        %v492 = vadd.f32 %v453, %v460
        %v493 = vadd.f32 %v454, %v460
        %v494 = vmax.f32 %v462, 0.0
        %v495 = vmax.f32 %v463, 0.0
        %v496 = vmax.f32 %v464, 0.0
        %v497 = vmax.f32 %v465, 0.0
        %v498 = vmax.f32 %v466, 0.0
        %v499 = vmax.f32 %v467, 0.0
        %v500 = vmax.f32 %v468, 0.0
        %v501 = vmax.f32 %v469, 0.0
        %v502 = vmax.f32 %v470, 0.0
        %v503 = vmax.f32 %v471, 0.0
        %v504 = vmax.f32 %v472, 0.0
        %v505 = vmax.f32 %v473, 0.0
        %v506 = vmax.f32 %v474, 0.0
        %v507 = vmax.f32 %v475, 0.0
        %v508 = vmax.f32 %v476, 0.0
        %v509 = vmax.f32 %v477, 0.0
        %v510 = vmax.f32 %v478, 0.0
        %v511 = vmax.f32 %v479, 0.0
        %v512 = vmax.f32 %v480, 0.0
        %v513 = vmax.f32 %v481, 0.0
        %v514 = vmax.f32 %v482, 0.0
        %v515 = vmax.f32 %v483, 0.0
        %v516 = vmax.f32 %v484, 0.0
        %v517 = vmax.f32 %v485, 0.0
        %v518 = vmax.f32 %v486, 0.0
        %v519 = vmax.f32 %v487, 0.0
        %v520 = vmax.f32 %v488, 0.0
        %v521 = vmax.f32 %v489, 0.0
        %v522 = vmax.f32 %v490, 0.0
        %v523 = vmax.f32 %v491, 0.0
        %v524 = vmax.f32 %v492, 0.0
        %v525 = vmax.f32 %v493, 0.0
        %v526 = vpack.c.bf16 %v495, %v494
        %v527 = vpack.c.bf16 %v497, %v496
        %v528 = vpack.c.bf16 %v499, %v498
        %v529 = vpack.c.bf16 %v501, %v500
        %v530 = vpack.c.bf16 %v503, %v502
        %v531 = vpack.c.bf16 %v505, %v504
        %v532 = vpack.c.bf16 %v507, %v506
        %v533 = vpack.c.bf16 %v509, %v508
        %v534 = vpack.c.bf16 %v511, %v510
        %v535 = vpack.c.bf16 %v513, %v512
        %v536 = vpack.c.bf16 %v515, %v514
        %v537 = vpack.c.bf16 %v517, %v516
        %v538 = vpack.c.bf16 %v519, %v518
        %v539 = vpack.c.bf16 %v521, %v520
        %v540 = vpack.c.bf16 %v523, %v522
        %v541 = vpack.c.bf16 %v525, %v524
        %v542 = vld [vmem:[%s4] sm:$0xf]
        %v543 = vld [vmem:[%s5] sm:$0x1]
        %v545 = vlaneseq
        %v546 = vshrl.u32 %v545, 7
        %v547 = vsub.s32 0, %v546
        %v548 = vrot.slane %v543, %v547
        %vm550 = vcmask 64512
        %v552 = vsel %vm550, %v526, 0
        %v555 = vsel %vm550, %v527, 0
        %v558 = vsel %vm550, %v528, 0
        %v561 = vsel %vm550, %v529, 0
        %v564 = vsel %vm550, %v530, 0
        %v567 = vsel %vm550, %v531, 0
        %v570 = vsel %vm550, %v532, 0
        %v573 = vsel %vm550, %v533, 0
        %v576 = vsel %vm550, %v534, 0
        %v579 = vsel %vm550, %v535, 0
        %v582 = vsel %vm550, %v536, 0
        %v585 = vsel %vm550, %v537, 0
        %v588 = vsel %vm550, %v538, 0
        %v591 = vsel %vm550, %v539, 0
        %v594 = vsel %vm550, %v540, 0
        %v597 = vsel %vm550, %v541, 0
        %vm599 = vcmask 1043456
        %v601 = vsel %vm599, %v542, 0
        %603 = vmatprep.subr.bf16.mxu0 0
        %604 = vmatpush1.bf16.msra.mxu0 %v601
        %605 = vmatprep.subr.bf16.mxu0 0
        %606 = vmatpush1.bf16.msra.mxu0 0
        %607 = vmatprep.subr.bf16.mxu0 0
        %608 = vmatpush1.bf16.msra.mxu0 0
        %609 = vmatprep.subr.bf16.mxu0 0
        %610 = vmatpush1.bf16.msra.mxu0 0
        %611 = vmatprep.subr.bf16.mxu0 0
        %612 = vmatpush1.bf16.msra.mxu0 0
        %613 = vmatprep.subr.bf16.mxu0 0
        %614 = vmatpush1.bf16.msra.mxu0 0
        %615 = vmatprep.subr.bf16.mxu0 0
        %616 = vmatpush1.bf16.msra.mxu0 0
        %617 = vmatprep.subr.bf16.mxu0 0
        %618 = vmatpush1.bf16.msra.mxu0 0
        %619 = vmatprep.subr.bf16.mxu0 0
        %620 = vmatpush1.bf16.msra.mxu0 0
        %621 = vmatprep.subr.bf16.mxu0 0
        %622 = vmatpush1.bf16.msra.mxu0 0
        %623 = vmatprep.subr.bf16.mxu0 0
        %624 = vmatpush1.bf16.msra.mxu0 0
        %625 = vmatprep.subr.bf16.mxu0 0
        %626 = vmatpush1.bf16.msra.mxu0 0
        %627 = vmatprep.subr.bf16.mxu0 0
        %628 = vmatpush1.bf16.msra.mxu0 0
        %629 = vmatprep.subr.bf16.mxu0 0
        %630 = vmatpush1.bf16.msra.mxu0 0
        %631 = vmatprep.subr.bf16.mxu0 0
        %632 = vmatpush1.bf16.msra.mxu0 0
        %633 = vmatprep.subr.bf16.mxu0 0
        %634 = vmatpush1.bf16.msra.mxu0 0
        %635 = vmatprep.mubr.bf16.mxu0 0
        %636 = vmatmul.mubr.bf16.gmra.mrb[0].mxu0 %v552
        %v637 = vpop.f32.mrb[0].mxu0
        %v638 = vadd.f32 %v548, %v637
        %v639 = vpop.f32.mrb[0].mxu0
        %v640 = vpop.f32.mrb[0].mxu0
        %v641 = vadd.f32 %v548, %v640
        %v642 = vpop.f32.mrb[0].mxu0
        %643 = vmatprep.mubr.bf16.mxu0 0
        %644 = vmatmul.mubr.bf16.gmra.mrb[0].mxu0 %v555
        %v645 = vpop.f32.mrb[0].mxu0
        %v646 = vadd.f32 %v548, %v645
        %v647 = vpop.f32.mrb[0].mxu0
        %v648 = vpop.f32.mrb[0].mxu0
        %v649 = vadd.f32 %v548, %v648
        %v650 = vpop.f32.mrb[0].mxu0
        %651 = vmatprep.mubr.bf16.mxu0 0
        %652 = vmatmul.mubr.bf16.gmra.mrb[0].mxu0 %v558
        %v653 = vpop.f32.mrb[0].mxu0
        %v654 = vadd.f32 %v548, %v653
        %v655 = vpop.f32.mrb[0].mxu0
        %v656 = vpop.f32.mrb[0].mxu0
        %v657 = vadd.f32 %v548, %v656
        %v658 = vpop.f32.mrb[0].mxu0
        %659 = vmatprep.mubr.bf16.mxu0 0
        %660 = vmatmul.mubr.bf16.gmra.mrb[0].mxu0 %v561
        %v661 = vpop.f32.mrb[0].mxu0
        %v662 = vadd.f32 %v548, %v661
        %v663 = vpop.f32.mrb[0].mxu0
        %v664 = vpop.f32.mrb[0].mxu0
        %v665 = vadd.f32 %v548, %v664
        %v666 = vpop.f32.mrb[0].mxu0
        %667 = vmatprep.mubr.bf16.mxu0 0
        %668 = vmatmul.mubr.bf16.gmra.mrb[0].mxu0 %v564
        %v669 = vpop.f32.mrb[0].mxu0
        %v670 = vadd.f32 %v548, %v669
        %v671 = vpop.f32.mrb[0].mxu0
        %v672 = vpop.f32.mrb[0].mxu0
        %v673 = vadd.f32 %v548, %v672
        %v674 = vpop.f32.mrb[0].mxu0
        %675 = vmatprep.mubr.bf16.mxu0 0
        %676 = vmatmul.mubr.bf16.gmra.mrb[0].mxu0 %v567
        %v677 = vpop.f32.mrb[0].mxu0
        %v678 = vadd.f32 %v548, %v677
        %v679 = vpop.f32.mrb[0].mxu0
        %v680 = vpop.f32.mrb[0].mxu0
        %v681 = vadd.f32 %v548, %v680
        %v682 = vpop.f32.mrb[0].mxu0
        %683 = vmatprep.mubr.bf16.mxu0 0
        %684 = vmatmul.mubr.bf16.gmra.mrb[0].mxu0 %v570
        %v685 = vpop.f32.mrb[0].mxu0
        %v686 = vadd.f32 %v548, %v685
        %v687 = vpop.f32.mrb[0].mxu0
        %v688 = vpop.f32.mrb[0].mxu0
        %v689 = vadd.f32 %v548, %v688
        %v690 = vpop.f32.mrb[0].mxu0
        %691 = vmatprep.mubr.bf16.mxu0 0
        %692 = vmatmul.mubr.bf16.gmra.mrb[0].mxu0 %v573
        %v693 = vpop.f32.mrb[0].mxu0
        %v694 = vadd.f32 %v548, %v693
        %v695 = vpop.f32.mrb[0].mxu0
        %v696 = vpop.f32.mrb[0].mxu0
        %v697 = vadd.f32 %v548, %v696
        %v698 = vpop.f32.mrb[0].mxu0
        %699 = vmatprep.mubr.bf16.mxu0 0
        %700 = vmatmul.mubr.bf16.gmra.mrb[0].mxu0 %v576
        %v701 = vpop.f32.mrb[0].mxu0
        %v702 = vadd.f32 %v548, %v701
        %v703 = vpop.f32.mrb[0].mxu0
        %v704 = vpop.f32.mrb[0].mxu0
        %v705 = vadd.f32 %v548, %v704
        %v706 = vpop.f32.mrb[0].mxu0
        %707 = vmatprep.mubr.bf16.mxu0 0
        %708 = vmatmul.mubr.bf16.gmra.mrb[0].mxu0 %v579
        %v709 = vpop.f32.mrb[0].mxu0
        %v710 = vadd.f32 %v548, %v709
        %v711 = vpop.f32.mrb[0].mxu0
        %v712 = vpop.f32.mrb[0].mxu0
        %v713 = vadd.f32 %v548, %v712
        %v714 = vpop.f32.mrb[0].mxu0
        %715 = vmatprep.mubr.bf16.mxu0 0
        %716 = vmatmul.mubr.bf16.gmra.mrb[0].mxu0 %v582
        %v717 = vpop.f32.mrb[0].mxu0
        %v718 = vadd.f32 %v548, %v717
        %v719 = vpop.f32.mrb[0].mxu0
        %v720 = vpop.f32.mrb[0].mxu0
        %v721 = vadd.f32 %v548, %v720
        %v722 = vpop.f32.mrb[0].mxu0
        %723 = vmatprep.mubr.bf16.mxu0 0
        %724 = vmatmul.mubr.bf16.gmra.mrb[0].mxu0 %v585
        %v725 = vpop.f32.mrb[0].mxu0
        %v726 = vadd.f32 %v548, %v725
        %v727 = vpop.f32.mrb[0].mxu0
        %v728 = vpop.f32.mrb[0].mxu0
        %v729 = vadd.f32 %v548, %v728
        %v730 = vpop.f32.mrb[0].mxu0
        %731 = vmatprep.mubr.bf16.mxu0 0
        %732 = vmatmul.mubr.bf16.gmra.mrb[0].mxu0 %v588
        %v733 = vpop.f32.mrb[0].mxu0
        %v734 = vadd.f32 %v548, %v733
        %v735 = vpop.f32.mrb[0].mxu0
        %v736 = vpop.f32.mrb[0].mxu0
        %v737 = vadd.f32 %v548, %v736
        %v738 = vpop.f32.mrb[0].mxu0
        %739 = vmatprep.mubr.bf16.mxu0 0
        %740 = vmatmul.mubr.bf16.gmra.mrb[0].mxu0 %v591
        %v741 = vpop.f32.mrb[0].mxu0
        %v742 = vadd.f32 %v548, %v741
        %v743 = vpop.f32.mrb[0].mxu0
        %v744 = vpop.f32.mrb[0].mxu0
        %v745 = vadd.f32 %v548, %v744
        %v746 = vpop.f32.mrb[0].mxu0
        %747 = vmatprep.mubr.bf16.mxu0 0
        %748 = vmatmul.mubr.bf16.gmra.mrb[0].mxu0 %v594
        %v749 = vpop.f32.mrb[0].mxu0
        %v750 = vadd.f32 %v548, %v749
        %v751 = vpop.f32.mrb[0].mxu0
        %v752 = vpop.f32.mrb[0].mxu0
        %v753 = vadd.f32 %v548, %v752
        %v754 = vpop.f32.mrb[0].mxu0
        %755 = vmatprep.mubr.bf16.mxu0 0
        %756 = vmatmul.mubr.bf16.gmra.mrb[0].mxu0 %v597
        %v757 = vpop.f32.mrb[0].mxu0
        %v758 = vadd.f32 %v548, %v757
        %v759 = vpop.f32.mrb[0].mxu0
        %v760 = vpop.f32.mrb[0].mxu0
        %v761 = vadd.f32 %v548, %v760
        %v762 = vpop.f32.mrb[0].mxu0
        %763 = vdwg.mxu0
        %v764 = vld [vmem:[%s380] sm:$0xff]
        %v765 = vld [vmem:[%s380 + $0x8] sm:$0xff]
        %v766 = vld [vmem:[%s380 + $0x10] sm:$0xff]
        %v767 = vld [vmem:[%s380 + $0x18] sm:$0xff]
        %v768 = vld [vmem:[%s380 + $0x20] sm:$0xff]
        %v769 = vld [vmem:[%s380 + $0x28] sm:$0xff]
        %v770 = vld [vmem:[%s380 + $0x30] sm:$0xff]
        %v771 = vld [vmem:[%s380 + $0x38] sm:$0xff]
        %v772 = vld [vmem:[%s380 + $0x40] sm:$0xff]
        %v773 = vld [vmem:[%s380 + $0x48] sm:$0xff]
        %v774 = vld [vmem:[%s380 + $0x50] sm:$0xff]
        %v775 = vld [vmem:[%s380 + $0x58] sm:$0xff]
        %v776 = vld [vmem:[%s380 + $0x60] sm:$0xff]
        %v777 = vld [vmem:[%s380 + $0x68] sm:$0xff]
        %v778 = vld [vmem:[%s380 + $0x70] sm:$0xff]
        %v779 = vld [vmem:[%s380 + $0x78] sm:$0xff]
        %v780 = vld [vmem:[%s380 + $0x80] sm:$0xff]
        %v781 = vld [vmem:[%s380 + $0x88] sm:$0xff]
        %v782 = vld [vmem:[%s380 + $0x90] sm:$0xff]
        %v783 = vld [vmem:[%s380 + $0x98] sm:$0xff]
        %v784 = vld [vmem:[%s380 + $0xa0] sm:$0xff]
        %v785 = vld [vmem:[%s380 + $0xa8] sm:$0xff]
        %v786 = vld [vmem:[%s380 + $0xb0] sm:$0xff]
        %v787 = vld [vmem:[%s380 + $0xb8] sm:$0xff]
        %v788 = vld [vmem:[%s380 + $0xc0] sm:$0xff]
        %v789 = vld [vmem:[%s380 + $0xc8] sm:$0xff]
        %v790 = vld [vmem:[%s380 + $0xd0] sm:$0xff]
        %v791 = vld [vmem:[%s380 + $0xd8] sm:$0xff]
        %v792 = vld [vmem:[%s380 + $0xe0] sm:$0xff]
        %v793 = vld [vmem:[%s380 + $0xe8] sm:$0xff]
        %v794 = vld [vmem:[%s380 + $0xf0] sm:$0xff]
        %v795 = vld [vmem:[%s380 + $0xf8] sm:$0xff]
        %v796 = vadd.f32 %v638, %v764
        %v797 = vadd.f32 %v641, %v765
        %v798 = vadd.f32 %v646, %v766
        %v799 = vadd.f32 %v649, %v767
        %v800 = vadd.f32 %v654, %v768
        %v801 = vadd.f32 %v657, %v769
        %v802 = vadd.f32 %v662, %v770
        %v803 = vadd.f32 %v665, %v771
        %v804 = vadd.f32 %v670, %v772
        %v805 = vadd.f32 %v673, %v773
        %v806 = vadd.f32 %v678, %v774
        %v807 = vadd.f32 %v681, %v775
        %v808 = vadd.f32 %v686, %v776
        %v809 = vadd.f32 %v689, %v777
        %v810 = vadd.f32 %v694, %v778
        %v811 = vadd.f32 %v697, %v779
        %v812 = vadd.f32 %v702, %v780
        %v813 = vadd.f32 %v705, %v781
        %v814 = vadd.f32 %v710, %v782
        %v815 = vadd.f32 %v713, %v783
        %v816 = vadd.f32 %v718, %v784
        %v817 = vadd.f32 %v721, %v785
        %v818 = vadd.f32 %v726, %v786
        %v819 = vadd.f32 %v729, %v787
        %v820 = vadd.f32 %v734, %v788
        %v821 = vadd.f32 %v737, %v789
        %v822 = vadd.f32 %v742, %v790
        %v823 = vadd.f32 %v745, %v791
        %v824 = vadd.f32 %v750, %v792
        %v825 = vadd.f32 %v753, %v793
        %v826 = vadd.f32 %v758, %v794
        %v827 = vadd.f32 %v761, %v795
        %v828 = vld [vmem:[%s6] sm:$0x1]
        %v830 = vlaneseq
        %v831 = vshrl.u32 %v830, 7
        %v832 = vsub.s32 0, %v831
        %v833 = vrot.slane %v828, %v832
        %v835 = vmul.f32 %v796, %v833
        %v836 = vmul.f32 %v797, %v833
        %v837 = vmul.f32 %v798, %v833
        %v838 = vmul.f32 %v799, %v833
        %v839 = vmul.f32 %v800, %v833
        %v840 = vmul.f32 %v801, %v833
        %v841 = vmul.f32 %v802, %v833
        %v842 = vmul.f32 %v803, %v833
        %v843 = vmul.f32 %v804, %v833
        %v844 = vmul.f32 %v805, %v833
        %v845 = vmul.f32 %v806, %v833
        %v846 = vmul.f32 %v807, %v833
        %v847 = vmul.f32 %v808, %v833
        %v848 = vmul.f32 %v809, %v833
        %v849 = vmul.f32 %v810, %v833
        %v850 = vmul.f32 %v811, %v833
        %v851 = vmul.f32 %v812, %v833
        %v852 = vmul.f32 %v813, %v833
        %v853 = vmul.f32 %v814, %v833
        %v854 = vmul.f32 %v815, %v833
        %v855 = vmul.f32 %v816, %v833
        %v856 = vmul.f32 %v817, %v833
        %v857 = vmul.f32 %v818, %v833
        %v858 = vmul.f32 %v819, %v833
        %v859 = vmul.f32 %v820, %v833
        %v860 = vmul.f32 %v821, %v833
        %v861 = vmul.f32 %v822, %v833
        %v862 = vmul.f32 %v823, %v833
        %v863 = vmul.f32 %v824, %v833
        %v864 = vmul.f32 %v825, %v833
        %v865 = vmul.f32 %v826, %v833
        %v866 = vmul.f32 %v827, %v833
        %v867 = vld [vmem:[%s7] sm:$0x1]
        %v869 = vlaneseq
        %v870 = vshrl.u32 %v869, 7
        %v871 = vsub.s32 0, %v870
        %v872 = vrot.slane %v867, %v871
        %v874 = vadd.f32 %v835, %v872
        %v875 = vadd.f32 %v836, %v872
        %v876 = vadd.f32 %v837, %v872
        %v877 = vadd.f32 %v838, %v872
        %v878 = vadd.f32 %v839, %v872
        %v879 = vadd.f32 %v840, %v872
        %v880 = vadd.f32 %v841, %v872
        %v881 = vadd.f32 %v842, %v872
        %v882 = vadd.f32 %v843, %v872
        %v883 = vadd.f32 %v844, %v872
        %v884 = vadd.f32 %v845, %v872
        %v885 = vadd.f32 %v846, %v872
        %v886 = vadd.f32 %v847, %v872
        %v887 = vadd.f32 %v848, %v872
        %v888 = vadd.f32 %v849, %v872
        %v889 = vadd.f32 %v850, %v872
        %v890 = vadd.f32 %v851, %v872
        %v891 = vadd.f32 %v852, %v872
        %v892 = vadd.f32 %v853, %v872
        %v893 = vadd.f32 %v854, %v872
        %v894 = vadd.f32 %v855, %v872
        %v895 = vadd.f32 %v856, %v872
        %v896 = vadd.f32 %v857, %v872
        %v897 = vadd.f32 %v858, %v872
        %v898 = vadd.f32 %v859, %v872
        %v899 = vadd.f32 %v860, %v872
        %v900 = vadd.f32 %v861, %v872
        %v901 = vadd.f32 %v862, %v872
        %v902 = vadd.f32 %v863, %v872
        %v903 = vadd.f32 %v864, %v872
        %v904 = vadd.f32 %v865, %v872
        %v905 = vadd.f32 %v866, %v872
        %v906 = vmax.f32 %v874, 0.0
        %v907 = vmax.f32 %v875, 0.0
        %v908 = vmax.f32 %v876, 0.0
        %v909 = vmax.f32 %v877, 0.0
        %v910 = vmax.f32 %v878, 0.0
        %v911 = vmax.f32 %v879, 0.0
        %v912 = vmax.f32 %v880, 0.0
        %v913 = vmax.f32 %v881, 0.0
        %v914 = vmax.f32 %v882, 0.0
        %v915 = vmax.f32 %v883, 0.0
        %v916 = vmax.f32 %v884, 0.0
        %v917 = vmax.f32 %v885, 0.0
        %v918 = vmax.f32 %v886, 0.0
        %v919 = vmax.f32 %v887, 0.0
        %v920 = vmax.f32 %v888, 0.0
        %v921 = vmax.f32 %v889, 0.0
        %v922 = vmax.f32 %v890, 0.0
        %v923 = vmax.f32 %v891, 0.0
        %v924 = vmax.f32 %v892, 0.0
        %v925 = vmax.f32 %v893, 0.0
        %v926 = vmax.f32 %v894, 0.0
        %v927 = vmax.f32 %v895, 0.0
        %v928 = vmax.f32 %v896, 0.0
        %v929 = vmax.f32 %v897, 0.0
        %v930 = vmax.f32 %v898, 0.0
        %v931 = vmax.f32 %v899, 0.0
        %v932 = vmax.f32 %v900, 0.0
        %v933 = vmax.f32 %v901, 0.0
        %v934 = vmax.f32 %v902, 0.0
        %v935 = vmax.f32 %v903, 0.0
        %v936 = vmax.f32 %v904, 0.0
        %v937 = vmax.f32 %v905, 0.0
        %v938 = vpack.c.bf16 %v907, %v906
        %v939 = vpack.c.bf16 %v909, %v908
        %v940 = vpack.c.bf16 %v911, %v910
        %v941 = vpack.c.bf16 %v913, %v912
        %v942 = vpack.c.bf16 %v915, %v914
        %v943 = vpack.c.bf16 %v917, %v916
        %v944 = vpack.c.bf16 %v919, %v918
        %v945 = vpack.c.bf16 %v921, %v920
        %v946 = vpack.c.bf16 %v923, %v922
        %v947 = vpack.c.bf16 %v925, %v924
        %v948 = vpack.c.bf16 %v927, %v926
        %v949 = vpack.c.bf16 %v929, %v928
        %v950 = vpack.c.bf16 %v931, %v930
        %v951 = vpack.c.bf16 %v933, %v932
        %v952 = vpack.c.bf16 %v935, %v934
        %v953 = vpack.c.bf16 %v937, %v936
        %v954 = vld [vmem:[%s8] sm:$0xf]
        %v955 = vld [vmem:[%s8 + $0x4] sm:$0xf]
        %v956 = vld [vmem:[%s9] sm:$0x1]
        %v958 = vlaneseq
        %v959 = vshrl.u32 %v958, 7
        %v960 = vsub.s32 0, %v959
        %v961 = vrot.slane %v956, %v960
        %v965 = vunpack.c.l.b16 %v954
        %v966 = vunpack.c.l.b16 %v955
        %v967 = vpack.c.b16 %v966, %v965
        %vm969 = vcmask 130048
        %v971 = vsel %vm969, %v938, 0
        %v974 = vsel %vm969, %v939, 0
        %v977 = vsel %vm969, %v940, 0
        %v980 = vsel %vm969, %v941, 0
        %v983 = vsel %vm969, %v942, 0
        %v986 = vsel %vm969, %v943, 0
        %v989 = vsel %vm969, %v944, 0
        %v992 = vsel %vm969, %v945, 0
        %v995 = vsel %vm969, %v946, 0
        %v998 = vsel %vm969, %v947, 0
        %v1001 = vsel %vm969, %v948, 0
        %v1004 = vsel %vm969, %v949, 0
        %v1007 = vsel %vm969, %v950, 0
        %v1010 = vsel %vm969, %v951, 0
        %v1013 = vsel %vm969, %v952, 0
        %v1016 = vsel %vm969, %v953, 0
        %1018 = vmatprep.subr.bf16.mxu0 0
        %1019 = vmatpush1.bf16.msra.mxu0 %v967
        %1020 = vmatprep.subr.bf16.mxu0 0
        %1021 = vmatpush1.bf16.msra.mxu0 0
        %1022 = vmatprep.subr.bf16.mxu0 0
        %1023 = vmatpush1.bf16.msra.mxu0 0
        %1024 = vmatprep.subr.bf16.mxu0 0
        %1025 = vmatpush1.bf16.msra.mxu0 0
        %1026 = vmatprep.subr.bf16.mxu0 0
        %1027 = vmatpush1.bf16.msra.mxu0 0
        %1028 = vmatprep.subr.bf16.mxu0 0
        %1029 = vmatpush1.bf16.msra.mxu0 0
        %1030 = vmatprep.subr.bf16.mxu0 0
        %1031 = vmatpush1.bf16.msra.mxu0 0
        %1032 = vmatprep.subr.bf16.mxu0 0
        %1033 = vmatpush1.bf16.msra.mxu0 0
        %1034 = vmatprep.subr.bf16.mxu0 0
        %1035 = vmatpush1.bf16.msra.mxu0 0
        %1036 = vmatprep.subr.bf16.mxu0 0
        %1037 = vmatpush1.bf16.msra.mxu0 0
        %1038 = vmatprep.subr.bf16.mxu0 0
        %1039 = vmatpush1.bf16.msra.mxu0 0
        %1040 = vmatprep.subr.bf16.mxu0 0
        %1041 = vmatpush1.bf16.msra.mxu0 0
        %1042 = vmatprep.subr.bf16.mxu0 0
        %1043 = vmatpush1.bf16.msra.mxu0 0
        %1044 = vmatprep.subr.bf16.mxu0 0
        %1045 = vmatpush1.bf16.msra.mxu0 0
        %1046 = vmatprep.subr.bf16.mxu0 0
        %1047 = vmatpush1.bf16.msra.mxu0 0
        %1048 = vmatprep.subr.bf16.mxu0 0
        %1049 = vmatpush1.bf16.msra.mxu0 0
        %1050 = vmatprep.mubr.bf16.mxu0 0
        %1051 = vmatmul.mubr.bf16.gmra.mrb[0].mxu0 %v971
        %v1052 = vpop.f32.mrb[0].mxu0
        %v1053 = vadd.f32 %v961, %v1052
        %v1054 = vpop.f32.mrb[0].mxu0
        %v1055 = vpop.f32.mrb[0].mxu0
        %v1056 = vadd.f32 %v961, %v1055
        %v1057 = vpop.f32.mrb[0].mxu0
        %1058 = vmatprep.mubr.bf16.mxu0 0
        %1059 = vmatmul.mubr.bf16.gmra.mrb[0].mxu0 %v974
        %v1060 = vpop.f32.mrb[0].mxu0
        %v1061 = vadd.f32 %v961, %v1060
        %v1062 = vpop.f32.mrb[0].mxu0
        %v1063 = vpop.f32.mrb[0].mxu0
        %v1064 = vadd.f32 %v961, %v1063
        %v1065 = vpop.f32.mrb[0].mxu0
        %1066 = vmatprep.mubr.bf16.mxu0 0
        %1067 = vmatmul.mubr.bf16.gmra.mrb[0].mxu0 %v977
        %v1068 = vpop.f32.mrb[0].mxu0
        %v1069 = vadd.f32 %v961, %v1068
        %v1070 = vpop.f32.mrb[0].mxu0
        %v1071 = vpop.f32.mrb[0].mxu0
        %v1072 = vadd.f32 %v961, %v1071
        %v1073 = vpop.f32.mrb[0].mxu0
        %1074 = vmatprep.mubr.bf16.mxu0 0
        %1075 = vmatmul.mubr.bf16.gmra.mrb[0].mxu0 %v980
        %v1076 = vpop.f32.mrb[0].mxu0
        %v1077 = vadd.f32 %v961, %v1076
        %v1078 = vpop.f32.mrb[0].mxu0
        %v1079 = vpop.f32.mrb[0].mxu0
        %v1080 = vadd.f32 %v961, %v1079
        %v1081 = vpop.f32.mrb[0].mxu0
        %1082 = vmatprep.mubr.bf16.mxu0 0
        %1083 = vmatmul.mubr.bf16.gmra.mrb[0].mxu0 %v983
        %v1084 = vpop.f32.mrb[0].mxu0
        %v1085 = vadd.f32 %v961, %v1084
        %v1086 = vpop.f32.mrb[0].mxu0
        %v1087 = vpop.f32.mrb[0].mxu0
        %v1088 = vadd.f32 %v961, %v1087
        %v1089 = vpop.f32.mrb[0].mxu0
        %1090 = vmatprep.mubr.bf16.mxu0 0
        %1091 = vmatmul.mubr.bf16.gmra.mrb[0].mxu0 %v986
        %v1092 = vpop.f32.mrb[0].mxu0
        %v1093 = vadd.f32 %v961, %v1092
        %v1094 = vpop.f32.mrb[0].mxu0
        %v1095 = vpop.f32.mrb[0].mxu0
        %v1096 = vadd.f32 %v961, %v1095
        %v1097 = vpop.f32.mrb[0].mxu0
        %1098 = vmatprep.mubr.bf16.mxu0 0
        %1099 = vmatmul.mubr.bf16.gmra.mrb[0].mxu0 %v989
        %v1100 = vpop.f32.mrb[0].mxu0
        %v1101 = vadd.f32 %v961, %v1100
        %v1102 = vpop.f32.mrb[0].mxu0
        %v1103 = vpop.f32.mrb[0].mxu0
        %v1104 = vadd.f32 %v961, %v1103
        %v1105 = vpop.f32.mrb[0].mxu0
        %1106 = vmatprep.mubr.bf16.mxu0 0
        %1107 = vmatmul.mubr.bf16.gmra.mrb[0].mxu0 %v992
        %v1108 = vpop.f32.mrb[0].mxu0
        %v1109 = vadd.f32 %v961, %v1108
        %v1110 = vpop.f32.mrb[0].mxu0
        %v1111 = vpop.f32.mrb[0].mxu0
        %v1112 = vadd.f32 %v961, %v1111
        %v1113 = vpop.f32.mrb[0].mxu0
        %1114 = vmatprep.mubr.bf16.mxu0 0
        %1115 = vmatmul.mubr.bf16.gmra.mrb[0].mxu0 %v995
        %v1116 = vpop.f32.mrb[0].mxu0
        %v1117 = vadd.f32 %v961, %v1116
        %v1118 = vpop.f32.mrb[0].mxu0
        %v1119 = vpop.f32.mrb[0].mxu0
        %v1120 = vadd.f32 %v961, %v1119
        %v1121 = vpop.f32.mrb[0].mxu0
        %1122 = vmatprep.mubr.bf16.mxu0 0
        %1123 = vmatmul.mubr.bf16.gmra.mrb[0].mxu0 %v998
        %v1124 = vpop.f32.mrb[0].mxu0
        %v1125 = vadd.f32 %v961, %v1124
        %v1126 = vpop.f32.mrb[0].mxu0
        %v1127 = vpop.f32.mrb[0].mxu0
        %v1128 = vadd.f32 %v961, %v1127
        %v1129 = vpop.f32.mrb[0].mxu0
        %1130 = vmatprep.mubr.bf16.mxu0 0
        %1131 = vmatmul.mubr.bf16.gmra.mrb[0].mxu0 %v1001
        %v1132 = vpop.f32.mrb[0].mxu0
        %v1133 = vadd.f32 %v961, %v1132
        %v1134 = vpop.f32.mrb[0].mxu0
        %v1135 = vpop.f32.mrb[0].mxu0
        %v1136 = vadd.f32 %v961, %v1135
        %v1137 = vpop.f32.mrb[0].mxu0
        %1138 = vmatprep.mubr.bf16.mxu0 0
        %1139 = vmatmul.mubr.bf16.gmra.mrb[0].mxu0 %v1004
        %v1140 = vpop.f32.mrb[0].mxu0
        %v1141 = vadd.f32 %v961, %v1140
        %v1142 = vpop.f32.mrb[0].mxu0
        %v1143 = vpop.f32.mrb[0].mxu0
        %v1144 = vadd.f32 %v961, %v1143
        %v1145 = vpop.f32.mrb[0].mxu0
        %1146 = vmatprep.mubr.bf16.mxu0 0
        %1147 = vmatmul.mubr.bf16.gmra.mrb[0].mxu0 %v1007
        %v1148 = vpop.f32.mrb[0].mxu0
        %v1149 = vadd.f32 %v961, %v1148
        %v1150 = vpop.f32.mrb[0].mxu0
        %v1151 = vpop.f32.mrb[0].mxu0
        %v1152 = vadd.f32 %v961, %v1151
        %v1153 = vpop.f32.mrb[0].mxu0
        %1154 = vmatprep.mubr.bf16.mxu0 0
        %1155 = vmatmul.mubr.bf16.gmra.mrb[0].mxu0 %v1010
        %v1156 = vpop.f32.mrb[0].mxu0
        %v1157 = vadd.f32 %v961, %v1156
        %v1158 = vpop.f32.mrb[0].mxu0
        %v1159 = vpop.f32.mrb[0].mxu0
        %v1160 = vadd.f32 %v961, %v1159
        %v1161 = vpop.f32.mrb[0].mxu0
        %1162 = vmatprep.mubr.bf16.mxu0 0
        %1163 = vmatmul.mubr.bf16.gmra.mrb[0].mxu0 %v1013
        %v1164 = vpop.f32.mrb[0].mxu0
        %v1165 = vadd.f32 %v961, %v1164
        %v1166 = vpop.f32.mrb[0].mxu0
        %v1167 = vpop.f32.mrb[0].mxu0
        %v1168 = vadd.f32 %v961, %v1167
        %v1169 = vpop.f32.mrb[0].mxu0
        %1170 = vmatprep.mubr.bf16.mxu0 0
        %1171 = vmatmul.mubr.bf16.gmra.mrb[0].mxu0 %v1016
        %v1172 = vpop.f32.mrb[0].mxu0
        %v1173 = vadd.f32 %v961, %v1172
        %v1174 = vpop.f32.mrb[0].mxu0
        %v1175 = vpop.f32.mrb[0].mxu0
        %v1176 = vadd.f32 %v961, %v1175
        %v1177 = vpop.f32.mrb[0].mxu0
        %1178 = vdwg.mxu0
        %vm1179 = vcmask 261120
        %1180 = vst.msk [vmem:[%s369] sm:$0xff] %vm1179, %v1053
        %1181 = vst.msk [vmem:[%s369 + $0x8] sm:$0xff] %vm1179, %v1056
        %1182 = vst.msk [vmem:[%s369 + $0x10] sm:$0xff] %vm1179, %v1061
        %1183 = vst.msk [vmem:[%s369 + $0x18] sm:$0xff] %vm1179, %v1064
        %1184 = vst.msk [vmem:[%s369 + $0x20] sm:$0xff] %vm1179, %v1069
        %1185 = vst.msk [vmem:[%s369 + $0x28] sm:$0xff] %vm1179, %v1072
        %1186 = vst.msk [vmem:[%s369 + $0x30] sm:$0xff] %vm1179, %v1077
        %1187 = vst.msk [vmem:[%s369 + $0x38] sm:$0xff] %vm1179, %v1080
        %1188 = vst.msk [vmem:[%s369 + $0x40] sm:$0xff] %vm1179, %v1085
        %1189 = vst.msk [vmem:[%s369 + $0x48] sm:$0xff] %vm1179, %v1088
        %1190 = vst.msk [vmem:[%s369 + $0x50] sm:$0xff] %vm1179, %v1093
        %1191 = vst.msk [vmem:[%s369 + $0x58] sm:$0xff] %vm1179, %v1096
        %1192 = vst.msk [vmem:[%s369 + $0x60] sm:$0xff] %vm1179, %v1101
        %1193 = vst.msk [vmem:[%s369 + $0x68] sm:$0xff] %vm1179, %v1104
        %1194 = vst.msk [vmem:[%s369 + $0x70] sm:$0xff] %vm1179, %v1109
        %1195 = vst.msk [vmem:[%s369 + $0x78] sm:$0xff] %vm1179, %v1112
        %1196 = vst.msk [vmem:[%s369 + $0x80] sm:$0xff] %vm1179, %v1117
        %1197 = vst.msk [vmem:[%s369 + $0x88] sm:$0xff] %vm1179, %v1120
        %1198 = vst.msk [vmem:[%s369 + $0x90] sm:$0xff] %vm1179, %v1125
        %1199 = vst.msk [vmem:[%s369 + $0x98] sm:$0xff] %vm1179, %v1128
        %1200 = vst.msk [vmem:[%s369 + $0xa0] sm:$0xff] %vm1179, %v1133
        %1201 = vst.msk [vmem:[%s369 + $0xa8] sm:$0xff] %vm1179, %v1136
        %1202 = vst.msk [vmem:[%s369 + $0xb0] sm:$0xff] %vm1179, %v1141
        %1203 = vst.msk [vmem:[%s369 + $0xb8] sm:$0xff] %vm1179, %v1144
        %1204 = vst.msk [vmem:[%s369 + $0xc0] sm:$0xff] %vm1179, %v1149
        %1205 = vst.msk [vmem:[%s369 + $0xc8] sm:$0xff] %vm1179, %v1152
        %1206 = vst.msk [vmem:[%s369 + $0xd0] sm:$0xff] %vm1179, %v1157
        %1207 = vst.msk [vmem:[%s369 + $0xd8] sm:$0xff] %vm1179, %v1160
        %1208 = vst.msk [vmem:[%s369 + $0xe0] sm:$0xff] %vm1179, %v1165
        %1209 = vst.msk [vmem:[%s369 + $0xe8] sm:$0xff] %vm1179, %v1168
        %1210 = vst.msk [vmem:[%s369 + $0xf0] sm:$0xff] %vm1179, %v1173
        %1211 = vst.msk [vmem:[%s369 + $0xf8] sm:$0xff] %vm1179, %v1176
        %s1212 = sand.u32 %s252, 1
        %s1213 = scalar_lea.sflag [#allocation3], %s1212
        %s1214 = sand.u32 %s252, 1
        %s1215 = smul.addr %s1214, 256
        %s1216 = scalar_lea.vmem [#allocation2], %s1215
        // Predicated region
        $region61: #{pyra_conv_block.9} parent=59 // pred_check
          %p1217 = pneg %p262
        $region62: #{pyra_conv_block.9} parent=59 // pred_check_branch
          %1219 = sbr.rel (%p1217) target = $region64
        $region63: #{pyra_conv_block.9} parent=59 // pred_region
          %s1220 = smul.u32 32, %s24
          %s1222 = ssub.s32 4096, 4096
          %1223 = vsyncadd %s1213, %s1222
          %s1224 = smul.addr %s1220, 128
          %s1225 = scalar_lea.hbm %s10, %s1224
          %s1226 = sshll.u32 %s1216, 4
          %s1227 = int_to_ptr.vmem [resolvable:$true] %s1226
          %1232 = dma.vmem_to_hbm [thread:$0]  %s1227, 4096, %s1225, %s1213, 128, 128, 8
        $region64: #{pyra_conv_block.9} parent=59 // pred_fallthru
          _
      $region60: #{pyra_conv_block.9} parent=5 // pred_fallthru
        _
      %p1233 = scmp.le.s32.totalorder 2, %s19
      // Predicated region
      $region65: #{pyra_conv_block.9} parent=5 // pred_check
        %p1234 = pneg %p1233
      $region66: #{pyra_conv_block.9} parent=5 // pred_check_branch
        %1236 = sbr.rel (%p1234) target = $region68
      $region67: #{pyra_conv_block.9} parent=5 // pred_region
        %s1237 = ssub.s32 %s19, 2
        // Predicated region
        $region69: #{pyra_conv_block.9} parent=67 // pred_check
          %p1238 = pneg %p268
        $region70: #{pyra_conv_block.9} parent=67 // pred_check_branch
          %1240 = sbr.rel (%p1238) target = $region72
        $region71: #{pyra_conv_block.9} parent=67 // pred_region
          %s1241 = sand.u32 %s253, 1
          %s1242 = scalar_lea.sflag [#allocation3], %s1241
          %s1243 = sand.u32 %s253, 1
          %s1244 = smul.addr %s1243, 256
          %s1245 = scalar_lea.vmem [#allocation2], %s1244
          %1246 = dma.done %s1242, 4096
        $region72: #{pyra_conv_block.9} parent=67 // pred_fallthru
          _
      $region68: #{pyra_conv_block.9} parent=5 // pred_fallthru
        _
    $region6: #{pyra_conv_block.9} parent=1 // loop_footer
      %s23 = sadd.s32 1, %s19
    $region7: #{pyra_conv_block.9} parent=1 // loop_footer_branch
      %18 = sbr.rel target = $region3
    $region8: #{pyra_conv_block.9} parent=1 // loop_exit
      _
    %1247 = vsyncpa [#allocation3], 1
    %s1248 = scalar_lea.sflag [#allocation3], 1
    %1249 = vsyncpa %s1248, 1

// kernel: pyra_conv_block.6
$region0: #{pyra_conv_block.6}
  #allocation0 [shape = 'u32[]', space=smem, size = 0x4, offset = 0x4, fixed_abs, tag = 'smem constant byte address 0x4 - core index']
  #allocation1 [shape = 'u32[144,128]{1,0:T(1,128)}', space=vmem, size = 0x12000, scoped, tag = 'internal scratch']
  %s0 = inlined_call_operand.vmem [shape: bf16[2,362,16], index: 0, kind: input, shape index: {}]
  %s1 = inlined_call_operand.vmem [shape: bf16[9,16,16], index: 1, kind: input, shape index: {}]
  %s2 = inlined_call_operand.vmem [shape: f32[1,16], index: 2, kind: input, shape index: {}]
  %s3 = inlined_call_operand.vmem [shape: f32[2,324,16], index: 3, kind: output, shape index: {}]
  %s4 = sld [smem:[#allocation0]]
  $region45: #{pyra_conv_block.6} parent=0
    _
  %s6 = ssub.s32 1, %s4
  %s7 = scalar_select 0, %s6, %s4
  loop: start=0, step=1, limit=4
  $region2: #{pyra_conv_block.6} parent=0 // loop_pre_header
    _
  $region3: #{pyra_conv_block.6} parent=0 // loop_header
    %s9 = sphi 0, %s13
    %p10 = scmp.ge.s32.totalorder %s9, 4
    %s19 = sphi 0, %s21
    %s22 = sphi 0, %s19
    %s23 = sphi 0, %s22
    %s39 = sphi 0, %s23
    %s43 = sphi 0, %s43
    %s45 = sphi 0, %s43
    %s46 = sphi 0, %s45
    %s60 = sphi 0, %s46
    %s64 = sphi 0, %s64
    %s66 = sphi 0, %s64
    %s67 = sphi 0, %s66
    %s81 = sphi 0, %s67
    %s87 = sphi 0, %s89
    %s90 = sphi 0, %s87
    %s91 = sphi 0, %s90
    %s107 = sphi 0, %s91
  $region4: #{pyra_conv_block.6} parent=0 // loop_header_branch
    %12 = sbr.rel (%p10) target = $region8
  $region5: #{pyra_conv_block.6} parent=0 // loop_body
    %s14 = ssub.s32 %s9, 1
    %s15 = ssub.s32 %s9, 2
    %s16 = sadd.s32 %s9, 1
    %s17 = ssub.s32 %s9, %s16
    %p18 = scmp.eq.s32.totalorder %s17, 0
    %s20 = sadd.s32 %s19, 1
    %s21 = scalar_select %p18, %s19, %s20
    %p24 = pneg %p18
    %p25 = scmp.eq.s32.totalorder %s9, 1
    %p26 = por %p24, %p25
    %p27 = scmp.ne.s32.totalorder %s19, %s22
    %p28 = scmp.eq.s32.totalorder %s9, 0
    %p29 = por %p27, %p28
    %p30 = scmp.ne.s32.totalorder %s19, %s22
    %p31 = scmp.eq.s32.totalorder %s14, 1
    %p32 = por %p30, %p31
    %p33 = scmp.ne.s32.totalorder %s22, %s23
    %p34 = scmp.eq.s32.totalorder %s14, 0
    %p35 = por %p33, %p34
    %p36 = scmp.ne.s32.totalorder %s22, %s23
    %p37 = scmp.eq.s32.totalorder %s15, 1
    %p38 = por %p36, %p37
    %p40 = scmp.ne.s32.totalorder %s23, %s39
    %p41 = scmp.eq.s32.totalorder %s15, 0
    %p42 = por %p40, %p41
    %s44 = sadd.s32 %s43, 1
    %p47 = scmp.eq.s32.totalorder %s9, 1
    %p48 = scmp.ne.s32.totalorder %s43, %s45
    %p49 = scmp.eq.s32.totalorder %s9, 0
    %p50 = por %p48, %p49
    %p51 = scmp.ne.s32.totalorder %s43, %s45
    %p52 = scmp.eq.s32.totalorder %s14, 1
    %p53 = por %p51, %p52
    %p54 = scmp.ne.s32.totalorder %s45, %s46
    %p55 = scmp.eq.s32.totalorder %s14, 0
    %p56 = por %p54, %p55
    %p57 = scmp.ne.s32.totalorder %s45, %s46
    %p58 = scmp.eq.s32.totalorder %s15, 1
    %p59 = por %p57, %p58
    %p61 = scmp.ne.s32.totalorder %s46, %s60
    %p62 = scmp.eq.s32.totalorder %s15, 0
    %p63 = por %p61, %p62
    %s65 = sadd.s32 %s64, 1
    %p68 = scmp.eq.s32.totalorder %s9, 1
    %p69 = scmp.ne.s32.totalorder %s64, %s66
    %p70 = scmp.eq.s32.totalorder %s9, 0
    %p71 = por %p69, %p70
    %p72 = scmp.ne.s32.totalorder %s64, %s66
    %p73 = scmp.eq.s32.totalorder %s14, 1
    %p74 = por %p72, %p73
    %p75 = scmp.ne.s32.totalorder %s66, %s67
    %p76 = scmp.eq.s32.totalorder %s14, 0
    %p77 = por %p75, %p76
    %p78 = scmp.ne.s32.totalorder %s66, %s67
    %p79 = scmp.eq.s32.totalorder %s15, 1
    %p80 = por %p78, %p79
    %p82 = scmp.ne.s32.totalorder %s67, %s81
    %p83 = scmp.eq.s32.totalorder %s15, 0
    %p84 = por %p82, %p83
    %s85 = ssub.s32 %s9, %s16
    %p86 = scmp.eq.s32.totalorder %s85, 0
    %s88 = sadd.s32 %s87, 1
    %s89 = scalar_select %p86, %s87, %s88
    %p92 = pneg %p86
    %p93 = scmp.eq.s32.totalorder %s9, 1
    %p94 = por %p92, %p93
    %p95 = scmp.ne.s32.totalorder %s87, %s90
    %p96 = scmp.eq.s32.totalorder %s9, 0
    %p97 = por %p95, %p96
    %p98 = scmp.ne.s32.totalorder %s87, %s90
    %p99 = scmp.eq.s32.totalorder %s14, 1
    %p100 = por %p98, %p99
    %p101 = scmp.ne.s32.totalorder %s90, %s91
    %p102 = scmp.eq.s32.totalorder %s14, 0
    %p103 = por %p101, %p102
    %p104 = scmp.ne.s32.totalorder %s90, %s91
    %p105 = scmp.eq.s32.totalorder %s15, 1
    %p106 = por %p104, %p105
    %p108 = scmp.ne.s32.totalorder %s91, %s107
    %p109 = scmp.eq.s32.totalorder %s15, 0
    %p110 = por %p108, %p109
    %p111 = scmp.le.s32.totalorder 1, %s9
    %p112 = scmp.lt.s32.totalorder %s9, 3
    %p113 = pnand %p111, %p112
    %p114 = pneg %p113
    // Predicated region
    $region9: #{pyra_conv_block.6} parent=5 // pred_check
      _
    $region10: #{pyra_conv_block.6} parent=5 // pred_check_branch
      %116 = sbr.rel (%p113) target = $region12
    $region11: #{pyra_conv_block.6} parent=5 // pred_region
      %s117 = ssub.s32 %s9, 1
      // Predicated region
      $region13: #{pyra_conv_block.6} parent=11 // pred_check
        %p118 = pneg %p56
      $region14: #{pyra_conv_block.6} parent=11 // pred_check_branch
        %120 = sbr.rel (%p118) target = $region16
      $region15: #{pyra_conv_block.6} parent=11 // pred_region
        _
      $region16: #{pyra_conv_block.6} parent=11 // pred_fallthru
        _
      // Predicated region
      $region17: #{pyra_conv_block.6} parent=11 // pred_check
        %p121 = pneg %p77
      $region18: #{pyra_conv_block.6} parent=11 // pred_check_branch
        %123 = sbr.rel (%p121) target = $region20
      $region19: #{pyra_conv_block.6} parent=11 // pred_region
        _
      $region20: #{pyra_conv_block.6} parent=11 // pred_fallthru
        _
    $region12: #{pyra_conv_block.6} parent=5 // pred_fallthru
      _
    %p124 = scmp.lt.s32.totalorder %s9, 2
    // Predicated region
    $region21: #{pyra_conv_block.6} parent=5 // pred_check
      %p125 = pneg %p124
    $region22: #{pyra_conv_block.6} parent=5 // pred_check_branch
      %127 = sbr.rel (%p125) target = $region24
    $region23: #{pyra_conv_block.6} parent=5 // pred_region
      // Predicated region
      $region25: #{pyra_conv_block.6} parent=23 // pred_check
        %p128 = pneg %p29
      $region26: #{pyra_conv_block.6} parent=23 // pred_check_branch
        %130 = sbr.rel (%p128) target = $region28
      $region27: #{pyra_conv_block.6} parent=23 // pred_region
        %p131 = scmp.lt.s32.totalorder %s9, 1
        %s132 = scalar_select %p131, %s9, 1
        %s133 = smul.addr %s132, 46
        %s134 = smul.addr %s133, 4
        %s135 = scalar_lea.vmem %s0, %s134
      $region28: #{pyra_conv_block.6} parent=23 // pred_fallthru
        _
    $region24: #{pyra_conv_block.6} parent=5 // pred_fallthru
      _
    %p136 = scmp.le.s32.totalorder 1, %s9
    %p137 = scmp.lt.s32.totalorder %s9, 3
    %p138 = pnand %p136, %p137
    %p139 = pneg %p138
    // Predicated region
    $region29: #{pyra_conv_block.6} parent=5 // pred_check
      _
    $region30: #{pyra_conv_block.6} parent=5 // pred_check_branch
      %141 = sbr.rel (%p138) target = $region32
    $region31: #{pyra_conv_block.6} parent=5 // pred_region
      %s142 = ssub.s32 %s9, 1
      %p143 = scmp.lt.s32.totalorder %s14, 1
      %s144 = scalar_select %p143, %s14, 1
      %s145 = smul.addr %s144, 46
      %s146 = smul.addr %s145, 4
      %s147 = scalar_lea.vmem %s0, %s146
      %p148 = pneg %p35
      %p149 = pneg %p32
      %p150 = pneg %p56
      %p151 = pneg %p53
      %p152 = pneg %p77
      %p153 = pneg %p74
      %p154 = pneg %p103
      %p155 = pneg %p100
      %p156 = scmp.lt.s32.totalorder %s14, 1
      %s157 = scalar_select %p156, %s14, 1
      %s158 = smul.addr %s157, 41
      %s159 = smul.addr %s158, 8
      %s160 = scalar_lea.vmem %s3, %s159
      %p161 = scmp.lt.s32.totalorder %s14, 1
      %s162 = scalar_select %p161, %s14, 1
      %s163 = smul.addr %s162, 46
      %s164 = smul.addr %s163, 4
      %s165 = scalar_lea.vmem %s0, %s164
      %p166 = scmp.lt.s32.totalorder %s14, 1
      %s167 = scalar_select %p166, %s14, 1
      %s168 = smul.addr %s167, 41
      %s169 = smul.addr %s168, 8
      %s170 = scalar_lea.vmem %s3, %s169
      %v172 = vld [vmem:[%s165] sm:$0xf]
      %v173 = vld [vmem:[%s165 + $0x4] sm:$0xf]
      %v174 = vld [vmem:[%s165 + $0x8] sm:$0xf]
      %v175 = vld [vmem:[%s165 + $0xc] sm:$0xf]
      %v176 = vld [vmem:[%s165 + $0x10] sm:$0xf]
      %v177 = vld [vmem:[%s165 + $0x14] sm:$0xf]
      %v178 = vld [vmem:[%s165 + $0x18] sm:$0xf]
      %v179 = vld [vmem:[%s165 + $0x1c] sm:$0xf]
      %v180 = vld [vmem:[%s165 + $0x20] sm:$0xf]
      %v181 = vld [vmem:[%s165 + $0x24] sm:$0xf]
      %v182 = vld [vmem:[%s165 + $0x28] sm:$0xf]
      %v183 = vld [vmem:[%s165 + $0x2c] sm:$0xf]
      %v184 = vld [vmem:[%s165 + $0x30] sm:$0xf]
      %v185 = vld [vmem:[%s165 + $0x34] sm:$0xf]
      %v186 = vld [vmem:[%s165 + $0x38] sm:$0xf]
      %v187 = vld [vmem:[%s165 + $0x3c] sm:$0xf]
      %v188 = vld [vmem:[%s165 + $0x40] sm:$0xf]
      %v189 = vld [vmem:[%s165 + $0x44] sm:$0xf]
      %v190 = vld [vmem:[%s165 + $0x48] sm:$0xf]
      %v191 = vld [vmem:[%s165 + $0x4c] sm:$0xf]
      %v192 = vld [vmem:[%s165 + $0x50] sm:$0xf]
      %v193 = vld [vmem:[%s165 + $0x54] sm:$0xf]
      %v194 = vld [vmem:[%s165 + $0x58] sm:$0xf]
      %v195 = vld [vmem:[%s165 + $0x5c] sm:$0xf]
      %v196 = vld [vmem:[%s165 + $0x60] sm:$0xf]
      %v197 = vld [vmem:[%s165 + $0x64] sm:$0xf]
      %v198 = vld [vmem:[%s165 + $0x68] sm:$0xf]
      %v199 = vld [vmem:[%s165 + $0x6c] sm:$0xf]
      %v200 = vld [vmem:[%s165 + $0x70] sm:$0xf]
      %v201 = vld [vmem:[%s165 + $0x74] sm:$0xf]
      %v202 = vld [vmem:[%s165 + $0x78] sm:$0xf]
      %v203 = vld [vmem:[%s165 + $0x7c] sm:$0xf]
      %v204 = vld [vmem:[%s165 + $0x80] sm:$0xf]
      %v205 = vld [vmem:[%s165 + $0x84] sm:$0xf]
      %v206 = vld [vmem:[%s165 + $0x88] sm:$0xf]
      %v207 = vld [vmem:[%s165 + $0x8c] sm:$0xf]
      %v208 = vld [vmem:[%s165 + $0x90] sm:$0xf]
      %v209 = vld [vmem:[%s165 + $0x94] sm:$0xf]
      %v210 = vld [vmem:[%s165 + $0x98] sm:$0xf]
      %v211 = vld [vmem:[%s165 + $0x9c] sm:$0xf]
      %v212 = vld [vmem:[%s165 + $0xa0] sm:$0x3]
      %v213 = vld [vmem:[%s1] sm:$0xf]
      %v214 = vld [vmem:[%s1 + $0x4] sm:$0xf]
      %v215 = vld [vmem:[%s165 + $0xa0] sm:$0x7]
      %s216 = scalar_lea.vmem %s1, 8
      %v217 = vld [vmem:[%s216] sm:$0xf]
      %v218 = vld [vmem:[%s216 + $0x4] sm:$0xf]
      %v260 = vunpack.c.l.b16 %v172
      %v261 = vunpack.c.l.b16 %v173
      %v262 = vunpack.c.l.b16 %v174
      %v263 = vunpack.c.l.b16 %v175
      %v264 = vunpack.c.l.b16 %v176
      %v265 = vunpack.c.l.b16 %v177
      %v266 = vunpack.c.l.b16 %v178
      %v267 = vunpack.c.l.b16 %v179
      %v268 = vunpack.c.l.b16 %v180
      %v269 = vunpack.c.l.b16 %v181
      %v270 = vunpack.c.l.b16 %v182
      %v271 = vunpack.c.l.b16 %v183
      %v272 = vunpack.c.l.b16 %v184
      %v273 = vunpack.c.l.b16 %v185
      %v274 = vunpack.c.l.b16 %v186
      %v275 = vunpack.c.l.b16 %v187
      %v276 = vunpack.c.l.b16 %v188
      %v277 = vunpack.c.l.b16 %v189
      %v278 = vunpack.c.l.b16 %v190
      %v279 = vunpack.c.l.b16 %v191
      %v280 = vunpack.c.l.b16 %v192
      %v281 = vunpack.c.l.b16 %v193
      %v282 = vunpack.c.l.b16 %v194
      %v283 = vunpack.c.l.b16 %v195
      %v284 = vunpack.c.l.b16 %v196
      %v285 = vunpack.c.l.b16 %v197
      %v286 = vunpack.c.l.b16 %v198
      %v287 = vunpack.c.l.b16 %v199
      %v288 = vunpack.c.l.b16 %v200
      %v289 = vunpack.c.l.b16 %v201
      %v290 = vunpack.c.l.b16 %v202
      %v291 = vunpack.c.l.b16 %v203
      %v292 = vunpack.c.l.b16 %v204
      %v293 = vunpack.c.l.b16 %v205
      %v294 = vunpack.c.l.b16 %v206
      %v295 = vunpack.c.l.b16 %v207
      %v296 = vunpack.c.l.b16 %v208
      %v297 = vunpack.c.l.b16 %v209
      %v298 = vunpack.c.l.b16 %v210
      %v299 = vunpack.c.l.b16 %v211
      %v300 = vunpack.c.l.b16 %v215
      %v301 = vpack.c.b16 %v261, %v260
      %v302 = vpack.c.b16 %v263, %v262
      %v303 = vpack.c.b16 %v265, %v264
      %v304 = vpack.c.b16 %v267, %v266
      %v305 = vpack.c.b16 %v269, %v268
      %v306 = vpack.c.b16 %v271, %v270
      %v307 = vpack.c.b16 %v273, %v272
      %v308 = vpack.c.b16 %v275, %v274
      %v309 = vpack.c.b16 %v277, %v276
      %v310 = vpack.c.b16 %v279, %v278
      %v311 = vpack.c.b16 %v281, %v280
      %v312 = vpack.c.b16 %v283, %v282
      %v313 = vpack.c.b16 %v285, %v284
      %v314 = vpack.c.b16 %v287, %v286
      %v315 = vpack.c.b16 %v289, %v288
      %v316 = vpack.c.b16 %v291, %v290
      %v317 = vpack.c.b16 %v293, %v292
      %v318 = vpack.c.b16 %v295, %v294
      %v319 = vpack.c.b16 %v297, %v296
      %v320 = vpack.c.b16 %v299, %v298
      %v321 = vpack.c.b16 %v300, %v300
      %vm322 = vsmask.f32 7424
      %v324 = vshrl.u32 %v301, 16
      %v326 = vshll.u32 %v301, 16
      %v328 = vrot.slane %v326, 1
      %v329 = vor.u32 %v324, %v328
      %v331 = vshll.u32 %v302, 16
      %v333 = vrot.slane %v331, 1
      %v334 = vsel %vm322, %v329, %v333
      %v335 = vshrl.u32 %v302, 16
      %v337 = vor.u32 %v335, %v333
      %v339 = vshll.u32 %v303, 16
      %v341 = vrot.slane %v339, 1
      %v342 = vsel %vm322, %v337, %v341
      %v343 = vshrl.u32 %v303, 16
      %v345 = vor.u32 %v343, %v341
      %v347 = vshll.u32 %v304, 16
      %v349 = vrot.slane %v347, 1
      %v350 = vsel %vm322, %v345, %v349
      %v351 = vshrl.u32 %v304, 16
      %v353 = vor.u32 %v351, %v349
      %v355 = vshll.u32 %v305, 16
      %v357 = vrot.slane %v355, 1
      %v358 = vsel %vm322, %v353, %v357
      %v359 = vshrl.u32 %v305, 16
      %v361 = vor.u32 %v359, %v357
      %v363 = vshll.u32 %v306, 16
      %v365 = vrot.slane %v363, 1
      %v366 = vsel %vm322, %v361, %v365
      %v367 = vshrl.u32 %v306, 16
      %v369 = vor.u32 %v367, %v365
      %v371 = vshll.u32 %v307, 16
      %v373 = vrot.slane %v371, 1
      %v374 = vsel %vm322, %v369, %v373
      %v375 = vshrl.u32 %v307, 16
      %v377 = vor.u32 %v375, %v373
      %v379 = vshll.u32 %v308, 16
      %v381 = vrot.slane %v379, 1
      %v382 = vsel %vm322, %v377, %v381
      %v383 = vshrl.u32 %v308, 16
      %v385 = vor.u32 %v383, %v381
      %v387 = vshll.u32 %v309, 16
      %v389 = vrot.slane %v387, 1
      %v390 = vsel %vm322, %v385, %v389
      %v391 = vshrl.u32 %v309, 16
      %v393 = vor.u32 %v391, %v389
      %v395 = vshll.u32 %v310, 16
      %v397 = vrot.slane %v395, 1
      %v398 = vsel %vm322, %v393, %v397
      %v399 = vshrl.u32 %v310, 16
      %v401 = vor.u32 %v399, %v397
      %v403 = vshll.u32 %v311, 16
      %v405 = vrot.slane %v403, 1
      %v406 = vsel %vm322, %v401, %v405
      %v407 = vshrl.u32 %v311, 16
      %v409 = vor.u32 %v407, %v405
      %v411 = vshll.u32 %v312, 16
      %v413 = vrot.slane %v411, 1
      %v414 = vsel %vm322, %v409, %v413
      %v415 = vshrl.u32 %v312, 16
      %v417 = vor.u32 %v415, %v413
      %v419 = vshll.u32 %v313, 16
      %v421 = vrot.slane %v419, 1
      %v422 = vsel %vm322, %v417, %v421
      %v423 = vshrl.u32 %v313, 16
      %v425 = vor.u32 %v423, %v421
      %v427 = vshll.u32 %v314, 16
      %v429 = vrot.slane %v427, 1
      %v430 = vsel %vm322, %v425, %v429
      %v431 = vshrl.u32 %v314, 16
      %v433 = vor.u32 %v431, %v429
      %v435 = vshll.u32 %v315, 16
      %v437 = vrot.slane %v435, 1
      %v438 = vsel %vm322, %v433, %v437
      %v439 = vshrl.u32 %v315, 16
      %v441 = vor.u32 %v439, %v437
      %v443 = vshll.u32 %v316, 16
      %v445 = vrot.slane %v443, 1
      %v446 = vsel %vm322, %v441, %v445
      %v447 = vshrl.u32 %v316, 16
      %v449 = vor.u32 %v447, %v445
      %v451 = vshll.u32 %v317, 16
      %v453 = vrot.slane %v451, 1
      %v454 = vsel %vm322, %v449, %v453
      %v455 = vshrl.u32 %v317, 16
      %v457 = vor.u32 %v455, %v453
      %v459 = vshll.u32 %v318, 16
      %v461 = vrot.slane %v459, 1
      %v462 = vsel %vm322, %v457, %v461
      %v463 = vshrl.u32 %v318, 16
      %v465 = vor.u32 %v463, %v461
      %v467 = vshll.u32 %v319, 16
      %v469 = vrot.slane %v467, 1
      %v470 = vsel %vm322, %v465, %v469
      %v471 = vshrl.u32 %v319, 16
      %v473 = vor.u32 %v471, %v469
      %v475 = vshll.u32 %v320, 16
      %v477 = vrot.slane %v475, 1
      %v478 = vsel %vm322, %v473, %v477
      %v479 = vshrl.u32 %v320, 16
      %v481 = vor.u32 %v479, %v477
      %v483 = vshll.u32 %v321, 16
      %v485 = vrot.slane %v483, 1
      %v486 = vsel %vm322, %v481, %v485
      %v487 = vshrl.u32 %v321, 16
      %v489 = vor.u32 %v487, %v485
      %v492 = vunpack.c.l.b16 %v217
      %v493 = vunpack.c.l.b16 %v218
      %v494 = vpack.c.b16 %v493, %v492
      %vm496 = vcmask 130048
      %v498 = vsel %vm496, %v334, 0
      %v501 = vsel %vm496, %v342, 0
      %v504 = vsel %vm496, %v350, 0
      %v507 = vsel %vm496, %v358, 0
      %v510 = vsel %vm496, %v366, 0
      %v513 = vsel %vm496, %v374, 0
      %v516 = vsel %vm496, %v382, 0
      %v519 = vsel %vm496, %v390, 0
      %v522 = vsel %vm496, %v398, 0
      %v525 = vsel %vm496, %v406, 0
      %v528 = vsel %vm496, %v414, 0
      %v531 = vsel %vm496, %v422, 0
      %v534 = vsel %vm496, %v430, 0
      %v537 = vsel %vm496, %v438, 0
      %v540 = vsel %vm496, %v446, 0
      %v543 = vsel %vm496, %v454, 0
      %v546 = vsel %vm496, %v462, 0
      %v549 = vsel %vm496, %v470, 0
      %v552 = vsel %vm496, %v478, 0
      %v555 = vsel %vm496, %v486, 0
      %v558 = vsel %vm496, %v489, 0
      %560 = vmatprep.subr.bf16.mxu0 0
      %561 = vmatpush1.bf16.msra.mxu0 %v494
      %562 = vmatprep.subr.bf16.mxu0 0
      %563 = vmatpush1.bf16.msra.mxu0 0
      %564 = vmatprep.subr.bf16.mxu0 0
      %565 = vmatpush1.bf16.msra.mxu0 0
      %566 = vmatprep.subr.bf16.mxu0 0
      %567 = vmatpush1.bf16.msra.mxu0 0
      %568 = vmatprep.subr.bf16.mxu0 0
      %569 = vmatpush1.bf16.msra.mxu0 0
      %570 = vmatprep.subr.bf16.mxu0 0
      %571 = vmatpush1.bf16.msra.mxu0 0
      %572 = vmatprep.subr.bf16.mxu0 0
      %573 = vmatpush1.bf16.msra.mxu0 0
      %574 = vmatprep.subr.bf16.mxu0 0
      %575 = vmatpush1.bf16.msra.mxu0 0
      %576 = vmatprep.subr.bf16.mxu0 0
      %577 = vmatpush1.bf16.msra.mxu0 0
      %578 = vmatprep.subr.bf16.mxu0 0
      %579 = vmatpush1.bf16.msra.mxu0 0
      %580 = vmatprep.subr.bf16.mxu0 0
      %581 = vmatpush1.bf16.msra.mxu0 0
      %582 = vmatprep.subr.bf16.mxu0 0
      %583 = vmatpush1.bf16.msra.mxu0 0
      %584 = vmatprep.subr.bf16.mxu0 0
      %585 = vmatpush1.bf16.msra.mxu0 0
      %586 = vmatprep.subr.bf16.mxu0 0
      %587 = vmatpush1.bf16.msra.mxu0 0
      %588 = vmatprep.subr.bf16.mxu0 0
      %589 = vmatpush1.bf16.msra.mxu0 0
      %590 = vmatprep.subr.bf16.mxu0 0
      %591 = vmatpush1.bf16.msra.mxu0 0
      %592 = vmatprep.mubr.bf16.mxu0 0
      %593 = vmatmul.mubr.bf16.gmra.mrb[0].mxu0 %v498
      %v594 = vpop.f32.mrb[0].mxu0
      %v595 = vadd.f32 0.0, %v594
      %v596 = vpop.f32.mrb[0].mxu0
      %v597 = vpop.f32.mrb[0].mxu0
      %v598 = vadd.f32 0.0, %v597
      %v599 = vpop.f32.mrb[0].mxu0
      %600 = vmatprep.mubr.bf16.mxu0 0
      %601 = vmatmul.mubr.bf16.gmra.mrb[0].mxu0 %v501
      %v602 = vpop.f32.mrb[0].mxu0
      %v603 = vadd.f32 0.0, %v602
      %v604 = vpop.f32.mrb[0].mxu0
      %v605 = vpop.f32.mrb[0].mxu0
      %v606 = vadd.f32 0.0, %v605
      %v607 = vpop.f32.mrb[0].mxu0
      %608 = vmatprep.mubr.bf16.mxu0 0
      %609 = vmatmul.mubr.bf16.gmra.mrb[0].mxu0 %v504
      %v610 = vpop.f32.mrb[0].mxu0
      %v611 = vadd.f32 0.0, %v610
      %v612 = vpop.f32.mrb[0].mxu0
      %v613 = vpop.f32.mrb[0].mxu0
      %v614 = vadd.f32 0.0, %v613
      %v615 = vpop.f32.mrb[0].mxu0
      %616 = vmatprep.mubr.bf16.mxu0 0
      %617 = vmatmul.mubr.bf16.gmra.mrb[0].mxu0 %v507
      %v618 = vpop.f32.mrb[0].mxu0
      %v619 = vadd.f32 0.0, %v618
      %v620 = vpop.f32.mrb[0].mxu0
      %v621 = vpop.f32.mrb[0].mxu0
      %v622 = vadd.f32 0.0, %v621
      %v623 = vpop.f32.mrb[0].mxu0
      %624 = vmatprep.mubr.bf16.mxu0 0
      %625 = vmatmul.mubr.bf16.gmra.mrb[0].mxu0 %v510
      %v626 = vpop.f32.mrb[0].mxu0
      %v627 = vadd.f32 0.0, %v626
      %v628 = vpop.f32.mrb[0].mxu0
      %v629 = vpop.f32.mrb[0].mxu0
      %v630 = vadd.f32 0.0, %v629
      %v631 = vpop.f32.mrb[0].mxu0
      %632 = vmatprep.mubr.bf16.mxu0 0
      %633 = vmatmul.mubr.bf16.gmra.mrb[0].mxu0 %v513
      %v634 = vpop.f32.mrb[0].mxu0
      %v635 = vadd.f32 0.0, %v634
      %v636 = vpop.f32.mrb[0].mxu0
      %v637 = vpop.f32.mrb[0].mxu0
      %v638 = vadd.f32 0.0, %v637
      %v639 = vpop.f32.mrb[0].mxu0
      %640 = vmatprep.mubr.bf16.mxu0 0
      %641 = vmatmul.mubr.bf16.gmra.mrb[0].mxu0 %v516
      %v642 = vpop.f32.mrb[0].mxu0
      %v643 = vadd.f32 0.0, %v642
      %v644 = vpop.f32.mrb[0].mxu0
      %v645 = vpop.f32.mrb[0].mxu0
      %v646 = vadd.f32 0.0, %v645
      %v647 = vpop.f32.mrb[0].mxu0
      %648 = vmatprep.mubr.bf16.mxu0 0
      %649 = vmatmul.mubr.bf16.gmra.mrb[0].mxu0 %v519
      %v650 = vpop.f32.mrb[0].mxu0
      %v651 = vadd.f32 0.0, %v650
      %v652 = vpop.f32.mrb[0].mxu0
      %v653 = vpop.f32.mrb[0].mxu0
      %v654 = vadd.f32 0.0, %v653
      %v655 = vpop.f32.mrb[0].mxu0
      %656 = vmatprep.mubr.bf16.mxu0 0
      %657 = vmatmul.mubr.bf16.gmra.mrb[0].mxu0 %v522
      %v658 = vpop.f32.mrb[0].mxu0
      %v659 = vadd.f32 0.0, %v658
      %v660 = vpop.f32.mrb[0].mxu0
      %v661 = vpop.f32.mrb[0].mxu0
      %v662 = vadd.f32 0.0, %v661
      %v663 = vpop.f32.mrb[0].mxu0
      %664 = vmatprep.mubr.bf16.mxu0 0
      %665 = vmatmul.mubr.bf16.gmra.mrb[0].mxu0 %v525
      %v666 = vpop.f32.mrb[0].mxu0
      %v667 = vadd.f32 0.0, %v666
      %v668 = vpop.f32.mrb[0].mxu0
      %v669 = vpop.f32.mrb[0].mxu0
      %v670 = vadd.f32 0.0, %v669
      %v671 = vpop.f32.mrb[0].mxu0
      %672 = vmatprep.mubr.bf16.mxu0 0
      %673 = vmatmul.mubr.bf16.gmra.mrb[0].mxu0 %v528
      %v674 = vpop.f32.mrb[0].mxu0
      %v675 = vadd.f32 0.0, %v674
      %v676 = vpop.f32.mrb[0].mxu0
      %v677 = vpop.f32.mrb[0].mxu0
      %v678 = vadd.f32 0.0, %v677
      %v679 = vpop.f32.mrb[0].mxu0
      %680 = vmatprep.mubr.bf16.mxu0 0
      %681 = vmatmul.mubr.bf16.gmra.mrb[0].mxu0 %v531
      %v682 = vpop.f32.mrb[0].mxu0
      %v683 = vadd.f32 0.0, %v682
      %v684 = vpop.f32.mrb[0].mxu0
      %v685 = vpop.f32.mrb[0].mxu0
      %v686 = vadd.f32 0.0, %v685
      %v687 = vpop.f32.mrb[0].mxu0
      %688 = vmatprep.mubr.bf16.mxu0 0
      %689 = vmatmul.mubr.bf16.gmra.mrb[0].mxu0 %v534
      %v690 = vpop.f32.mrb[0].mxu0
      %v691 = vadd.f32 0.0, %v690
      %v692 = vpop.f32.mrb[0].mxu0
      %v693 = vpop.f32.mrb[0].mxu0
      %v694 = vadd.f32 0.0, %v693
      %v695 = vpop.f32.mrb[0].mxu0
      %696 = vmatprep.mubr.bf16.mxu0 0
      %697 = vmatmul.mubr.bf16.gmra.mrb[0].mxu0 %v537
      %v698 = vpop.f32.mrb[0].mxu0
      %v699 = vadd.f32 0.0, %v698
      %v700 = vpop.f32.mrb[0].mxu0
      %v701 = vpop.f32.mrb[0].mxu0
      %v702 = vadd.f32 0.0, %v701
      %v703 = vpop.f32.mrb[0].mxu0
      %704 = vmatprep.mubr.bf16.mxu0 0
      %705 = vmatmul.mubr.bf16.gmra.mrb[0].mxu0 %v540
      %v706 = vpop.f32.mrb[0].mxu0
      %v707 = vadd.f32 0.0, %v706
      %v708 = vpop.f32.mrb[0].mxu0
      %v709 = vpop.f32.mrb[0].mxu0
      %v710 = vadd.f32 0.0, %v709
      %v711 = vpop.f32.mrb[0].mxu0
      %712 = vmatprep.mubr.bf16.mxu0 0
      %713 = vmatmul.mubr.bf16.gmra.mrb[0].mxu0 %v543
      %v714 = vpop.f32.mrb[0].mxu0
      %v715 = vadd.f32 0.0, %v714
      %v716 = vpop.f32.mrb[0].mxu0
      %v717 = vpop.f32.mrb[0].mxu0
      %v718 = vadd.f32 0.0, %v717
      %v719 = vpop.f32.mrb[0].mxu0
      %720 = vmatprep.mubr.bf16.mxu0 0
      %721 = vmatmul.mubr.bf16.gmra.mrb[0].mxu0 %v546
      %v722 = vpop.f32.mrb[0].mxu0
      %v723 = vadd.f32 0.0, %v722
      %v724 = vpop.f32.mrb[0].mxu0
      %v725 = vpop.f32.mrb[0].mxu0
      %v726 = vadd.f32 0.0, %v725
      %v727 = vpop.f32.mrb[0].mxu0
      %728 = vmatprep.mubr.bf16.mxu0 0
      %729 = vmatmul.mubr.bf16.gmra.mrb[0].mxu0 %v549
      %v730 = vpop.f32.mrb[0].mxu0
      %v731 = vadd.f32 0.0, %v730
      %v732 = vpop.f32.mrb[0].mxu0
      %v733 = vpop.f32.mrb[0].mxu0
      %v734 = vadd.f32 0.0, %v733
      %v735 = vpop.f32.mrb[0].mxu0
      %736 = vmatprep.mubr.bf16.mxu0 0
      %737 = vmatmul.mubr.bf16.gmra.mrb[0].mxu0 %v552
      %v738 = vpop.f32.mrb[0].mxu0
      %v739 = vadd.f32 0.0, %v738
      %v740 = vpop.f32.mrb[0].mxu0
      %v741 = vpop.f32.mrb[0].mxu0
      %v742 = vadd.f32 0.0, %v741
      %v743 = vpop.f32.mrb[0].mxu0
      %744 = vmatprep.mubr.bf16.mxu0 0
      %745 = vmatmul.mubr.bf16.gmra.mrb[0].mxu0 %v555
      %v746 = vpop.f32.mrb[0].mxu0
      %v747 = vadd.f32 0.0, %v746
      %v748 = vpop.f32.mrb[0].mxu0
      %v749 = vpop.f32.mrb[0].mxu0
      %v750 = vadd.f32 0.0, %v749
      %v751 = vpop.f32.mrb[0].mxu0
      %752 = vmatprep.mubr.bf16.mxu0 0
      %753 = vmatmul.mubr.bf16.gmra.mrb[0].mxu0 %v558
      %v754 = vpop.f32.mrb[0].mxu0
      %v755 = vadd.f32 0.0, %v754
      %v756 = vpop.f32.mrb[0].mxu0
      %v757 = vpop.f32.mrb[0].mxu0
      %v758 = vpop.f32.mrb[0].mxu0
      %759 = vdwg.mxu0
      %v761 = vunpack.c.l.b16 %v212
      %v762 = vpack.c.b16 %v761, %v761
      %v765 = vunpack.c.l.b16 %v213
      %v766 = vunpack.c.l.b16 %v214
      %v767 = vpack.c.b16 %v766, %v765
      %v769 = vsel %vm496, %v301, 0
      %v771 = vsel %vm496, %v302, 0
      %v773 = vsel %vm496, %v303, 0
      %v775 = vsel %vm496, %v304, 0
      %v777 = vsel %vm496, %v305, 0
      %v779 = vsel %vm496, %v306, 0
      %v781 = vsel %vm496, %v307, 0
      %v783 = vsel %vm496, %v308, 0
      %v785 = vsel %vm496, %v309, 0
      %v787 = vsel %vm496, %v310, 0
      %v789 = vsel %vm496, %v311, 0
      %v791 = vsel %vm496, %v312, 0
      %v793 = vsel %vm496, %v313, 0
      %v795 = vsel %vm496, %v314, 0
      %v797 = vsel %vm496, %v315, 0
      %v799 = vsel %vm496, %v316, 0
      %v801 = vsel %vm496, %v317, 0
      %v803 = vsel %vm496, %v318, 0
      %v805 = vsel %vm496, %v319, 0
      %v807 = vsel %vm496, %v320, 0
      %v810 = vsel %vm496, %v762, 0
      %812 = vmatprep.subr.bf16.mxu0 0
      %813 = vmatpush1.bf16.msra.mxu0 %v767
      %814 = vmatprep.subr.bf16.mxu0 0
      %815 = vmatpush1.bf16.msra.mxu0 0
      %816 = vmatprep.subr.bf16.mxu0 0
      %817 = vmatpush1.bf16.msra.mxu0 0
      %818 = vmatprep.subr.bf16.mxu0 0
      %819 = vmatpush1.bf16.msra.mxu0 0
      %820 = vmatprep.subr.bf16.mxu0 0
      %821 = vmatpush1.bf16.msra.mxu0 0
      %822 = vmatprep.subr.bf16.mxu0 0
      %823 = vmatpush1.bf16.msra.mxu0 0
      %824 = vmatprep.subr.bf16.mxu0 0
      %825 = vmatpush1.bf16.msra.mxu0 0
      %826 = vmatprep.subr.bf16.mxu0 0
      %827 = vmatpush1.bf16.msra.mxu0 0
      %828 = vmatprep.subr.bf16.mxu0 0
      %829 = vmatpush1.bf16.msra.mxu0 0
      %830 = vmatprep.subr.bf16.mxu0 0
      %831 = vmatpush1.bf16.msra.mxu0 0
      %832 = vmatprep.subr.bf16.mxu0 0
      %833 = vmatpush1.bf16.msra.mxu0 0
      %834 = vmatprep.subr.bf16.mxu0 0
      %835 = vmatpush1.bf16.msra.mxu0 0
      %836 = vmatprep.subr.bf16.mxu0 0
      %837 = vmatpush1.bf16.msra.mxu0 0
      %838 = vmatprep.subr.bf16.mxu0 0
      %839 = vmatpush1.bf16.msra.mxu0 0
      %840 = vmatprep.subr.bf16.mxu0 0
      %841 = vmatpush1.bf16.msra.mxu0 0
      %842 = vmatprep.subr.bf16.mxu0 0
      %843 = vmatpush1.bf16.msra.mxu0 0
      %844 = vmatprep.mubr.bf16.mxu0 0
      %845 = vmatmul.mubr.bf16.gmra.mrb[0].mxu0 %v769
      %v846 = vpop.f32.mrb[0].mxu0
      %v847 = vadd.f32 %v595, %v846
      %v848 = vpop.f32.mrb[0].mxu0
      %v849 = vpop.f32.mrb[0].mxu0
      %v850 = vadd.f32 %v598, %v849
      %v851 = vpop.f32.mrb[0].mxu0
      %852 = vmatprep.mubr.bf16.mxu0 0
      %853 = vmatmul.mubr.bf16.gmra.mrb[0].mxu0 %v771
      %v854 = vpop.f32.mrb[0].mxu0
      %v855 = vadd.f32 %v603, %v854
      %v856 = vpop.f32.mrb[0].mxu0
      %v857 = vpop.f32.mrb[0].mxu0
      %v858 = vadd.f32 %v606, %v857
      %v859 = vpop.f32.mrb[0].mxu0
      %860 = vmatprep.mubr.bf16.mxu0 0
      %861 = vmatmul.mubr.bf16.gmra.mrb[0].mxu0 %v773
      %v862 = vpop.f32.mrb[0].mxu0
      %v863 = vadd.f32 %v611, %v862
      %v864 = vpop.f32.mrb[0].mxu0
      %v865 = vpop.f32.mrb[0].mxu0
      %v866 = vadd.f32 %v614, %v865
      %v867 = vpop.f32.mrb[0].mxu0
      %868 = vmatprep.mubr.bf16.mxu0 0
      %869 = vmatmul.mubr.bf16.gmra.mrb[0].mxu0 %v775
      %v870 = vpop.f32.mrb[0].mxu0
      %v871 = vadd.f32 %v619, %v870
      %v872 = vpop.f32.mrb[0].mxu0
      %v873 = vpop.f32.mrb[0].mxu0
      %v874 = vadd.f32 %v622, %v873
      %v875 = vpop.f32.mrb[0].mxu0
      %876 = vmatprep.mubr.bf16.mxu0 0
      %877 = vmatmul.mubr.bf16.gmra.mrb[0].mxu0 %v777
      %v878 = vpop.f32.mrb[0].mxu0
      %v879 = vadd.f32 %v627, %v878
      %v880 = vpop.f32.mrb[0].mxu0
      %v881 = vpop.f32.mrb[0].mxu0
      %v882 = vadd.f32 %v630, %v881
      %v883 = vpop.f32.mrb[0].mxu0
      %884 = vmatprep.mubr.bf16.mxu0 0
      %885 = vmatmul.mubr.bf16.gmra.mrb[0].mxu0 %v779
      %v886 = vpop.f32.mrb[0].mxu0
      %v887 = vadd.f32 %v635, %v886
      %v888 = vpop.f32.mrb[0].mxu0
      %v889 = vpop.f32.mrb[0].mxu0
      %v890 = vadd.f32 %v638, %v889
      %v891 = vpop.f32.mrb[0].mxu0
      %892 = vmatprep.mubr.bf16.mxu0 0
      %893 = vmatmul.mubr.bf16.gmra.mrb[0].mxu0 %v781
      %v894 = vpop.f32.mrb[0].mxu0
      %v895 = vadd.f32 %v643, %v894
      %v896 = vpop.f32.mrb[0].mxu0
      %v897 = vpop.f32.mrb[0].mxu0
      %v898 = vadd.f32 %v646, %v897
      %v899 = vpop.f32.mrb[0].mxu0
      %900 = vmatprep.mubr.bf16.mxu0 0
      %901 = vmatmul.mubr.bf16.gmra.mrb[0].mxu0 %v783
      %v902 = vpop.f32.mrb[0].mxu0
      %v903 = vadd.f32 %v651, %v902
      %v904 = vpop.f32.mrb[0].mxu0
      %v905 = vpop.f32.mrb[0].mxu0
      %v906 = vadd.f32 %v654, %v905
      %v907 = vpop.f32.mrb[0].mxu0
      %908 = vmatprep.mubr.bf16.mxu0 0
      %909 = vmatmul.mubr.bf16.gmra.mrb[0].mxu0 %v785
      %v910 = vpop.f32.mrb[0].mxu0
      %v911 = vadd.f32 %v659, %v910
      %v912 = vpop.f32.mrb[0].mxu0
      %v913 = vpop.f32.mrb[0].mxu0
      %v914 = vadd.f32 %v662, %v913
      %v915 = vpop.f32.mrb[0].mxu0
      %916 = vmatprep.mubr.bf16.mxu0 0
      %917 = vmatmul.mubr.bf16.gmra.mrb[0].mxu0 %v787
      %v918 = vpop.f32.mrb[0].mxu0
      %v919 = vadd.f32 %v667, %v918
      %v920 = vpop.f32.mrb[0].mxu0
      %v921 = vpop.f32.mrb[0].mxu0
      %v922 = vadd.f32 %v670, %v921
      %v923 = vpop.f32.mrb[0].mxu0
      %924 = vmatprep.mubr.bf16.mxu0 0
      %925 = vmatmul.mubr.bf16.gmra.mrb[0].mxu0 %v789
      %v926 = vpop.f32.mrb[0].mxu0
      %v927 = vadd.f32 %v675, %v926
      %v928 = vpop.f32.mrb[0].mxu0
      %v929 = vpop.f32.mrb[0].mxu0
      %v930 = vadd.f32 %v678, %v929
      %v931 = vpop.f32.mrb[0].mxu0
      %932 = vmatprep.mubr.bf16.mxu0 0
      %933 = vmatmul.mubr.bf16.gmra.mrb[0].mxu0 %v791
      %v934 = vpop.f32.mrb[0].mxu0
      %v935 = vadd.f32 %v683, %v934
      %v936 = vpop.f32.mrb[0].mxu0
      %v937 = vpop.f32.mrb[0].mxu0
      %v938 = vadd.f32 %v686, %v937
      %v939 = vpop.f32.mrb[0].mxu0
      %940 = vmatprep.mubr.bf16.mxu0 0
      %941 = vmatmul.mubr.bf16.gmra.mrb[0].mxu0 %v793
      %v942 = vpop.f32.mrb[0].mxu0
      %v943 = vadd.f32 %v691, %v942
      %v944 = vpop.f32.mrb[0].mxu0
      %v945 = vpop.f32.mrb[0].mxu0
      %v946 = vadd.f32 %v694, %v945
      %v947 = vpop.f32.mrb[0].mxu0
      %948 = vmatprep.mubr.bf16.mxu0 0
      %949 = vmatmul.mubr.bf16.gmra.mrb[0].mxu0 %v795
      %v950 = vpop.f32.mrb[0].mxu0
      %v951 = vadd.f32 %v699, %v950
      %v952 = vpop.f32.mrb[0].mxu0
      %v953 = vpop.f32.mrb[0].mxu0
      %v954 = vadd.f32 %v702, %v953
      %v955 = vpop.f32.mrb[0].mxu0
      %956 = vmatprep.mubr.bf16.mxu0 0
      %957 = vmatmul.mubr.bf16.gmra.mrb[0].mxu0 %v797
      %v958 = vpop.f32.mrb[0].mxu0
      %v959 = vadd.f32 %v707, %v958
      %v960 = vpop.f32.mrb[0].mxu0
      %v961 = vpop.f32.mrb[0].mxu0
      %v962 = vadd.f32 %v710, %v961
      %v963 = vpop.f32.mrb[0].mxu0
      %964 = vmatprep.mubr.bf16.mxu0 0
      %965 = vmatmul.mubr.bf16.gmra.mrb[0].mxu0 %v799
      %v966 = vpop.f32.mrb[0].mxu0
      %v967 = vadd.f32 %v715, %v966
      %v968 = vpop.f32.mrb[0].mxu0
      %v969 = vpop.f32.mrb[0].mxu0
      %v970 = vadd.f32 %v718, %v969
      %v971 = vpop.f32.mrb[0].mxu0
      %972 = vmatprep.mubr.bf16.mxu0 0
      %973 = vmatmul.mubr.bf16.gmra.mrb[0].mxu0 %v801
      %v974 = vpop.f32.mrb[0].mxu0
      %v975 = vadd.f32 %v723, %v974
      %v976 = vpop.f32.mrb[0].mxu0
      %v977 = vpop.f32.mrb[0].mxu0
      %v978 = vadd.f32 %v726, %v977
      %v979 = vpop.f32.mrb[0].mxu0
      %980 = vmatprep.mubr.bf16.mxu0 0
      %981 = vmatmul.mubr.bf16.gmra.mrb[0].mxu0 %v803
      %v982 = vpop.f32.mrb[0].mxu0
      %v983 = vadd.f32 %v731, %v982
      %v984 = vpop.f32.mrb[0].mxu0
      %v985 = vpop.f32.mrb[0].mxu0
      %v986 = vadd.f32 %v734, %v985
      %v987 = vpop.f32.mrb[0].mxu0
      %988 = vmatprep.mubr.bf16.mxu0 0
      %989 = vmatmul.mubr.bf16.gmra.mrb[0].mxu0 %v805
      %v990 = vpop.f32.mrb[0].mxu0
      %v991 = vadd.f32 %v739, %v990
      %v992 = vpop.f32.mrb[0].mxu0
      %v993 = vpop.f32.mrb[0].mxu0
      %v994 = vadd.f32 %v742, %v993
      %v995 = vpop.f32.mrb[0].mxu0
      %996 = vmatprep.mubr.bf16.mxu0 0
      %997 = vmatmul.mubr.bf16.gmra.mrb[0].mxu0 %v807
      %v998 = vpop.f32.mrb[0].mxu0
      %v999 = vadd.f32 %v747, %v998
      %v1000 = vpop.f32.mrb[0].mxu0
      %v1001 = vpop.f32.mrb[0].mxu0
      %v1002 = vadd.f32 %v750, %v1001
      %v1003 = vpop.f32.mrb[0].mxu0
      %1004 = vmatprep.mubr.bf16.mxu0 0
      %1005 = vmatmul.mubr.bf16.gmra.mrb[0].mxu0 %v810
      %v1006 = vpop.f32.mrb[0].mxu0
      %v1007 = vadd.f32 %v755, %v1006
      %v1008 = vpop.f32.mrb[0].mxu0
      %v1009 = vpop.f32.mrb[0].mxu0
      %v1010 = vpop.f32.mrb[0].mxu0
      %1011 = vdwg.mxu0
      %v1012 = vld [vmem:[%s165] sm:$0xe]
      %s1013 = scalar_lea.vmem %s1, 16
      %v1014 = vld [vmem:[%s1013] sm:$0xf]
      %v1015 = vld [vmem:[%s1013 + $0x4] sm:$0xf]
      %v1017 = vunpack.c.l.b16 %v1012
      %v1018 = vpack.c.b16 %v261, %v1017
      %vm1019 = vcmask 1046528
      %v1020 = vrot.slane %v1018, 1
      %v1021 = vrot.slane %v302, 1
      %v1022 = vsel %vm1019, %v1020, %v1021
      %v1023 = vrot.slane %v303, 1
      %v1024 = vsel %vm1019, %v1021, %v1023
      %v1025 = vrot.slane %v304, 1
      %v1026 = vsel %vm1019, %v1023, %v1025
      %v1027 = vrot.slane %v305, 1
      %v1028 = vsel %vm1019, %v1025, %v1027
      %v1029 = vrot.slane %v306, 1
      %v1030 = vsel %vm1019, %v1027, %v1029
      %v1031 = vrot.slane %v307, 1
      %v1032 = vsel %vm1019, %v1029, %v1031
      %v1033 = vrot.slane %v308, 1
      %v1034 = vsel %vm1019, %v1031, %v1033
      %v1035 = vrot.slane %v309, 1
      %v1036 = vsel %vm1019, %v1033, %v1035
      %v1037 = vrot.slane %v310, 1
      %v1038 = vsel %vm1019, %v1035, %v1037
      %v1039 = vrot.slane %v311, 1
      %v1040 = vsel %vm1019, %v1037, %v1039
      %v1041 = vrot.slane %v312, 1
      %v1042 = vsel %vm1019, %v1039, %v1041
      %v1043 = vrot.slane %v313, 1
      %v1044 = vsel %vm1019, %v1041, %v1043
      %v1045 = vrot.slane %v314, 1
      %v1046 = vsel %vm1019, %v1043, %v1045
      %v1047 = vrot.slane %v315, 1
      %v1048 = vsel %vm1019, %v1045, %v1047
      %v1049 = vrot.slane %v316, 1
      %v1050 = vsel %vm1019, %v1047, %v1049
      %v1051 = vrot.slane %v317, 1
      %v1052 = vsel %vm1019, %v1049, %v1051
      %v1053 = vrot.slane %v318, 1
      %v1054 = vsel %vm1019, %v1051, %v1053
      %v1055 = vrot.slane %v319, 1
      %v1056 = vsel %vm1019, %v1053, %v1055
      %v1057 = vrot.slane %v320, 1
      %v1058 = vsel %vm1019, %v1055, %v1057
      %v1059 = vrot.slane %v321, 1
      %v1060 = vsel %vm1019, %v1057, %v1059
      %v1063 = vunpack.c.l.b16 %v1014
      %v1064 = vunpack.c.l.b16 %v1015
      %v1065 = vpack.c.b16 %v1064, %v1063
      %v1068 = vsel %vm496, %v1022, 0
      %v1071 = vsel %vm496, %v1024, 0
      %v1074 = vsel %vm496, %v1026, 0
      %v1077 = vsel %vm496, %v1028, 0
      %v1080 = vsel %vm496, %v1030, 0
      %v1083 = vsel %vm496, %v1032, 0
      %v1086 = vsel %vm496, %v1034, 0
      %v1089 = vsel %vm496, %v1036, 0
      %v1092 = vsel %vm496, %v1038, 0
      %v1095 = vsel %vm496, %v1040, 0
      %v1098 = vsel %vm496, %v1042, 0
      %v1101 = vsel %vm496, %v1044, 0
      %v1104 = vsel %vm496, %v1046, 0
      %v1107 = vsel %vm496, %v1048, 0
      %v1110 = vsel %vm496, %v1050, 0
      %v1113 = vsel %vm496, %v1052, 0
      %v1116 = vsel %vm496, %v1054, 0
      %v1119 = vsel %vm496, %v1056, 0
      %v1122 = vsel %vm496, %v1058, 0
      %v1125 = vsel %vm496, %v1060, 0
      %v1128 = vsel %vm496, %v1059, 0
      %1130 = vmatprep.subr.bf16.mxu0 0
      %1131 = vmatpush1.bf16.msra.mxu0 %v1065
      %1132 = vmatprep.subr.bf16.mxu0 0
      %1133 = vmatpush1.bf16.msra.mxu0 0
      %1134 = vmatprep.subr.bf16.mxu0 0
      %1135 = vmatpush1.bf16.msra.mxu0 0
      %1136 = vmatprep.subr.bf16.mxu0 0
      %1137 = vmatpush1.bf16.msra.mxu0 0
      %1138 = vmatprep.subr.bf16.mxu0 0
      %1139 = vmatpush1.bf16.msra.mxu0 0
      %1140 = vmatprep.subr.bf16.mxu0 0
      %1141 = vmatpush1.bf16.msra.mxu0 0
      %1142 = vmatprep.subr.bf16.mxu0 0
      %1143 = vmatpush1.bf16.msra.mxu0 0
      %1144 = vmatprep.subr.bf16.mxu0 0
      %1145 = vmatpush1.bf16.msra.mxu0 0
      %1146 = vmatprep.subr.bf16.mxu0 0
      %1147 = vmatpush1.bf16.msra.mxu0 0
      %1148 = vmatprep.subr.bf16.mxu0 0
      %1149 = vmatpush1.bf16.msra.mxu0 0
      %1150 = vmatprep.subr.bf16.mxu0 0
      %1151 = vmatpush1.bf16.msra.mxu0 0
      %1152 = vmatprep.subr.bf16.mxu0 0
      %1153 = vmatpush1.bf16.msra.mxu0 0
      %1154 = vmatprep.subr.bf16.mxu0 0
      %1155 = vmatpush1.bf16.msra.mxu0 0
      %1156 = vmatprep.subr.bf16.mxu0 0
      %1157 = vmatpush1.bf16.msra.mxu0 0
      %1158 = vmatprep.subr.bf16.mxu0 0
      %1159 = vmatpush1.bf16.msra.mxu0 0
      %1160 = vmatprep.subr.bf16.mxu0 0
      %1161 = vmatpush1.bf16.msra.mxu0 0
      %1162 = vmatprep.mubr.bf16.mxu0 0
      %1163 = vmatmul.mubr.bf16.gmra.mrb[0].mxu0 %v1068
      %v1164 = vpop.f32.mrb[0].mxu0
      %v1165 = vadd.f32 0.0, %v1164
      %v1166 = vpop.f32.mrb[0].mxu0
      %v1167 = vpop.f32.mrb[0].mxu0
      %v1168 = vadd.f32 0.0, %v1167
      %v1169 = vpop.f32.mrb[0].mxu0
      %1170 = vmatprep.mubr.bf16.mxu0 0
      %1171 = vmatmul.mubr.bf16.gmra.mrb[0].mxu0 %v1071
      %v1172 = vpop.f32.mrb[0].mxu0
      %v1173 = vadd.f32 0.0, %v1172
      %v1174 = vpop.f32.mrb[0].mxu0
      %v1175 = vpop.f32.mrb[0].mxu0
      %v1176 = vadd.f32 0.0, %v1175
      %v1177 = vpop.f32.mrb[0].mxu0
      %1178 = vmatprep.mubr.bf16.mxu0 0
      %1179 = vmatmul.mubr.bf16.gmra.mrb[0].mxu0 %v1074
      %v1180 = vpop.f32.mrb[0].mxu0
      %v1181 = vadd.f32 0.0, %v1180
      %v1182 = vpop.f32.mrb[0].mxu0
      %v1183 = vpop.f32.mrb[0].mxu0
      %v1184 = vadd.f32 0.0, %v1183
      %v1185 = vpop.f32.mrb[0].mxu0
      %1186 = vmatprep.mubr.bf16.mxu0 0
      %1187 = vmatmul.mubr.bf16.gmra.mrb[0].mxu0 %v1077
      %v1188 = vpop.f32.mrb[0].mxu0
      %v1189 = vadd.f32 0.0, %v1188
      %v1190 = vpop.f32.mrb[0].mxu0
      %v1191 = vpop.f32.mrb[0].mxu0
      %v1192 = vadd.f32 0.0, %v1191
      %v1193 = vpop.f32.mrb[0].mxu0
      %1194 = vmatprep.mubr.bf16.mxu0 0
      %1195 = vmatmul.mubr.bf16.gmra.mrb[0].mxu0 %v1080
      %v1196 = vpop.f32.mrb[0].mxu0
      %v1197 = vadd.f32 0.0, %v1196
      %v1198 = vpop.f32.mrb[0].mxu0
      %v1199 = vpop.f32.mrb[0].mxu0
      %v1200 = vadd.f32 0.0, %v1199
      %v1201 = vpop.f32.mrb[0].mxu0
      %1202 = vmatprep.mubr.bf16.mxu0 0
      %1203 = vmatmul.mubr.bf16.gmra.mrb[0].mxu0 %v1083
      %v1204 = vpop.f32.mrb[0].mxu0
      %v1205 = vadd.f32 0.0, %v1204
      %v1206 = vpop.f32.mrb[0].mxu0
      %v1207 = vpop.f32.mrb[0].mxu0
      %v1208 = vadd.f32 0.0, %v1207
      %v1209 = vpop.f32.mrb[0].mxu0
      %1210 = vmatprep.mubr.bf16.mxu0 0
      %1211 = vmatmul.mubr.bf16.gmra.mrb[0].mxu0 %v1086
      %v1212 = vpop.f32.mrb[0].mxu0
      %v1213 = vadd.f32 0.0, %v1212
      %v1214 = vpop.f32.mrb[0].mxu0
      %v1215 = vpop.f32.mrb[0].mxu0
      %v1216 = vadd.f32 0.0, %v1215
      %v1217 = vpop.f32.mrb[0].mxu0
      %1218 = vmatprep.mubr.bf16.mxu0 0
      %1219 = vmatmul.mubr.bf16.gmra.mrb[0].mxu0 %v1089
      %v1220 = vpop.f32.mrb[0].mxu0
      %v1221 = vadd.f32 0.0, %v1220
      %v1222 = vpop.f32.mrb[0].mxu0
      %v1223 = vpop.f32.mrb[0].mxu0
      %v1224 = vadd.f32 0.0, %v1223
      %v1225 = vpop.f32.mrb[0].mxu0
      %1226 = vmatprep.mubr.bf16.mxu0 0
      %1227 = vmatmul.mubr.bf16.gmra.mrb[0].mxu0 %v1092
      %v1228 = vpop.f32.mrb[0].mxu0
      %v1229 = vadd.f32 0.0, %v1228
      %v1230 = vpop.f32.mrb[0].mxu0
      %v1231 = vpop.f32.mrb[0].mxu0
      %v1232 = vadd.f32 0.0, %v1231
      %v1233 = vpop.f32.mrb[0].mxu0
      %1234 = vmatprep.mubr.bf16.mxu0 0
      %1235 = vmatmul.mubr.bf16.gmra.mrb[0].mxu0 %v1095
      %v1236 = vpop.f32.mrb[0].mxu0
      %v1237 = vadd.f32 0.0, %v1236
      %v1238 = vpop.f32.mrb[0].mxu0
      %v1239 = vpop.f32.mrb[0].mxu0
      %v1240 = vadd.f32 0.0, %v1239
      %v1241 = vpop.f32.mrb[0].mxu0
      %1242 = vmatprep.mubr.bf16.mxu0 0
      %1243 = vmatmul.mubr.bf16.gmra.mrb[0].mxu0 %v1098
      %v1244 = vpop.f32.mrb[0].mxu0
      %v1245 = vadd.f32 0.0, %v1244
      %v1246 = vpop.f32.mrb[0].mxu0
      %v1247 = vpop.f32.mrb[0].mxu0
      %v1248 = vadd.f32 0.0, %v1247
      %v1249 = vpop.f32.mrb[0].mxu0
      %1250 = vmatprep.mubr.bf16.mxu0 0
      %1251 = vmatmul.mubr.bf16.gmra.mrb[0].mxu0 %v1101
      %v1252 = vpop.f32.mrb[0].mxu0
      %v1253 = vadd.f32 0.0, %v1252
      %v1254 = vpop.f32.mrb[0].mxu0
      %v1255 = vpop.f32.mrb[0].mxu0
      %v1256 = vadd.f32 0.0, %v1255
      %v1257 = vpop.f32.mrb[0].mxu0
      %1258 = vmatprep.mubr.bf16.mxu0 0
      %1259 = vmatmul.mubr.bf16.gmra.mrb[0].mxu0 %v1104
      %v1260 = vpop.f32.mrb[0].mxu0
      %v1261 = vadd.f32 0.0, %v1260
      %v1262 = vpop.f32.mrb[0].mxu0
      %v1263 = vpop.f32.mrb[0].mxu0
      %v1264 = vadd.f32 0.0, %v1263
      %v1265 = vpop.f32.mrb[0].mxu0
      %1266 = vmatprep.mubr.bf16.mxu0 0
      %1267 = vmatmul.mubr.bf16.gmra.mrb[0].mxu0 %v1107
      %v1268 = vpop.f32.mrb[0].mxu0
      %v1269 = vadd.f32 0.0, %v1268
      %v1270 = vpop.f32.mrb[0].mxu0
      %v1271 = vpop.f32.mrb[0].mxu0
      %v1272 = vadd.f32 0.0, %v1271
      %v1273 = vpop.f32.mrb[0].mxu0
      %1274 = vmatprep.mubr.bf16.mxu0 0
      %1275 = vmatmul.mubr.bf16.gmra.mrb[0].mxu0 %v1110
      %v1276 = vpop.f32.mrb[0].mxu0
      %v1277 = vadd.f32 0.0, %v1276
      %v1278 = vpop.f32.mrb[0].mxu0
      %v1279 = vpop.f32.mrb[0].mxu0
      %v1280 = vadd.f32 0.0, %v1279
      %v1281 = vpop.f32.mrb[0].mxu0
      %1282 = vmatprep.mubr.bf16.mxu0 0
      %1283 = vmatmul.mubr.bf16.gmra.mrb[0].mxu0 %v1113
      %v1284 = vpop.f32.mrb[0].mxu0
      %v1285 = vadd.f32 0.0, %v1284
      %v1286 = vpop.f32.mrb[0].mxu0
      %v1287 = vpop.f32.mrb[0].mxu0
      %v1288 = vadd.f32 0.0, %v1287
      %v1289 = vpop.f32.mrb[0].mxu0
      %1290 = vmatprep.mubr.bf16.mxu0 0
      %1291 = vmatmul.mubr.bf16.gmra.mrb[0].mxu0 %v1116
      %v1292 = vpop.f32.mrb[0].mxu0
      %v1293 = vadd.f32 0.0, %v1292
      %v1294 = vpop.f32.mrb[0].mxu0
      %v1295 = vpop.f32.mrb[0].mxu0
      %v1296 = vadd.f32 0.0, %v1295
      %v1297 = vpop.f32.mrb[0].mxu0
      %1298 = vmatprep.mubr.bf16.mxu0 0
      %1299 = vmatmul.mubr.bf16.gmra.mrb[0].mxu0 %v1119
      %v1300 = vpop.f32.mrb[0].mxu0
      %v1301 = vadd.f32 0.0, %v1300
      %v1302 = vpop.f32.mrb[0].mxu0
      %v1303 = vpop.f32.mrb[0].mxu0
      %v1304 = vadd.f32 0.0, %v1303
      %v1305 = vpop.f32.mrb[0].mxu0
      %1306 = vmatprep.mubr.bf16.mxu0 0
      %1307 = vmatmul.mubr.bf16.gmra.mrb[0].mxu0 %v1122
      %v1308 = vpop.f32.mrb[0].mxu0
      %v1309 = vadd.f32 0.0, %v1308
      %v1310 = vpop.f32.mrb[0].mxu0
      %v1311 = vpop.f32.mrb[0].mxu0
      %v1312 = vadd.f32 0.0, %v1311
      %v1313 = vpop.f32.mrb[0].mxu0
      %1314 = vmatprep.mubr.bf16.mxu0 0
      %1315 = vmatmul.mubr.bf16.gmra.mrb[0].mxu0 %v1125
      %v1316 = vpop.f32.mrb[0].mxu0
      %v1317 = vadd.f32 0.0, %v1316
      %v1318 = vpop.f32.mrb[0].mxu0
      %v1319 = vpop.f32.mrb[0].mxu0
      %v1320 = vadd.f32 0.0, %v1319
      %v1321 = vpop.f32.mrb[0].mxu0
      %1322 = vmatprep.mubr.bf16.mxu0 0
      %1323 = vmatmul.mubr.bf16.gmra.mrb[0].mxu0 %v1128
      %v1324 = vpop.f32.mrb[0].mxu0
      %v1325 = vadd.f32 0.0, %v1324
      %v1326 = vpop.f32.mrb[0].mxu0
      %v1327 = vpop.f32.mrb[0].mxu0
      %v1328 = vpop.f32.mrb[0].mxu0
      %1329 = vdwg.mxu0
      %v1330 = vadd.f32 %v847, %v1165
      %v1331 = vadd.f32 %v850, %v1168
      %v1332 = vadd.f32 %v855, %v1173
      %v1333 = vadd.f32 %v858, %v1176
      %v1334 = vadd.f32 %v863, %v1181
      %v1335 = vadd.f32 %v866, %v1184
      %v1336 = vadd.f32 %v871, %v1189
      %v1337 = vadd.f32 %v874, %v1192
      %v1338 = vadd.f32 %v879, %v1197
      %v1339 = vadd.f32 %v882, %v1200
      %v1340 = vadd.f32 %v887, %v1205
      %v1341 = vadd.f32 %v890, %v1208
      %v1342 = vadd.f32 %v895, %v1213
      %v1343 = vadd.f32 %v898, %v1216
      %v1344 = vadd.f32 %v903, %v1221
      %v1345 = vadd.f32 %v906, %v1224
      %v1346 = vadd.f32 %v911, %v1229
      %v1347 = vadd.f32 %v914, %v1232
      %v1348 = vadd.f32 %v919, %v1237
      %v1349 = vadd.f32 %v922, %v1240
      %v1350 = vadd.f32 %v927, %v1245
      %v1351 = vadd.f32 %v930, %v1248
      %v1352 = vadd.f32 %v935, %v1253
      %v1353 = vadd.f32 %v938, %v1256
      %v1354 = vadd.f32 %v943, %v1261
      %v1355 = vadd.f32 %v946, %v1264
      %v1356 = vadd.f32 %v951, %v1269
      %v1357 = vadd.f32 %v954, %v1272
      %v1358 = vadd.f32 %v959, %v1277
      %v1359 = vadd.f32 %v962, %v1280
      %v1360 = vadd.f32 %v967, %v1285
      %v1361 = vadd.f32 %v970, %v1288
      %v1362 = vadd.f32 %v975, %v1293
      %v1363 = vadd.f32 %v978, %v1296
      %v1364 = vadd.f32 %v983, %v1301
      %v1365 = vadd.f32 %v986, %v1304
      %v1366 = vadd.f32 %v991, %v1309
      %v1367 = vadd.f32 %v994, %v1312
      %v1368 = vadd.f32 %v999, %v1317
      %v1369 = vadd.f32 %v1002, %v1320
      %v1370 = vadd.f32 %v1007, %v1325
      %v1371 = vld [vmem:[%s165 + $0x8] sm:$0xe]
      %v1372 = vld [vmem:[%s165 + $0xc] sm:$0xf]
      %v1373 = vld [vmem:[%s165 + $0x10] sm:$0xf]
      %v1374 = vld [vmem:[%s165 + $0x14] sm:$0xf]
      %v1375 = vld [vmem:[%s165 + $0x18] sm:$0xf]
      %v1376 = vld [vmem:[%s165 + $0x1c] sm:$0xf]
      %v1377 = vld [vmem:[%s165 + $0x20] sm:$0xf]
      %v1378 = vld [vmem:[%s165 + $0x24] sm:$0xf]
      %v1379 = vld [vmem:[%s165 + $0x28] sm:$0xf]
      %v1380 = vld [vmem:[%s165 + $0x2c] sm:$0xf]
      %v1381 = vld [vmem:[%s165 + $0x30] sm:$0xf]
      %v1382 = vld [vmem:[%s165 + $0x34] sm:$0xf]
      %v1383 = vld [vmem:[%s165 + $0x38] sm:$0xf]
      %v1384 = vld [vmem:[%s165 + $0x3c] sm:$0xf]
      %v1385 = vld [vmem:[%s165 + $0x40] sm:$0xf]
      %v1386 = vld [vmem:[%s165 + $0x44] sm:$0xf]
      %v1387 = vld [vmem:[%s165 + $0x48] sm:$0xf]
      %v1388 = vld [vmem:[%s165 + $0x4c] sm:$0xf]
      %v1389 = vld [vmem:[%s165 + $0x50] sm:$0xf]
      %v1390 = vld [vmem:[%s165 + $0x54] sm:$0xf]
      %v1391 = vld [vmem:[%s165 + $0x58] sm:$0xf]
      %v1392 = vld [vmem:[%s165 + $0x5c] sm:$0xf]
      %v1393 = vld [vmem:[%s165 + $0x60] sm:$0xf]
      %v1394 = vld [vmem:[%s165 + $0x64] sm:$0xf]
      %v1395 = vld [vmem:[%s165 + $0x68] sm:$0xf]
      %v1396 = vld [vmem:[%s165 + $0x6c] sm:$0xf]
      %v1397 = vld [vmem:[%s165 + $0x70] sm:$0xf]
      %v1398 = vld [vmem:[%s165 + $0x74] sm:$0xf]
      %v1399 = vld [vmem:[%s165 + $0x78] sm:$0xf]
      %v1400 = vld [vmem:[%s165 + $0x7c] sm:$0xf]
      %v1401 = vld [vmem:[%s165 + $0x80] sm:$0xf]
      %v1402 = vld [vmem:[%s165 + $0x84] sm:$0xf]
      %v1403 = vld [vmem:[%s165 + $0x88] sm:$0xf]
      %v1404 = vld [vmem:[%s165 + $0x8c] sm:$0xf]
      %v1405 = vld [vmem:[%s165 + $0x90] sm:$0xf]
      %v1406 = vld [vmem:[%s165 + $0x94] sm:$0xf]
      %v1407 = vld [vmem:[%s165 + $0x98] sm:$0xf]
      %v1408 = vld [vmem:[%s165 + $0x9c] sm:$0xf]
      %v1409 = vld [vmem:[%s165 + $0xa0] sm:$0xf]
      %v1410 = vld [vmem:[%s165 + $0xa4] sm:$0xf]
      %v1411 = vld [vmem:[%s165 + $0xa8] sm:$0x7]
      %s1412 = scalar_lea.vmem %s1, 24
      %v1413 = vld [vmem:[%s1412] sm:$0xf]
      %v1414 = vld [vmem:[%s1412 + $0x4] sm:$0xf]
      %v1456 = vunpack.c.l.b16 %v1371
      %v1457 = vunpack.c.l.b16 %v1372
      %v1458 = vunpack.c.l.b16 %v1373
      %v1459 = vunpack.c.l.b16 %v1374
      %v1460 = vunpack.c.l.b16 %v1375
      %v1461 = vunpack.c.l.b16 %v1376
      %v1462 = vunpack.c.l.b16 %v1377
      %v1463 = vunpack.c.l.b16 %v1378
      %v1464 = vunpack.c.l.b16 %v1379
      %v1465 = vunpack.c.l.b16 %v1380
      %v1466 = vunpack.c.l.b16 %v1381
      %v1467 = vunpack.c.l.b16 %v1382
      %v1468 = vunpack.c.l.b16 %v1383
      %v1469 = vunpack.c.l.b16 %v1384
      %v1470 = vunpack.c.l.b16 %v1385
      %v1471 = vunpack.c.l.b16 %v1386
      %v1472 = vunpack.c.l.b16 %v1387
      %v1473 = vunpack.c.l.b16 %v1388
      %v1474 = vunpack.c.l.b16 %v1389
      %v1475 = vunpack.c.l.b16 %v1390
      %v1476 = vunpack.c.l.b16 %v1391
      %v1477 = vunpack.c.l.b16 %v1392
      %v1478 = vunpack.c.l.b16 %v1393
      %v1479 = vunpack.c.l.b16 %v1394
      %v1480 = vunpack.c.l.b16 %v1395
      %v1481 = vunpack.c.l.b16 %v1396
      %v1482 = vunpack.c.l.b16 %v1397
      %v1483 = vunpack.c.l.b16 %v1398
      %v1484 = vunpack.c.l.b16 %v1399
      %v1485 = vunpack.c.l.b16 %v1400
      %v1486 = vunpack.c.l.b16 %v1401
      %v1487 = vunpack.c.l.b16 %v1402
      %v1488 = vunpack.c.l.b16 %v1403
      %v1489 = vunpack.c.l.b16 %v1404
      %v1490 = vunpack.c.l.b16 %v1405
      %v1491 = vunpack.c.l.b16 %v1406
      %v1492 = vunpack.c.l.b16 %v1407
      %v1493 = vunpack.c.l.b16 %v1408
      %v1494 = vunpack.c.l.b16 %v1409
      %v1495 = vunpack.c.l.b16 %v1410
      %v1496 = vunpack.c.l.b16 %v1411
      %v1497 = vpack.c.b16 %v1457, %v1456
      %v1498 = vpack.c.b16 %v1459, %v1458
      %v1499 = vpack.c.b16 %v1461, %v1460
      %v1500 = vpack.c.b16 %v1463, %v1462
      %v1501 = vpack.c.b16 %v1465, %v1464
      %v1502 = vpack.c.b16 %v1467, %v1466
      %v1503 = vpack.c.b16 %v1469, %v1468
      %v1504 = vpack.c.b16 %v1471, %v1470
      %v1505 = vpack.c.b16 %v1473, %v1472
      %v1506 = vpack.c.b16 %v1475, %v1474
      %v1507 = vpack.c.b16 %v1477, %v1476
      %v1508 = vpack.c.b16 %v1479, %v1478
      %v1509 = vpack.c.b16 %v1481, %v1480
      %v1510 = vpack.c.b16 %v1483, %v1482
      %v1511 = vpack.c.b16 %v1485, %v1484
      %v1512 = vpack.c.b16 %v1487, %v1486
      %v1513 = vpack.c.b16 %v1489, %v1488
      %v1514 = vpack.c.b16 %v1491, %v1490
      %v1515 = vpack.c.b16 %v1493, %v1492
      %v1516 = vpack.c.b16 %v1495, %v1494
      %v1517 = vpack.c.b16 %v1496, %v1496
      %v1518 = vrot.slane %v1497, 1
      %v1519 = vrot.slane %v1498, 1
      %v1520 = vsel %vm1019, %v1518, %v1519
      %v1521 = vrot.slane %v1499, 1
      %v1522 = vsel %vm1019, %v1519, %v1521
      %v1523 = vrot.slane %v1500, 1
      %v1524 = vsel %vm1019, %v1521, %v1523
      %v1525 = vrot.slane %v1501, 1
      %v1526 = vsel %vm1019, %v1523, %v1525
      %v1527 = vrot.slane %v1502, 1
      %v1528 = vsel %vm1019, %v1525, %v1527
      %v1529 = vrot.slane %v1503, 1
      %v1530 = vsel %vm1019, %v1527, %v1529
      %v1531 = vrot.slane %v1504, 1
      %v1532 = vsel %vm1019, %v1529, %v1531
      %v1533 = vrot.slane %v1505, 1
      %v1534 = vsel %vm1019, %v1531, %v1533
      %v1535 = vrot.slane %v1506, 1
      %v1536 = vsel %vm1019, %v1533, %v1535
      %v1537 = vrot.slane %v1507, 1
      %v1538 = vsel %vm1019, %v1535, %v1537
      %v1539 = vrot.slane %v1508, 1
      %v1540 = vsel %vm1019, %v1537, %v1539
      %v1541 = vrot.slane %v1509, 1
      %v1542 = vsel %vm1019, %v1539, %v1541
      %v1543 = vrot.slane %v1510, 1
      %v1544 = vsel %vm1019, %v1541, %v1543
      %v1545 = vrot.slane %v1511, 1
      %v1546 = vsel %vm1019, %v1543, %v1545
      %v1547 = vrot.slane %v1512, 1
      %v1548 = vsel %vm1019, %v1545, %v1547
      %v1549 = vrot.slane %v1513, 1
      %v1550 = vsel %vm1019, %v1547, %v1549
      %v1551 = vrot.slane %v1514, 1
      %v1552 = vsel %vm1019, %v1549, %v1551
      %v1553 = vrot.slane %v1515, 1
      %v1554 = vsel %vm1019, %v1551, %v1553
      %v1555 = vrot.slane %v1516, 1
      %v1556 = vsel %vm1019, %v1553, %v1555
      %v1557 = vrot.slane %v1517, 1
      %v1558 = vsel %vm1019, %v1555, %v1557
      %v1561 = vunpack.c.l.b16 %v1413
      %v1562 = vunpack.c.l.b16 %v1414
      %v1563 = vpack.c.b16 %v1562, %v1561
      %v1566 = vsel %vm496, %v1520, 0
      %v1569 = vsel %vm496, %v1522, 0
      %v1572 = vsel %vm496, %v1524, 0
      %v1575 = vsel %vm496, %v1526, 0
      %v1578 = vsel %vm496, %v1528, 0
      %v1581 = vsel %vm496, %v1530, 0
      %v1584 = vsel %vm496, %v1532, 0
      %v1587 = vsel %vm496, %v1534, 0
      %v1590 = vsel %vm496, %v1536, 0
      %v1593 = vsel %vm496, %v1538, 0
      %v1596 = vsel %vm496, %v1540, 0
      %v1599 = vsel %vm496, %v1542, 0
      %v1602 = vsel %vm496, %v1544, 0
      %v1605 = vsel %vm496, %v1546, 0
      %v1608 = vsel %vm496, %v1548, 0
      %v1611 = vsel %vm496, %v1550, 0
      %v1614 = vsel %vm496, %v1552, 0
      %v1617 = vsel %vm496, %v1554, 0
      %v1620 = vsel %vm496, %v1556, 0
      %v1623 = vsel %vm496, %v1558, 0
      %v1626 = vsel %vm496, %v1557, 0
      %1628 = vmatprep.subr.bf16.mxu0 0
      %1629 = vmatpush1.bf16.msra.mxu0 %v1563
      %1630 = vmatprep.subr.bf16.mxu0 0
      %1631 = vmatpush1.bf16.msra.mxu0 0
      %1632 = vmatprep.subr.bf16.mxu0 0
      %1633 = vmatpush1.bf16.msra.mxu0 0
      %1634 = vmatprep.subr.bf16.mxu0 0
      %1635 = vmatpush1.bf16.msra.mxu0 0
      %1636 = vmatprep.subr.bf16.mxu0 0
      %1637 = vmatpush1.bf16.msra.mxu0 0
      %1638 = vmatprep.subr.bf16.mxu0 0
      %1639 = vmatpush1.bf16.msra.mxu0 0
      %1640 = vmatprep.subr.bf16.mxu0 0
      %1641 = vmatpush1.bf16.msra.mxu0 0
      %1642 = vmatprep.subr.bf16.mxu0 0
      %1643 = vmatpush1.bf16.msra.mxu0 0
      %1644 = vmatprep.subr.bf16.mxu0 0
      %1645 = vmatpush1.bf16.msra.mxu0 0
      %1646 = vmatprep.subr.bf16.mxu0 0
      %1647 = vmatpush1.bf16.msra.mxu0 0
      %1648 = vmatprep.subr.bf16.mxu0 0
      %1649 = vmatpush1.bf16.msra.mxu0 0
      %1650 = vmatprep.subr.bf16.mxu0 0
      %1651 = vmatpush1.bf16.msra.mxu0 0
      %1652 = vmatprep.subr.bf16.mxu0 0
      %1653 = vmatpush1.bf16.msra.mxu0 0
      %1654 = vmatprep.subr.bf16.mxu0 0
      %1655 = vmatpush1.bf16.msra.mxu0 0
      %1656 = vmatprep.subr.bf16.mxu0 0
      %1657 = vmatpush1.bf16.msra.mxu0 0
      %1658 = vmatprep.subr.bf16.mxu0 0
      %1659 = vmatpush1.bf16.msra.mxu0 0
      %1660 = vmatprep.mubr.bf16.mxu0 0
      %1661 = vmatmul.mubr.bf16.gmra.mrb[0].mxu0 %v1566
      %v1662 = vpop.f32.mrb[0].mxu0
      %v1663 = vadd.f32 0.0, %v1662
      %v1664 = vpop.f32.mrb[0].mxu0
      %v1665 = vpop.f32.mrb[0].mxu0
      %v1666 = vadd.f32 0.0, %v1665
      %v1667 = vpop.f32.mrb[0].mxu0
      %1668 = vmatprep.mubr.bf16.mxu0 0
      %1669 = vmatmul.mubr.bf16.gmra.mrb[0].mxu0 %v1569
      %v1670 = vpop.f32.mrb[0].mxu0
      %v1671 = vadd.f32 0.0, %v1670
      %v1672 = vpop.f32.mrb[0].mxu0
      %v1673 = vpop.f32.mrb[0].mxu0
      %v1674 = vadd.f32 0.0, %v1673
      %v1675 = vpop.f32.mrb[0].mxu0
      %1676 = vmatprep.mubr.bf16.mxu0 0
      %1677 = vmatmul.mubr.bf16.gmra.mrb[0].mxu0 %v1572
      %v1678 = vpop.f32.mrb[0].mxu0
      %v1679 = vadd.f32 0.0, %v1678
      %v1680 = vpop.f32.mrb[0].mxu0
      %v1681 = vpop.f32.mrb[0].mxu0
      %v1682 = vadd.f32 0.0, %v1681
      %v1683 = vpop.f32.mrb[0].mxu0
      %1684 = vmatprep.mubr.bf16.mxu0 0
      %1685 = vmatmul.mubr.bf16.gmra.mrb[0].mxu0 %v1575
      %v1686 = vpop.f32.mrb[0].mxu0
      %v1687 = vadd.f32 0.0, %v1686
      %v1688 = vpop.f32.mrb[0].mxu0
      %v1689 = vpop.f32.mrb[0].mxu0
      %v1690 = vadd.f32 0.0, %v1689
      %v1691 = vpop.f32.mrb[0].mxu0
      %1692 = vmatprep.mubr.bf16.mxu0 0
      %1693 = vmatmul.mubr.bf16.gmra.mrb[0].mxu0 %v1578
      %v1694 = vpop.f32.mrb[0].mxu0
      %v1695 = vadd.f32 0.0, %v1694
      %v1696 = vpop.f32.mrb[0].mxu0
      %v1697 = vpop.f32.mrb[0].mxu0
      %v1698 = vadd.f32 0.0, %v1697
      %v1699 = vpop.f32.mrb[0].mxu0
      %1700 = vmatprep.mubr.bf16.mxu0 0
      %1701 = vmatmul.mubr.bf16.gmra.mrb[0].mxu0 %v1581
      %v1702 = vpop.f32.mrb[0].mxu0
      %v1703 = vadd.f32 0.0, %v1702
      %v1704 = vpop.f32.mrb[0].mxu0
      %v1705 = vpop.f32.mrb[0].mxu0
      %v1706 = vadd.f32 0.0, %v1705
      %v1707 = vpop.f32.mrb[0].mxu0
      %1708 = vmatprep.mubr.bf16.mxu0 0
      %1709 = vmatmul.mubr.bf16.gmra.mrb[0].mxu0 %v1584
      %v1710 = vpop.f32.mrb[0].mxu0
      %v1711 = vadd.f32 0.0, %v1710
      %v1712 = vpop.f32.mrb[0].mxu0
      %v1713 = vpop.f32.mrb[0].mxu0
      %v1714 = vadd.f32 0.0, %v1713
      %v1715 = vpop.f32.mrb[0].mxu0
      %1716 = vmatprep.mubr.bf16.mxu0 0
      %1717 = vmatmul.mubr.bf16.gmra.mrb[0].mxu0 %v1587
      %v1718 = vpop.f32.mrb[0].mxu0
      %v1719 = vadd.f32 0.0, %v1718
      %v1720 = vpop.f32.mrb[0].mxu0
      %v1721 = vpop.f32.mrb[0].mxu0
      %v1722 = vadd.f32 0.0, %v1721
      %v1723 = vpop.f32.mrb[0].mxu0
      %1724 = vmatprep.mubr.bf16.mxu0 0
      %1725 = vmatmul.mubr.bf16.gmra.mrb[0].mxu0 %v1590
      %v1726 = vpop.f32.mrb[0].mxu0
      %v1727 = vadd.f32 0.0, %v1726
      %v1728 = vpop.f32.mrb[0].mxu0
      %v1729 = vpop.f32.mrb[0].mxu0
      %v1730 = vadd.f32 0.0, %v1729
      %v1731 = vpop.f32.mrb[0].mxu0
      %1732 = vmatprep.mubr.bf16.mxu0 0
      %1733 = vmatmul.mubr.bf16.gmra.mrb[0].mxu0 %v1593
      %v1734 = vpop.f32.mrb[0].mxu0
      %v1735 = vadd.f32 0.0, %v1734
      %v1736 = vpop.f32.mrb[0].mxu0
      %v1737 = vpop.f32.mrb[0].mxu0
      %v1738 = vadd.f32 0.0, %v1737
      %v1739 = vpop.f32.mrb[0].mxu0
      %1740 = vmatprep.mubr.bf16.mxu0 0
      %1741 = vmatmul.mubr.bf16.gmra.mrb[0].mxu0 %v1596
      %v1742 = vpop.f32.mrb[0].mxu0
      %v1743 = vadd.f32 0.0, %v1742
      %v1744 = vpop.f32.mrb[0].mxu0
      %v1745 = vpop.f32.mrb[0].mxu0
      %v1746 = vadd.f32 0.0, %v1745
      %v1747 = vpop.f32.mrb[0].mxu0
      %1748 = vmatprep.mubr.bf16.mxu0 0
      %1749 = vmatmul.mubr.bf16.gmra.mrb[0].mxu0 %v1599
      %v1750 = vpop.f32.mrb[0].mxu0
      %v1751 = vadd.f32 0.0, %v1750
      %v1752 = vpop.f32.mrb[0].mxu0
      %v1753 = vpop.f32.mrb[0].mxu0
      %v1754 = vadd.f32 0.0, %v1753
      %v1755 = vpop.f32.mrb[0].mxu0
      %1756 = vmatprep.mubr.bf16.mxu0 0
      %1757 = vmatmul.mubr.bf16.gmra.mrb[0].mxu0 %v1602
      %v1758 = vpop.f32.mrb[0].mxu0
      %v1759 = vadd.f32 0.0, %v1758
      %v1760 = vpop.f32.mrb[0].mxu0
      %v1761 = vpop.f32.mrb[0].mxu0
      %v1762 = vadd.f32 0.0, %v1761
      %v1763 = vpop.f32.mrb[0].mxu0
      %1764 = vmatprep.mubr.bf16.mxu0 0
      %1765 = vmatmul.mubr.bf16.gmra.mrb[0].mxu0 %v1605
      %v1766 = vpop.f32.mrb[0].mxu0
      %v1767 = vadd.f32 0.0, %v1766
      %v1768 = vpop.f32.mrb[0].mxu0
      %v1769 = vpop.f32.mrb[0].mxu0
      %v1770 = vadd.f32 0.0, %v1769
      %v1771 = vpop.f32.mrb[0].mxu0
      %1772 = vmatprep.mubr.bf16.mxu0 0
      %1773 = vmatmul.mubr.bf16.gmra.mrb[0].mxu0 %v1608
      %v1774 = vpop.f32.mrb[0].mxu0
      %v1775 = vadd.f32 0.0, %v1774
      %v1776 = vpop.f32.mrb[0].mxu0
      %v1777 = vpop.f32.mrb[0].mxu0
      %v1778 = vadd.f32 0.0, %v1777
      %v1779 = vpop.f32.mrb[0].mxu0
      %1780 = vmatprep.mubr.bf16.mxu0 0
      %1781 = vmatmul.mubr.bf16.gmra.mrb[0].mxu0 %v1611
      %v1782 = vpop.f32.mrb[0].mxu0
      %v1783 = vadd.f32 0.0, %v1782
      %v1784 = vpop.f32.mrb[0].mxu0
      %v1785 = vpop.f32.mrb[0].mxu0
      %v1786 = vadd.f32 0.0, %v1785
      %v1787 = vpop.f32.mrb[0].mxu0
      %1788 = vmatprep.mubr.bf16.mxu0 0
      %1789 = vmatmul.mubr.bf16.gmra.mrb[0].mxu0 %v1614
      %v1790 = vpop.f32.mrb[0].mxu0
      %v1791 = vadd.f32 0.0, %v1790
      %v1792 = vpop.f32.mrb[0].mxu0
      %v1793 = vpop.f32.mrb[0].mxu0
      %v1794 = vadd.f32 0.0, %v1793
      %v1795 = vpop.f32.mrb[0].mxu0
      %1796 = vmatprep.mubr.bf16.mxu0 0
      %1797 = vmatmul.mubr.bf16.gmra.mrb[0].mxu0 %v1617
      %v1798 = vpop.f32.mrb[0].mxu0
      %v1799 = vadd.f32 0.0, %v1798
      %v1800 = vpop.f32.mrb[0].mxu0
      %v1801 = vpop.f32.mrb[0].mxu0
      %v1802 = vadd.f32 0.0, %v1801
      %v1803 = vpop.f32.mrb[0].mxu0
      %1804 = vmatprep.mubr.bf16.mxu0 0
      %1805 = vmatmul.mubr.bf16.gmra.mrb[0].mxu0 %v1620
      %v1806 = vpop.f32.mrb[0].mxu0
      %v1807 = vadd.f32 0.0, %v1806
      %v1808 = vpop.f32.mrb[0].mxu0
      %v1809 = vpop.f32.mrb[0].mxu0
      %v1810 = vadd.f32 0.0, %v1809
      %v1811 = vpop.f32.mrb[0].mxu0
      %1812 = vmatprep.mubr.bf16.mxu0 0
      %1813 = vmatmul.mubr.bf16.gmra.mrb[0].mxu0 %v1623
      %v1814 = vpop.f32.mrb[0].mxu0
      %v1815 = vadd.f32 0.0, %v1814
      %v1816 = vpop.f32.mrb[0].mxu0
      %v1817 = vpop.f32.mrb[0].mxu0
      %v1818 = vadd.f32 0.0, %v1817
      %v1819 = vpop.f32.mrb[0].mxu0
      %1820 = vmatprep.mubr.bf16.mxu0 0
      %1821 = vmatmul.mubr.bf16.gmra.mrb[0].mxu0 %v1626
      %v1822 = vpop.f32.mrb[0].mxu0
      %v1823 = vadd.f32 0.0, %v1822
      %v1824 = vpop.f32.mrb[0].mxu0
      %v1825 = vpop.f32.mrb[0].mxu0
      %v1826 = vpop.f32.mrb[0].mxu0
      %1827 = vdwg.mxu0
      %v1828 = vadd.f32 %v1330, %v1663
      %v1829 = vadd.f32 %v1331, %v1666
      %v1830 = vadd.f32 %v1332, %v1671
      %v1831 = vadd.f32 %v1333, %v1674
      %v1832 = vadd.f32 %v1334, %v1679
      %v1833 = vadd.f32 %v1335, %v1682
      %v1834 = vadd.f32 %v1336, %v1687
      %v1835 = vadd.f32 %v1337, %v1690
      %v1836 = vadd.f32 %v1338, %v1695
      %v1837 = vadd.f32 %v1339, %v1698
      %v1838 = vadd.f32 %v1340, %v1703
      %v1839 = vadd.f32 %v1341, %v1706
      %v1840 = vadd.f32 %v1342, %v1711
      %v1841 = vadd.f32 %v1343, %v1714
      %v1842 = vadd.f32 %v1344, %v1719
      %v1843 = vadd.f32 %v1345, %v1722
      %v1844 = vadd.f32 %v1346, %v1727
      %v1845 = vadd.f32 %v1347, %v1730
      %v1846 = vadd.f32 %v1348, %v1735
      %v1847 = vadd.f32 %v1349, %v1738
      %v1848 = vadd.f32 %v1350, %v1743
      %v1849 = vadd.f32 %v1351, %v1746
      %v1850 = vadd.f32 %v1352, %v1751
      %v1851 = vadd.f32 %v1353, %v1754
      %v1852 = vadd.f32 %v1354, %v1759
      %v1853 = vadd.f32 %v1355, %v1762
      %v1854 = vadd.f32 %v1356, %v1767
      %v1855 = vadd.f32 %v1357, %v1770
      %v1856 = vadd.f32 %v1358, %v1775
      %v1857 = vadd.f32 %v1359, %v1778
      %v1858 = vadd.f32 %v1360, %v1783
      %v1859 = vadd.f32 %v1361, %v1786
      %v1860 = vadd.f32 %v1362, %v1791
      %v1861 = vadd.f32 %v1363, %v1794
      %v1862 = vadd.f32 %v1364, %v1799
      %v1863 = vadd.f32 %v1365, %v1802
      %v1864 = vadd.f32 %v1366, %v1807
      %v1865 = vadd.f32 %v1367, %v1810
      %v1866 = vadd.f32 %v1368, %v1815
      %v1867 = vadd.f32 %v1369, %v1818
      %v1868 = vadd.f32 %v1370, %v1823
      %v1869 = vld [vmem:[%s165 + $0xa8] sm:$0xf]
      %s1870 = scalar_lea.vmem %s1, 32
      %v1871 = vld [vmem:[%s1870] sm:$0xf]
      %v1872 = vld [vmem:[%s1870 + $0x4] sm:$0xf]
      %v1874 = vunpack.c.l.b16 %v1869
      %v1875 = vpack.c.b16 %v1874, %v1874
      %vm1876 = vsmask.f32 6400
      %v1878 = vshrl.u32 %v1497, 16
      %v1880 = vrot.slane %v1878, 1
      %v1881 = vshll.u32 %v1497, 16
      %v1883 = vrot.slane %v1881, 2
      %v1884 = vor.u32 %v1880, %v1883
      %v1886 = vshrl.u32 %v1498, 16
      %v1888 = vrot.slane %v1886, 1
      %v1889 = vshll.u32 %v1498, 16
      %v1891 = vrot.slane %v1889, 2
      %v1892 = vor.u32 %v1888, %v1891
      %v1893 = vsel %vm1876, %v1884, %v1892
      %v1895 = vshrl.u32 %v1499, 16
      %v1897 = vrot.slane %v1895, 1
      %v1898 = vshll.u32 %v1499, 16
      %v1900 = vrot.slane %v1898, 2
      %v1901 = vor.u32 %v1897, %v1900
      %v1902 = vsel %vm1876, %v1892, %v1901
      %v1904 = vshrl.u32 %v1500, 16
      %v1906 = vrot.slane %v1904, 1
      %v1907 = vshll.u32 %v1500, 16
      %v1909 = vrot.slane %v1907, 2
      %v1910 = vor.u32 %v1906, %v1909
      %v1911 = vsel %vm1876, %v1901, %v1910
      %v1913 = vshrl.u32 %v1501, 16
      %v1915 = vrot.slane %v1913, 1
      %v1916 = vshll.u32 %v1501, 16
      %v1918 = vrot.slane %v1916, 2
      %v1919 = vor.u32 %v1915, %v1918
      %v1920 = vsel %vm1876, %v1910, %v1919
      %v1922 = vshrl.u32 %v1502, 16
      %v1924 = vrot.slane %v1922, 1
      %v1925 = vshll.u32 %v1502, 16
      %v1927 = vrot.slane %v1925, 2
      %v1928 = vor.u32 %v1924, %v1927
      %v1929 = vsel %vm1876, %v1919, %v1928
      %v1931 = vshrl.u32 %v1503, 16
      %v1933 = vrot.slane %v1931, 1
      %v1934 = vshll.u32 %v1503, 16
      %v1936 = vrot.slane %v1934, 2
      %v1937 = vor.u32 %v1933, %v1936
      %v1938 = vsel %vm1876, %v1928, %v1937
      %v1940 = vshrl.u32 %v1504, 16
      %v1942 = vrot.slane %v1940, 1
      %v1943 = vshll.u32 %v1504, 16
      %v1945 = vrot.slane %v1943, 2
      %v1946 = vor.u32 %v1942, %v1945
      %v1947 = vsel %vm1876, %v1937, %v1946
      %v1949 = vshrl.u32 %v1505, 16
      %v1951 = vrot.slane %v1949, 1
      %v1952 = vshll.u32 %v1505, 16
      %v1954 = vrot.slane %v1952, 2
      %v1955 = vor.u32 %v1951, %v1954
      %v1956 = vsel %vm1876, %v1946, %v1955
      %v1958 = vshrl.u32 %v1506, 16
      %v1960 = vrot.slane %v1958, 1
      %v1961 = vshll.u32 %v1506, 16
      %v1963 = vrot.slane %v1961, 2
      %v1964 = vor.u32 %v1960, %v1963
      %v1965 = vsel %vm1876, %v1955, %v1964
      %v1967 = vshrl.u32 %v1507, 16
      %v1969 = vrot.slane %v1967, 1
      %v1970 = vshll.u32 %v1507, 16
      %v1972 = vrot.slane %v1970, 2
      %v1973 = vor.u32 %v1969, %v1972
      %v1974 = vsel %vm1876, %v1964, %v1973
      %v1976 = vshrl.u32 %v1508, 16
      %v1978 = vrot.slane %v1976, 1
      %v1979 = vshll.u32 %v1508, 16
      %v1981 = vrot.slane %v1979, 2
      %v1982 = vor.u32 %v1978, %v1981
      %v1983 = vsel %vm1876, %v1973, %v1982
      %v1985 = vshrl.u32 %v1509, 16
      %v1987 = vrot.slane %v1985, 1
      %v1988 = vshll.u32 %v1509, 16
      %v1990 = vrot.slane %v1988, 2
      %v1991 = vor.u32 %v1987, %v1990
      %v1992 = vsel %vm1876, %v1982, %v1991
      %v1994 = vshrl.u32 %v1510, 16
      %v1996 = vrot.slane %v1994, 1
      %v1997 = vshll.u32 %v1510, 16
      %v1999 = vrot.slane %v1997, 2
      %v2000 = vor.u32 %v1996, %v1999
      %v2001 = vsel %vm1876, %v1991, %v2000
      %v2003 = vshrl.u32 %v1511, 16
      %v2005 = vrot.slane %v2003, 1
      %v2006 = vshll.u32 %v1511, 16
      %v2008 = vrot.slane %v2006, 2
      %v2009 = vor.u32 %v2005, %v2008
      %v2010 = vsel %vm1876, %v2000, %v2009
      %v2012 = vshrl.u32 %v1512, 16
      %v2014 = vrot.slane %v2012, 1
      %v2015 = vshll.u32 %v1512, 16
      %v2017 = vrot.slane %v2015, 2
      %v2018 = vor.u32 %v2014, %v2017
      %v2019 = vsel %vm1876, %v2009, %v2018
      %v2021 = vshrl.u32 %v1513, 16
      %v2023 = vrot.slane %v2021, 1
      %v2024 = vshll.u32 %v1513, 16
      %v2026 = vrot.slane %v2024, 2
      %v2027 = vor.u32 %v2023, %v2026
      %v2028 = vsel %vm1876, %v2018, %v2027
      %v2030 = vshrl.u32 %v1514, 16
      %v2032 = vrot.slane %v2030, 1
      %v2033 = vshll.u32 %v1514, 16
      %v2035 = vrot.slane %v2033, 2
      %v2036 = vor.u32 %v2032, %v2035
      %v2037 = vsel %vm1876, %v2027, %v2036
      %v2039 = vshrl.u32 %v1515, 16
      %v2041 = vrot.slane %v2039, 1
      %v2042 = vshll.u32 %v1515, 16
      %v2044 = vrot.slane %v2042, 2
      %v2045 = vor.u32 %v2041, %v2044
      %v2046 = vsel %vm1876, %v2036, %v2045
      %v2048 = vshrl.u32 %v1516, 16
      %v2050 = vrot.slane %v2048, 1
      %v2051 = vshll.u32 %v1516, 16
      %v2053 = vrot.slane %v2051, 2
      %v2054 = vor.u32 %v2050, %v2053
      %v2055 = vsel %vm1876, %v2045, %v2054
      %v2057 = vshrl.u32 %v1875, 16
      %v2059 = vrot.slane %v2057, 1
      %v2060 = vshll.u32 %v1875, 16
      %v2062 = vrot.slane %v2060, 2
      %v2063 = vor.u32 %v2059, %v2062
      %v2064 = vsel %vm1876, %v2054, %v2063
      %v2067 = vunpack.c.l.b16 %v1871
      %v2068 = vunpack.c.l.b16 %v1872
      %v2069 = vpack.c.b16 %v2068, %v2067
      %v2072 = vsel %vm496, %v1893, 0
      %v2075 = vsel %vm496, %v1902, 0
      %v2078 = vsel %vm496, %v1911, 0
      %v2081 = vsel %vm496, %v1920, 0
      %v2084 = vsel %vm496, %v1929, 0
      %v2087 = vsel %vm496, %v1938, 0
      %v2090 = vsel %vm496, %v1947, 0
      %v2093 = vsel %vm496, %v1956, 0
      %v2096 = vsel %vm496, %v1965, 0
      %v2099 = vsel %vm496, %v1974, 0
      %v2102 = vsel %vm496, %v1983, 0
      %v2105 = vsel %vm496, %v1992, 0
      %v2108 = vsel %vm496, %v2001, 0
      %v2111 = vsel %vm496, %v2010, 0
      %v2114 = vsel %vm496, %v2019, 0
      %v2117 = vsel %vm496, %v2028, 0
      %v2120 = vsel %vm496, %v2037, 0
      %v2123 = vsel %vm496, %v2046, 0
      %v2126 = vsel %vm496, %v2055, 0
      %v2129 = vsel %vm496, %v2064, 0
      %v2132 = vsel %vm496, %v2063, 0
      %2134 = vmatprep.subr.bf16.mxu0 0
      %2135 = vmatpush1.bf16.msra.mxu0 %v2069
      %2136 = vmatprep.subr.bf16.mxu0 0
      %2137 = vmatpush1.bf16.msra.mxu0 0
      %2138 = vmatprep.subr.bf16.mxu0 0
      %2139 = vmatpush1.bf16.msra.mxu0 0
      %2140 = vmatprep.subr.bf16.mxu0 0
      %2141 = vmatpush1.bf16.msra.mxu0 0
      %2142 = vmatprep.subr.bf16.mxu0 0
      %2143 = vmatpush1.bf16.msra.mxu0 0
      %2144 = vmatprep.subr.bf16.mxu0 0
      %2145 = vmatpush1.bf16.msra.mxu0 0
      %2146 = vmatprep.subr.bf16.mxu0 0
      %2147 = vmatpush1.bf16.msra.mxu0 0
      %2148 = vmatprep.subr.bf16.mxu0 0
      %2149 = vmatpush1.bf16.msra.mxu0 0
      %2150 = vmatprep.subr.bf16.mxu0 0
      %2151 = vmatpush1.bf16.msra.mxu0 0
      %2152 = vmatprep.subr.bf16.mxu0 0
      %2153 = vmatpush1.bf16.msra.mxu0 0
      %2154 = vmatprep.subr.bf16.mxu0 0
      %2155 = vmatpush1.bf16.msra.mxu0 0
      %2156 = vmatprep.subr.bf16.mxu0 0
      %2157 = vmatpush1.bf16.msra.mxu0 0
      %2158 = vmatprep.subr.bf16.mxu0 0
      %2159 = vmatpush1.bf16.msra.mxu0 0
      %2160 = vmatprep.subr.bf16.mxu0 0
      %2161 = vmatpush1.bf16.msra.mxu0 0
      %2162 = vmatprep.subr.bf16.mxu0 0
      %2163 = vmatpush1.bf16.msra.mxu0 0
      %2164 = vmatprep.subr.bf16.mxu0 0
      %2165 = vmatpush1.bf16.msra.mxu0 0
      %2166 = vmatprep.mubr.bf16.mxu0 0
      %2167 = vmatmul.mubr.bf16.gmra.mrb[0].mxu0 %v2072
      %v2168 = vpop.f32.mrb[0].mxu0
      %v2169 = vadd.f32 0.0, %v2168
      %v2170 = vpop.f32.mrb[0].mxu0
      %v2171 = vpop.f32.mrb[0].mxu0
      %v2172 = vadd.f32 0.0, %v2171
      %v2173 = vpop.f32.mrb[0].mxu0
      %2174 = vmatprep.mubr.bf16.mxu0 0
      %2175 = vmatmul.mubr.bf16.gmra.mrb[0].mxu0 %v2075
      %v2176 = vpop.f32.mrb[0].mxu0
      %v2177 = vadd.f32 0.0, %v2176
      %v2178 = vpop.f32.mrb[0].mxu0
      %v2179 = vpop.f32.mrb[0].mxu0
      %v2180 = vadd.f32 0.0, %v2179
      %v2181 = vpop.f32.mrb[0].mxu0
      %2182 = vmatprep.mubr.bf16.mxu0 0
      %2183 = vmatmul.mubr.bf16.gmra.mrb[0].mxu0 %v2078
      %v2184 = vpop.f32.mrb[0].mxu0
      %v2185 = vadd.f32 0.0, %v2184
      %v2186 = vpop.f32.mrb[0].mxu0
      %v2187 = vpop.f32.mrb[0].mxu0
      %v2188 = vadd.f32 0.0, %v2187
      %v2189 = vpop.f32.mrb[0].mxu0
      %2190 = vmatprep.mubr.bf16.mxu0 0
      %2191 = vmatmul.mubr.bf16.gmra.mrb[0].mxu0 %v2081
      %v2192 = vpop.f32.mrb[0].mxu0
      %v2193 = vadd.f32 0.0, %v2192
      %v2194 = vpop.f32.mrb[0].mxu0
      %v2195 = vpop.f32.mrb[0].mxu0
      %v2196 = vadd.f32 0.0, %v2195
      %v2197 = vpop.f32.mrb[0].mxu0
      %2198 = vmatprep.mubr.bf16.mxu0 0
      %2199 = vmatmul.mubr.bf16.gmra.mrb[0].mxu0 %v2084
      %v2200 = vpop.f32.mrb[0].mxu0
      %v2201 = vadd.f32 0.0, %v2200
      %v2202 = vpop.f32.mrb[0].mxu0
      %v2203 = vpop.f32.mrb[0].mxu0
      %v2204 = vadd.f32 0.0, %v2203
      %v2205 = vpop.f32.mrb[0].mxu0
      %2206 = vmatprep.mubr.bf16.mxu0 0
      %2207 = vmatmul.mubr.bf16.gmra.mrb[0].mxu0 %v2087
      %v2208 = vpop.f32.mrb[0].mxu0
      %v2209 = vadd.f32 0.0, %v2208
      %v2210 = vpop.f32.mrb[0].mxu0
      %v2211 = vpop.f32.mrb[0].mxu0
      %v2212 = vadd.f32 0.0, %v2211
      %v2213 = vpop.f32.mrb[0].mxu0
      %2214 = vmatprep.mubr.bf16.mxu0 0
      %2215 = vmatmul.mubr.bf16.gmra.mrb[0].mxu0 %v2090
      %v2216 = vpop.f32.mrb[0].mxu0
      %v2217 = vadd.f32 0.0, %v2216
      %v2218 = vpop.f32.mrb[0].mxu0
      %v2219 = vpop.f32.mrb[0].mxu0
      %v2220 = vadd.f32 0.0, %v2219
      %v2221 = vpop.f32.mrb[0].mxu0
      %2222 = vmatprep.mubr.bf16.mxu0 0
      %2223 = vmatmul.mubr.bf16.gmra.mrb[0].mxu0 %v2093
      %v2224 = vpop.f32.mrb[0].mxu0
      %v2225 = vadd.f32 0.0, %v2224
      %v2226 = vpop.f32.mrb[0].mxu0
      %v2227 = vpop.f32.mrb[0].mxu0
      %v2228 = vadd.f32 0.0, %v2227
      %v2229 = vpop.f32.mrb[0].mxu0
      %2230 = vmatprep.mubr.bf16.mxu0 0
      %2231 = vmatmul.mubr.bf16.gmra.mrb[0].mxu0 %v2096
      %v2232 = vpop.f32.mrb[0].mxu0
      %v2233 = vadd.f32 0.0, %v2232
      %v2234 = vpop.f32.mrb[0].mxu0
      %v2235 = vpop.f32.mrb[0].mxu0
      %v2236 = vadd.f32 0.0, %v2235
      %v2237 = vpop.f32.mrb[0].mxu0
      %2238 = vmatprep.mubr.bf16.mxu0 0
      %2239 = vmatmul.mubr.bf16.gmra.mrb[0].mxu0 %v2099
      %v2240 = vpop.f32.mrb[0].mxu0
      %v2241 = vadd.f32 0.0, %v2240
      %v2242 = vpop.f32.mrb[0].mxu0
      %v2243 = vpop.f32.mrb[0].mxu0
      %v2244 = vadd.f32 0.0, %v2243
      %v2245 = vpop.f32.mrb[0].mxu0
      %2246 = vmatprep.mubr.bf16.mxu0 0
      %2247 = vmatmul.mubr.bf16.gmra.mrb[0].mxu0 %v2102
      %v2248 = vpop.f32.mrb[0].mxu0
      %v2249 = vadd.f32 0.0, %v2248
      %v2250 = vpop.f32.mrb[0].mxu0
      %v2251 = vpop.f32.mrb[0].mxu0
      %v2252 = vadd.f32 0.0, %v2251
      %v2253 = vpop.f32.mrb[0].mxu0
      %2254 = vmatprep.mubr.bf16.mxu0 0
      %2255 = vmatmul.mubr.bf16.gmra.mrb[0].mxu0 %v2105
      %v2256 = vpop.f32.mrb[0].mxu0
      %v2257 = vadd.f32 0.0, %v2256
      %v2258 = vpop.f32.mrb[0].mxu0
      %v2259 = vpop.f32.mrb[0].mxu0
      %v2260 = vadd.f32 0.0, %v2259
      %v2261 = vpop.f32.mrb[0].mxu0
      %2262 = vmatprep.mubr.bf16.mxu0 0
      %2263 = vmatmul.mubr.bf16.gmra.mrb[0].mxu0 %v2108
      %v2264 = vpop.f32.mrb[0].mxu0
      %v2265 = vadd.f32 0.0, %v2264
      %v2266 = vpop.f32.mrb[0].mxu0
      %v2267 = vpop.f32.mrb[0].mxu0
      %v2268 = vadd.f32 0.0, %v2267
      %v2269 = vpop.f32.mrb[0].mxu0
      %2270 = vmatprep.mubr.bf16.mxu0 0
      %2271 = vmatmul.mubr.bf16.gmra.mrb[0].mxu0 %v2111
      %v2272 = vpop.f32.mrb[0].mxu0
      %v2273 = vadd.f32 0.0, %v2272
      %v2274 = vpop.f32.mrb[0].mxu0
      %v2275 = vpop.f32.mrb[0].mxu0
      %v2276 = vadd.f32 0.0, %v2275
      %v2277 = vpop.f32.mrb[0].mxu0
      %2278 = vmatprep.mubr.bf16.mxu0 0
      %2279 = vmatmul.mubr.bf16.gmra.mrb[0].mxu0 %v2114
      %v2280 = vpop.f32.mrb[0].mxu0
      %v2281 = vadd.f32 0.0, %v2280
      %v2282 = vpop.f32.mrb[0].mxu0
      %v2283 = vpop.f32.mrb[0].mxu0
      %v2284 = vadd.f32 0.0, %v2283
      %v2285 = vpop.f32.mrb[0].mxu0
      %2286 = vmatprep.mubr.bf16.mxu0 0
      %2287 = vmatmul.mubr.bf16.gmra.mrb[0].mxu0 %v2117
      %v2288 = vpop.f32.mrb[0].mxu0
      %v2289 = vadd.f32 0.0, %v2288
      %v2290 = vpop.f32.mrb[0].mxu0
      %v2291 = vpop.f32.mrb[0].mxu0
      %v2292 = vadd.f32 0.0, %v2291
      %v2293 = vpop.f32.mrb[0].mxu0
      %2294 = vmatprep.mubr.bf16.mxu0 0
      %2295 = vmatmul.mubr.bf16.gmra.mrb[0].mxu0 %v2120
      %v2296 = vpop.f32.mrb[0].mxu0
      %v2297 = vadd.f32 0.0, %v2296
      %v2298 = vpop.f32.mrb[0].mxu0
      %v2299 = vpop.f32.mrb[0].mxu0
      %v2300 = vadd.f32 0.0, %v2299
      %v2301 = vpop.f32.mrb[0].mxu0
      %2302 = vmatprep.mubr.bf16.mxu0 0
      %2303 = vmatmul.mubr.bf16.gmra.mrb[0].mxu0 %v2123
      %v2304 = vpop.f32.mrb[0].mxu0
      %v2305 = vadd.f32 0.0, %v2304
      %v2306 = vpop.f32.mrb[0].mxu0
      %v2307 = vpop.f32.mrb[0].mxu0
      %v2308 = vadd.f32 0.0, %v2307
      %v2309 = vpop.f32.mrb[0].mxu0
      %2310 = vmatprep.mubr.bf16.mxu0 0
      %2311 = vmatmul.mubr.bf16.gmra.mrb[0].mxu0 %v2126
      %v2312 = vpop.f32.mrb[0].mxu0
      %v2313 = vadd.f32 0.0, %v2312
      %v2314 = vpop.f32.mrb[0].mxu0
      %v2315 = vpop.f32.mrb[0].mxu0
      %v2316 = vadd.f32 0.0, %v2315
      %v2317 = vpop.f32.mrb[0].mxu0
      %2318 = vmatprep.mubr.bf16.mxu0 0
      %2319 = vmatmul.mubr.bf16.gmra.mrb[0].mxu0 %v2129
      %v2320 = vpop.f32.mrb[0].mxu0
      %v2321 = vadd.f32 0.0, %v2320
      %v2322 = vpop.f32.mrb[0].mxu0
      %v2323 = vpop.f32.mrb[0].mxu0
      %v2324 = vadd.f32 0.0, %v2323
      %v2325 = vpop.f32.mrb[0].mxu0
      %2326 = vmatprep.mubr.bf16.mxu0 0
      %2327 = vmatmul.mubr.bf16.gmra.mrb[0].mxu0 %v2132
      %v2328 = vpop.f32.mrb[0].mxu0
      %v2329 = vadd.f32 0.0, %v2328
      %v2330 = vpop.f32.mrb[0].mxu0
      %v2331 = vpop.f32.mrb[0].mxu0
      %v2332 = vpop.f32.mrb[0].mxu0
      %2333 = vdwg.mxu0
      %v2334 = vadd.f32 %v1828, %v2169
      %v2335 = vadd.f32 %v1829, %v2172
      %v2336 = vadd.f32 %v1830, %v2177
      %v2337 = vadd.f32 %v1831, %v2180
      %v2338 = vadd.f32 %v1832, %v2185
      %v2339 = vadd.f32 %v1833, %v2188
      %v2340 = vadd.f32 %v1834, %v2193
      %v2341 = vadd.f32 %v1835, %v2196
      %v2342 = vadd.f32 %v1836, %v2201
      %v2343 = vadd.f32 %v1837, %v2204
      %v2344 = vadd.f32 %v1838, %v2209
      %v2345 = vadd.f32 %v1839, %v2212
      %v2346 = vadd.f32 %v1840, %v2217
      %v2347 = vadd.f32 %v1841, %v2220
      %v2348 = vadd.f32 %v1842, %v2225
      %v2349 = vadd.f32 %v1843, %v2228
      %v2350 = vadd.f32 %v1844, %v2233
      %v2351 = vadd.f32 %v1845, %v2236
      %v2352 = vadd.f32 %v1846, %v2241
      %v2353 = vadd.f32 %v1847, %v2244
      %v2354 = vadd.f32 %v1848, %v2249
      %v2355 = vadd.f32 %v1849, %v2252
      %v2356 = vadd.f32 %v1850, %v2257
      %v2357 = vadd.f32 %v1851, %v2260
      %v2358 = vadd.f32 %v1852, %v2265
      %v2359 = vadd.f32 %v1853, %v2268
      %v2360 = vadd.f32 %v1854, %v2273
      %v2361 = vadd.f32 %v1855, %v2276
      %v2362 = vadd.f32 %v1856, %v2281
      %v2363 = vadd.f32 %v1857, %v2284
      %v2364 = vadd.f32 %v1858, %v2289
      %v2365 = vadd.f32 %v1859, %v2292
      %v2366 = vadd.f32 %v1860, %v2297
      %v2367 = vadd.f32 %v1861, %v2300
      %v2368 = vadd.f32 %v1862, %v2305
      %v2369 = vadd.f32 %v1863, %v2308
      %v2370 = vadd.f32 %v1864, %v2313
      %v2371 = vadd.f32 %v1865, %v2316
      %v2372 = vadd.f32 %v1866, %v2321
      %v2373 = vadd.f32 %v1867, %v2324
      %v2374 = vadd.f32 %v1868, %v2329
      %v2375 = vld [vmem:[%s165 + $0x8] sm:$0xc]
      %s2376 = scalar_lea.vmem %s1, 40
      %v2377 = vld [vmem:[%s2376] sm:$0xf]
      %v2378 = vld [vmem:[%s2376 + $0x4] sm:$0xf]
      %v2380 = vunpack.c.l.b16 %v2375
      %v2381 = vpack.c.b16 %v1457, %v2380
      %vm2382 = vcmask 1045504
      %v2383 = vrot.slane %v2381, 2
      %v2384 = vrot.slane %v1498, 2
      %v2385 = vsel %vm2382, %v2383, %v2384
      %v2386 = vrot.slane %v1499, 2
      %v2387 = vsel %vm2382, %v2384, %v2386
      %v2388 = vrot.slane %v1500, 2
      %v2389 = vsel %vm2382, %v2386, %v2388
      %v2390 = vrot.slane %v1501, 2
      %v2391 = vsel %vm2382, %v2388, %v2390
      %v2392 = vrot.slane %v1502, 2
      %v2393 = vsel %vm2382, %v2390, %v2392
      %v2394 = vrot.slane %v1503, 2
      %v2395 = vsel %vm2382, %v2392, %v2394
      %v2396 = vrot.slane %v1504, 2
      %v2397 = vsel %vm2382, %v2394, %v2396
      %v2398 = vrot.slane %v1505, 2
      %v2399 = vsel %vm2382, %v2396, %v2398
      %v2400 = vrot.slane %v1506, 2
      %v2401 = vsel %vm2382, %v2398, %v2400
      %v2402 = vrot.slane %v1507, 2
      %v2403 = vsel %vm2382, %v2400, %v2402
      %v2404 = vrot.slane %v1508, 2
      %v2405 = vsel %vm2382, %v2402, %v2404
      %v2406 = vrot.slane %v1509, 2
      %v2407 = vsel %vm2382, %v2404, %v2406
      %v2408 = vrot.slane %v1510, 2
      %v2409 = vsel %vm2382, %v2406, %v2408
      %v2410 = vrot.slane %v1511, 2
      %v2411 = vsel %vm2382, %v2408, %v2410
      %v2412 = vrot.slane %v1512, 2
      %v2413 = vsel %vm2382, %v2410, %v2412
      %v2414 = vrot.slane %v1513, 2
      %v2415 = vsel %vm2382, %v2412, %v2414
      %v2416 = vrot.slane %v1514, 2
      %v2417 = vsel %vm2382, %v2414, %v2416
      %v2418 = vrot.slane %v1515, 2
      %v2419 = vsel %vm2382, %v2416, %v2418
      %v2420 = vrot.slane %v1516, 2
      %v2421 = vsel %vm2382, %v2418, %v2420
      %v2422 = vrot.slane %v1875, 2
      %v2423 = vsel %vm2382, %v2420, %v2422
      %v2426 = vunpack.c.l.b16 %v2377
      %v2427 = vunpack.c.l.b16 %v2378
      %v2428 = vpack.c.b16 %v2427, %v2426
      %v2431 = vsel %vm496, %v2385, 0
      %v2434 = vsel %vm496, %v2387, 0
      %v2437 = vsel %vm496, %v2389, 0
      %v2440 = vsel %vm496, %v2391, 0
      %v2443 = vsel %vm496, %v2393, 0
      %v2446 = vsel %vm496, %v2395, 0
      %v2449 = vsel %vm496, %v2397, 0
      %v2452 = vsel %vm496, %v2399, 0
      %v2455 = vsel %vm496, %v2401, 0
      %v2458 = vsel %vm496, %v2403, 0
      %v2461 = vsel %vm496, %v2405, 0
      %v2464 = vsel %vm496, %v2407, 0
      %v2467 = vsel %vm496, %v2409, 0
      %v2470 = vsel %vm496, %v2411, 0
      %v2473 = vsel %vm496, %v2413, 0
      %v2476 = vsel %vm496, %v2415, 0
      %v2479 = vsel %vm496, %v2417, 0
      %v2482 = vsel %vm496, %v2419, 0
      %v2485 = vsel %vm496, %v2421, 0
      %v2488 = vsel %vm496, %v2423, 0
      %v2491 = vsel %vm496, %v2422, 0
      %2493 = vmatprep.subr.bf16.mxu0 0
      %2494 = vmatpush1.bf16.msra.mxu0 %v2428
      %2495 = vmatprep.subr.bf16.mxu0 0
      %2496 = vmatpush1.bf16.msra.mxu0 0
      %2497 = vmatprep.subr.bf16.mxu0 0
      %2498 = vmatpush1.bf16.msra.mxu0 0
      %2499 = vmatprep.subr.bf16.mxu0 0
      %2500 = vmatpush1.bf16.msra.mxu0 0
      %2501 = vmatprep.subr.bf16.mxu0 0
      %2502 = vmatpush1.bf16.msra.mxu0 0
      %2503 = vmatprep.subr.bf16.mxu0 0
      %2504 = vmatpush1.bf16.msra.mxu0 0
      %2505 = vmatprep.subr.bf16.mxu0 0
      %2506 = vmatpush1.bf16.msra.mxu0 0
      %2507 = vmatprep.subr.bf16.mxu0 0
      %2508 = vmatpush1.bf16.msra.mxu0 0
      %2509 = vmatprep.subr.bf16.mxu0 0
      %2510 = vmatpush1.bf16.msra.mxu0 0
      %2511 = vmatprep.subr.bf16.mxu0 0
      %2512 = vmatpush1.bf16.msra.mxu0 0
      %2513 = vmatprep.subr.bf16.mxu0 0
      %2514 = vmatpush1.bf16.msra.mxu0 0
      %2515 = vmatprep.subr.bf16.mxu0 0
      %2516 = vmatpush1.bf16.msra.mxu0 0
      %2517 = vmatprep.subr.bf16.mxu0 0
      %2518 = vmatpush1.bf16.msra.mxu0 0
      %2519 = vmatprep.subr.bf16.mxu0 0
      %2520 = vmatpush1.bf16.msra.mxu0 0
      %2521 = vmatprep.subr.bf16.mxu0 0
      %2522 = vmatpush1.bf16.msra.mxu0 0
      %2523 = vmatprep.subr.bf16.mxu0 0
      %2524 = vmatpush1.bf16.msra.mxu0 0
      %2525 = vmatprep.mubr.bf16.mxu0 0
      %2526 = vmatmul.mubr.bf16.gmra.mrb[0].mxu0 %v2431
      %v2527 = vpop.f32.mrb[0].mxu0
      %v2528 = vadd.f32 0.0, %v2527
      %v2529 = vpop.f32.mrb[0].mxu0
      %v2530 = vpop.f32.mrb[0].mxu0
      %v2531 = vadd.f32 0.0, %v2530
      %v2532 = vpop.f32.mrb[0].mxu0
      %2533 = vmatprep.mubr.bf16.mxu0 0
      %2534 = vmatmul.mubr.bf16.gmra.mrb[0].mxu0 %v2434
      %v2535 = vpop.f32.mrb[0].mxu0
      %v2536 = vadd.f32 0.0, %v2535
      %v2537 = vpop.f32.mrb[0].mxu0
      %v2538 = vpop.f32.mrb[0].mxu0
      %v2539 = vadd.f32 0.0, %v2538
      %v2540 = vpop.f32.mrb[0].mxu0
      %2541 = vmatprep.mubr.bf16.mxu0 0
      %2542 = vmatmul.mubr.bf16.gmra.mrb[0].mxu0 %v2437
      %v2543 = vpop.f32.mrb[0].mxu0
      %v2544 = vadd.f32 0.0, %v2543
      %v2545 = vpop.f32.mrb[0].mxu0
      %v2546 = vpop.f32.mrb[0].mxu0
      %v2547 = vadd.f32 0.0, %v2546
      %v2548 = vpop.f32.mrb[0].mxu0
      %2549 = vmatprep.mubr.bf16.mxu0 0
      %2550 = vmatmul.mubr.bf16.gmra.mrb[0].mxu0 %v2440
      %v2551 = vpop.f32.mrb[0].mxu0
      %v2552 = vadd.f32 0.0, %v2551
      %v2553 = vpop.f32.mrb[0].mxu0
      %v2554 = vpop.f32.mrb[0].mxu0
      %v2555 = vadd.f32 0.0, %v2554
      %v2556 = vpop.f32.mrb[0].mxu0
      %2557 = vmatprep.mubr.bf16.mxu0 0
      %2558 = vmatmul.mubr.bf16.gmra.mrb[0].mxu0 %v2443
      %v2559 = vpop.f32.mrb[0].mxu0
      %v2560 = vadd.f32 0.0, %v2559
      %v2561 = vpop.f32.mrb[0].mxu0
      %v2562 = vpop.f32.mrb[0].mxu0
      %v2563 = vadd.f32 0.0, %v2562
      %v2564 = vpop.f32.mrb[0].mxu0
      %2565 = vmatprep.mubr.bf16.mxu0 0
      %2566 = vmatmul.mubr.bf16.gmra.mrb[0].mxu0 %v2446
      %v2567 = vpop.f32.mrb[0].mxu0
      %v2568 = vadd.f32 0.0, %v2567
      %v2569 = vpop.f32.mrb[0].mxu0
      %v2570 = vpop.f32.mrb[0].mxu0
      %v2571 = vadd.f32 0.0, %v2570
      %v2572 = vpop.f32.mrb[0].mxu0
      %2573 = vmatprep.mubr.bf16.mxu0 0
      %2574 = vmatmul.mubr.bf16.gmra.mrb[0].mxu0 %v2449
      %v2575 = vpop.f32.mrb[0].mxu0
      %v2576 = vadd.f32 0.0, %v2575
      %v2577 = vpop.f32.mrb[0].mxu0
      %v2578 = vpop.f32.mrb[0].mxu0
      %v2579 = vadd.f32 0.0, %v2578
      %v2580 = vpop.f32.mrb[0].mxu0
      %2581 = vmatprep.mubr.bf16.mxu0 0
      %2582 = vmatmul.mubr.bf16.gmra.mrb[0].mxu0 %v2452
      %v2583 = vpop.f32.mrb[0].mxu0
      %v2584 = vadd.f32 0.0, %v2583
      %v2585 = vpop.f32.mrb[0].mxu0
      %v2586 = vpop.f32.mrb[0].mxu0
      %v2587 = vadd.f32 0.0, %v2586
      %v2588 = vpop.f32.mrb[0].mxu0
      %2589 = vmatprep.mubr.bf16.mxu0 0
      %2590 = vmatmul.mubr.bf16.gmra.mrb[0].mxu0 %v2455
      %v2591 = vpop.f32.mrb[0].mxu0
      %v2592 = vadd.f32 0.0, %v2591
      %v2593 = vpop.f32.mrb[0].mxu0
      %v2594 = vpop.f32.mrb[0].mxu0
      %v2595 = vadd.f32 0.0, %v2594
      %v2596 = vpop.f32.mrb[0].mxu0
      %2597 = vmatprep.mubr.bf16.mxu0 0
      %2598 = vmatmul.mubr.bf16.gmra.mrb[0].mxu0 %v2458
      %v2599 = vpop.f32.mrb[0].mxu0
      %v2600 = vadd.f32 0.0, %v2599
      %v2601 = vpop.f32.mrb[0].mxu0
      %v2602 = vpop.f32.mrb[0].mxu0
      %v2603 = vadd.f32 0.0, %v2602
      %v2604 = vpop.f32.mrb[0].mxu0
      %2605 = vmatprep.mubr.bf16.mxu0 0
      %2606 = vmatmul.mubr.bf16.gmra.mrb[0].mxu0 %v2461
      %v2607 = vpop.f32.mrb[0].mxu0
      %v2608 = vadd.f32 0.0, %v2607
      %v2609 = vpop.f32.mrb[0].mxu0
      %v2610 = vpop.f32.mrb[0].mxu0
      %v2611 = vadd.f32 0.0, %v2610
      %v2612 = vpop.f32.mrb[0].mxu0
      %2613 = vmatprep.mubr.bf16.mxu0 0
      %2614 = vmatmul.mubr.bf16.gmra.mrb[0].mxu0 %v2464
      %v2615 = vpop.f32.mrb[0].mxu0
      %v2616 = vadd.f32 0.0, %v2615
      %v2617 = vpop.f32.mrb[0].mxu0
      %v2618 = vpop.f32.mrb[0].mxu0
      %v2619 = vadd.f32 0.0, %v2618
      %v2620 = vpop.f32.mrb[0].mxu0
      %2621 = vmatprep.mubr.bf16.mxu0 0
      %2622 = vmatmul.mubr.bf16.gmra.mrb[0].mxu0 %v2467
      %v2623 = vpop.f32.mrb[0].mxu0
      %v2624 = vadd.f32 0.0, %v2623
      %v2625 = vpop.f32.mrb[0].mxu0
      %v2626 = vpop.f32.mrb[0].mxu0
      %v2627 = vadd.f32 0.0, %v2626
      %v2628 = vpop.f32.mrb[0].mxu0
      %2629 = vmatprep.mubr.bf16.mxu0 0
      %2630 = vmatmul.mubr.bf16.gmra.mrb[0].mxu0 %v2470
      %v2631 = vpop.f32.mrb[0].mxu0
      %v2632 = vadd.f32 0.0, %v2631
      %v2633 = vpop.f32.mrb[0].mxu0
      %v2634 = vpop.f32.mrb[0].mxu0
      %v2635 = vadd.f32 0.0, %v2634
      %v2636 = vpop.f32.mrb[0].mxu0
      %2637 = vmatprep.mubr.bf16.mxu0 0
      %2638 = vmatmul.mubr.bf16.gmra.mrb[0].mxu0 %v2473
      %v2639 = vpop.f32.mrb[0].mxu0
      %v2640 = vadd.f32 0.0, %v2639
      %v2641 = vpop.f32.mrb[0].mxu0
      %v2642 = vpop.f32.mrb[0].mxu0
      %v2643 = vadd.f32 0.0, %v2642
      %v2644 = vpop.f32.mrb[0].mxu0
      %2645 = vmatprep.mubr.bf16.mxu0 0
      %2646 = vmatmul.mubr.bf16.gmra.mrb[0].mxu0 %v2476
      %v2647 = vpop.f32.mrb[0].mxu0
      %v2648 = vadd.f32 0.0, %v2647
      %v2649 = vpop.f32.mrb[0].mxu0
      %v2650 = vpop.f32.mrb[0].mxu0
      %v2651 = vadd.f32 0.0, %v2650
      %v2652 = vpop.f32.mrb[0].mxu0
      %2653 = vmatprep.mubr.bf16.mxu0 0
      %2654 = vmatmul.mubr.bf16.gmra.mrb[0].mxu0 %v2479
      %v2655 = vpop.f32.mrb[0].mxu0
      %v2656 = vadd.f32 0.0, %v2655
      %v2657 = vpop.f32.mrb[0].mxu0
      %v2658 = vpop.f32.mrb[0].mxu0
      %v2659 = vadd.f32 0.0, %v2658
      %v2660 = vpop.f32.mrb[0].mxu0
      %2661 = vmatprep.mubr.bf16.mxu0 0
      %2662 = vmatmul.mubr.bf16.gmra.mrb[0].mxu0 %v2482
      %v2663 = vpop.f32.mrb[0].mxu0
      %v2664 = vadd.f32 0.0, %v2663
      %v2665 = vpop.f32.mrb[0].mxu0
      %v2666 = vpop.f32.mrb[0].mxu0
      %v2667 = vadd.f32 0.0, %v2666
      %v2668 = vpop.f32.mrb[0].mxu0
      %2669 = vmatprep.mubr.bf16.mxu0 0
      %2670 = vmatmul.mubr.bf16.gmra.mrb[0].mxu0 %v2485
      %v2671 = vpop.f32.mrb[0].mxu0
      %v2672 = vadd.f32 0.0, %v2671
      %v2673 = vpop.f32.mrb[0].mxu0
      %v2674 = vpop.f32.mrb[0].mxu0
      %v2675 = vadd.f32 0.0, %v2674
      %v2676 = vpop.f32.mrb[0].mxu0
      %2677 = vmatprep.mubr.bf16.mxu0 0
      %2678 = vmatmul.mubr.bf16.gmra.mrb[0].mxu0 %v2488
      %v2679 = vpop.f32.mrb[0].mxu0
      %v2680 = vadd.f32 0.0, %v2679
      %v2681 = vpop.f32.mrb[0].mxu0
      %v2682 = vpop.f32.mrb[0].mxu0
      %v2683 = vadd.f32 0.0, %v2682
      %v2684 = vpop.f32.mrb[0].mxu0
      %2685 = vmatprep.mubr.bf16.mxu0 0
      %2686 = vmatmul.mubr.bf16.gmra.mrb[0].mxu0 %v2491
      %v2687 = vpop.f32.mrb[0].mxu0
      %v2688 = vadd.f32 0.0, %v2687
      %v2689 = vpop.f32.mrb[0].mxu0
      %v2690 = vpop.f32.mrb[0].mxu0
      %v2691 = vpop.f32.mrb[0].mxu0
      %2692 = vdwg.mxu0
      %v2693 = vadd.f32 %v2334, %v2528
      %v2694 = vadd.f32 %v2335, %v2531
      %v2695 = vadd.f32 %v2336, %v2536
      %v2696 = vadd.f32 %v2337, %v2539
      %v2697 = vadd.f32 %v2338, %v2544
      %v2698 = vadd.f32 %v2339, %v2547
      %v2699 = vadd.f32 %v2340, %v2552
      %v2700 = vadd.f32 %v2341, %v2555
      %v2701 = vadd.f32 %v2342, %v2560
      %v2702 = vadd.f32 %v2343, %v2563
      %v2703 = vadd.f32 %v2344, %v2568
      %v2704 = vadd.f32 %v2345, %v2571
      %v2705 = vadd.f32 %v2346, %v2576
      %v2706 = vadd.f32 %v2347, %v2579
      %v2707 = vadd.f32 %v2348, %v2584
      %v2708 = vadd.f32 %v2349, %v2587
      %v2709 = vadd.f32 %v2350, %v2592
      %v2710 = vadd.f32 %v2351, %v2595
      %v2711 = vadd.f32 %v2352, %v2600
      %v2712 = vadd.f32 %v2353, %v2603
      %v2713 = vadd.f32 %v2354, %v2608
      %v2714 = vadd.f32 %v2355, %v2611
      %v2715 = vadd.f32 %v2356, %v2616
      %v2716 = vadd.f32 %v2357, %v2619
      %v2717 = vadd.f32 %v2358, %v2624
      %v2718 = vadd.f32 %v2359, %v2627
      %v2719 = vadd.f32 %v2360, %v2632
      %v2720 = vadd.f32 %v2361, %v2635
      %v2721 = vadd.f32 %v2362, %v2640
      %v2722 = vadd.f32 %v2363, %v2643
      %v2723 = vadd.f32 %v2364, %v2648
      %v2724 = vadd.f32 %v2365, %v2651
      %v2725 = vadd.f32 %v2366, %v2656
      %v2726 = vadd.f32 %v2367, %v2659
      %v2727 = vadd.f32 %v2368, %v2664
      %v2728 = vadd.f32 %v2369, %v2667
      %v2729 = vadd.f32 %v2370, %v2672
      %v2730 = vadd.f32 %v2371, %v2675
      %v2731 = vadd.f32 %v2372, %v2680
      %v2732 = vadd.f32 %v2373, %v2683
      %v2733 = vadd.f32 %v2374, %v2688
      %v2734 = vld [vmem:[%s165 + $0x10] sm:$0xc]
      %v2735 = vld [vmem:[%s165 + $0x14] sm:$0xf]
      %v2736 = vld [vmem:[%s165 + $0x18] sm:$0xf]
      %v2737 = vld [vmem:[%s165 + $0x1c] sm:$0xf]
      %v2738 = vld [vmem:[%s165 + $0x20] sm:$0xf]
      %v2739 = vld [vmem:[%s165 + $0x24] sm:$0xf]
      %v2740 = vld [vmem:[%s165 + $0x28] sm:$0xf]
      %v2741 = vld [vmem:[%s165 + $0x2c] sm:$0xf]
      %v2742 = vld [vmem:[%s165 + $0x30] sm:$0xf]
      %v2743 = vld [vmem:[%s165 + $0x34] sm:$0xf]
      %v2744 = vld [vmem:[%s165 + $0x38] sm:$0xf]
      %v2745 = vld [vmem:[%s165 + $0x3c] sm:$0xf]
      %v2746 = vld [vmem:[%s165 + $0x40] sm:$0xf]
      %v2747 = vld [vmem:[%s165 + $0x44] sm:$0xf]
      %v2748 = vld [vmem:[%s165 + $0x48] sm:$0xf]
      %v2749 = vld [vmem:[%s165 + $0x4c] sm:$0xf]
      %v2750 = vld [vmem:[%s165 + $0x50] sm:$0xf]
      %v2751 = vld [vmem:[%s165 + $0x54] sm:$0xf]
      %v2752 = vld [vmem:[%s165 + $0x58] sm:$0xf]
      %v2753 = vld [vmem:[%s165 + $0x5c] sm:$0xf]
      %v2754 = vld [vmem:[%s165 + $0x60] sm:$0xf]
      %v2755 = vld [vmem:[%s165 + $0x64] sm:$0xf]
      %v2756 = vld [vmem:[%s165 + $0x68] sm:$0xf]
      %v2757 = vld [vmem:[%s165 + $0x6c] sm:$0xf]
      %v2758 = vld [vmem:[%s165 + $0x70] sm:$0xf]
      %v2759 = vld [vmem:[%s165 + $0x74] sm:$0xf]
      %v2760 = vld [vmem:[%s165 + $0x78] sm:$0xf]
      %v2761 = vld [vmem:[%s165 + $0x7c] sm:$0xf]
      %v2762 = vld [vmem:[%s165 + $0x80] sm:$0xf]
      %v2763 = vld [vmem:[%s165 + $0x84] sm:$0xf]
      %v2764 = vld [vmem:[%s165 + $0x88] sm:$0xf]
      %v2765 = vld [vmem:[%s165 + $0x8c] sm:$0xf]
      %v2766 = vld [vmem:[%s165 + $0x90] sm:$0xf]
      %v2767 = vld [vmem:[%s165 + $0x94] sm:$0xf]
      %v2768 = vld [vmem:[%s165 + $0x98] sm:$0xf]
      %v2769 = vld [vmem:[%s165 + $0x9c] sm:$0xf]
      %v2770 = vld [vmem:[%s165 + $0xa0] sm:$0xf]
      %v2771 = vld [vmem:[%s165 + $0xa4] sm:$0xf]
      %v2772 = vld [vmem:[%s165 + $0xa8] sm:$0xf]
      %v2773 = vld [vmem:[%s165 + $0xac] sm:$0xf]
      %v2774 = vld [vmem:[%s165 + $0xb0] sm:$0xf]
      %s2775 = scalar_lea.vmem %s1, 48
      %v2776 = vld [vmem:[%s2775] sm:$0xf]
      %v2777 = vld [vmem:[%s2775 + $0x4] sm:$0xf]
      %v2819 = vunpack.c.l.b16 %v2734
      %v2820 = vunpack.c.l.b16 %v2735
      %v2821 = vunpack.c.l.b16 %v2736
      %v2822 = vunpack.c.l.b16 %v2737
      %v2823 = vunpack.c.l.b16 %v2738
      %v2824 = vunpack.c.l.b16 %v2739
      %v2825 = vunpack.c.l.b16 %v2740
      %v2826 = vunpack.c.l.b16 %v2741
      %v2827 = vunpack.c.l.b16 %v2742
      %v2828 = vunpack.c.l.b16 %v2743
      %v2829 = vunpack.c.l.b16 %v2744
      %v2830 = vunpack.c.l.b16 %v2745
      %v2831 = vunpack.c.l.b16 %v2746
      %v2832 = vunpack.c.l.b16 %v2747
      %v2833 = vunpack.c.l.b16 %v2748
      %v2834 = vunpack.c.l.b16 %v2749
      %v2835 = vunpack.c.l.b16 %v2750
      %v2836 = vunpack.c.l.b16 %v2751
      %v2837 = vunpack.c.l.b16 %v2752
      %v2838 = vunpack.c.l.b16 %v2753
      %v2839 = vunpack.c.l.b16 %v2754
      %v2840 = vunpack.c.l.b16 %v2755
      %v2841 = vunpack.c.l.b16 %v2756
      %v2842 = vunpack.c.l.b16 %v2757
      %v2843 = vunpack.c.l.b16 %v2758
      %v2844 = vunpack.c.l.b16 %v2759
      %v2845 = vunpack.c.l.b16 %v2760
      %v2846 = vunpack.c.l.b16 %v2761
      %v2847 = vunpack.c.l.b16 %v2762
      %v2848 = vunpack.c.l.b16 %v2763
      %v2849 = vunpack.c.l.b16 %v2764
      %v2850 = vunpack.c.l.b16 %v2765
      %v2851 = vunpack.c.l.b16 %v2766
      %v2852 = vunpack.c.l.b16 %v2767
      %v2853 = vunpack.c.l.b16 %v2768
      %v2854 = vunpack.c.l.b16 %v2769
      %v2855 = vunpack.c.l.b16 %v2770
      %v2856 = vunpack.c.l.b16 %v2771
      %v2857 = vunpack.c.l.b16 %v2772
      %v2858 = vunpack.c.l.b16 %v2773
      %v2859 = vunpack.c.l.b16 %v2774
      %v2860 = vpack.c.b16 %v2820, %v2819
      %v2861 = vpack.c.b16 %v2822, %v2821
      %v2862 = vpack.c.b16 %v2824, %v2823
      %v2863 = vpack.c.b16 %v2826, %v2825
      %v2864 = vpack.c.b16 %v2828, %v2827
      %v2865 = vpack.c.b16 %v2830, %v2829
      %v2866 = vpack.c.b16 %v2832, %v2831
      %v2867 = vpack.c.b16 %v2834, %v2833
      %v2868 = vpack.c.b16 %v2836, %v2835
      %v2869 = vpack.c.b16 %v2838, %v2837
      %v2870 = vpack.c.b16 %v2840, %v2839
      %v2871 = vpack.c.b16 %v2842, %v2841
      %v2872 = vpack.c.b16 %v2844, %v2843
      %v2873 = vpack.c.b16 %v2846, %v2845
      %v2874 = vpack.c.b16 %v2848, %v2847
      %v2875 = vpack.c.b16 %v2850, %v2849
      %v2876 = vpack.c.b16 %v2852, %v2851
      %v2877 = vpack.c.b16 %v2854, %v2853
      %v2878 = vpack.c.b16 %v2856, %v2855
      %v2879 = vpack.c.b16 %v2858, %v2857
      %v2880 = vpack.c.b16 %v2859, %v2859
      %v2881 = vrot.slane %v2860, 2
      %v2882 = vrot.slane %v2861, 2
      %v2883 = vsel %vm2382, %v2881, %v2882
      %v2884 = vrot.slane %v2862, 2
      %v2885 = vsel %vm2382, %v2882, %v2884
      %v2886 = vrot.slane %v2863, 2
      %v2887 = vsel %vm2382, %v2884, %v2886
      %v2888 = vrot.slane %v2864, 2
      %v2889 = vsel %vm2382, %v2886, %v2888
      %v2890 = vrot.slane %v2865, 2
      %v2891 = vsel %vm2382, %v2888, %v2890
      %v2892 = vrot.slane %v2866, 2
      %v2893 = vsel %vm2382, %v2890, %v2892
      %v2894 = vrot.slane %v2867, 2
      %v2895 = vsel %vm2382, %v2892, %v2894
      %v2896 = vrot.slane %v2868, 2
      %v2897 = vsel %vm2382, %v2894, %v2896
      %v2898 = vrot.slane %v2869, 2
      %v2899 = vsel %vm2382, %v2896, %v2898
      %v2900 = vrot.slane %v2870, 2
      %v2901 = vsel %vm2382, %v2898, %v2900
      %v2902 = vrot.slane %v2871, 2
      %v2903 = vsel %vm2382, %v2900, %v2902
      %v2904 = vrot.slane %v2872, 2
      %v2905 = vsel %vm2382, %v2902, %v2904
      %v2906 = vrot.slane %v2873, 2
      %v2907 = vsel %vm2382, %v2904, %v2906
      %v2908 = vrot.slane %v2874, 2
      %v2909 = vsel %vm2382, %v2906, %v2908
      %v2910 = vrot.slane %v2875, 2
      %v2911 = vsel %vm2382, %v2908, %v2910
      %v2912 = vrot.slane %v2876, 2
      %v2913 = vsel %vm2382, %v2910, %v2912
      %v2914 = vrot.slane %v2877, 2
      %v2915 = vsel %vm2382, %v2912, %v2914
      %v2916 = vrot.slane %v2878, 2
      %v2917 = vsel %vm2382, %v2914, %v2916
      %v2918 = vrot.slane %v2879, 2
      %v2919 = vsel %vm2382, %v2916, %v2918
      %v2920 = vrot.slane %v2880, 2
      %v2921 = vsel %vm2382, %v2918, %v2920
      %v2924 = vunpack.c.l.b16 %v2776
      %v2925 = vunpack.c.l.b16 %v2777
      %v2926 = vpack.c.b16 %v2925, %v2924
      %v2929 = vsel %vm496, %v2883, 0
      %v2932 = vsel %vm496, %v2885, 0
      %v2935 = vsel %vm496, %v2887, 0
      %v2938 = vsel %vm496, %v2889, 0
      %v2941 = vsel %vm496, %v2891, 0
      %v2944 = vsel %vm496, %v2893, 0
      %v2947 = vsel %vm496, %v2895, 0
      %v2950 = vsel %vm496, %v2897, 0
      %v2953 = vsel %vm496, %v2899, 0
      %v2956 = vsel %vm496, %v2901, 0
      %v2959 = vsel %vm496, %v2903, 0
      %v2962 = vsel %vm496, %v2905, 0
      %v2965 = vsel %vm496, %v2907, 0
      %v2968 = vsel %vm496, %v2909, 0
      %v2971 = vsel %vm496, %v2911, 0
      %v2974 = vsel %vm496, %v2913, 0
      %v2977 = vsel %vm496, %v2915, 0
      %v2980 = vsel %vm496, %v2917, 0
      %v2983 = vsel %vm496, %v2919, 0
      %v2986 = vsel %vm496, %v2921, 0
      %v2989 = vsel %vm496, %v2920, 0
      %2991 = vmatprep.subr.bf16.mxu0 0
      %2992 = vmatpush1.bf16.msra.mxu0 %v2926
      %2993 = vmatprep.subr.bf16.mxu0 0
      %2994 = vmatpush1.bf16.msra.mxu0 0
      %2995 = vmatprep.subr.bf16.mxu0 0
      %2996 = vmatpush1.bf16.msra.mxu0 0
      %2997 = vmatprep.subr.bf16.mxu0 0
      %2998 = vmatpush1.bf16.msra.mxu0 0
      %2999 = vmatprep.subr.bf16.mxu0 0
      %3000 = vmatpush1.bf16.msra.mxu0 0
      %3001 = vmatprep.subr.bf16.mxu0 0
      %3002 = vmatpush1.bf16.msra.mxu0 0
      %3003 = vmatprep.subr.bf16.mxu0 0
      %3004 = vmatpush1.bf16.msra.mxu0 0
      %3005 = vmatprep.subr.bf16.mxu0 0
      %3006 = vmatpush1.bf16.msra.mxu0 0
      %3007 = vmatprep.subr.bf16.mxu0 0
      %3008 = vmatpush1.bf16.msra.mxu0 0
      %3009 = vmatprep.subr.bf16.mxu0 0
      %3010 = vmatpush1.bf16.msra.mxu0 0
      %3011 = vmatprep.subr.bf16.mxu0 0
      %3012 = vmatpush1.bf16.msra.mxu0 0
      %3013 = vmatprep.subr.bf16.mxu0 0
      %3014 = vmatpush1.bf16.msra.mxu0 0
      %3015 = vmatprep.subr.bf16.mxu0 0
      %3016 = vmatpush1.bf16.msra.mxu0 0
      %3017 = vmatprep.subr.bf16.mxu0 0
      %3018 = vmatpush1.bf16.msra.mxu0 0
      %3019 = vmatprep.subr.bf16.mxu0 0
      %3020 = vmatpush1.bf16.msra.mxu0 0
      %3021 = vmatprep.subr.bf16.mxu0 0
      %3022 = vmatpush1.bf16.msra.mxu0 0
      %3023 = vmatprep.mubr.bf16.mxu0 0
      %3024 = vmatmul.mubr.bf16.gmra.mrb[0].mxu0 %v2929
      %v3025 = vpop.f32.mrb[0].mxu0
      %v3026 = vadd.f32 0.0, %v3025
      %v3027 = vpop.f32.mrb[0].mxu0
      %v3028 = vpop.f32.mrb[0].mxu0
      %v3029 = vadd.f32 0.0, %v3028
      %v3030 = vpop.f32.mrb[0].mxu0
      %3031 = vmatprep.mubr.bf16.mxu0 0
      %3032 = vmatmul.mubr.bf16.gmra.mrb[0].mxu0 %v2932
      %v3033 = vpop.f32.mrb[0].mxu0
      %v3034 = vadd.f32 0.0, %v3033
      %v3035 = vpop.f32.mrb[0].mxu0
      %v3036 = vpop.f32.mrb[0].mxu0
      %v3037 = vadd.f32 0.0, %v3036
      %v3038 = vpop.f32.mrb[0].mxu0
      %3039 = vmatprep.mubr.bf16.mxu0 0
      %3040 = vmatmul.mubr.bf16.gmra.mrb[0].mxu0 %v2935
      %v3041 = vpop.f32.mrb[0].mxu0
      %v3042 = vadd.f32 0.0, %v3041
      %v3043 = vpop.f32.mrb[0].mxu0
      %v3044 = vpop.f32.mrb[0].mxu0
      %v3045 = vadd.f32 0.0, %v3044
      %v3046 = vpop.f32.mrb[0].mxu0
      %3047 = vmatprep.mubr.bf16.mxu0 0
      %3048 = vmatmul.mubr.bf16.gmra.mrb[0].mxu0 %v2938
      %v3049 = vpop.f32.mrb[0].mxu0
      %v3050 = vadd.f32 0.0, %v3049
      %v3051 = vpop.f32.mrb[0].mxu0
      %v3052 = vpop.f32.mrb[0].mxu0
      %v3053 = vadd.f32 0.0, %v3052
      %v3054 = vpop.f32.mrb[0].mxu0
      %3055 = vmatprep.mubr.bf16.mxu0 0
      %3056 = vmatmul.mubr.bf16.gmra.mrb[0].mxu0 %v2941
      %v3057 = vpop.f32.mrb[0].mxu0
      %v3058 = vadd.f32 0.0, %v3057
      %v3059 = vpop.f32.mrb[0].mxu0
      %v3060 = vpop.f32.mrb[0].mxu0
      %v3061 = vadd.f32 0.0, %v3060
      %v3062 = vpop.f32.mrb[0].mxu0
      %3063 = vmatprep.mubr.bf16.mxu0 0
      %3064 = vmatmul.mubr.bf16.gmra.mrb[0].mxu0 %v2944
      %v3065 = vpop.f32.mrb[0].mxu0
      %v3066 = vadd.f32 0.0, %v3065
      %v3067 = vpop.f32.mrb[0].mxu0
      %v3068 = vpop.f32.mrb[0].mxu0
      %v3069 = vadd.f32 0.0, %v3068
      %v3070 = vpop.f32.mrb[0].mxu0
      %3071 = vmatprep.mubr.bf16.mxu0 0
      %3072 = vmatmul.mubr.bf16.gmra.mrb[0].mxu0 %v2947
      %v3073 = vpop.f32.mrb[0].mxu0
      %v3074 = vadd.f32 0.0, %v3073
      %v3075 = vpop.f32.mrb[0].mxu0
      %v3076 = vpop.f32.mrb[0].mxu0
      %v3077 = vadd.f32 0.0, %v3076
      %v3078 = vpop.f32.mrb[0].mxu0
      %3079 = vmatprep.mubr.bf16.mxu0 0
      %3080 = vmatmul.mubr.bf16.gmra.mrb[0].mxu0 %v2950
      %v3081 = vpop.f32.mrb[0].mxu0
      %v3082 = vadd.f32 0.0, %v3081
      %v3083 = vpop.f32.mrb[0].mxu0
      %v3084 = vpop.f32.mrb[0].mxu0
      %v3085 = vadd.f32 0.0, %v3084
      %v3086 = vpop.f32.mrb[0].mxu0
      %3087 = vmatprep.mubr.bf16.mxu0 0
      %3088 = vmatmul.mubr.bf16.gmra.mrb[0].mxu0 %v2953
      %v3089 = vpop.f32.mrb[0].mxu0
      %v3090 = vadd.f32 0.0, %v3089
      %v3091 = vpop.f32.mrb[0].mxu0
      %v3092 = vpop.f32.mrb[0].mxu0
      %v3093 = vadd.f32 0.0, %v3092
      %v3094 = vpop.f32.mrb[0].mxu0
      %3095 = vmatprep.mubr.bf16.mxu0 0
      %3096 = vmatmul.mubr.bf16.gmra.mrb[0].mxu0 %v2956
      %v3097 = vpop.f32.mrb[0].mxu0
      %v3098 = vadd.f32 0.0, %v3097
      %v3099 = vpop.f32.mrb[0].mxu0
      %v3100 = vpop.f32.mrb[0].mxu0
      %v3101 = vadd.f32 0.0, %v3100
      %v3102 = vpop.f32.mrb[0].mxu0
      %3103 = vmatprep.mubr.bf16.mxu0 0
      %3104 = vmatmul.mubr.bf16.gmra.mrb[0].mxu0 %v2959
      %v3105 = vpop.f32.mrb[0].mxu0
      %v3106 = vadd.f32 0.0, %v3105
      %v3107 = vpop.f32.mrb[0].mxu0
      %v3108 = vpop.f32.mrb[0].mxu0
      %v3109 = vadd.f32 0.0, %v3108
      %v3110 = vpop.f32.mrb[0].mxu0
      %3111 = vmatprep.mubr.bf16.mxu0 0
      %3112 = vmatmul.mubr.bf16.gmra.mrb[0].mxu0 %v2962
      %v3113 = vpop.f32.mrb[0].mxu0
      %v3114 = vadd.f32 0.0, %v3113
      %v3115 = vpop.f32.mrb[0].mxu0
      %v3116 = vpop.f32.mrb[0].mxu0
      %v3117 = vadd.f32 0.0, %v3116
      %v3118 = vpop.f32.mrb[0].mxu0
      %3119 = vmatprep.mubr.bf16.mxu0 0
      %3120 = vmatmul.mubr.bf16.gmra.mrb[0].mxu0 %v2965
      %v3121 = vpop.f32.mrb[0].mxu0
      %v3122 = vadd.f32 0.0, %v3121
      %v3123 = vpop.f32.mrb[0].mxu0
      %v3124 = vpop.f32.mrb[0].mxu0
      %v3125 = vadd.f32 0.0, %v3124
      %v3126 = vpop.f32.mrb[0].mxu0
      %3127 = vmatprep.mubr.bf16.mxu0 0
      %3128 = vmatmul.mubr.bf16.gmra.mrb[0].mxu0 %v2968
      %v3129 = vpop.f32.mrb[0].mxu0
      %v3130 = vadd.f32 0.0, %v3129
      %v3131 = vpop.f32.mrb[0].mxu0
      %v3132 = vpop.f32.mrb[0].mxu0
      %v3133 = vadd.f32 0.0, %v3132
      %v3134 = vpop.f32.mrb[0].mxu0
      %3135 = vmatprep.mubr.bf16.mxu0 0
      %3136 = vmatmul.mubr.bf16.gmra.mrb[0].mxu0 %v2971
      %v3137 = vpop.f32.mrb[0].mxu0
      %v3138 = vadd.f32 0.0, %v3137
      %v3139 = vpop.f32.mrb[0].mxu0
      %v3140 = vpop.f32.mrb[0].mxu0
      %v3141 = vadd.f32 0.0, %v3140
      %v3142 = vpop.f32.mrb[0].mxu0
      %3143 = vmatprep.mubr.bf16.mxu0 0
      %3144 = vmatmul.mubr.bf16.gmra.mrb[0].mxu0 %v2974
      %v3145 = vpop.f32.mrb[0].mxu0
      %v3146 = vadd.f32 0.0, %v3145
      %v3147 = vpop.f32.mrb[0].mxu0
      %v3148 = vpop.f32.mrb[0].mxu0
      %v3149 = vadd.f32 0.0, %v3148
      %v3150 = vpop.f32.mrb[0].mxu0
      %3151 = vmatprep.mubr.bf16.mxu0 0
      %3152 = vmatmul.mubr.bf16.gmra.mrb[0].mxu0 %v2977
      %v3153 = vpop.f32.mrb[0].mxu0
      %v3154 = vadd.f32 0.0, %v3153
      %v3155 = vpop.f32.mrb[0].mxu0
      %v3156 = vpop.f32.mrb[0].mxu0
      %v3157 = vadd.f32 0.0, %v3156
      %v3158 = vpop.f32.mrb[0].mxu0
      %3159 = vmatprep.mubr.bf16.mxu0 0
      %3160 = vmatmul.mubr.bf16.gmra.mrb[0].mxu0 %v2980
      %v3161 = vpop.f32.mrb[0].mxu0
      %v3162 = vadd.f32 0.0, %v3161
      %v3163 = vpop.f32.mrb[0].mxu0
      %v3164 = vpop.f32.mrb[0].mxu0
      %v3165 = vadd.f32 0.0, %v3164
      %v3166 = vpop.f32.mrb[0].mxu0
      %3167 = vmatprep.mubr.bf16.mxu0 0
      %3168 = vmatmul.mubr.bf16.gmra.mrb[0].mxu0 %v2983
      %v3169 = vpop.f32.mrb[0].mxu0
      %v3170 = vadd.f32 0.0, %v3169
      %v3171 = vpop.f32.mrb[0].mxu0
      %v3172 = vpop.f32.mrb[0].mxu0
      %v3173 = vadd.f32 0.0, %v3172
      %v3174 = vpop.f32.mrb[0].mxu0
      %3175 = vmatprep.mubr.bf16.mxu0 0
      %3176 = vmatmul.mubr.bf16.gmra.mrb[0].mxu0 %v2986
      %v3177 = vpop.f32.mrb[0].mxu0
      %v3178 = vadd.f32 0.0, %v3177
      %v3179 = vpop.f32.mrb[0].mxu0
      %v3180 = vpop.f32.mrb[0].mxu0
      %v3181 = vadd.f32 0.0, %v3180
      %v3182 = vpop.f32.mrb[0].mxu0
      %3183 = vmatprep.mubr.bf16.mxu0 0
      %3184 = vmatmul.mubr.bf16.gmra.mrb[0].mxu0 %v2989
      %v3185 = vpop.f32.mrb[0].mxu0
      %v3186 = vadd.f32 0.0, %v3185
      %v3187 = vpop.f32.mrb[0].mxu0
      %v3188 = vpop.f32.mrb[0].mxu0
      %v3189 = vpop.f32.mrb[0].mxu0
      %3190 = vdwg.mxu0
      %v3191 = vadd.f32 %v2693, %v3026
      %v3192 = vadd.f32 %v2694, %v3029
      %v3193 = vadd.f32 %v2695, %v3034
      %v3194 = vadd.f32 %v2696, %v3037
      %v3195 = vadd.f32 %v2697, %v3042
      %v3196 = vadd.f32 %v2698, %v3045
      %v3197 = vadd.f32 %v2699, %v3050
      %v3198 = vadd.f32 %v2700, %v3053
      %v3199 = vadd.f32 %v2701, %v3058
      %v3200 = vadd.f32 %v2702, %v3061
      %v3201 = vadd.f32 %v2703, %v3066
      %v3202 = vadd.f32 %v2704, %v3069
      %v3203 = vadd.f32 %v2705, %v3074
      %v3204 = vadd.f32 %v2706, %v3077
      %v3205 = vadd.f32 %v2707, %v3082
      %v3206 = vadd.f32 %v2708, %v3085
      %v3207 = vadd.f32 %v2709, %v3090
      %v3208 = vadd.f32 %v2710, %v3093
      %v3209 = vadd.f32 %v2711, %v3098
      %v3210 = vadd.f32 %v2712, %v3101
      %v3211 = vadd.f32 %v2713, %v3106
      %v3212 = vadd.f32 %v2714, %v3109
      %v3213 = vadd.f32 %v2715, %v3114
      %v3214 = vadd.f32 %v2716, %v3117
      %v3215 = vadd.f32 %v2717, %v3122
      %v3216 = vadd.f32 %v2718, %v3125
      %v3217 = vadd.f32 %v2719, %v3130
      %v3218 = vadd.f32 %v2720, %v3133
      %v3219 = vadd.f32 %v2721, %v3138
      %v3220 = vadd.f32 %v2722, %v3141
      %v3221 = vadd.f32 %v2723, %v3146
      %v3222 = vadd.f32 %v2724, %v3149
      %v3223 = vadd.f32 %v2725, %v3154
      %v3224 = vadd.f32 %v2726, %v3157
      %v3225 = vadd.f32 %v2727, %v3162
      %v3226 = vadd.f32 %v2728, %v3165
      %v3227 = vadd.f32 %v2729, %v3170
      %v3228 = vadd.f32 %v2730, %v3173
      %v3229 = vadd.f32 %v2731, %v3178
      %v3230 = vadd.f32 %v2732, %v3181
      %v3231 = vadd.f32 %v2733, %v3186
      %v3232 = vld [vmem:[%s165 + $0x10] sm:$0xc]
      %v3233 = vld [vmem:[%s165 + $0x14] sm:$0xf]
      %v3234 = vld [vmem:[%s165 + $0x18] sm:$0xf]
      %v3235 = vld [vmem:[%s165 + $0x1c] sm:$0xf]
      %v3236 = vld [vmem:[%s165 + $0x20] sm:$0xf]
      %v3237 = vld [vmem:[%s165 + $0x24] sm:$0xf]
      %v3238 = vld [vmem:[%s165 + $0x28] sm:$0xf]
      %v3239 = vld [vmem:[%s165 + $0x2c] sm:$0xf]
      %v3240 = vld [vmem:[%s165 + $0x30] sm:$0xf]
      %v3241 = vld [vmem:[%s165 + $0x34] sm:$0xf]
      %v3242 = vld [vmem:[%s165 + $0x38] sm:$0xf]
      %v3243 = vld [vmem:[%s165 + $0x3c] sm:$0xf]
      %v3244 = vld [vmem:[%s165 + $0x40] sm:$0xf]
      %v3245 = vld [vmem:[%s165 + $0x44] sm:$0xf]
      %v3246 = vld [vmem:[%s165 + $0x48] sm:$0xf]
      %v3247 = vld [vmem:[%s165 + $0x4c] sm:$0xf]
      %v3248 = vld [vmem:[%s165 + $0x50] sm:$0xf]
      %v3249 = vld [vmem:[%s165 + $0x54] sm:$0xf]
      %v3250 = vld [vmem:[%s165 + $0x58] sm:$0xf]
      %v3251 = vld [vmem:[%s165 + $0x5c] sm:$0xf]
      %v3252 = vld [vmem:[%s165 + $0x60] sm:$0xf]
      %v3253 = vld [vmem:[%s165 + $0x64] sm:$0xf]
      %v3254 = vld [vmem:[%s165 + $0x68] sm:$0xf]
      %v3255 = vld [vmem:[%s165 + $0x6c] sm:$0xf]
      %v3256 = vld [vmem:[%s165 + $0x70] sm:$0xf]
      %v3257 = vld [vmem:[%s165 + $0x74] sm:$0xf]
      %v3258 = vld [vmem:[%s165 + $0x78] sm:$0xf]
      %v3259 = vld [vmem:[%s165 + $0x7c] sm:$0xf]
      %v3260 = vld [vmem:[%s165 + $0x80] sm:$0xf]
      %v3261 = vld [vmem:[%s165 + $0x84] sm:$0xf]
      %v3262 = vld [vmem:[%s165 + $0x88] sm:$0xf]
      %v3263 = vld [vmem:[%s165 + $0x8c] sm:$0xf]
      %v3264 = vld [vmem:[%s165 + $0x90] sm:$0xf]
      %v3265 = vld [vmem:[%s165 + $0x94] sm:$0xf]
      %v3266 = vld [vmem:[%s165 + $0x98] sm:$0xf]
      %v3267 = vld [vmem:[%s165 + $0x9c] sm:$0xf]
      %v3268 = vld [vmem:[%s165 + $0xa0] sm:$0xf]
      %v3269 = vld [vmem:[%s165 + $0xa4] sm:$0xf]
      %v3270 = vld [vmem:[%s165 + $0xa8] sm:$0xf]
      %v3271 = vld [vmem:[%s165 + $0xac] sm:$0xf]
      %v3272 = vld [vmem:[%s165 + $0xb0] sm:$0xf]
      %v3273 = vld [vmem:[%s165 + $0xb4] sm:$0x1]
      %s3274 = scalar_lea.vmem %s1, 56
      %v3275 = vld [vmem:[%s3274] sm:$0xf]
      %v3276 = vld [vmem:[%s3274 + $0x4] sm:$0xf]
      %v3319 = vunpack.c.l.b16 %v3232
      %v3320 = vunpack.c.l.b16 %v3233
      %v3321 = vunpack.c.l.b16 %v3234
      %v3322 = vunpack.c.l.b16 %v3235
      %v3323 = vunpack.c.l.b16 %v3236
      %v3324 = vunpack.c.l.b16 %v3237
      %v3325 = vunpack.c.l.b16 %v3238
      %v3326 = vunpack.c.l.b16 %v3239
      %v3327 = vunpack.c.l.b16 %v3240
      %v3328 = vunpack.c.l.b16 %v3241
      %v3329 = vunpack.c.l.b16 %v3242
      %v3330 = vunpack.c.l.b16 %v3243
      %v3331 = vunpack.c.l.b16 %v3244
      %v3332 = vunpack.c.l.b16 %v3245
      %v3333 = vunpack.c.l.b16 %v3246
      %v3334 = vunpack.c.l.b16 %v3247
      %v3335 = vunpack.c.l.b16 %v3248
      %v3336 = vunpack.c.l.b16 %v3249
      %v3337 = vunpack.c.l.b16 %v3250
      %v3338 = vunpack.c.l.b16 %v3251
      %v3339 = vunpack.c.l.b16 %v3252
      %v3340 = vunpack.c.l.b16 %v3253
      %v3341 = vunpack.c.l.b16 %v3254
      %v3342 = vunpack.c.l.b16 %v3255
      %v3343 = vunpack.c.l.b16 %v3256
      %v3344 = vunpack.c.l.b16 %v3257
      %v3345 = vunpack.c.l.b16 %v3258
      %v3346 = vunpack.c.l.b16 %v3259
      %v3347 = vunpack.c.l.b16 %v3260
      %v3348 = vunpack.c.l.b16 %v3261
      %v3349 = vunpack.c.l.b16 %v3262
      %v3350 = vunpack.c.l.b16 %v3263
      %v3351 = vunpack.c.l.b16 %v3264
      %v3352 = vunpack.c.l.b16 %v3265
      %v3353 = vunpack.c.l.b16 %v3266
      %v3354 = vunpack.c.l.b16 %v3267
      %v3355 = vunpack.c.l.b16 %v3268
      %v3356 = vunpack.c.l.b16 %v3269
      %v3357 = vunpack.c.l.b16 %v3270
      %v3358 = vunpack.c.l.b16 %v3271
      %v3359 = vunpack.c.l.b16 %v3272
      %v3360 = vunpack.c.l.b16 %v3273
      %v3361 = vpack.c.b16 %v3320, %v3319
      %v3362 = vpack.c.b16 %v3322, %v3321
      %v3363 = vpack.c.b16 %v3324, %v3323
      %v3364 = vpack.c.b16 %v3326, %v3325
      %v3365 = vpack.c.b16 %v3328, %v3327
      %v3366 = vpack.c.b16 %v3330, %v3329
      %v3367 = vpack.c.b16 %v3332, %v3331
      %v3368 = vpack.c.b16 %v3334, %v3333
      %v3369 = vpack.c.b16 %v3336, %v3335
      %v3370 = vpack.c.b16 %v3338, %v3337
      %v3371 = vpack.c.b16 %v3340, %v3339
      %v3372 = vpack.c.b16 %v3342, %v3341
      %v3373 = vpack.c.b16 %v3344, %v3343
      %v3374 = vpack.c.b16 %v3346, %v3345
      %v3375 = vpack.c.b16 %v3348, %v3347
      %v3376 = vpack.c.b16 %v3350, %v3349
      %v3377 = vpack.c.b16 %v3352, %v3351
      %v3378 = vpack.c.b16 %v3354, %v3353
      %v3379 = vpack.c.b16 %v3356, %v3355
      %v3380 = vpack.c.b16 %v3358, %v3357
      %v3381 = vpack.c.b16 %v3360, %v3359
      %vm3382 = vsmask.f32 5376
      %v3384 = vshrl.u32 %v3361, 16
      %v3386 = vrot.slane %v3384, 2
      %v3387 = vshll.u32 %v3361, 16
      %v3389 = vrot.slane %v3387, 3
      %v3390 = vor.u32 %v3386, %v3389
      %v3392 = vshrl.u32 %v3362, 16
      %v3394 = vrot.slane %v3392, 2
      %v3395 = vshll.u32 %v3362, 16
      %v3397 = vrot.slane %v3395, 3
      %v3398 = vor.u32 %v3394, %v3397
      %v3399 = vsel %vm3382, %v3390, %v3398
      %v3401 = vshrl.u32 %v3363, 16
      %v3403 = vrot.slane %v3401, 2
      %v3404 = vshll.u32 %v3363, 16
      %v3406 = vrot.slane %v3404, 3
      %v3407 = vor.u32 %v3403, %v3406
      %v3408 = vsel %vm3382, %v3398, %v3407
      %v3410 = vshrl.u32 %v3364, 16
      %v3412 = vrot.slane %v3410, 2
      %v3413 = vshll.u32 %v3364, 16
      %v3415 = vrot.slane %v3413, 3
      %v3416 = vor.u32 %v3412, %v3415
      %v3417 = vsel %vm3382, %v3407, %v3416
      %v3419 = vshrl.u32 %v3365, 16
      %v3421 = vrot.slane %v3419, 2
      %v3422 = vshll.u32 %v3365, 16
      %v3424 = vrot.slane %v3422, 3
      %v3425 = vor.u32 %v3421, %v3424
      %v3426 = vsel %vm3382, %v3416, %v3425
      %v3428 = vshrl.u32 %v3366, 16
      %v3430 = vrot.slane %v3428, 2
      %v3431 = vshll.u32 %v3366, 16
      %v3433 = vrot.slane %v3431, 3
      %v3434 = vor.u32 %v3430, %v3433
      %v3435 = vsel %vm3382, %v3425, %v3434
      %v3437 = vshrl.u32 %v3367, 16
      %v3439 = vrot.slane %v3437, 2
      %v3440 = vshll.u32 %v3367, 16
      %v3442 = vrot.slane %v3440, 3
      %v3443 = vor.u32 %v3439, %v3442
      %v3444 = vsel %vm3382, %v3434, %v3443
      %v3446 = vshrl.u32 %v3368, 16
      %v3448 = vrot.slane %v3446, 2
      %v3449 = vshll.u32 %v3368, 16
      %v3451 = vrot.slane %v3449, 3
      %v3452 = vor.u32 %v3448, %v3451
      %v3453 = vsel %vm3382, %v3443, %v3452
      %v3455 = vshrl.u32 %v3369, 16
      %v3457 = vrot.slane %v3455, 2
      %v3458 = vshll.u32 %v3369, 16
      %v3460 = vrot.slane %v3458, 3
      %v3461 = vor.u32 %v3457, %v3460
      %v3462 = vsel %vm3382, %v3452, %v3461
      %v3464 = vshrl.u32 %v3370, 16
      %v3466 = vrot.slane %v3464, 2
      %v3467 = vshll.u32 %v3370, 16
      %v3469 = vrot.slane %v3467, 3
      %v3470 = vor.u32 %v3466, %v3469
      %v3471 = vsel %vm3382, %v3461, %v3470
      %v3473 = vshrl.u32 %v3371, 16
      %v3475 = vrot.slane %v3473, 2
      %v3476 = vshll.u32 %v3371, 16
      %v3478 = vrot.slane %v3476, 3
      %v3479 = vor.u32 %v3475, %v3478
      %v3480 = vsel %vm3382, %v3470, %v3479
      %v3482 = vshrl.u32 %v3372, 16
      %v3484 = vrot.slane %v3482, 2
      %v3485 = vshll.u32 %v3372, 16
      %v3487 = vrot.slane %v3485, 3
      %v3488 = vor.u32 %v3484, %v3487
      %v3489 = vsel %vm3382, %v3479, %v3488
      %v3491 = vshrl.u32 %v3373, 16
      %v3493 = vrot.slane %v3491, 2
      %v3494 = vshll.u32 %v3373, 16
      %v3496 = vrot.slane %v3494, 3
      %v3497 = vor.u32 %v3493, %v3496
      %v3498 = vsel %vm3382, %v3488, %v3497
      %v3500 = vshrl.u32 %v3374, 16
      %v3502 = vrot.slane %v3500, 2
      %v3503 = vshll.u32 %v3374, 16
      %v3505 = vrot.slane %v3503, 3
      %v3506 = vor.u32 %v3502, %v3505
      %v3507 = vsel %vm3382, %v3497, %v3506
      %v3509 = vshrl.u32 %v3375, 16
      %v3511 = vrot.slane %v3509, 2
      %v3512 = vshll.u32 %v3375, 16
      %v3514 = vrot.slane %v3512, 3
      %v3515 = vor.u32 %v3511, %v3514
      %v3516 = vsel %vm3382, %v3506, %v3515
      %v3518 = vshrl.u32 %v3376, 16
      %v3520 = vrot.slane %v3518, 2
      %v3521 = vshll.u32 %v3376, 16
      %v3523 = vrot.slane %v3521, 3
      %v3524 = vor.u32 %v3520, %v3523
      %v3525 = vsel %vm3382, %v3515, %v3524
      %v3527 = vshrl.u32 %v3377, 16
      %v3529 = vrot.slane %v3527, 2
      %v3530 = vshll.u32 %v3377, 16
      %v3532 = vrot.slane %v3530, 3
      %v3533 = vor.u32 %v3529, %v3532
      %v3534 = vsel %vm3382, %v3524, %v3533
      %v3536 = vshrl.u32 %v3378, 16
      %v3538 = vrot.slane %v3536, 2
      %v3539 = vshll.u32 %v3378, 16
      %v3541 = vrot.slane %v3539, 3
      %v3542 = vor.u32 %v3538, %v3541
      %v3543 = vsel %vm3382, %v3533, %v3542
      %v3545 = vshrl.u32 %v3379, 16
      %v3547 = vrot.slane %v3545, 2
      %v3548 = vshll.u32 %v3379, 16
      %v3550 = vrot.slane %v3548, 3
      %v3551 = vor.u32 %v3547, %v3550
      %v3552 = vsel %vm3382, %v3542, %v3551
      %v3554 = vshrl.u32 %v3380, 16
      %v3556 = vrot.slane %v3554, 2
      %v3557 = vshll.u32 %v3380, 16
      %v3559 = vrot.slane %v3557, 3
      %v3560 = vor.u32 %v3556, %v3559
      %v3561 = vsel %vm3382, %v3551, %v3560
      %v3563 = vshrl.u32 %v3381, 16
      %v3565 = vrot.slane %v3563, 2
      %v3566 = vshll.u32 %v3381, 16
      %v3568 = vrot.slane %v3566, 3
      %v3569 = vor.u32 %v3565, %v3568
      %v3570 = vsel %vm3382, %v3560, %v3569
      %v3573 = vunpack.c.l.b16 %v3275
      %v3574 = vunpack.c.l.b16 %v3276
      %v3575 = vpack.c.b16 %v3574, %v3573
      %v3578 = vsel %vm496, %v3399, 0
      %v3581 = vsel %vm496, %v3408, 0
      %v3584 = vsel %vm496, %v3417, 0
      %v3587 = vsel %vm496, %v3426, 0
      %v3590 = vsel %vm496, %v3435, 0
      %v3593 = vsel %vm496, %v3444, 0
      %v3596 = vsel %vm496, %v3453, 0
      %v3599 = vsel %vm496, %v3462, 0
      %v3602 = vsel %vm496, %v3471, 0
      %v3605 = vsel %vm496, %v3480, 0
      %v3608 = vsel %vm496, %v3489, 0
      %v3611 = vsel %vm496, %v3498, 0
      %v3614 = vsel %vm496, %v3507, 0
      %v3617 = vsel %vm496, %v3516, 0
      %v3620 = vsel %vm496, %v3525, 0
      %v3623 = vsel %vm496, %v3534, 0
      %v3626 = vsel %vm496, %v3543, 0
      %v3629 = vsel %vm496, %v3552, 0
      %v3632 = vsel %vm496, %v3561, 0
      %v3635 = vsel %vm496, %v3570, 0
      %v3638 = vsel %vm496, %v3569, 0
      %3640 = vmatprep.subr.bf16.mxu0 0
      %3641 = vmatpush1.bf16.msra.mxu0 %v3575
      %3642 = vmatprep.subr.bf16.mxu0 0
      %3643 = vmatpush1.bf16.msra.mxu0 0
      %3644 = vmatprep.subr.bf16.mxu0 0
      %3645 = vmatpush1.bf16.msra.mxu0 0
      %3646 = vmatprep.subr.bf16.mxu0 0
      %3647 = vmatpush1.bf16.msra.mxu0 0
      %3648 = vmatprep.subr.bf16.mxu0 0
      %3649 = vmatpush1.bf16.msra.mxu0 0
      %3650 = vmatprep.subr.bf16.mxu0 0
      %3651 = vmatpush1.bf16.msra.mxu0 0
      %3652 = vmatprep.subr.bf16.mxu0 0
      %3653 = vmatpush1.bf16.msra.mxu0 0
      %3654 = vmatprep.subr.bf16.mxu0 0
      %3655 = vmatpush1.bf16.msra.mxu0 0
      %3656 = vmatprep.subr.bf16.mxu0 0
      %3657 = vmatpush1.bf16.msra.mxu0 0
      %3658 = vmatprep.subr.bf16.mxu0 0
      %3659 = vmatpush1.bf16.msra.mxu0 0
      %3660 = vmatprep.subr.bf16.mxu0 0
      %3661 = vmatpush1.bf16.msra.mxu0 0
      %3662 = vmatprep.subr.bf16.mxu0 0
      %3663 = vmatpush1.bf16.msra.mxu0 0
      %3664 = vmatprep.subr.bf16.mxu0 0
      %3665 = vmatpush1.bf16.msra.mxu0 0
      %3666 = vmatprep.subr.bf16.mxu0 0
      %3667 = vmatpush1.bf16.msra.mxu0 0
      %3668 = vmatprep.subr.bf16.mxu0 0
      %3669 = vmatpush1.bf16.msra.mxu0 0
      %3670 = vmatprep.subr.bf16.mxu0 0
      %3671 = vmatpush1.bf16.msra.mxu0 0
      %3672 = vmatprep.mubr.bf16.mxu0 0
      %3673 = vmatmul.mubr.bf16.gmra.mrb[0].mxu0 %v3578
      %v3674 = vpop.f32.mrb[0].mxu0
      %v3675 = vadd.f32 0.0, %v3674
      %v3676 = vpop.f32.mrb[0].mxu0
      %v3677 = vpop.f32.mrb[0].mxu0
      %v3678 = vadd.f32 0.0, %v3677
      %v3679 = vpop.f32.mrb[0].mxu0
      %3680 = vmatprep.mubr.bf16.mxu0 0
      %3681 = vmatmul.mubr.bf16.gmra.mrb[0].mxu0 %v3581
      %v3682 = vpop.f32.mrb[0].mxu0
      %v3683 = vadd.f32 0.0, %v3682
      %v3684 = vpop.f32.mrb[0].mxu0
      %v3685 = vpop.f32.mrb[0].mxu0
      %v3686 = vadd.f32 0.0, %v3685
      %v3687 = vpop.f32.mrb[0].mxu0
      %3688 = vmatprep.mubr.bf16.mxu0 0
      %3689 = vmatmul.mubr.bf16.gmra.mrb[0].mxu0 %v3584
      %v3690 = vpop.f32.mrb[0].mxu0
      %v3691 = vadd.f32 0.0, %v3690
      %v3692 = vpop.f32.mrb[0].mxu0
      %v3693 = vpop.f32.mrb[0].mxu0
      %v3694 = vadd.f32 0.0, %v3693
      %v3695 = vpop.f32.mrb[0].mxu0
      %3696 = vmatprep.mubr.bf16.mxu0 0
      %3697 = vmatmul.mubr.bf16.gmra.mrb[0].mxu0 %v3587
      %v3698 = vpop.f32.mrb[0].mxu0
      %v3699 = vadd.f32 0.0, %v3698
      %v3700 = vpop.f32.mrb[0].mxu0
      %v3701 = vpop.f32.mrb[0].mxu0
      %v3702 = vadd.f32 0.0, %v3701
      %v3703 = vpop.f32.mrb[0].mxu0
      %3704 = vmatprep.mubr.bf16.mxu0 0
      %3705 = vmatmul.mubr.bf16.gmra.mrb[0].mxu0 %v3590
      %v3706 = vpop.f32.mrb[0].mxu0
      %v3707 = vadd.f32 0.0, %v3706
      %v3708 = vpop.f32.mrb[0].mxu0
      %v3709 = vpop.f32.mrb[0].mxu0
      %v3710 = vadd.f32 0.0, %v3709
      %v3711 = vpop.f32.mrb[0].mxu0
      %3712 = vmatprep.mubr.bf16.mxu0 0
      %3713 = vmatmul.mubr.bf16.gmra.mrb[0].mxu0 %v3593
      %v3714 = vpop.f32.mrb[0].mxu0
      %v3715 = vadd.f32 0.0, %v3714
      %v3716 = vpop.f32.mrb[0].mxu0
      %v3717 = vpop.f32.mrb[0].mxu0
      %v3718 = vadd.f32 0.0, %v3717
      %v3719 = vpop.f32.mrb[0].mxu0
      %3720 = vmatprep.mubr.bf16.mxu0 0
      %3721 = vmatmul.mubr.bf16.gmra.mrb[0].mxu0 %v3596
      %v3722 = vpop.f32.mrb[0].mxu0
      %v3723 = vadd.f32 0.0, %v3722
      %v3724 = vpop.f32.mrb[0].mxu0
      %v3725 = vpop.f32.mrb[0].mxu0
      %v3726 = vadd.f32 0.0, %v3725
      %v3727 = vpop.f32.mrb[0].mxu0
      %3728 = vmatprep.mubr.bf16.mxu0 0
      %3729 = vmatmul.mubr.bf16.gmra.mrb[0].mxu0 %v3599
      %v3730 = vpop.f32.mrb[0].mxu0
      %v3731 = vadd.f32 0.0, %v3730
      %v3732 = vpop.f32.mrb[0].mxu0
      %v3733 = vpop.f32.mrb[0].mxu0
      %v3734 = vadd.f32 0.0, %v3733
      %v3735 = vpop.f32.mrb[0].mxu0
      %3736 = vmatprep.mubr.bf16.mxu0 0
      %3737 = vmatmul.mubr.bf16.gmra.mrb[0].mxu0 %v3602
      %v3738 = vpop.f32.mrb[0].mxu0
      %v3739 = vadd.f32 0.0, %v3738
      %v3740 = vpop.f32.mrb[0].mxu0
      %v3741 = vpop.f32.mrb[0].mxu0
      %v3742 = vadd.f32 0.0, %v3741
      %v3743 = vpop.f32.mrb[0].mxu0
      %3744 = vmatprep.mubr.bf16.mxu0 0
      %3745 = vmatmul.mubr.bf16.gmra.mrb[0].mxu0 %v3605
      %v3746 = vpop.f32.mrb[0].mxu0
      %v3747 = vadd.f32 0.0, %v3746
      %v3748 = vpop.f32.mrb[0].mxu0
      %v3749 = vpop.f32.mrb[0].mxu0
      %v3750 = vadd.f32 0.0, %v3749
      %v3751 = vpop.f32.mrb[0].mxu0
      %3752 = vmatprep.mubr.bf16.mxu0 0
      %3753 = vmatmul.mubr.bf16.gmra.mrb[0].mxu0 %v3608
      %v3754 = vpop.f32.mrb[0].mxu0
      %v3755 = vadd.f32 0.0, %v3754
      %v3756 = vpop.f32.mrb[0].mxu0
      %v3757 = vpop.f32.mrb[0].mxu0
      %v3758 = vadd.f32 0.0, %v3757
      %v3759 = vpop.f32.mrb[0].mxu0
      %3760 = vmatprep.mubr.bf16.mxu0 0
      %3761 = vmatmul.mubr.bf16.gmra.mrb[0].mxu0 %v3611
      %v3762 = vpop.f32.mrb[0].mxu0
      %v3763 = vadd.f32 0.0, %v3762
      %v3764 = vpop.f32.mrb[0].mxu0
      %v3765 = vpop.f32.mrb[0].mxu0
      %v3766 = vadd.f32 0.0, %v3765
      %v3767 = vpop.f32.mrb[0].mxu0
      %3768 = vmatprep.mubr.bf16.mxu0 0
      %3769 = vmatmul.mubr.bf16.gmra.mrb[0].mxu0 %v3614
      %v3770 = vpop.f32.mrb[0].mxu0
      %v3771 = vadd.f32 0.0, %v3770
      %v3772 = vpop.f32.mrb[0].mxu0
      %v3773 = vpop.f32.mrb[0].mxu0
      %v3774 = vadd.f32 0.0, %v3773
      %v3775 = vpop.f32.mrb[0].mxu0
      %3776 = vmatprep.mubr.bf16.mxu0 0
      %3777 = vmatmul.mubr.bf16.gmra.mrb[0].mxu0 %v3617
      %v3778 = vpop.f32.mrb[0].mxu0
      %v3779 = vadd.f32 0.0, %v3778
      %v3780 = vpop.f32.mrb[0].mxu0
      %v3781 = vpop.f32.mrb[0].mxu0
      %v3782 = vadd.f32 0.0, %v3781
      %v3783 = vpop.f32.mrb[0].mxu0
      %3784 = vmatprep.mubr.bf16.mxu0 0
      %3785 = vmatmul.mubr.bf16.gmra.mrb[0].mxu0 %v3620
      %v3786 = vpop.f32.mrb[0].mxu0
      %v3787 = vadd.f32 0.0, %v3786
      %v3788 = vpop.f32.mrb[0].mxu0
      %v3789 = vpop.f32.mrb[0].mxu0
      %v3790 = vadd.f32 0.0, %v3789
      %v3791 = vpop.f32.mrb[0].mxu0
      %3792 = vmatprep.mubr.bf16.mxu0 0
      %3793 = vmatmul.mubr.bf16.gmra.mrb[0].mxu0 %v3623
      %v3794 = vpop.f32.mrb[0].mxu0
      %v3795 = vadd.f32 0.0, %v3794
      %v3796 = vpop.f32.mrb[0].mxu0
      %v3797 = vpop.f32.mrb[0].mxu0
      %v3798 = vadd.f32 0.0, %v3797
      %v3799 = vpop.f32.mrb[0].mxu0
      %3800 = vmatprep.mubr.bf16.mxu0 0
      %3801 = vmatmul.mubr.bf16.gmra.mrb[0].mxu0 %v3626
      %v3802 = vpop.f32.mrb[0].mxu0
      %v3803 = vadd.f32 0.0, %v3802
      %v3804 = vpop.f32.mrb[0].mxu0
      %v3805 = vpop.f32.mrb[0].mxu0
      %v3806 = vadd.f32 0.0, %v3805
      %v3807 = vpop.f32.mrb[0].mxu0
      %3808 = vmatprep.mubr.bf16.mxu0 0
      %3809 = vmatmul.mubr.bf16.gmra.mrb[0].mxu0 %v3629
      %v3810 = vpop.f32.mrb[0].mxu0
      %v3811 = vadd.f32 0.0, %v3810
      %v3812 = vpop.f32.mrb[0].mxu0
      %v3813 = vpop.f32.mrb[0].mxu0
      %v3814 = vadd.f32 0.0, %v3813
      %v3815 = vpop.f32.mrb[0].mxu0
      %3816 = vmatprep.mubr.bf16.mxu0 0
      %3817 = vmatmul.mubr.bf16.gmra.mrb[0].mxu0 %v3632
      %v3818 = vpop.f32.mrb[0].mxu0
      %v3819 = vadd.f32 0.0, %v3818
      %v3820 = vpop.f32.mrb[0].mxu0
      %v3821 = vpop.f32.mrb[0].mxu0
      %v3822 = vadd.f32 0.0, %v3821
      %v3823 = vpop.f32.mrb[0].mxu0
      %3824 = vmatprep.mubr.bf16.mxu0 0
      %3825 = vmatmul.mubr.bf16.gmra.mrb[0].mxu0 %v3635
      %v3826 = vpop.f32.mrb[0].mxu0
      %v3827 = vadd.f32 0.0, %v3826
      %v3828 = vpop.f32.mrb[0].mxu0
      %v3829 = vpop.f32.mrb[0].mxu0
      %v3830 = vadd.f32 0.0, %v3829
      %v3831 = vpop.f32.mrb[0].mxu0
      %3832 = vmatprep.mubr.bf16.mxu0 0
      %3833 = vmatmul.mubr.bf16.gmra.mrb[0].mxu0 %v3638
      %v3834 = vpop.f32.mrb[0].mxu0
      %v3835 = vadd.f32 0.0, %v3834
      %v3836 = vpop.f32.mrb[0].mxu0
      %v3837 = vpop.f32.mrb[0].mxu0
      %v3838 = vpop.f32.mrb[0].mxu0
      %3839 = vdwg.mxu0
      %v3840 = vadd.f32 %v3191, %v3675
      %v3841 = vadd.f32 %v3192, %v3678
      %v3842 = vadd.f32 %v3193, %v3683
      %v3843 = vadd.f32 %v3194, %v3686
      %v3844 = vadd.f32 %v3195, %v3691
      %v3845 = vadd.f32 %v3196, %v3694
      %v3846 = vadd.f32 %v3197, %v3699
      %v3847 = vadd.f32 %v3198, %v3702
      %v3848 = vadd.f32 %v3199, %v3707
      %v3849 = vadd.f32 %v3200, %v3710
      %v3850 = vadd.f32 %v3201, %v3715
      %v3851 = vadd.f32 %v3202, %v3718
      %v3852 = vadd.f32 %v3203, %v3723
      %v3853 = vadd.f32 %v3204, %v3726
      %v3854 = vadd.f32 %v3205, %v3731
      %v3855 = vadd.f32 %v3206, %v3734
      %v3856 = vadd.f32 %v3207, %v3739
      %v3857 = vadd.f32 %v3208, %v3742
      %v3858 = vadd.f32 %v3209, %v3747
      %v3859 = vadd.f32 %v3210, %v3750
      %v3860 = vadd.f32 %v3211, %v3755
      %v3861 = vadd.f32 %v3212, %v3758
      %v3862 = vadd.f32 %v3213, %v3763
      %v3863 = vadd.f32 %v3214, %v3766
      %v3864 = vadd.f32 %v3215, %v3771
      %v3865 = vadd.f32 %v3216, %v3774
      %v3866 = vadd.f32 %v3217, %v3779
      %v3867 = vadd.f32 %v3218, %v3782
      %v3868 = vadd.f32 %v3219, %v3787
      %v3869 = vadd.f32 %v3220, %v3790
      %v3870 = vadd.f32 %v3221, %v3795
      %v3871 = vadd.f32 %v3222, %v3798
      %v3872 = vadd.f32 %v3223, %v3803
      %v3873 = vadd.f32 %v3224, %v3806
      %v3874 = vadd.f32 %v3225, %v3811
      %v3875 = vadd.f32 %v3226, %v3814
      %v3876 = vadd.f32 %v3227, %v3819
      %v3877 = vadd.f32 %v3228, %v3822
      %v3878 = vadd.f32 %v3229, %v3827
      %v3879 = vadd.f32 %v3230, %v3830
      %v3880 = vadd.f32 %v3231, %v3835
      %v3881 = vld [vmem:[%s165 + $0x10] sm:$0x8]
      %s3882 = scalar_lea.vmem %s1, 64
      %v3883 = vld [vmem:[%s3882] sm:$0xf]
      %v3884 = vld [vmem:[%s3882 + $0x4] sm:$0xf]
      %v3886 = vunpack.c.l.b16 %v3881
      %v3887 = vpack.c.b16 %v3320, %v3886
      %vm3888 = vcmask 1044480
      %v3889 = vrot.slane %v3887, 3
      %v3890 = vrot.slane %v3362, 3
      %v3891 = vsel %vm3888, %v3889, %v3890
      %v3892 = vrot.slane %v3363, 3
      %v3893 = vsel %vm3888, %v3890, %v3892
      %v3894 = vrot.slane %v3364, 3
      %v3895 = vsel %vm3888, %v3892, %v3894
      %v3896 = vrot.slane %v3365, 3
      %v3897 = vsel %vm3888, %v3894, %v3896
      %v3898 = vrot.slane %v3366, 3
      %v3899 = vsel %vm3888, %v3896, %v3898
      %v3900 = vrot.slane %v3367, 3
      %v3901 = vsel %vm3888, %v3898, %v3900
      %v3902 = vrot.slane %v3368, 3
      %v3903 = vsel %vm3888, %v3900, %v3902
      %v3904 = vrot.slane %v3369, 3
      %v3905 = vsel %vm3888, %v3902, %v3904
      %v3906 = vrot.slane %v3370, 3
      %v3907 = vsel %vm3888, %v3904, %v3906
      %v3908 = vrot.slane %v3371, 3
      %v3909 = vsel %vm3888, %v3906, %v3908
      %v3910 = vrot.slane %v3372, 3
      %v3911 = vsel %vm3888, %v3908, %v3910
      %v3912 = vrot.slane %v3373, 3
      %v3913 = vsel %vm3888, %v3910, %v3912
      %v3914 = vrot.slane %v3374, 3
      %v3915 = vsel %vm3888, %v3912, %v3914
      %v3916 = vrot.slane %v3375, 3
      %v3917 = vsel %vm3888, %v3914, %v3916
      %v3918 = vrot.slane %v3376, 3
      %v3919 = vsel %vm3888, %v3916, %v3918
      %v3920 = vrot.slane %v3377, 3
      %v3921 = vsel %vm3888, %v3918, %v3920
      %v3922 = vrot.slane %v3378, 3
      %v3923 = vsel %vm3888, %v3920, %v3922
      %v3924 = vrot.slane %v3379, 3
      %v3925 = vsel %vm3888, %v3922, %v3924
      %v3926 = vrot.slane %v3380, 3
      %v3927 = vsel %vm3888, %v3924, %v3926
      %v3928 = vrot.slane %v3381, 3
      %v3929 = vsel %vm3888, %v3926, %v3928
      %v3932 = vunpack.c.l.b16 %v3883
      %v3933 = vunpack.c.l.b16 %v3884
      %v3934 = vpack.c.b16 %v3933, %v3932
      %v3937 = vsel %vm496, %v3891, 0
      %v3940 = vsel %vm496, %v3893, 0
      %v3943 = vsel %vm496, %v3895, 0
      %v3946 = vsel %vm496, %v3897, 0
      %v3949 = vsel %vm496, %v3899, 0
      %v3952 = vsel %vm496, %v3901, 0
      %v3955 = vsel %vm496, %v3903, 0
      %v3958 = vsel %vm496, %v3905, 0
      %v3961 = vsel %vm496, %v3907, 0
      %v3964 = vsel %vm496, %v3909, 0
      %v3967 = vsel %vm496, %v3911, 0
      %v3970 = vsel %vm496, %v3913, 0
      %v3973 = vsel %vm496, %v3915, 0
      %v3976 = vsel %vm496, %v3917, 0
      %v3979 = vsel %vm496, %v3919, 0
      %v3982 = vsel %vm496, %v3921, 0
      %v3985 = vsel %vm496, %v3923, 0
      %v3988 = vsel %vm496, %v3925, 0
      %v3991 = vsel %vm496, %v3927, 0
      %v3994 = vsel %vm496, %v3929, 0
      %v3997 = vsel %vm496, %v3928, 0
      %3999 = vmatprep.subr.bf16.mxu0 0
      %4000 = vmatpush1.bf16.msra.mxu0 %v3934
      %4001 = vmatprep.subr.bf16.mxu0 0
      %4002 = vmatpush1.bf16.msra.mxu0 0
      %4003 = vmatprep.subr.bf16.mxu0 0
      %4004 = vmatpush1.bf16.msra.mxu0 0
      %4005 = vmatprep.subr.bf16.mxu0 0
      %4006 = vmatpush1.bf16.msra.mxu0 0
      %4007 = vmatprep.subr.bf16.mxu0 0
      %4008 = vmatpush1.bf16.msra.mxu0 0
      %4009 = vmatprep.subr.bf16.mxu0 0
      %4010 = vmatpush1.bf16.msra.mxu0 0
      %4011 = vmatprep.subr.bf16.mxu0 0
      %4012 = vmatpush1.bf16.msra.mxu0 0
      %4013 = vmatprep.subr.bf16.mxu0 0
      %4014 = vmatpush1.bf16.msra.mxu0 0
      %4015 = vmatprep.subr.bf16.mxu0 0
      %4016 = vmatpush1.bf16.msra.mxu0 0
      %4017 = vmatprep.subr.bf16.mxu0 0
      %4018 = vmatpush1.bf16.msra.mxu0 0
      %4019 = vmatprep.subr.bf16.mxu0 0
      %4020 = vmatpush1.bf16.msra.mxu0 0
      %4021 = vmatprep.subr.bf16.mxu0 0
      %4022 = vmatpush1.bf16.msra.mxu0 0
      %4023 = vmatprep.subr.bf16.mxu0 0
      %4024 = vmatpush1.bf16.msra.mxu0 0
      %4025 = vmatprep.subr.bf16.mxu0 0
      %4026 = vmatpush1.bf16.msra.mxu0 0
      %4027 = vmatprep.subr.bf16.mxu0 0
      %4028 = vmatpush1.bf16.msra.mxu0 0
      %4029 = vmatprep.subr.bf16.mxu0 0
      %4030 = vmatpush1.bf16.msra.mxu0 0
      %4031 = vmatprep.mubr.bf16.mxu0 0
      %4032 = vmatmul.mubr.bf16.gmra.mrb[0].mxu0 %v3937
      %v4033 = vpop.f32.mrb[0].mxu0
      %v4034 = vadd.f32 0.0, %v4033
      %v4035 = vpop.f32.mrb[0].mxu0
      %v4036 = vpop.f32.mrb[0].mxu0
      %v4037 = vadd.f32 0.0, %v4036
      %v4038 = vpop.f32.mrb[0].mxu0
      %4039 = vmatprep.mubr.bf16.mxu0 0
      %4040 = vmatmul.mubr.bf16.gmra.mrb[0].mxu0 %v3940
      %v4041 = vpop.f32.mrb[0].mxu0
      %v4042 = vadd.f32 0.0, %v4041
      %v4043 = vpop.f32.mrb[0].mxu0
      %v4044 = vpop.f32.mrb[0].mxu0
      %v4045 = vadd.f32 0.0, %v4044
      %v4046 = vpop.f32.mrb[0].mxu0
      %4047 = vmatprep.mubr.bf16.mxu0 0
      %4048 = vmatmul.mubr.bf16.gmra.mrb[0].mxu0 %v3943
      %v4049 = vpop.f32.mrb[0].mxu0
      %v4050 = vadd.f32 0.0, %v4049
      %v4051 = vpop.f32.mrb[0].mxu0
      %v4052 = vpop.f32.mrb[0].mxu0
      %v4053 = vadd.f32 0.0, %v4052
      %v4054 = vpop.f32.mrb[0].mxu0
      %4055 = vmatprep.mubr.bf16.mxu0 0
      %4056 = vmatmul.mubr.bf16.gmra.mrb[0].mxu0 %v3946
      %v4057 = vpop.f32.mrb[0].mxu0
      %v4058 = vadd.f32 0.0, %v4057
      %v4059 = vpop.f32.mrb[0].mxu0
      %v4060 = vpop.f32.mrb[0].mxu0
      %v4061 = vadd.f32 0.0, %v4060
      %v4062 = vpop.f32.mrb[0].mxu0
      %4063 = vmatprep.mubr.bf16.mxu0 0
      %4064 = vmatmul.mubr.bf16.gmra.mrb[0].mxu0 %v3949
      %v4065 = vpop.f32.mrb[0].mxu0
      %v4066 = vadd.f32 0.0, %v4065
      %v4067 = vpop.f32.mrb[0].mxu0
      %v4068 = vpop.f32.mrb[0].mxu0
      %v4069 = vadd.f32 0.0, %v4068
      %v4070 = vpop.f32.mrb[0].mxu0
      %4071 = vmatprep.mubr.bf16.mxu0 0
      %4072 = vmatmul.mubr.bf16.gmra.mrb[0].mxu0 %v3952
      %v4073 = vpop.f32.mrb[0].mxu0
      %v4074 = vadd.f32 0.0, %v4073
      %v4075 = vpop.f32.mrb[0].mxu0
      %v4076 = vpop.f32.mrb[0].mxu0
      %v4077 = vadd.f32 0.0, %v4076
      %v4078 = vpop.f32.mrb[0].mxu0
      %4079 = vmatprep.mubr.bf16.mxu0 0
      %4080 = vmatmul.mubr.bf16.gmra.mrb[0].mxu0 %v3955
      %v4081 = vpop.f32.mrb[0].mxu0
      %v4082 = vadd.f32 0.0, %v4081
      %v4083 = vpop.f32.mrb[0].mxu0
      %v4084 = vpop.f32.mrb[0].mxu0
      %v4085 = vadd.f32 0.0, %v4084
      %v4086 = vpop.f32.mrb[0].mxu0
      %4087 = vmatprep.mubr.bf16.mxu0 0
      %4088 = vmatmul.mubr.bf16.gmra.mrb[0].mxu0 %v3958
      %v4089 = vpop.f32.mrb[0].mxu0
      %v4090 = vadd.f32 0.0, %v4089
      %v4091 = vpop.f32.mrb[0].mxu0
      %v4092 = vpop.f32.mrb[0].mxu0
      %v4093 = vadd.f32 0.0, %v4092
      %v4094 = vpop.f32.mrb[0].mxu0
      %4095 = vmatprep.mubr.bf16.mxu0 0
      %4096 = vmatmul.mubr.bf16.gmra.mrb[0].mxu0 %v3961
      %v4097 = vpop.f32.mrb[0].mxu0
      %v4098 = vadd.f32 0.0, %v4097
      %v4099 = vpop.f32.mrb[0].mxu0
      %v4100 = vpop.f32.mrb[0].mxu0
      %v4101 = vadd.f32 0.0, %v4100
      %v4102 = vpop.f32.mrb[0].mxu0
      %4103 = vmatprep.mubr.bf16.mxu0 0
      %4104 = vmatmul.mubr.bf16.gmra.mrb[0].mxu0 %v3964
      %v4105 = vpop.f32.mrb[0].mxu0
      %v4106 = vadd.f32 0.0, %v4105
      %v4107 = vpop.f32.mrb[0].mxu0
      %v4108 = vpop.f32.mrb[0].mxu0
      %v4109 = vadd.f32 0.0, %v4108
      %v4110 = vpop.f32.mrb[0].mxu0
      %4111 = vmatprep.mubr.bf16.mxu0 0
      %4112 = vmatmul.mubr.bf16.gmra.mrb[0].mxu0 %v3967
      %v4113 = vpop.f32.mrb[0].mxu0
      %v4114 = vadd.f32 0.0, %v4113
      %v4115 = vpop.f32.mrb[0].mxu0
      %v4116 = vpop.f32.mrb[0].mxu0
      %v4117 = vadd.f32 0.0, %v4116
      %v4118 = vpop.f32.mrb[0].mxu0
      %4119 = vmatprep.mubr.bf16.mxu0 0
      %4120 = vmatmul.mubr.bf16.gmra.mrb[0].mxu0 %v3970
      %v4121 = vpop.f32.mrb[0].mxu0
      %v4122 = vadd.f32 0.0, %v4121
      %v4123 = vpop.f32.mrb[0].mxu0
      %v4124 = vpop.f32.mrb[0].mxu0
      %v4125 = vadd.f32 0.0, %v4124
      %v4126 = vpop.f32.mrb[0].mxu0
      %4127 = vmatprep.mubr.bf16.mxu0 0
      %4128 = vmatmul.mubr.bf16.gmra.mrb[0].mxu0 %v3973
      %v4129 = vpop.f32.mrb[0].mxu0
      %v4130 = vadd.f32 0.0, %v4129
      %v4131 = vpop.f32.mrb[0].mxu0
      %v4132 = vpop.f32.mrb[0].mxu0
      %v4133 = vadd.f32 0.0, %v4132
      %v4134 = vpop.f32.mrb[0].mxu0
      %4135 = vmatprep.mubr.bf16.mxu0 0
      %4136 = vmatmul.mubr.bf16.gmra.mrb[0].mxu0 %v3976
      %v4137 = vpop.f32.mrb[0].mxu0
      %v4138 = vadd.f32 0.0, %v4137
      %v4139 = vpop.f32.mrb[0].mxu0
      %v4140 = vpop.f32.mrb[0].mxu0
      %v4141 = vadd.f32 0.0, %v4140
      %v4142 = vpop.f32.mrb[0].mxu0
      %4143 = vmatprep.mubr.bf16.mxu0 0
      %4144 = vmatmul.mubr.bf16.gmra.mrb[0].mxu0 %v3979
      %v4145 = vpop.f32.mrb[0].mxu0
      %v4146 = vadd.f32 0.0, %v4145
      %v4147 = vpop.f32.mrb[0].mxu0
      %v4148 = vpop.f32.mrb[0].mxu0
      %v4149 = vadd.f32 0.0, %v4148
      %v4150 = vpop.f32.mrb[0].mxu0
      %4151 = vmatprep.mubr.bf16.mxu0 0
      %4152 = vmatmul.mubr.bf16.gmra.mrb[0].mxu0 %v3982
      %v4153 = vpop.f32.mrb[0].mxu0
      %v4154 = vadd.f32 0.0, %v4153
      %v4155 = vpop.f32.mrb[0].mxu0
      %v4156 = vpop.f32.mrb[0].mxu0
      %v4157 = vadd.f32 0.0, %v4156
      %v4158 = vpop.f32.mrb[0].mxu0
      %4159 = vmatprep.mubr.bf16.mxu0 0
      %4160 = vmatmul.mubr.bf16.gmra.mrb[0].mxu0 %v3985
      %v4161 = vpop.f32.mrb[0].mxu0
      %v4162 = vadd.f32 0.0, %v4161
      %v4163 = vpop.f32.mrb[0].mxu0
      %v4164 = vpop.f32.mrb[0].mxu0
      %v4165 = vadd.f32 0.0, %v4164
      %v4166 = vpop.f32.mrb[0].mxu0
      %4167 = vmatprep.mubr.bf16.mxu0 0
      %4168 = vmatmul.mubr.bf16.gmra.mrb[0].mxu0 %v3988
      %v4169 = vpop.f32.mrb[0].mxu0
      %v4170 = vadd.f32 0.0, %v4169
      %v4171 = vpop.f32.mrb[0].mxu0
      %v4172 = vpop.f32.mrb[0].mxu0
      %v4173 = vadd.f32 0.0, %v4172
      %v4174 = vpop.f32.mrb[0].mxu0
      %4175 = vmatprep.mubr.bf16.mxu0 0
      %4176 = vmatmul.mubr.bf16.gmra.mrb[0].mxu0 %v3991
      %v4177 = vpop.f32.mrb[0].mxu0
      %v4178 = vadd.f32 0.0, %v4177
      %v4179 = vpop.f32.mrb[0].mxu0
      %v4180 = vpop.f32.mrb[0].mxu0
      %v4181 = vadd.f32 0.0, %v4180
      %v4182 = vpop.f32.mrb[0].mxu0
      %4183 = vmatprep.mubr.bf16.mxu0 0
      %4184 = vmatmul.mubr.bf16.gmra.mrb[0].mxu0 %v3994
      %v4185 = vpop.f32.mrb[0].mxu0
      %v4186 = vadd.f32 0.0, %v4185
      %v4187 = vpop.f32.mrb[0].mxu0
      %v4188 = vpop.f32.mrb[0].mxu0
      %v4189 = vadd.f32 0.0, %v4188
      %v4190 = vpop.f32.mrb[0].mxu0
      %4191 = vmatprep.mubr.bf16.mxu0 0
      %4192 = vmatmul.mubr.bf16.gmra.mrb[0].mxu0 %v3997
      %v4193 = vpop.f32.mrb[0].mxu0
      %v4194 = vadd.f32 0.0, %v4193
      %v4195 = vpop.f32.mrb[0].mxu0
      %v4196 = vpop.f32.mrb[0].mxu0
      %v4197 = vpop.f32.mrb[0].mxu0
      %4198 = vdwg.mxu0
      %v4199 = vadd.f32 %v3840, %v4034
      %v4200 = vadd.f32 %v3841, %v4037
      %v4201 = vadd.f32 %v3842, %v4042
      %v4202 = vadd.f32 %v3843, %v4045
      %v4203 = vadd.f32 %v3844, %v4050
      %v4204 = vadd.f32 %v3845, %v4053
      %v4205 = vadd.f32 %v3846, %v4058
      %v4206 = vadd.f32 %v3847, %v4061
      %v4207 = vadd.f32 %v3848, %v4066
      %v4208 = vadd.f32 %v3849, %v4069
      %v4209 = vadd.f32 %v3850, %v4074
      %v4210 = vadd.f32 %v3851, %v4077
      %v4211 = vadd.f32 %v3852, %v4082
      %v4212 = vadd.f32 %v3853, %v4085
      %v4213 = vadd.f32 %v3854, %v4090
      %v4214 = vadd.f32 %v3855, %v4093
      %v4215 = vadd.f32 %v3856, %v4098
      %v4216 = vadd.f32 %v3857, %v4101
      %v4217 = vadd.f32 %v3858, %v4106
      %v4218 = vadd.f32 %v3859, %v4109
      %v4219 = vadd.f32 %v3860, %v4114
      %v4220 = vadd.f32 %v3861, %v4117
      %v4221 = vadd.f32 %v3862, %v4122
      %v4222 = vadd.f32 %v3863, %v4125
      %v4223 = vadd.f32 %v3864, %v4130
      %v4224 = vadd.f32 %v3865, %v4133
      %v4225 = vadd.f32 %v3866, %v4138
      %v4226 = vadd.f32 %v3867, %v4141
      %v4227 = vadd.f32 %v3868, %v4146
      %v4228 = vadd.f32 %v3869, %v4149
      %v4229 = vadd.f32 %v3870, %v4154
      %v4230 = vadd.f32 %v3871, %v4157
      %v4231 = vadd.f32 %v3872, %v4162
      %v4232 = vadd.f32 %v3873, %v4165
      %v4233 = vadd.f32 %v3874, %v4170
      %v4234 = vadd.f32 %v3875, %v4173
      %v4235 = vadd.f32 %v3876, %v4178
      %v4236 = vadd.f32 %v3877, %v4181
      %v4237 = vadd.f32 %v3878, %v4186
      %v4238 = vadd.f32 %v3879, %v4189
      %v4239 = vadd.f32 %v3880, %v4194
      %v4240 = vld [vmem:[%s2] sm:$0x1]
      %v4242 = vlaneseq
      %v4243 = vshrl.u32 %v4242, 7
      %v4244 = vsub.s32 0, %v4243
      %v4245 = vrot.slane %v4240, %v4244
      %v4247 = vadd.f32 %v4199, %v4245
      %v4248 = vadd.f32 %v4200, %v4245
      %v4249 = vadd.f32 %v4201, %v4245
      %v4250 = vadd.f32 %v4202, %v4245
      %v4251 = vadd.f32 %v4203, %v4245
      %v4252 = vadd.f32 %v4204, %v4245
      %v4253 = vadd.f32 %v4205, %v4245
      %v4254 = vadd.f32 %v4206, %v4245
      %v4255 = vadd.f32 %v4207, %v4245
      %v4256 = vadd.f32 %v4208, %v4245
      %v4257 = vadd.f32 %v4209, %v4245
      %v4258 = vadd.f32 %v4210, %v4245
      %v4259 = vadd.f32 %v4211, %v4245
      %v4260 = vadd.f32 %v4212, %v4245
      %v4261 = vadd.f32 %v4213, %v4245
      %v4262 = vadd.f32 %v4214, %v4245
      %v4263 = vadd.f32 %v4215, %v4245
      %v4264 = vadd.f32 %v4216, %v4245
      %v4265 = vadd.f32 %v4217, %v4245
      %v4266 = vadd.f32 %v4218, %v4245
      %v4267 = vadd.f32 %v4219, %v4245
      %v4268 = vadd.f32 %v4220, %v4245
      %v4269 = vadd.f32 %v4221, %v4245
      %v4270 = vadd.f32 %v4222, %v4245
      %v4271 = vadd.f32 %v4223, %v4245
      %v4272 = vadd.f32 %v4224, %v4245
      %v4273 = vadd.f32 %v4225, %v4245
      %v4274 = vadd.f32 %v4226, %v4245
      %v4275 = vadd.f32 %v4227, %v4245
      %v4276 = vadd.f32 %v4228, %v4245
      %v4277 = vadd.f32 %v4229, %v4245
      %v4278 = vadd.f32 %v4230, %v4245
      %v4279 = vadd.f32 %v4231, %v4245
      %v4280 = vadd.f32 %v4232, %v4245
      %v4281 = vadd.f32 %v4233, %v4245
      %v4282 = vadd.f32 %v4234, %v4245
      %v4283 = vadd.f32 %v4235, %v4245
      %v4284 = vadd.f32 %v4236, %v4245
      %v4285 = vadd.f32 %v4237, %v4245
      %v4286 = vadd.f32 %v4238, %v4245
      %v4287 = vadd.f32 %v4239, %v4245
      %4288 = vst.msk [vmem:[%s170] sm:$0xff] %vm496, %v4247
      %4289 = vst.msk [vmem:[%s170 + $0x8] sm:$0xff] %vm496, %v4248
      %4290 = vst.msk [vmem:[%s170 + $0x10] sm:$0xff] %vm496, %v4249
      %4291 = vst.msk [vmem:[%s170 + $0x18] sm:$0xff] %vm496, %v4250
      %4292 = vst.msk [vmem:[%s170 + $0x20] sm:$0xff] %vm496, %v4251
      %4293 = vst.msk [vmem:[%s170 + $0x28] sm:$0xff] %vm496, %v4252
      %4294 = vst.msk [vmem:[%s170 + $0x30] sm:$0xff] %vm496, %v4253
      %4295 = vst.msk [vmem:[%s170 + $0x38] sm:$0xff] %vm496, %v4254
      %4296 = vst.msk [vmem:[%s170 + $0x40] sm:$0xff] %vm496, %v4255
      %4297 = vst.msk [vmem:[%s170 + $0x48] sm:$0xff] %vm496, %v4256
      %4298 = vst.msk [vmem:[%s170 + $0x50] sm:$0xff] %vm496, %v4257
      %4299 = vst.msk [vmem:[%s170 + $0x58] sm:$0xff] %vm496, %v4258
      %4300 = vst.msk [vmem:[%s170 + $0x60] sm:$0xff] %vm496, %v4259
      %4301 = vst.msk [vmem:[%s170 + $0x68] sm:$0xff] %vm496, %v4260
      %4302 = vst.msk [vmem:[%s170 + $0x70] sm:$0xff] %vm496, %v4261
      %4303 = vst.msk [vmem:[%s170 + $0x78] sm:$0xff] %vm496, %v4262
      %4304 = vst.msk [vmem:[%s170 + $0x80] sm:$0xff] %vm496, %v4263
      %4305 = vst.msk [vmem:[%s170 + $0x88] sm:$0xff] %vm496, %v4264
      %4306 = vst.msk [vmem:[%s170 + $0x90] sm:$0xff] %vm496, %v4265
      %4307 = vst.msk [vmem:[%s170 + $0x98] sm:$0xff] %vm496, %v4266
      %4308 = vst.msk [vmem:[%s170 + $0xa0] sm:$0xff] %vm496, %v4267
      %4309 = vst.msk [vmem:[%s170 + $0xa8] sm:$0xff] %vm496, %v4268
      %4310 = vst.msk [vmem:[%s170 + $0xb0] sm:$0xff] %vm496, %v4269
      %4311 = vst.msk [vmem:[%s170 + $0xb8] sm:$0xff] %vm496, %v4270
      %4312 = vst.msk [vmem:[%s170 + $0xc0] sm:$0xff] %vm496, %v4271
      %4313 = vst.msk [vmem:[%s170 + $0xc8] sm:$0xff] %vm496, %v4272
      %4314 = vst.msk [vmem:[%s170 + $0xd0] sm:$0xff] %vm496, %v4273
      %4315 = vst.msk [vmem:[%s170 + $0xd8] sm:$0xff] %vm496, %v4274
      %4316 = vst.msk [vmem:[%s170 + $0xe0] sm:$0xff] %vm496, %v4275
      %4317 = vst.msk [vmem:[%s170 + $0xe8] sm:$0xff] %vm496, %v4276
      %4318 = vst.msk [vmem:[%s170 + $0xf0] sm:$0xff] %vm496, %v4277
      %4319 = vst.msk [vmem:[%s170 + $0xf8] sm:$0xff] %vm496, %v4278
      %4320 = vst.msk [vmem:[%s170 + $0x100] sm:$0xff] %vm496, %v4279
      %4321 = vst.msk [vmem:[%s170 + $0x108] sm:$0xff] %vm496, %v4280
      %4322 = vst.msk [vmem:[%s170 + $0x110] sm:$0xff] %vm496, %v4281
      %4323 = vst.msk [vmem:[%s170 + $0x118] sm:$0xff] %vm496, %v4282
      %4324 = vst.msk [vmem:[%s170 + $0x120] sm:$0xff] %vm496, %v4283
      %4325 = vst.msk [vmem:[%s170 + $0x128] sm:$0xff] %vm496, %v4284
      %4326 = vst.msk [vmem:[%s170 + $0x130] sm:$0xff] %vm496, %v4285
      %4327 = vst.msk [vmem:[%s170 + $0x138] sm:$0xff] %vm496, %v4286
      %vm4328 = vcmask 125952
      %4329 = vst.msk [vmem:[%s170 + $0x140] sm:$0xf] %vm4328, %v4287
      %p4330 = scmp.lt.s32.totalorder %s14, 1
      %s4331 = scalar_select %p4330, %s14, 1
      %s4332 = smul.addr %s4331, 41
      %s4333 = smul.addr %s4332, 8
      %s4334 = scalar_lea.vmem %s3, %s4333
      // Predicated region
      $region33: #{pyra_conv_block.6} parent=31 // pred_check
        %p4335 = pneg %p100
      $region34: #{pyra_conv_block.6} parent=31 // pred_check_branch
        %4337 = sbr.rel (%p4335) target = $region36
      $region35: #{pyra_conv_block.6} parent=31 // pred_region
        _
      $region36: #{pyra_conv_block.6} parent=31 // pred_fallthru
        _
    $region32: #{pyra_conv_block.6} parent=5 // pred_fallthru
      _
    %p4338 = scmp.le.s32.totalorder 2, %s9
    // Predicated region
    $region37: #{pyra_conv_block.6} parent=5 // pred_check
      %p4339 = pneg %p4338
    $region38: #{pyra_conv_block.6} parent=5 // pred_check_branch
      %4341 = sbr.rel (%p4339) target = $region40
    $region39: #{pyra_conv_block.6} parent=5 // pred_region
      %s4342 = ssub.s32 %s9, 2
      // Predicated region
      $region41: #{pyra_conv_block.6} parent=39 // pred_check
        %p4343 = pneg %p106
      $region42: #{pyra_conv_block.6} parent=39 // pred_check_branch
        %4345 = sbr.rel (%p4343) target = $region44
      $region43: #{pyra_conv_block.6} parent=39 // pred_region
        %p4346 = scmp.lt.s32.totalorder %s15, 1
        %s4347 = scalar_select %p4346, %s15, 1
        %s4348 = smul.addr %s4347, 41
        %s4349 = smul.addr %s4348, 8
        %s4350 = scalar_lea.vmem %s3, %s4349
      $region44: #{pyra_conv_block.6} parent=39 // pred_fallthru
        _
    $region40: #{pyra_conv_block.6} parent=5 // pred_fallthru
      _
  $region6: #{pyra_conv_block.6} parent=0 // loop_footer
    %s13 = sadd.s32 1, %s9
  $region7: #{pyra_conv_block.6} parent=0 // loop_footer_branch
    %8 = sbr.rel target = $region3
  $region8: #{pyra_conv_block.6} parent=0 // loop_exit
    _

</llo_original>
